<compile_context>
chip_gen: v7x
topology: tpu7x:2x2x1
jax: 0.10.0
libtpu: 0.0.40
codegen_flags: <defaults>
</compile_context>

<pallas_src>
import functools

import jax
import jax.numpy as jnp
from jax.experimental import pallas as pl
from jax.experimental.pallas import tpu as pltpu

# ---------------------------------------------------------------------------
# Model dimensions (PyTorch defaults: n_mfcc=13, num_frames=101)
# ---------------------------------------------------------------------------
N_MFCC = 13
C_PAD = 16                                 # channels padded to 16 for aligned tap slices
NUM_FRAMES = 101
C_HID = 64
T_CONV1 = NUM_FRAMES                       # conv1: k=3, s=1, pad=1 -> 101
T_POOL1 = (T_CONV1 - 3) // 2 + 1           # maxpool1: k=3, s=2 -> 50
T_CONV2 = T_POOL1                          # conv2: k=3, s=1, pad=1 -> 50
T_POOL2 = (T_CONV2 - 3) // 2 + 1           # maxpool2: k=3, s=2 -> 24
FC_IN = C_HID * T_POOL2                    # 64 * 24 = 1536
FC_HID = 128
BN_EPS = 1e-5

K2 = 3 * C_HID                             # 192 (conv2 weight rows: k*64 + c_in)

# Flat per-sample row strides (multiples of 8 so sample boundaries align with
# sublane tiles, and S0 == 2*S1 == 4*S2 so every stride-2 pooling read stays
# uniform across sample boundaries).
S0 = 112   # conv1 input/output rows per sample (1 pad + 101 valid + 10 zero tail)
S1 = 56    # pool1 / conv2 rows per sample (1 left pad + 50 valid + 1 right pad + 4 junk)
S2 = 28    # pool2 rows per sample (24 valid + 4 junk)


def _round_up(x, m):
    return ((x + m - 1) // m) * m


def _vmem_limit_bytes(tb):
    """Lane-padding-aware VMEM budget for one grid step (f32, (8,128) tiles)."""
    row128 = 128 * 4                                   # one f32 row padded to 128 lanes
    resident = (2 * tb * S0 * row128                   # double-buffered input block
                + (tb * S0 + 8) * row128               # h1 scratch
                + 2 * (tb * S1 + 8) * row128           # p1 + h2 scratch
                + tb * S2 * row128                     # p2 scratch
                + 2 * (3 * C_PAD + K2 + FC_IN + 24) * row128)   # resident weights/biases
    temporaries = 6 * tb * S0 * row128                 # headroom for Mosaic vector temps
    est = resident + temporaries + (4 << 20)
    return int(min(max(est, 32 << 20), 100 << 20))


# ---------------------------------------------------------------------------
# Fused kernel: conv1+BN1+ReLU+pool1 + conv2+BN2+ReLU+pool2 + fc1+ReLU+fc2+sigmoid
# One grid step = TB samples, batch collapsed into the MXU M dimension.
# ---------------------------------------------------------------------------
def wakeword_fused_kernel(x_ref, w1_ref, b1_ref, w2_ref, b2_ref,
                          wfc1_ref, bfc1_ref, wfc2_ref, bfc2_ref,
                          out_ref, h1_ref, p1_ref, h2_ref, p2_ref):
    tb = out_ref.shape[2]          # samples per grid step (static)
    m1 = tb * S0                   # conv1 rows in this block
    m2 = tb * S1                   # pool1 / conv2 rows
    m3 = tb * S2                   # pool2 rows
    mm = m1 - 8                    # conv1 rows actually computed: keeps the +1/+2
                                   # shifted input reads in-bounds; rows >= m1-12 are junk
    f32 = jnp.float32

    # ---- conv1 (+ folded BN1) + ReLU: 3 accumulated per-tap matmuls (K = 16) ----
    # x_ref rows: sample b occupies [b*S0, (b+1)*S0); row 0 and rows 102..111 are the
    # conv "same" zero padding (written by the wrapper); channels 13..15 are zero.
    h1 = (jnp.dot(x_ref[pl.ds(0, mm), :], w1_ref[0 * C_PAD:1 * C_PAD, :],
                  preferred_element_type=f32)
          + jnp.dot(x_ref[pl.ds(1, mm), :], w1_ref[1 * C_PAD:2 * C_PAD, :],
                    preferred_element_type=f32)
          + jnp.dot(x_ref[pl.ds(2, mm), :], w1_ref[2 * C_PAD:3 * C_PAD, :],
                    preferred_element_type=f32)
          + b1_ref[...])
    h1_ref[pl.ds(0, mm), :] = jnp.maximum(h1, 0.0)
    h1_ref[pl.ds(mm, 16), :] = jnp.zeros((16, C_HID), f32)   # tail rows read by pool1

    # ---- maxpool1 (k=3, s=2): whole-buffer stride-2 reads; stride S0 -> S1 ----
    p1 = jnp.maximum(
        jnp.maximum(h1_ref[pl.ds(0, m2, 2), :], h1_ref[pl.ds(1, m2, 2), :]),
        h1_ref[pl.ds(2, m2, 2), :])

    # p1_ref layout, sample b -> rows [b*S1, (b+1)*S1):
    #   +0: conv2 left zero pad | +1..+50: pooled t'=0..49
    #   +51: conv2 right zero pad | +52..+55: junk (forced to 0)
    # One masked store replaces the per-sample zeroing loop: in p1's own row index j
    # (= p1_ref row - 1), every row with (j % S1) >= T_POOL1 is a pad/junk row.
    j = jax.lax.broadcasted_iota(jnp.int32, (m2, 1), 0)
    p1_ref[pl.ds(1, m2), :] = jnp.where((j % S1) < T_POOL1, p1, 0.0)
    p1_ref[0:1, :] = jnp.zeros((1, C_HID), f32)         # sample 0's left pad row
    p1_ref[pl.ds(m2, 8), :] = jnp.zeros((8, C_HID), f32)  # tail read by conv2's +1/+2 taps

    # ---- conv2 (+ folded BN2) + ReLU: 3 accumulated per-tap matmuls (K = 64) ----
    h2 = (jnp.dot(p1_ref[pl.ds(0, m2), :], w2_ref[0 * C_HID:1 * C_HID, :],
                  preferred_element_type=f32)
          + jnp.dot(p1_ref[pl.ds(1, m2), :], w2_ref[1 * C_HID:2 * C_HID, :],
                    preferred_element_type=f32)
          + jnp.dot(p1_ref[pl.ds(2, m2), :], w2_ref[2 * C_HID:3 * C_HID, :],
                    preferred_element_type=f32)
          + b2_ref[...])
    h2_ref[pl.ds(0, m2), :] = jnp.maximum(h2, 0.0)
    h2_ref[pl.ds(m2, 8), :] = jnp.zeros((8, C_HID), f32)  # tail read by pool2

    # ---- maxpool2 (k=3, s=2): whole-buffer stride-2 reads; stride S1 -> S2 ----
    p2_ref[...] = jnp.maximum(
        jnp.maximum(h2_ref[pl.ds(0, m3, 2), :], h2_ref[pl.ds(1, m3, 2), :]),
        h2_ref[pl.ds(2, m3, 2), :])

    # ---- fc1 + ReLU as an accumulation over the 24 pooled time steps ----
    # (wfc1 rows are pre-permuted to w*C + c order, so each 64-row slice is one step)
    hfc = jnp.broadcast_to(bfc1_ref[...], (tb, FC_HID))
    for t in range(T_POOL2):
        hfc = hfc + jnp.dot(p2_ref[pl.ds(t, tb, S2), :],
                            wfc1_ref[t * C_HID:(t + 1) * C_HID, :],
                            preferred_element_type=f32)
    hfc = jnp.maximum(hfc, 0.0)

    # ---- fc2 (N=1) + sigmoid, emitted as a lane-dense (8, tb) aligned block ----
    z = jnp.dot(wfc2_ref[...], hfc.T, preferred_element_type=f32) + bfc2_ref[...]  # (1, tb)
    out_ref[0] = jnp.broadcast_to(jax.nn.sigmoid(z), (8, tb)).astype(out_ref.dtype)


# ---------------------------------------------------------------------------
# Wrapper
# ---------------------------------------------------------------------------
@functools.partial(jax.jit, static_argnames=("block_batch",))
def wake_word_forward(x_ncw, params, block_batch=64):
    """x_ncw: (B, N_MFCC, NUM_FRAMES) float32 — same layout as the PyTorch module."""
    w1, b1, w2, b2, wfc1, bfc1, wfc2, bfc2 = params
    B = x_ncw.shape[0]

    # Samples per grid step: default 64 (review: 64-128, sized against v7x's 64 MiB
    # VMEM with lane padding). Shrink for small batches; split into >=2 grid steps
    # when the batch allows it (input-DMA pipelining, and megacore on v7x).
    tb = _round_up(min(int(block_batch), _round_up(max(B, 1), 8)), 8)
    if B >= 16 and _round_up(B, tb) == tb:
        tb = _round_up((B + 1) // 2, 8)
    b_pad = _round_up(max(B, 1), tb)
    grid = b_pad // tb

    # Layout glue (XLA, small): NCW -> NWC, channels 13 -> 16 (zero pad), per-sample
    # time layout of S0=112 rows (rows 0 and 102..111 are conv1's zero padding),
    # batch padded to a TB multiple, flattened to a 2D row-major array.
    x = jnp.transpose(x_ncw, (0, 2, 1)).astype(jnp.float32)          # (B, 101, 13)
    x = jnp.pad(x, ((0, b_pad - B),
                    (1, S0 - NUM_FRAMES - 1),
                    (0, C_PAD - N_MFCC)))                            # (b_pad, 112, 16)
    x2d = x.reshape(b_pad * S0, C_PAD)

    const2 = lambda i: (0, 0)
    out = pl.pallas_call(
        wakeword_fused_kernel,
        out_shape=jax.ShapeDtypeStruct((grid, 8, tb), jnp.float32),
        grid_spec=pltpu.PrefetchScalarGridSpec(
            num_scalar_prefetch=0,
            grid=(grid,),
            in_specs=[
                pl.BlockSpec((tb * S0, C_PAD), lambda i: (i, 0)),   # raw NWC input block
                pl.BlockSpec((3 * C_PAD, C_HID), const2),           # conv1 weight (3 taps)
                pl.BlockSpec((1, C_HID), const2),                   # conv1 bias
                pl.BlockSpec((K2, C_HID), const2),                  # conv2 weight (3 taps)
                pl.BlockSpec((1, C_HID), const2),                   # conv2 bias
                pl.BlockSpec((FC_IN, FC_HID), const2),              # fc1 weight (resident)
                pl.BlockSpec((1, FC_HID), const2),                  # fc1 bias
                pl.BlockSpec((1, FC_HID), const2),                  # fc2 weight (row)
                pl.BlockSpec((1, 1), const2),                       # fc2 bias
            ],
            out_specs=pl.BlockSpec((1, 8, tb), lambda i: (i, 0, 0)),
            scratch_shapes=[
                pltpu.VMEM((tb * S0 + 8, C_HID), jnp.float32),      # h1 (conv1 + relu)
                pltpu.VMEM((tb * S1 + 8, C_HID), jnp.float32),      # p1 (padded pool1)
                pltpu.VMEM((tb * S1 + 8, C_HID), jnp.float32),      # h2 (conv2 + relu)
                pltpu.VMEM((tb * S2, C_HID), jnp.float32),          # p2 (pool2)
            ],
        ),
        compiler_params=pltpu.CompilerParams(
            dimension_semantics=("parallel",),
            vmem_limit_bytes=_vmem_limit_bytes(tb)),
    )(x2d, w1, b1, w2, b2, wfc1, bfc1, wfc2, bfc2)

    # Lane-dense output: out[i, r, :] (all 8 rows identical) holds grid step i's
    # tb probabilities along lanes.
    return out[:, 0, :].reshape(b_pad, 1)[:B]


# ---------------------------------------------------------------------------
# Parameters (synthetic, deterministic). BN uses eval-mode running stats
# (PyTorch defaults gamma=1, beta=0, mean=0, var=1) folded into the convs.
# ---------------------------------------------------------------------------
def init_params(key):
    ks = jax.random.split(key, 8)
    raw = dict(
        w_conv1=jax.random.normal(ks[0], (C_HID, N_MFCC, 3), jnp.float32) * 0.1,
        b_conv1=jax.random.normal(ks[1], (C_HID,), jnp.float32) * 0.1,
        w_conv2=jax.random.normal(ks[2], (C_HID, C_HID, 3), jnp.float32) * 0.05,
        b_conv2=jax.random.normal(ks[3], (C_HID,), jnp.float32) * 0.1,
        w_fc1=jax.random.normal(ks[4], (FC_HID, FC_IN), jnp.float32) * 0.02,
        b_fc1=jax.random.normal(ks[5], (FC_HID,), jnp.float32) * 0.02,
        w_fc2=jax.random.normal(ks[6], (1, FC_HID), jnp.float32) * 0.02,
        b_fc2=jax.random.normal(ks[7], (1,), jnp.float32) * 0.02,
        gamma1=jnp.ones((C_HID,), jnp.float32), beta1=jnp.zeros((C_HID,), jnp.float32),
        mean1=jnp.zeros((C_HID,), jnp.float32), var1=jnp.ones((C_HID,), jnp.float32),
        gamma2=jnp.ones((C_HID,), jnp.float32), beta2=jnp.zeros((C_HID,), jnp.float32),
        mean2=jnp.zeros((C_HID,), jnp.float32), var2=jnp.ones((C_HID,), jnp.float32),
    )
    return raw


def pack_params(raw):
    """Fold eval-mode BN into conv weights and convert to kernel layouts."""
    scale1 = raw["gamma1"] / jnp.sqrt(raw["var1"] + BN_EPS)
    scale2 = raw["gamma2"] / jnp.sqrt(raw["var2"] + BN_EPS)
    w1_eff = raw["w_conv1"] * scale1[:, None, None]
    b1_eff = (raw["b_conv1"] - raw["mean1"]) * scale1 + raw["beta1"]
    w2_eff = raw["w_conv2"] * scale2[:, None, None]
    b2_eff = (raw["b_conv2"] - raw["mean2"]) * scale2 + raw["beta2"]

    # conv1 weights per tap, channels padded 13 -> 16: row index = k*16 + c_in.
    w1 = jnp.transpose(w1_eff, (2, 1, 0))                         # (3, 13, 64)
    w1 = jnp.pad(w1, ((0, 0), (0, C_PAD - N_MFCC), (0, 0)))       # (3, 16, 64)
    w1 = w1.reshape(3 * C_PAD, C_HID)
    # conv2 weights: row index = k*64 + c_in.
    w2 = jnp.transpose(w2_eff, (2, 1, 0)).reshape(K2, C_HID)
    b1 = b1_eff.reshape(1, C_HID)
    b2 = b2_eff.reshape(1, C_HID)

    # fc1 rows permuted from PyTorch flatten order c*W + w  ->  kernel order w*C + c.
    wfc1 = (raw["w_fc1"].T                       # (1536, 128), row = c*24 + w
            .reshape(C_HID, T_POOL2, FC_HID)
            .transpose(1, 0, 2)
            .reshape(FC_IN, FC_HID))             # row = w*64 + c
    bfc1 = raw["b_fc1"].reshape(1, FC_HID)
    wfc2 = raw["w_fc2"].reshape(1, FC_HID)
    bfc2 = raw["b_fc2"].reshape(1, 1)
    return (w1, b1, w2, b2, wfc1, bfc1, wfc2, bfc2)


# ---------------------------------------------------------------------------
# Pure-JAX reference (mirrors the PyTorch module, eval mode)
# ---------------------------------------------------------------------------
def reference_forward(x_ncw, raw):
    def bn(y, g, b, m, v):
        s = g / jnp.sqrt(v + BN_EPS)
        return (y - m[None, :, None]) * s[None, :, None] + b[None, :, None]

    y = jax.lax.conv_general_dilated(x_ncw, raw["w_conv1"], (1,), ((1, 1),),
                                     dimension_numbers=("NCH", "OIH", "NCH"))
    y = y + raw["b_conv1"][None, :, None]
    y = jnp.maximum(bn(y, raw["gamma1"], raw["beta1"], raw["mean1"], raw["var1"]), 0.0)
    y = jax.lax.reduce_window(y, -jnp.inf, jax.lax.max, (1, 1, 3), (1, 1, 2), "VALID")
    y = jax.lax.conv_general_dilated(y, raw["w_conv2"], (1,), ((1, 1),),
                                     dimension_numbers=("NCH", "OIH", "NCH"))
    y = y + raw["b_conv2"][None, :, None]
    y = jnp.maximum(bn(y, raw["gamma2"], raw["beta2"], raw["mean2"], raw["var2"]), 0.0)
    y = jax.lax.reduce_window(y, -jnp.inf, jax.lax.max, (1, 1, 3), (1, 1, 2), "VALID")
    feat = y.reshape(y.shape[0], -1)                       # (B, 1536), order c*W + w
    h = jnp.maximum(feat @ raw["w_fc1"].T + raw["b_fc1"], 0.0)
    z = h @ raw["w_fc2"].T + raw["b_fc2"]
    return jax.nn.sigmoid(z)


if __name__ == "__main__":
    key = jax.random.PRNGKey(0)
    pkey, xkey = jax.random.split(key)
    raw = init_params(pkey)
    params = pack_params(raw)

    batch = 2
    x = jax.random.normal(xkey, (batch, N_MFCC, NUM_FRAMES), jnp.float32)

    out = jax.block_until_ready(wake_word_forward(x, params))
    ref = jax.block_until_ready(reference_forward(x, raw))

    assert out.shape == (batch, 1)
    assert bool(jnp.all(jnp.isfinite(out)))
    assert bool(jnp.all((out >= 0.0) & (out <= 1.0)))          # sigmoid range
    max_err = float(jnp.max(jnp.abs(out - ref)))
    assert max_err < 1e-4, f"mismatch vs reference: {max_err}"
    print("KERNEL_OK")
</pallas_src>

<mosaic_0001>
module attributes {stable_mosaic.version = 11 : i64} {
  func.func @wakeword_fused_kernel(%arg0: i32, %arg1: memref<896x16xf32, #tpu.memory_space<vmem>>, %arg2: memref<48x64xf32, #tpu.memory_space<vmem>>, %arg3: memref<1x64xf32, #tpu.memory_space<vmem>>, %arg4: memref<192x64xf32, #tpu.memory_space<vmem>>, %arg5: memref<1x64xf32, #tpu.memory_space<vmem>>, %arg6: memref<1536x128xf32, #tpu.memory_space<vmem>>, %arg7: memref<1x128xf32, #tpu.memory_space<vmem>>, %arg8: memref<1x128xf32, #tpu.memory_space<vmem>>, %arg9: memref<1x1xf32, #tpu.memory_space<vmem>>, %arg10: memref<1x8x8xf32, #tpu.memory_space<vmem>>, %arg11: memref<904x64xf32, #tpu.memory_space<vmem>>, %arg12: memref<456x64xf32, #tpu.memory_space<vmem>>, %arg13: memref<456x64xf32, #tpu.memory_space<vmem>>, %arg14: memref<224x64xf32, #tpu.memory_space<vmem>>) attributes {dimension_semantics = [#tpu.dimension_semantics<parallel>], iteration_bounds = array<i64: 1>, scalar_prefetch = 0 : i64, scratch_operands = 4 : i64, tpu.core_type = #tpu.core_type<tc>, window_params = [{transform_indices = @transform_0, window_bounds = array<i64: 896, 16>}, {pipeline_mode = #tpu.pipeline_mode<synchronous>, transform_indices = @transform_1, window_bounds = array<i64: 48, 64>}, {pipeline_mode = #tpu.pipeline_mode<synchronous>, transform_indices = @transform_2, window_bounds = array<i64: 1, 64>}, {pipeline_mode = #tpu.pipeline_mode<synchronous>, transform_indices = @transform_3, window_bounds = array<i64: 192, 64>}, {pipeline_mode = #tpu.pipeline_mode<synchronous>, transform_indices = @transform_4, window_bounds = array<i64: 1, 64>}, {pipeline_mode = #tpu.pipeline_mode<synchronous>, transform_indices = @transform_5, window_bounds = array<i64: 1536, 128>}, {pipeline_mode = #tpu.pipeline_mode<synchronous>, transform_indices = @transform_6, window_bounds = array<i64: 1, 128>}, {pipeline_mode = #tpu.pipeline_mode<synchronous>, transform_indices = @transform_7, window_bounds = array<i64: 1, 128>}, {pipeline_mode = #tpu.pipeline_mode<synchronous>, transform_indices = @transform_8, window_bounds = array<i64: 1, 1>}, {transform_indices = @transform_9, window_bounds = array<i64: 1, 8, 8>}]} {
    %c0 = arith.constant 0 : index
    %c0_0 = arith.constant 0 : index
    %0 = vector.load %arg1[%c0, %c0_0] : memref<896x16xf32, #tpu.memory_space<vmem>>, vector<888x16xf32>
    %c0_1 = arith.constant 0 : index
    %c0_2 = arith.constant 0 : index
    %1 = vector.load %arg2[%c0_1, %c0_2] : memref<48x64xf32, #tpu.memory_space<vmem>>, vector<16x64xf32>
    %cst = arith.constant dense<0.000000e+00> : vector<888x64xf32>
    %2 = tpu.matmul %0, %1, %cst {dimension_numbers = #tpu.dot_dimension_numbers<[1], [0], [0], [1], [0, 0, 1, 1], [], []>} : vector<888x16xf32>, vector<16x64xf32>, vector<888x64xf32> -> vector<888x64xf32>
    %c1 = arith.constant 1 : index
    %c0_3 = arith.constant 0 : index
    %3 = vector.load %arg1[%c1, %c0_3] : memref<896x16xf32, #tpu.memory_space<vmem>>, vector<888x16xf32>
    %c16 = arith.constant 16 : index
    %c0_4 = arith.constant 0 : index
    %4 = vector.load %arg2[%c16, %c0_4] : memref<48x64xf32, #tpu.memory_space<vmem>>, vector<16x64xf32>
    %cst_5 = arith.constant dense<0.000000e+00> : vector<888x64xf32>
    %5 = tpu.matmul %3, %4, %cst_5 {dimension_numbers = #tpu.dot_dimension_numbers<[1], [0], [0], [1], [0, 0, 1, 1], [], []>} : vector<888x16xf32>, vector<16x64xf32>, vector<888x64xf32> -> vector<888x64xf32>
    %6 = arith.addf %2, %5 : vector<888x64xf32>
    %c2 = arith.constant 2 : index
    %c0_6 = arith.constant 0 : index
    %7 = vector.load %arg1[%c2, %c0_6] : memref<896x16xf32, #tpu.memory_space<vmem>>, vector<888x16xf32>
    %c32 = arith.constant 32 : index
    %c0_7 = arith.constant 0 : index
    %8 = vector.load %arg2[%c32, %c0_7] : memref<48x64xf32, #tpu.memory_space<vmem>>, vector<16x64xf32>
    %cst_8 = arith.constant dense<0.000000e+00> : vector<888x64xf32>
    %9 = tpu.matmul %7, %8, %cst_8 {dimension_numbers = #tpu.dot_dimension_numbers<[1], [0], [0], [1], [0, 0, 1, 1], [], []>} : vector<888x16xf32>, vector<16x64xf32>, vector<888x64xf32> -> vector<888x64xf32>
    %10 = arith.addf %6, %9 : vector<888x64xf32>
    %c0_9 = arith.constant 0 : index
    %c0_10 = arith.constant 0 : index
    %11 = vector.load %arg3[%c0_9, %c0_10] : memref<1x64xf32, #tpu.memory_space<vmem>>, vector<1x64xf32>
    %12 = vector.broadcast %11 : vector<1x64xf32> to vector<888x64xf32>
    %13 = arith.addf %10, %12 : vector<888x64xf32>
    %cst_11 = arith.constant 0.000000e+00 : f32
    %14 = vector.broadcast %cst_11 : f32 to vector<888x64xf32>
    %15 = arith.maximumf %13, %14 : vector<888x64xf32>
    %c0_12 = arith.constant 0 : index
    %c0_13 = arith.constant 0 : index
    %16 = vector.load %arg11[%c0_12, %c0_13] : memref<904x64xf32, #tpu.memory_space<vmem>>, vector<888x64xf32>
    tpu.vector_store %arg11[%c0_12, %c0_13], %15 {strides = array<i32>} : memref<904x64xf32, #tpu.memory_space<vmem>>, vector<888x64xf32>,
    %cst_14 = arith.constant 0.000000e+00 : f32
    %17 = vector.broadcast %cst_14 : f32 to vector<16x64xf32>
    %c888 = arith.constant 888 : index
    %c0_15 = arith.constant 0 : index
    %18 = vector.load %arg11[%c888, %c0_15] : memref<904x64xf32, #tpu.memory_space<vmem>>, vector<16x64xf32>
    tpu.vector_store %arg11[%c888, %c0_15], %17 {strides = array<i32>} : memref<904x64xf32, #tpu.memory_space<vmem>>, vector<16x64xf32>,
    %c0_16 = arith.constant 0 : index
    %c0_17 = arith.constant 0 : index
    %19 = tpu.strided_load %arg11[%c0_16, %c0_17] {strides = array<i32: 2, 1>} : memref<904x64xf32, #tpu.memory_space<vmem>>, vector<448x64xf32>
    %c1_18 = arith.constant 1 : index
    %c0_19 = arith.constant 0 : index
    %20 = tpu.strided_load %arg11[%c1_18, %c0_19] {strides = array<i32: 2, 1>} : memref<904x64xf32, #tpu.memory_space<vmem>>, vector<448x64xf32>
    %21 = arith.maximumf %19, %20 : vector<448x64xf32>
    %c2_20 = arith.constant 2 : index
    %c0_21 = arith.constant 0 : index
    %22 = tpu.strided_load %arg11[%c2_20, %c0_21] {strides = array<i32: 2, 1>} : memref<904x64xf32, #tpu.memory_space<vmem>>, vector<448x64xf32>
    %23 = arith.maximumf %21, %22 : vector<448x64xf32>
    %24 = tpu.iota {dimensions = array<i32: 0>} : vector<448x1xi32>
    %c56_i32 = arith.constant 56 : i32
    %c0_i32 = arith.constant 0 : i32
    %25 = arith.cmpi eq, %c56_i32, %c0_i32 : i32
    %c1_i32 = arith.constant 1 : i32
    %26 = arith.select %25, %c1_i32, %c56_i32 : i32
    %27 = vector.broadcast %26 : i32 to vector<448x1xi32>
    %28 = arith.remsi %24, %27 : vector<448x1xi32>
    %c0_i32_22 = arith.constant 0 : i32
    %29 = vector.broadcast %c0_i32_22 : i32 to vector<448x1xi32>
    %30 = arith.cmpi ne, %28, %29 : vector<448x1xi32>
    %c0_i32_23 = arith.constant 0 : i32
    %31 = vector.broadcast %c0_i32_23 : i32 to vector<448x1xi32>
    %32 = arith.cmpi slt, %28, %31 : vector<448x1xi32>
    %c0_i32_24 = arith.constant 0 : i32
    %33 = arith.cmpi slt, %26, %c0_i32_24 : i32
    %34 = vector.broadcast %33 : i1 to vector<448x1xi1>
    %35 = vector.broadcast %34 : vector<448x1xi1> to vector<448x1xi1>
    %36 = arith.xori %32, %35 : vector<448x1xi1>
    %37 = arith.andi %36, %30 : vector<448x1xi1>
    %38 = vector.broadcast %26 : i32 to vector<448x1xi32>
    %39 = arith.addi %28, %38 : vector<448x1xi32>
    %40 = arith.select %37, %39, %28 : vector<448x1xi1>, vector<448x1xi32>
    %c50_i32 = arith.constant 50 : i32
    %41 = vector.broadcast %c50_i32 : i32 to vector<448x1xi32>
    %42 = arith.cmpi slt, %40, %41 : vector<448x1xi32>
    %cst_25 = arith.constant 0.000000e+00 : f32
    %43 = vector.shape_cast %42 : vector<448x1xi1> to vector<448x1xi1>
    %44 = vector.broadcast %43 : vector<448x1xi1> to vector<448x64xi1>
    %45 = vector.broadcast %cst_25 : f32 to vector<448x64xf32>
    %46 = arith.select %44, %23, %45 : vector<448x64xi1>, vector<448x64xf32>
    %c1_26 = arith.constant 1 : index
    %c0_27 = arith.constant 0 : index
    %47 = vector.load %arg12[%c1_26, %c0_27] : memref<456x64xf32, #tpu.memory_space<vmem>>, vector<448x64xf32>
    tpu.vector_store %arg12[%c1_26, %c0_27], %46 {strides = array<i32>} : memref<456x64xf32, #tpu.memory_space<vmem>>, vector<448x64xf32>,
    %cst_28 = arith.constant 0.000000e+00 : f32
    %48 = vector.broadcast %cst_28 : f32 to vector<1x64xf32>
    %c0_29 = arith.constant 0 : index
    %c0_30 = arith.constant 0 : index
    %49 = vector.load %arg12[%c0_29, %c0_30] : memref<456x64xf32, #tpu.memory_space<vmem>>, vector<1x64xf32>
    tpu.vector_store %arg12[%c0_29, %c0_30], %48 {strides = array<i32>} : memref<456x64xf32, #tpu.memory_space<vmem>>, vector<1x64xf32>,
    %cst_31 = arith.constant 0.000000e+00 : f32
    %50 = vector.broadcast %cst_31 : f32 to vector<8x64xf32>
    %c448 = arith.constant 448 : index
    %c0_32 = arith.constant 0 : index
    %51 = vector.load %arg12[%c448, %c0_32] : memref<456x64xf32, #tpu.memory_space<vmem>>, vector<8x64xf32>
    tpu.vector_store %arg12[%c448, %c0_32], %50 {strides = array<i32>} : memref<456x64xf32, #tpu.memory_space<vmem>>, vector<8x64xf32>,
    %c0_33 = arith.constant 0 : index
    %c0_34 = arith.constant 0 : index
    %52 = vector.load %arg12[%c0_33, %c0_34] : memref<456x64xf32, #tpu.memory_space<vmem>>, vector<448x64xf32>
    %c0_35 = arith.constant 0 : index
    %c0_36 = arith.constant 0 : index
    %53 = vector.load %arg4[%c0_35, %c0_36] : memref<192x64xf32, #tpu.memory_space<vmem>>, vector<64x64xf32>
    %cst_37 = arith.constant dense<0.000000e+00> : vector<448x64xf32>
    %54 = tpu.matmul %52, %53, %cst_37 {dimension_numbers = #tpu.dot_dimension_numbers<[1], [0], [0], [1], [0, 0, 1, 1], [], []>} : vector<448x64xf32>, vector<64x64xf32>, vector<448x64xf32> -> vector<448x64xf32>
    %c1_38 = arith.constant 1 : index
    %c0_39 = arith.constant 0 : index
    %55 = vector.load %arg12[%c1_38, %c0_39] : memref<456x64xf32, #tpu.memory_space<vmem>>, vector<448x64xf32>
    %c64 = arith.constant 64 : index
    %c0_40 = arith.constant 0 : index
    %56 = vector.load %arg4[%c64, %c0_40] : memref<192x64xf32, #tpu.memory_space<vmem>>, vector<64x64xf32>
    %cst_41 = arith.constant dense<0.000000e+00> : vector<448x64xf32>
    %57 = tpu.matmul %55, %56, %cst_41 {dimension_numbers = #tpu.dot_dimension_numbers<[1], [0], [0], [1], [0, 0, 1, 1], [], []>} : vector<448x64xf32>, vector<64x64xf32>, vector<448x64xf32> -> vector<448x64xf32>
    %58 = arith.addf %54, %57 : vector<448x64xf32>
    %c2_42 = arith.constant 2 : index
    %c0_43 = arith.constant 0 : index
    %59 = vector.load %arg12[%c2_42, %c0_43] : memref<456x64xf32, #tpu.memory_space<vmem>>, vector<448x64xf32>
    %c128 = arith.constant 128 : index
    %c0_44 = arith.constant 0 : index
    %60 = vector.load %arg4[%c128, %c0_44] : memref<192x64xf32, #tpu.memory_space<vmem>>, vector<64x64xf32>
    %cst_45 = arith.constant dense<0.000000e+00> : vector<448x64xf32>
    %61 = tpu.matmul %59, %60, %cst_45 {dimension_numbers = #tpu.dot_dimension_numbers<[1], [0], [0], [1], [0, 0, 1, 1], [], []>} : vector<448x64xf32>, vector<64x64xf32>, vector<448x64xf32> -> vector<448x64xf32>
    %62 = arith.addf %58, %61 : vector<448x64xf32>
    %c0_46 = arith.constant 0 : index
    %c0_47 = arith.constant 0 : index
    %63 = vector.load %arg5[%c0_46, %c0_47] : memref<1x64xf32, #tpu.memory_space<vmem>>, vector<1x64xf32>
    %64 = vector.broadcast %63 : vector<1x64xf32> to vector<448x64xf32>
    %65 = arith.addf %62, %64 : vector<448x64xf32>
    %cst_48 = arith.constant 0.000000e+00 : f32
    %66 = vector.broadcast %cst_48 : f32 to vector<448x64xf32>
    %67 = arith.maximumf %65, %66 : vector<448x64xf32>
    %c0_49 = arith.constant 0 : index
    %c0_50 = arith.constant 0 : index
    %68 = vector.load %arg13[%c0_49, %c0_50] : memref<456x64xf32, #tpu.memory_space<vmem>>, vector<448x64xf32>
    tpu.vector_store %arg13[%c0_49, %c0_50], %67 {strides = array<i32>} : memref<456x64xf32, #tpu.memory_space<vmem>>, vector<448x64xf32>,
    %cst_51 = arith.constant 0.000000e+00 : f32
    %69 = vector.broadcast %cst_51 : f32 to vector<8x64xf32>
    %c448_52 = arith.constant 448 : index
    %c0_53 = arith.constant 0 : index
    %70 = vector.load %arg13[%c448_52, %c0_53] : memref<456x64xf32, #tpu.memory_space<vmem>>, vector<8x64xf32>
    tpu.vector_store %arg13[%c448_52, %c0_53], %69 {strides = array<i32>} : memref<456x64xf32, #tpu.memory_space<vmem>>, vector<8x64xf32>,
    %c0_54 = arith.constant 0 : index
    %c0_55 = arith.constant 0 : index
    %71 = tpu.strided_load %arg13[%c0_54, %c0_55] {strides = array<i32: 2, 1>} : memref<456x64xf32, #tpu.memory_space<vmem>>, vector<224x64xf32>
    %c1_56 = arith.constant 1 : index
    %c0_57 = arith.constant 0 : index
    %72 = tpu.strided_load %arg13[%c1_56, %c0_57] {strides = array<i32: 2, 1>} : memref<456x64xf32, #tpu.memory_space<vmem>>, vector<224x64xf32>
    %73 = arith.maximumf %71, %72 : vector<224x64xf32>
    %c2_58 = arith.constant 2 : index
    %c0_59 = arith.constant 0 : index
    %74 = tpu.strided_load %arg13[%c2_58, %c0_59] {strides = array<i32: 2, 1>} : memref<456x64xf32, #tpu.memory_space<vmem>>, vector<224x64xf32>
    %75 = arith.maximumf %73, %74 : vector<224x64xf32>
    %c0_60 = arith.constant 0 : index
    %c0_61 = arith.constant 0 : index
    %76 = vector.load %arg14[%c0_60, %c0_61] : memref<224x64xf32, #tpu.memory_space<vmem>>, vector<224x64xf32>
    tpu.vector_store %arg14[%c0_60, %c0_61], %75 {strides = array<i32>} : memref<224x64xf32, #tpu.memory_space<vmem>>, vector<224x64xf32>,
    %c0_62 = arith.constant 0 : index
    %c0_63 = arith.constant 0 : index
    %77 = vector.load %arg7[%c0_62, %c0_63] : memref<1x128xf32, #tpu.memory_space<vmem>>, vector<1x128xf32>
    %78 = vector.shape_cast %77 : vector<1x128xf32> to vector<1x128xf32>
    %79 = vector.broadcast %78 : vector<1x128xf32> to vector<8x128xf32>
    %c0_64 = arith.constant 0 : index
    %c0_65 = arith.constant 0 : index
    %80 = tpu.strided_load %arg14[%c0_64, %c0_65] {strides = array<i32: 28, 1>} : memref<224x64xf32, #tpu.memory_space<vmem>>, vector<8x64xf32>
    %c0_66 = arith.constant 0 : index
    %c0_67 = arith.constant 0 : index
    %81 = vector.load %arg6[%c0_66, %c0_67] : memref<1536x128xf32, #tpu.memory_space<vmem>>, vector<64x128xf32>
    %cst_68 = arith.constant dense<0.000000e+00> : vector<8x128xf32>
    %82 = tpu.matmul %80, %81, %cst_68 {dimension_numbers = #tpu.dot_dimension_numbers<[1], [0], [0], [1], [0, 0, 1, 1], [], []>} : vector<8x64xf32>, vector<64x128xf32>, vector<8x128xf32> -> vector<8x128xf32>
    %83 = arith.addf %79, %82 : vector<8x128xf32>
    %c1_69 = arith.constant 1 : index
    %c0_70 = arith.constant 0 : index
    %84 = tpu.strided_load %arg14[%c1_69, %c0_70] {strides = array<i32: 28, 1>} : memref<224x64xf32, #tpu.memory_space<vmem>>, vector<8x64xf32>
    %c64_71 = arith.constant 64 : index
    %c0_72 = arith.constant 0 : index
    %85 = vector.load %arg6[%c64_71, %c0_72] : memref<1536x128xf32, #tpu.memory_space<vmem>>, vector<64x128xf32>
    %cst_73 = arith.constant dense<0.000000e+00> : vector<8x128xf32>
    %86 = tpu.matmul %84, %85, %cst_73 {dimension_numbers = #tpu.dot_dimension_numbers<[1], [0], [0], [1], [0, 0, 1, 1], [], []>} : vector<8x64xf32>, vector<64x128xf32>, vector<8x128xf32> -> vector<8x128xf32>
    %87 = arith.addf %83, %86 : vector<8x128xf32>
    %c2_74 = arith.constant 2 : index
    %c0_75 = arith.constant 0 : index
    %88 = tpu.strided_load %arg14[%c2_74, %c0_75] {strides = array<i32: 28, 1>} : memref<224x64xf32, #tpu.memory_space<vmem>>, vector<8x64xf32>
    %c128_76 = arith.constant 128 : index
    %c0_77 = arith.constant 0 : index
    %89 = vector.load %arg6[%c128_76, %c0_77] : memref<1536x128xf32, #tpu.memory_space<vmem>>, vector<64x128xf32>
    %cst_78 = arith.constant dense<0.000000e+00> : vector<8x128xf32>
    %90 = tpu.matmul %88, %89, %cst_78 {dimension_numbers = #tpu.dot_dimension_numbers<[1], [0], [0], [1], [0, 0, 1, 1], [], []>} : vector<8x64xf32>, vector<64x128xf32>, vector<8x128xf32> -> vector<8x128xf32>
    %91 = arith.addf %87, %90 : vector<8x128xf32>
    %c3 = arith.constant 3 : index
    %c0_79 = arith.constant 0 : index
    %92 = tpu.strided_load %arg14[%c3, %c0_79] {strides = array<i32: 28, 1>} : memref<224x64xf32, #tpu.memory_space<vmem>>, vector<8x64xf32>
    %c192 = arith.constant 192 : index
    %c0_80 = arith.constant 0 : index
    %93 = vector.load %arg6[%c192, %c0_80] : memref<1536x128xf32, #tpu.memory_space<vmem>>, vector<64x128xf32>
    %cst_81 = arith.constant dense<0.000000e+00> : vector<8x128xf32>
    %94 = tpu.matmul %92, %93, %cst_81 {dimension_numbers = #tpu.dot_dimension_numbers<[1], [0], [0], [1], [0, 0, 1, 1], [], []>} : vector<8x64xf32>, vector<64x128xf32>, vector<8x128xf32> -> vector<8x128xf32>
    %95 = arith.addf %91, %94 : vector<8x128xf32>
    %c4 = arith.constant 4 : index
    %c0_82 = arith.constant 0 : index
    %96 = tpu.strided_load %arg14[%c4, %c0_82] {strides = array<i32: 28, 1>} : memref<224x64xf32, #tpu.memory_space<vmem>>, vector<8x64xf32>
    %c256 = arith.constant 256 : index
    %c0_83 = arith.constant 0 : index
    %97 = vector.load %arg6[%c256, %c0_83] : memref<1536x128xf32, #tpu.memory_space<vmem>>, vector<64x128xf32>
    %cst_84 = arith.constant dense<0.000000e+00> : vector<8x128xf32>
    %98 = tpu.matmul %96, %97, %cst_84 {dimension_numbers = #tpu.dot_dimension_numbers<[1], [0], [0], [1], [0, 0, 1, 1], [], []>} : vector<8x64xf32>, vector<64x128xf32>, vector<8x128xf32> -> vector<8x128xf32>
    %99 = arith.addf %95, %98 : vector<8x128xf32>
    %c5 = arith.constant 5 : index
    %c0_85 = arith.constant 0 : index
    %100 = tpu.strided_load %arg14[%c5, %c0_85] {strides = array<i32: 28, 1>} : memref<224x64xf32, #tpu.memory_space<vmem>>, vector<8x64xf32>
    %c320 = arith.constant 320 : index
    %c0_86 = arith.constant 0 : index
    %101 = vector.load %arg6[%c320, %c0_86] : memref<1536x128xf32, #tpu.memory_space<vmem>>, vector<64x128xf32>
    %cst_87 = arith.constant dense<0.000000e+00> : vector<8x128xf32>
    %102 = tpu.matmul %100, %101, %cst_87 {dimension_numbers = #tpu.dot_dimension_numbers<[1], [0], [0], [1], [0, 0, 1, 1], [], []>} : vector<8x64xf32>, vector<64x128xf32>, vector<8x128xf32> -> vector<8x128xf32>
    %103 = arith.addf %99, %102 : vector<8x128xf32>
    %c6 = arith.constant 6 : index
    %c0_88 = arith.constant 0 : index
    %104 = tpu.strided_load %arg14[%c6, %c0_88] {strides = array<i32: 28, 1>} : memref<224x64xf32, #tpu.memory_space<vmem>>, vector<8x64xf32>
    %c384 = arith.constant 384 : index
    %c0_89 = arith.constant 0 : index
    %105 = vector.load %arg6[%c384, %c0_89] : memref<1536x128xf32, #tpu.memory_space<vmem>>, vector<64x128xf32>
    %cst_90 = arith.constant dense<0.000000e+00> : vector<8x128xf32>
    %106 = tpu.matmul %104, %105, %cst_90 {dimension_numbers = #tpu.dot_dimension_numbers<[1], [0], [0], [1], [0, 0, 1, 1], [], []>} : vector<8x64xf32>, vector<64x128xf32>, vector<8x128xf32> -> vector<8x128xf32>
    %107 = arith.addf %103, %106 : vector<8x128xf32>
    %c7 = arith.constant 7 : index
    %c0_91 = arith.constant 0 : index
    %108 = tpu.strided_load %arg14[%c7, %c0_91] {strides = array<i32: 28, 1>} : memref<224x64xf32, #tpu.memory_space<vmem>>, vector<8x64xf32>
    %c448_92 = arith.constant 448 : index
    %c0_93 = arith.constant 0 : index
    %109 = vector.load %arg6[%c448_92, %c0_93] : memref<1536x128xf32, #tpu.memory_space<vmem>>, vector<64x128xf32>
    %cst_94 = arith.constant dense<0.000000e+00> : vector<8x128xf32>
    %110 = tpu.matmul %108, %109, %cst_94 {dimension_numbers = #tpu.dot_dimension_numbers<[1], [0], [0], [1], [0, 0, 1, 1], [], []>} : vector<8x64xf32>, vector<64x128xf32>, vector<8x128xf32> -> vector<8x128xf32>
    %111 = arith.addf %107, %110 : vector<8x128xf32>
    %c8 = arith.constant 8 : index
    %c0_95 = arith.constant 0 : index
    %112 = tpu.strided_load %arg14[%c8, %c0_95] {strides = array<i32: 28, 1>} : memref<224x64xf32, #tpu.memory_space<vmem>>, vector<8x64xf32>
    %c512 = arith.constant 512 : index
    %c0_96 = arith.constant 0 : index
    %113 = vector.load %arg6[%c512, %c0_96] : memref<1536x128xf32, #tpu.memory_space<vmem>>, vector<64x128xf32>
    %cst_97 = arith.constant dense<0.000000e+00> : vector<8x128xf32>
    %114 = tpu.matmul %112, %113, %cst_97 {dimension_numbers = #tpu.dot_dimension_numbers<[1], [0], [0], [1], [0, 0, 1, 1], [], []>} : vector<8x64xf32>, vector<64x128xf32>, vector<8x128xf32> -> vector<8x128xf32>
    %115 = arith.addf %111, %114 : vector<8x128xf32>
    %c9 = arith.constant 9 : index
    %c0_98 = arith.constant 0 : index
    %116 = tpu.strided_load %arg14[%c9, %c0_98] {strides = array<i32: 28, 1>} : memref<224x64xf32, #tpu.memory_space<vmem>>, vector<8x64xf32>
    %c576 = arith.constant 576 : index
    %c0_99 = arith.constant 0 : index
    %117 = vector.load %arg6[%c576, %c0_99] : memref<1536x128xf32, #tpu.memory_space<vmem>>, vector<64x128xf32>
    %cst_100 = arith.constant dense<0.000000e+00> : vector<8x128xf32>
    %118 = tpu.matmul %116, %117, %cst_100 {dimension_numbers = #tpu.dot_dimension_numbers<[1], [0], [0], [1], [0, 0, 1, 1], [], []>} : vector<8x64xf32>, vector<64x128xf32>, vector<8x128xf32> -> vector<8x128xf32>
    %119 = arith.addf %115, %118 : vector<8x128xf32>
    %c10 = arith.constant 10 : index
    %c0_101 = arith.constant 0 : index
    %120 = tpu.strided_load %arg14[%c10, %c0_101] {strides = array<i32: 28, 1>} : memref<224x64xf32, #tpu.memory_space<vmem>>, vector<8x64xf32>
    %c640 = arith.constant 640 : index
    %c0_102 = arith.constant 0 : index
    %121 = vector.load %arg6[%c640, %c0_102] : memref<1536x128xf32, #tpu.memory_space<vmem>>, vector<64x128xf32>
    %cst_103 = arith.constant dense<0.000000e+00> : vector<8x128xf32>
    %122 = tpu.matmul %120, %121, %cst_103 {dimension_numbers = #tpu.dot_dimension_numbers<[1], [0], [0], [1], [0, 0, 1, 1], [], []>} : vector<8x64xf32>, vector<64x128xf32>, vector<8x128xf32> -> vector<8x128xf32>
    %123 = arith.addf %119, %122 : vector<8x128xf32>
    %c11 = arith.constant 11 : index
    %c0_104 = arith.constant 0 : index
    %124 = tpu.strided_load %arg14[%c11, %c0_104] {strides = array<i32: 28, 1>} : memref<224x64xf32, #tpu.memory_space<vmem>>, vector<8x64xf32>
    %c704 = arith.constant 704 : index
    %c0_105 = arith.constant 0 : index
    %125 = vector.load %arg6[%c704, %c0_105] : memref<1536x128xf32, #tpu.memory_space<vmem>>, vector<64x128xf32>
    %cst_106 = arith.constant dense<0.000000e+00> : vector<8x128xf32>
    %126 = tpu.matmul %124, %125, %cst_106 {dimension_numbers = #tpu.dot_dimension_numbers<[1], [0], [0], [1], [0, 0, 1, 1], [], []>} : vector<8x64xf32>, vector<64x128xf32>, vector<8x128xf32> -> vector<8x128xf32>
    %127 = arith.addf %123, %126 : vector<8x128xf32>
    %c12 = arith.constant 12 : index
    %c0_107 = arith.constant 0 : index
    %128 = tpu.strided_load %arg14[%c12, %c0_107] {strides = array<i32: 28, 1>} : memref<224x64xf32, #tpu.memory_space<vmem>>, vector<8x64xf32>
    %c768 = arith.constant 768 : index
    %c0_108 = arith.constant 0 : index
    %129 = vector.load %arg6[%c768, %c0_108] : memref<1536x128xf32, #tpu.memory_space<vmem>>, vector<64x128xf32>
    %cst_109 = arith.constant dense<0.000000e+00> : vector<8x128xf32>
    %130 = tpu.matmul %128, %129, %cst_109 {dimension_numbers = #tpu.dot_dimension_numbers<[1], [0], [0], [1], [0, 0, 1, 1], [], []>} : vector<8x64xf32>, vector<64x128xf32>, vector<8x128xf32> -> vector<8x128xf32>
    %131 = arith.addf %127, %130 : vector<8x128xf32>
    %c13 = arith.constant 13 : index
    %c0_110 = arith.constant 0 : index
    %132 = tpu.strided_load %arg14[%c13, %c0_110] {strides = array<i32: 28, 1>} : memref<224x64xf32, #tpu.memory_space<vmem>>, vector<8x64xf32>
    %c832 = arith.constant 832 : index
    %c0_111 = arith.constant 0 : index
    %133 = vector.load %arg6[%c832, %c0_111] : memref<1536x128xf32, #tpu.memory_space<vmem>>, vector<64x128xf32>
    %cst_112 = arith.constant dense<0.000000e+00> : vector<8x128xf32>
    %134 = tpu.matmul %132, %133, %cst_112 {dimension_numbers = #tpu.dot_dimension_numbers<[1], [0], [0], [1], [0, 0, 1, 1], [], []>} : vector<8x64xf32>, vector<64x128xf32>, vector<8x128xf32> -> vector<8x128xf32>
    %135 = arith.addf %131, %134 : vector<8x128xf32>
    %c14 = arith.constant 14 : index
    %c0_113 = arith.constant 0 : index
    %136 = tpu.strided_load %arg14[%c14, %c0_113] {strides = array<i32: 28, 1>} : memref<224x64xf32, #tpu.memory_space<vmem>>, vector<8x64xf32>
    %c896 = arith.constant 896 : index
    %c0_114 = arith.constant 0 : index
    %137 = vector.load %arg6[%c896, %c0_114] : memref<1536x128xf32, #tpu.memory_space<vmem>>, vector<64x128xf32>
    %cst_115 = arith.constant dense<0.000000e+00> : vector<8x128xf32>
    %138 = tpu.matmul %136, %137, %cst_115 {dimension_numbers = #tpu.dot_dimension_numbers<[1], [0], [0], [1], [0, 0, 1, 1], [], []>} : vector<8x64xf32>, vector<64x128xf32>, vector<8x128xf32> -> vector<8x128xf32>
    %139 = arith.addf %135, %138 : vector<8x128xf32>
    %c15 = arith.constant 15 : index
    %c0_116 = arith.constant 0 : index
    %140 = tpu.strided_load %arg14[%c15, %c0_116] {strides = array<i32: 28, 1>} : memref<224x64xf32, #tpu.memory_space<vmem>>, vector<8x64xf32>
    %c960 = arith.constant 960 : index
    %c0_117 = arith.constant 0 : index
    %141 = vector.load %arg6[%c960, %c0_117] : memref<1536x128xf32, #tpu.memory_space<vmem>>, vector<64x128xf32>
    %cst_118 = arith.constant dense<0.000000e+00> : vector<8x128xf32>
    %142 = tpu.matmul %140, %141, %cst_118 {dimension_numbers = #tpu.dot_dimension_numbers<[1], [0], [0], [1], [0, 0, 1, 1], [], []>} : vector<8x64xf32>, vector<64x128xf32>, vector<8x128xf32> -> vector<8x128xf32>
    %143 = arith.addf %139, %142 : vector<8x128xf32>
    %c16_119 = arith.constant 16 : index
    %c0_120 = arith.constant 0 : index
    %144 = tpu.strided_load %arg14[%c16_119, %c0_120] {strides = array<i32: 28, 1>} : memref<224x64xf32, #tpu.memory_space<vmem>>, vector<8x64xf32>
    %c1024 = arith.constant 1024 : index
    %c0_121 = arith.constant 0 : index
    %145 = vector.load %arg6[%c1024, %c0_121] : memref<1536x128xf32, #tpu.memory_space<vmem>>, vector<64x128xf32>
    %cst_122 = arith.constant dense<0.000000e+00> : vector<8x128xf32>
    %146 = tpu.matmul %144, %145, %cst_122 {dimension_numbers = #tpu.dot_dimension_numbers<[1], [0], [0], [1], [0, 0, 1, 1], [], []>} : vector<8x64xf32>, vector<64x128xf32>, vector<8x128xf32> -> vector<8x128xf32>
    %147 = arith.addf %143, %146 : vector<8x128xf32>
    %c17 = arith.constant 17 : index
    %c0_123 = arith.constant 0 : index
    %148 = tpu.strided_load %arg14[%c17, %c0_123] {strides = array<i32: 28, 1>} : memref<224x64xf32, #tpu.memory_space<vmem>>, vector<8x64xf32>
    %c1088 = arith.constant 1088 : index
    %c0_124 = arith.constant 0 : index
    %149 = vector.load %arg6[%c1088, %c0_124] : memref<1536x128xf32, #tpu.memory_space<vmem>>, vector<64x128xf32>
    %cst_125 = arith.constant dense<0.000000e+00> : vector<8x128xf32>
    %150 = tpu.matmul %148, %149, %cst_125 {dimension_numbers = #tpu.dot_dimension_numbers<[1], [0], [0], [1], [0, 0, 1, 1], [], []>} : vector<8x64xf32>, vector<64x128xf32>, vector<8x128xf32> -> vector<8x128xf32>
    %151 = arith.addf %147, %150 : vector<8x128xf32>
    %c18 = arith.constant 18 : index
    %c0_126 = arith.constant 0 : index
    %152 = tpu.strided_load %arg14[%c18, %c0_126] {strides = array<i32: 28, 1>} : memref<224x64xf32, #tpu.memory_space<vmem>>, vector<8x64xf32>
    %c1152 = arith.constant 1152 : index
    %c0_127 = arith.constant 0 : index
    %153 = vector.load %arg6[%c1152, %c0_127] : memref<1536x128xf32, #tpu.memory_space<vmem>>, vector<64x128xf32>
    %cst_128 = arith.constant dense<0.000000e+00> : vector<8x128xf32>
    %154 = tpu.matmul %152, %153, %cst_128 {dimension_numbers = #tpu.dot_dimension_numbers<[1], [0], [0], [1], [0, 0, 1, 1], [], []>} : vector<8x64xf32>, vector<64x128xf32>, vector<8x128xf32> -> vector<8x128xf32>
    %155 = arith.addf %151, %154 : vector<8x128xf32>
    %c19 = arith.constant 19 : index
    %c0_129 = arith.constant 0 : index
    %156 = tpu.strided_load %arg14[%c19, %c0_129] {strides = array<i32: 28, 1>} : memref<224x64xf32, #tpu.memory_space<vmem>>, vector<8x64xf32>
    %c1216 = arith.constant 1216 : index
    %c0_130 = arith.constant 0 : index
    %157 = vector.load %arg6[%c1216, %c0_130] : memref<1536x128xf32, #tpu.memory_space<vmem>>, vector<64x128xf32>
    %cst_131 = arith.constant dense<0.000000e+00> : vector<8x128xf32>
    %158 = tpu.matmul %156, %157, %cst_131 {dimension_numbers = #tpu.dot_dimension_numbers<[1], [0], [0], [1], [0, 0, 1, 1], [], []>} : vector<8x64xf32>, vector<64x128xf32>, vector<8x128xf32> -> vector<8x128xf32>
    %159 = arith.addf %155, %158 : vector<8x128xf32>
    %c20 = arith.constant 20 : index
    %c0_132 = arith.constant 0 : index
    %160 = tpu.strided_load %arg14[%c20, %c0_132] {strides = array<i32: 28, 1>} : memref<224x64xf32, #tpu.memory_space<vmem>>, vector<8x64xf32>
    %c1280 = arith.constant 1280 : index
    %c0_133 = arith.constant 0 : index
    %161 = vector.load %arg6[%c1280, %c0_133] : memref<1536x128xf32, #tpu.memory_space<vmem>>, vector<64x128xf32>
    %cst_134 = arith.constant dense<0.000000e+00> : vector<8x128xf32>
    %162 = tpu.matmul %160, %161, %cst_134 {dimension_numbers = #tpu.dot_dimension_numbers<[1], [0], [0], [1], [0, 0, 1, 1], [], []>} : vector<8x64xf32>, vector<64x128xf32>, vector<8x128xf32> -> vector<8x128xf32>
    %163 = arith.addf %159, %162 : vector<8x128xf32>
    %c21 = arith.constant 21 : index
    %c0_135 = arith.constant 0 : index
    %164 = tpu.strided_load %arg14[%c21, %c0_135] {strides = array<i32: 28, 1>} : memref<224x64xf32, #tpu.memory_space<vmem>>, vector<8x64xf32>
    %c1344 = arith.constant 1344 : index
    %c0_136 = arith.constant 0 : index
    %165 = vector.load %arg6[%c1344, %c0_136] : memref<1536x128xf32, #tpu.memory_space<vmem>>, vector<64x128xf32>
    %cst_137 = arith.constant dense<0.000000e+00> : vector<8x128xf32>
    %166 = tpu.matmul %164, %165, %cst_137 {dimension_numbers = #tpu.dot_dimension_numbers<[1], [0], [0], [1], [0, 0, 1, 1], [], []>} : vector<8x64xf32>, vector<64x128xf32>, vector<8x128xf32> -> vector<8x128xf32>
    %167 = arith.addf %163, %166 : vector<8x128xf32>
    %c22 = arith.constant 22 : index
    %c0_138 = arith.constant 0 : index
    %168 = tpu.strided_load %arg14[%c22, %c0_138] {strides = array<i32: 28, 1>} : memref<224x64xf32, #tpu.memory_space<vmem>>, vector<8x64xf32>
    %c1408 = arith.constant 1408 : index
    %c0_139 = arith.constant 0 : index
    %169 = vector.load %arg6[%c1408, %c0_139] : memref<1536x128xf32, #tpu.memory_space<vmem>>, vector<64x128xf32>
    %cst_140 = arith.constant dense<0.000000e+00> : vector<8x128xf32>
    %170 = tpu.matmul %168, %169, %cst_140 {dimension_numbers = #tpu.dot_dimension_numbers<[1], [0], [0], [1], [0, 0, 1, 1], [], []>} : vector<8x64xf32>, vector<64x128xf32>, vector<8x128xf32> -> vector<8x128xf32>
    %171 = arith.addf %167, %170 : vector<8x128xf32>
    %c23 = arith.constant 23 : index
    %c0_141 = arith.constant 0 : index
    %172 = tpu.strided_load %arg14[%c23, %c0_141] {strides = array<i32: 28, 1>} : memref<224x64xf32, #tpu.memory_space<vmem>>, vector<8x64xf32>
    %c1472 = arith.constant 1472 : index
    %c0_142 = arith.constant 0 : index
    %173 = vector.load %arg6[%c1472, %c0_142] : memref<1536x128xf32, #tpu.memory_space<vmem>>, vector<64x128xf32>
    %cst_143 = arith.constant dense<0.000000e+00> : vector<8x128xf32>
    %174 = tpu.matmul %172, %173, %cst_143 {dimension_numbers = #tpu.dot_dimension_numbers<[1], [0], [0], [1], [0, 0, 1, 1], [], []>} : vector<8x64xf32>, vector<64x128xf32>, vector<8x128xf32> -> vector<8x128xf32>
    %175 = arith.addf %171, %174 : vector<8x128xf32>
    %cst_144 = arith.constant 0.000000e+00 : f32
    %176 = vector.broadcast %cst_144 : f32 to vector<8x128xf32>
    %177 = arith.maximumf %175, %176 : vector<8x128xf32>
    %c0_145 = arith.constant 0 : index
    %c0_146 = arith.constant 0 : index
    %178 = vector.load %arg8[%c0_145, %c0_146] : memref<1x128xf32, #tpu.memory_space<vmem>>, vector<1x128xf32>
    %179 = tpu.transpose %177, [1, 0] : vector<8x128xf32> -> vector<128x8xf32>
    %cst_147 = arith.constant dense<0.000000e+00> : vector<1x8xf32>
    %180 = tpu.matmul %178, %179, %cst_147 {dimension_numbers = #tpu.dot_dimension_numbers<[1], [0], [0], [1], [0, 0, 1, 1], [], []>} : vector<1x128xf32>, vector<128x8xf32>, vector<1x8xf32> -> vector<1x8xf32>
    %c0_148 = arith.constant 0 : index
    %c0_149 = arith.constant 0 : index
    %181 = vector.load %arg9[%c0_148, %c0_149] : memref<1x1xf32, #tpu.memory_space<vmem>>, vector<1x1xf32>
    %182 = vector.broadcast %181 : vector<1x1xf32> to vector<1x8xf32>
    %183 = arith.addf %180, %182 : vector<1x8xf32>
    %184 = arith.negf %183 : vector<1x8xf32>
    %185 = math.exp %184 : vector<1x8xf32>
    %cst_150 = arith.constant 1.000000e+00 : f32
    %186 = vector.broadcast %cst_150 : f32 to vector<1x8xf32>
    %187 = arith.addf %186, %185 : vector<1x8xf32>
    %188 = arith.divf %186, %187 : vector<1x8xf32>
    %189 = vector.shape_cast %188 : vector<1x8xf32> to vector<1x8xf32>
    %190 = vector.broadcast %189 : vector<1x8xf32> to vector<8x8xf32>
    %c0_151 = arith.constant 0 : index
    %c0_152 = arith.constant 0 : index
    %c0_153 = arith.constant 0 : index
    %191 = vector.load %arg10[%c0_151, %c0_152, %c0_153] : memref<1x8x8xf32, #tpu.memory_space<vmem>>, vector<1x8x8xf32>
    %192 = vector.shape_cast %191 : vector<1x8x8xf32> to vector<8x8xf32>
    %193 = vector.shape_cast %190 : vector<8x8xf32> to vector<1x8x8xf32>
    tpu.vector_store %arg10[%c0_151, %c0_152, %c0_153], %193 {strides = array<i32>} : memref<1x8x8xf32, #tpu.memory_space<vmem>>, vector<1x8x8xf32>,
    return
  }
  func.func @transform_0(%arg0: i32) -> (i32, i32) {
    %c0_i32 = arith.constant 0 : i32
    %c0_i32_0 = arith.constant 0 : i32
    return %arg0, %c0_i32 : i32, i32
  }
  func.func @transform_1(%arg0: i32) -> (i32, i32) {
    %c0_i32 = arith.constant 0 : i32
    %c0_i32_0 = arith.constant 0 : i32
    %c0_i32_1 = arith.constant 0 : i32
    return %c0_i32, %c0_i32_0 : i32, i32
  }
  func.func @transform_2(%arg0: i32) -> (i32, i32) {
    %c0_i32 = arith.constant 0 : i32
    %c0_i32_0 = arith.constant 0 : i32
    %c0_i32_1 = arith.constant 0 : i32
    return %c0_i32, %c0_i32_0 : i32, i32
  }
  func.func @transform_3(%arg0: i32) -> (i32, i32) {
    %c0_i32 = arith.constant 0 : i32
    %c0_i32_0 = arith.constant 0 : i32
    %c0_i32_1 = arith.constant 0 : i32
    return %c0_i32, %c0_i32_0 : i32, i32
  }
  func.func @transform_4(%arg0: i32) -> (i32, i32) {
    %c0_i32 = arith.constant 0 : i32
    %c0_i32_0 = arith.constant 0 : i32
    %c0_i32_1 = arith.constant 0 : i32
    return %c0_i32, %c0_i32_0 : i32, i32
  }
  func.func @transform_5(%arg0: i32) -> (i32, i32) {
    %c0_i32 = arith.constant 0 : i32
    %c0_i32_0 = arith.constant 0 : i32
    %c0_i32_1 = arith.constant 0 : i32
    return %c0_i32, %c0_i32_0 : i32, i32
  }
  func.func @transform_6(%arg0: i32) -> (i32, i32) {
    %c0_i32 = arith.constant 0 : i32
    %c0_i32_0 = arith.constant 0 : i32
    %c0_i32_1 = arith.constant 0 : i32
    return %c0_i32, %c0_i32_0 : i32, i32
  }
  func.func @transform_7(%arg0: i32) -> (i32, i32) {
    %c0_i32 = arith.constant 0 : i32
    %c0_i32_0 = arith.constant 0 : i32
    %c0_i32_1 = arith.constant 0 : i32
    return %c0_i32, %c0_i32_0 : i32, i32
  }
  func.func @transform_8(%arg0: i32) -> (i32, i32) {
    %c0_i32 = arith.constant 0 : i32
    %c0_i32_0 = arith.constant 0 : i32
    %c0_i32_1 = arith.constant 0 : i32
    return %c0_i32, %c0_i32_0 : i32, i32
  }
  func.func @transform_9(%arg0: i32) -> (i32, i32, i32) {
    %c0_i32 = arith.constant 0 : i32
    %c0_i32_0 = arith.constant 0 : i32
    %c0_i32_1 = arith.constant 0 : i32
    return %arg0, %c0_i32, %c0_i32_0 : i32, i32, i32
  }
}

</mosaic_0001>

<llo_original>
// kernel: wake_word_forward.1
$region0: #{wake_word_forward.1}
  #allocation0 [shape = 'u32[]', space=smem, size = 0x4, offset = 0x4, fixed_abs, tag = 'smem constant byte address 0x4 - core index']
  #allocation1 [shape = 'u32[144,128]{1,0:T(1,128)}', space=vmem, size = 0x12000, scoped, tag = 'internal scratch']
  #allocation2 [shape = 'f32[904,64]{1,0:T(8,128)}', space=vmem, size = 0x71000, scoped, tag = 'scratch operand']
  #allocation3 [shape = 'f32[456,64]{1,0:T(8,128)}', space=vmem, size = 0x39000, scoped, tag = 'scratch operand']
  #allocation4 [shape = 'f32[456,64]{1,0:T(8,128)}', space=vmem, size = 0x39000, scoped, tag = 'scratch operand']
  #allocation5 [shape = 'f32[224,64]{1,0:T(8,128)}', space=vmem, size = 0x1c000, scoped, tag = 'scratch operand']
  #allocation6 [shape = 'f32[1,1]{1,0:T(1,128)S(1)}', space=vmem, size = 0x200, scoped, tag = 'scoped memory for wake_word_forward.1']
  %s0 = inlined_call_operand.vmem [shape: f32[896,16], index: 0, kind: input, shape index: {}]
  %s1 = inlined_call_operand.hbm [shape: f32[48,64], index: 1, kind: input, shape index: {}]
  %s2 = inlined_call_operand.vmem [shape: f32[1,64], index: 2, kind: input, shape index: {}]
  %s3 = inlined_call_operand.vmem [shape: f32[192,64], index: 3, kind: input, shape index: {}]
  %s4 = inlined_call_operand.vmem [shape: f32[1,64], index: 4, kind: input, shape index: {}]
  %s5 = inlined_call_operand.vmem [shape: f32[1536,128], index: 5, kind: input, shape index: {}]
  %s6 = inlined_call_operand.vmem [shape: f32[1,128], index: 6, kind: input, shape index: {}]
  %s7 = inlined_call_operand.vmem [shape: f32[1,128], index: 7, kind: input, shape index: {}]
  %s8 = inlined_call_operand.<no memory space> [shape: f32[1,1], index: 8, kind: input, shape index: {}]
  %s9 = inlined_call_operand.vmem [shape: f32[1,8,8], index: 9, kind: output, shape index: {}]
  %s10 = sld [smem:[#allocation0]]
  $region50: #{wake_word_forward.1} parent=0
    _
  %s12 = ssub.s32 1, %s10
  %s13 = scalar_select 0, %s12, %s10
  %v14 = vstv %s8
  %15 = vst [vmem:[#allocation6] sm:$0x1] %v14
  $region1: #{wake_word_forward.1} parent=0
    #allocation7 [shape = 'u8[24576]{0}', space=vmem, size = 0x6000, scoped, tag = 'input window, operand 1, single buffered']
    #allocation8 [shape = 's32[1]{0}', space=sflag, size = 0x4, scoped, tag = 'scoped memory for wake_word_forward.1']
    %16 = vsyncpa [#allocation8], 0
    // Predicated region
    $region2: #{wake_word_forward.1} parent=1 // pred_check
      _
    $region3: #{wake_word_forward.1} parent=1 // pred_check_branch
      %18 = sbr.rel (0) target = $region5
    $region4: #{wake_word_forward.1} parent=1 // pred_region
      _
    $region5: #{wake_word_forward.1} parent=1 // pred_fallthru
      _
    // Predicated region
    $region6: #{wake_word_forward.1} parent=1 // pred_check
      _
    $region7: #{wake_word_forward.1} parent=1 // pred_check_branch
      %20 = sbr.rel (0) target = $region9
    $region8: #{wake_word_forward.1} parent=1 // pred_region
      %s22 = ssub.s32 768, 768
      %23 = vsyncadd [#allocation8], %s22
      %s24 = sshll.u32 [#allocation7], 4
      %s25 = int_to_ptr.vmem [resolvable:$true] %s24
      %30 = dma.hbm_to_vmem [thread:$0]  %s1, 768, %s25, [#allocation8], 128, 128, 8
    $region9: #{wake_word_forward.1} parent=1 // pred_fallthru
      _
    // Predicated region
    $region10: #{wake_word_forward.1} parent=1 // pred_check
      _
    $region11: #{wake_word_forward.1} parent=1 // pred_check_branch
      %32 = sbr.rel (0) target = $region13
    $region12: #{wake_word_forward.1} parent=1 // pred_region
      _
    $region13: #{wake_word_forward.1} parent=1 // pred_fallthru
      _
    // Predicated region
    $region14: #{wake_word_forward.1} parent=1 // pred_check
      _
    $region15: #{wake_word_forward.1} parent=1 // pred_check_branch
      %34 = sbr.rel (0) target = $region17
    $region16: #{wake_word_forward.1} parent=1 // pred_region
      _
    $region17: #{wake_word_forward.1} parent=1 // pred_fallthru
      _
    // Predicated region
    $region18: #{wake_word_forward.1} parent=1 // pred_check
      _
    $region19: #{wake_word_forward.1} parent=1 // pred_check_branch
      %36 = sbr.rel (0) target = $region21
    $region20: #{wake_word_forward.1} parent=1 // pred_region
      _
    $region21: #{wake_word_forward.1} parent=1 // pred_fallthru
      _
    // Predicated region
    $region22: #{wake_word_forward.1} parent=1 // pred_check
      _
    $region23: #{wake_word_forward.1} parent=1 // pred_check_branch
      %38 = sbr.rel (0) target = $region25
    $region24: #{wake_word_forward.1} parent=1 // pred_region
      _
    $region25: #{wake_word_forward.1} parent=1 // pred_fallthru
      _
    // Predicated region
    $region26: #{wake_word_forward.1} parent=1 // pred_check
      _
    $region27: #{wake_word_forward.1} parent=1 // pred_check_branch
      %40 = sbr.rel (0) target = $region29
    $region28: #{wake_word_forward.1} parent=1 // pred_region
      _
    $region29: #{wake_word_forward.1} parent=1 // pred_fallthru
      _
    // Predicated region
    $region30: #{wake_word_forward.1} parent=1 // pred_check
      _
    $region31: #{wake_word_forward.1} parent=1 // pred_check_branch
      %42 = sbr.rel (0) target = $region33
    $region32: #{wake_word_forward.1} parent=1 // pred_region
      _
    $region33: #{wake_word_forward.1} parent=1 // pred_fallthru
      _
    // Predicated region
    $region34: #{wake_word_forward.1} parent=1 // pred_check
      _
    $region35: #{wake_word_forward.1} parent=1 // pred_check_branch
      %44 = sbr.rel (0) target = $region37
    $region36: #{wake_word_forward.1} parent=1 // pred_region
      _
    $region37: #{wake_word_forward.1} parent=1 // pred_fallthru
      _
    // Predicated region
    $region38: #{wake_word_forward.1} parent=1 // pred_check
      _
    $region39: #{wake_word_forward.1} parent=1 // pred_check_branch
      %46 = sbr.rel (0) target = $region41
    $region40: #{wake_word_forward.1} parent=1 // pred_region
      %47 = dma.done [#allocation8], 768
    $region41: #{wake_word_forward.1} parent=1 // pred_fallthru
      _
    %v48 = vld [vmem:[%s0] sm:$0xff]
    %v49 = vld [vmem:[%s0 + $0x8] sm:$0xff]
    %v50 = vld [vmem:[%s0 + $0x10] sm:$0xff]
    %v51 = vld [vmem:[%s0 + $0x18] sm:$0xff]
    %v52 = vld [vmem:[%s0 + $0x20] sm:$0xff]
    %v53 = vld [vmem:[%s0 + $0x28] sm:$0xff]
    %v54 = vld [vmem:[%s0 + $0x30] sm:$0xff]
    %v55 = vld [vmem:[%s0 + $0x38] sm:$0xff]
    %v56 = vld [vmem:[%s0 + $0x40] sm:$0xff]
    %v57 = vld [vmem:[%s0 + $0x48] sm:$0xff]
    %v58 = vld [vmem:[%s0 + $0x50] sm:$0xff]
    %v59 = vld [vmem:[%s0 + $0x58] sm:$0xff]
    %v60 = vld [vmem:[%s0 + $0x60] sm:$0xff]
    %v61 = vld [vmem:[%s0 + $0x68] sm:$0xff]
    %v62 = vld [vmem:[%s0 + $0x70] sm:$0xff]
    %v63 = vld [vmem:[%s0 + $0x78] sm:$0xff]
    %v64 = vld [vmem:[%s0 + $0x80] sm:$0xff]
    %v65 = vld [vmem:[%s0 + $0x88] sm:$0xff]
    %v66 = vld [vmem:[%s0 + $0x90] sm:$0xff]
    %v67 = vld [vmem:[%s0 + $0x98] sm:$0xff]
    %v68 = vld [vmem:[%s0 + $0xa0] sm:$0xff]
    %v69 = vld [vmem:[%s0 + $0xa8] sm:$0xff]
    %v70 = vld [vmem:[%s0 + $0xb0] sm:$0xff]
    %v71 = vld [vmem:[%s0 + $0xb8] sm:$0xff]
    %v72 = vld [vmem:[%s0 + $0xc0] sm:$0xff]
    %v73 = vld [vmem:[%s0 + $0xc8] sm:$0xff]
    %v74 = vld [vmem:[%s0 + $0xd0] sm:$0xff]
    %v75 = vld [vmem:[%s0 + $0xd8] sm:$0xff]
    %v76 = vld [vmem:[%s0 + $0xe0] sm:$0xff]
    %v77 = vld [vmem:[%s0 + $0xe8] sm:$0xff]
    %v78 = vld [vmem:[%s0 + $0xf0] sm:$0xff]
    %v79 = vld [vmem:[%s0 + $0xf8] sm:$0xff]
    %v80 = vld [vmem:[%s0 + $0x100] sm:$0xff]
    %v81 = vld [vmem:[%s0 + $0x108] sm:$0xff]
    %v82 = vld [vmem:[%s0 + $0x110] sm:$0xff]
    %v83 = vld [vmem:[%s0 + $0x118] sm:$0xff]
    %v84 = vld [vmem:[%s0 + $0x120] sm:$0xff]
    %v85 = vld [vmem:[%s0 + $0x128] sm:$0xff]
    %v86 = vld [vmem:[%s0 + $0x130] sm:$0xff]
    %v87 = vld [vmem:[%s0 + $0x138] sm:$0xff]
    %v88 = vld [vmem:[%s0 + $0x140] sm:$0xff]
    %v89 = vld [vmem:[%s0 + $0x148] sm:$0xff]
    %v90 = vld [vmem:[%s0 + $0x150] sm:$0xff]
    %v91 = vld [vmem:[%s0 + $0x158] sm:$0xff]
    %v92 = vld [vmem:[%s0 + $0x160] sm:$0xff]
    %v93 = vld [vmem:[%s0 + $0x168] sm:$0xff]
    %v94 = vld [vmem:[%s0 + $0x170] sm:$0xff]
    %v95 = vld [vmem:[%s0 + $0x178] sm:$0xff]
    %v96 = vld [vmem:[%s0 + $0x180] sm:$0xff]
    %v97 = vld [vmem:[%s0 + $0x188] sm:$0xff]
    %v98 = vld [vmem:[%s0 + $0x190] sm:$0xff]
    %v99 = vld [vmem:[%s0 + $0x198] sm:$0xff]
    %v100 = vld [vmem:[%s0 + $0x1a0] sm:$0xff]
    %v101 = vld [vmem:[%s0 + $0x1a8] sm:$0xff]
    %v102 = vld [vmem:[%s0 + $0x1b0] sm:$0xff]
    %v103 = vld [vmem:[%s0 + $0x1b8] sm:$0xff]
    %v104 = vld [vmem:[%s0 + $0x1c0] sm:$0xff]
    %v105 = vld [vmem:[%s0 + $0x1c8] sm:$0xff]
    %v106 = vld [vmem:[%s0 + $0x1d0] sm:$0xff]
    %v107 = vld [vmem:[%s0 + $0x1d8] sm:$0xff]
    %v108 = vld [vmem:[%s0 + $0x1e0] sm:$0xff]
    %v109 = vld [vmem:[%s0 + $0x1e8] sm:$0xff]
    %v110 = vld [vmem:[%s0 + $0x1f0] sm:$0xff]
    %v111 = vld [vmem:[%s0 + $0x1f8] sm:$0xff]
    %v112 = vld [vmem:[%s0 + $0x200] sm:$0xff]
    %v113 = vld [vmem:[%s0 + $0x208] sm:$0xff]
    %v114 = vld [vmem:[%s0 + $0x210] sm:$0xff]
    %v115 = vld [vmem:[%s0 + $0x218] sm:$0xff]
    %v116 = vld [vmem:[%s0 + $0x220] sm:$0xff]
    %v117 = vld [vmem:[%s0 + $0x228] sm:$0xff]
    %v118 = vld [vmem:[%s0 + $0x230] sm:$0xff]
    %v119 = vld [vmem:[%s0 + $0x238] sm:$0xff]
    %v120 = vld [vmem:[%s0 + $0x240] sm:$0xff]
    %v121 = vld [vmem:[%s0 + $0x248] sm:$0xff]
    %v122 = vld [vmem:[%s0 + $0x250] sm:$0xff]
    %v123 = vld [vmem:[%s0 + $0x258] sm:$0xff]
    %v124 = vld [vmem:[%s0 + $0x260] sm:$0xff]
    %v125 = vld [vmem:[%s0 + $0x268] sm:$0xff]
    %v126 = vld [vmem:[%s0 + $0x270] sm:$0xff]
    %v127 = vld [vmem:[%s0 + $0x278] sm:$0xff]
    %v128 = vld [vmem:[%s0 + $0x280] sm:$0xff]
    %v129 = vld [vmem:[%s0 + $0x288] sm:$0xff]
    %v130 = vld [vmem:[%s0 + $0x290] sm:$0xff]
    %v131 = vld [vmem:[%s0 + $0x298] sm:$0xff]
    %v132 = vld [vmem:[%s0 + $0x2a0] sm:$0xff]
    %v133 = vld [vmem:[%s0 + $0x2a8] sm:$0xff]
    %v134 = vld [vmem:[%s0 + $0x2b0] sm:$0xff]
    %v135 = vld [vmem:[%s0 + $0x2b8] sm:$0xff]
    %v136 = vld [vmem:[%s0 + $0x2c0] sm:$0xff]
    %v137 = vld [vmem:[%s0 + $0x2c8] sm:$0xff]
    %v138 = vld [vmem:[%s0 + $0x2d0] sm:$0xff]
    %v139 = vld [vmem:[%s0 + $0x2d8] sm:$0xff]
    %v140 = vld [vmem:[%s0 + $0x2e0] sm:$0xff]
    %v141 = vld [vmem:[%s0 + $0x2e8] sm:$0xff]
    %v142 = vld [vmem:[%s0 + $0x2f0] sm:$0xff]
    %v143 = vld [vmem:[%s0 + $0x2f8] sm:$0xff]
    %v144 = vld [vmem:[%s0 + $0x300] sm:$0xff]
    %v145 = vld [vmem:[%s0 + $0x308] sm:$0xff]
    %v146 = vld [vmem:[%s0 + $0x310] sm:$0xff]
    %v147 = vld [vmem:[%s0 + $0x318] sm:$0xff]
    %v148 = vld [vmem:[%s0 + $0x320] sm:$0xff]
    %v149 = vld [vmem:[%s0 + $0x328] sm:$0xff]
    %v150 = vld [vmem:[%s0 + $0x330] sm:$0xff]
    %v151 = vld [vmem:[%s0 + $0x338] sm:$0xff]
    %v152 = vld [vmem:[%s0 + $0x340] sm:$0xff]
    %v153 = vld [vmem:[%s0 + $0x348] sm:$0xff]
    %v154 = vld [vmem:[%s0 + $0x350] sm:$0xff]
    %v155 = vld [vmem:[%s0 + $0x358] sm:$0xff]
    %v156 = vld [vmem:[%s0 + $0x360] sm:$0xff]
    %v157 = vld [vmem:[%s0 + $0x368] sm:$0xff]
    %v158 = vld [vmem:[%s0 + $0x370] sm:$0xff]
    %v159 = vld [vmem:[#allocation7] sm:$0xff]
    %v160 = vld [vmem:[#allocation7 + $0x8] sm:$0xff]
    %v161 = vld [vmem:[%s0 + $0x1] sm:$0xff]
    %v162 = vld [vmem:[%s0 + $0x9] sm:$0xff]
    %v163 = vld [vmem:[%s0 + $0x11] sm:$0xff]
    %v164 = vld [vmem:[%s0 + $0x19] sm:$0xff]
    %v165 = vld [vmem:[%s0 + $0x21] sm:$0xff]
    %v166 = vld [vmem:[%s0 + $0x29] sm:$0xff]
    %v167 = vld [vmem:[%s0 + $0x31] sm:$0xff]
    %v168 = vld [vmem:[%s0 + $0x39] sm:$0xff]
    %v169 = vld [vmem:[%s0 + $0x41] sm:$0xff]
    %v170 = vld [vmem:[%s0 + $0x49] sm:$0xff]
    %v171 = vld [vmem:[%s0 + $0x51] sm:$0xff]
    %v172 = vld [vmem:[%s0 + $0x59] sm:$0xff]
    %v173 = vld [vmem:[%s0 + $0x61] sm:$0xff]
    %v174 = vld [vmem:[%s0 + $0x69] sm:$0xff]
    %v175 = vld [vmem:[%s0 + $0x71] sm:$0xff]
    %v176 = vld [vmem:[%s0 + $0x79] sm:$0xff]
    %v177 = vld [vmem:[%s0 + $0x81] sm:$0xff]
    %v178 = vld [vmem:[%s0 + $0x89] sm:$0xff]
    %v179 = vld [vmem:[%s0 + $0x91] sm:$0xff]
    %v180 = vld [vmem:[%s0 + $0x99] sm:$0xff]
    %v181 = vld [vmem:[%s0 + $0xa1] sm:$0xff]
    %v182 = vld [vmem:[%s0 + $0xa9] sm:$0xff]
    %v183 = vld [vmem:[%s0 + $0xb1] sm:$0xff]
    %v184 = vld [vmem:[%s0 + $0xb9] sm:$0xff]
    %v185 = vld [vmem:[%s0 + $0xc1] sm:$0xff]
    %v186 = vld [vmem:[%s0 + $0xc9] sm:$0xff]
    %v187 = vld [vmem:[%s0 + $0xd1] sm:$0xff]
    %v188 = vld [vmem:[%s0 + $0xd9] sm:$0xff]
    %v189 = vld [vmem:[%s0 + $0xe1] sm:$0xff]
    %v190 = vld [vmem:[%s0 + $0xe9] sm:$0xff]
    %v191 = vld [vmem:[%s0 + $0xf1] sm:$0xff]
    %v192 = vld [vmem:[%s0 + $0xf9] sm:$0xff]
    %v193 = vld [vmem:[%s0 + $0x101] sm:$0xff]
    %v194 = vld [vmem:[%s0 + $0x109] sm:$0xff]
    %v195 = vld [vmem:[%s0 + $0x111] sm:$0xff]
    %v196 = vld [vmem:[%s0 + $0x119] sm:$0xff]
    %v197 = vld [vmem:[%s0 + $0x121] sm:$0xff]
    %v198 = vld [vmem:[%s0 + $0x129] sm:$0xff]
    %v199 = vld [vmem:[%s0 + $0x131] sm:$0xff]
    %v200 = vld [vmem:[%s0 + $0x139] sm:$0xff]
    %v201 = vld [vmem:[%s0 + $0x141] sm:$0xff]
    %v202 = vld [vmem:[%s0 + $0x149] sm:$0xff]
    %v203 = vld [vmem:[%s0 + $0x151] sm:$0xff]
    %v204 = vld [vmem:[%s0 + $0x159] sm:$0xff]
    %v205 = vld [vmem:[%s0 + $0x161] sm:$0xff]
    %v206 = vld [vmem:[%s0 + $0x169] sm:$0xff]
    %v207 = vld [vmem:[%s0 + $0x171] sm:$0xff]
    %v208 = vld [vmem:[%s0 + $0x179] sm:$0xff]
    %v209 = vld [vmem:[%s0 + $0x181] sm:$0xff]
    %v210 = vld [vmem:[%s0 + $0x189] sm:$0xff]
    %v211 = vld [vmem:[%s0 + $0x191] sm:$0xff]
    %v212 = vld [vmem:[%s0 + $0x199] sm:$0xff]
    %v213 = vld [vmem:[%s0 + $0x1a1] sm:$0xff]
    %v214 = vld [vmem:[%s0 + $0x1a9] sm:$0xff]
    %v215 = vld [vmem:[%s0 + $0x1b1] sm:$0xff]
    %v216 = vld [vmem:[%s0 + $0x1b9] sm:$0xff]
    %v217 = vld [vmem:[%s0 + $0x1c1] sm:$0xff]
    %v218 = vld [vmem:[%s0 + $0x1c9] sm:$0xff]
    %v219 = vld [vmem:[%s0 + $0x1d1] sm:$0xff]
    %v220 = vld [vmem:[%s0 + $0x1d9] sm:$0xff]
    %v221 = vld [vmem:[%s0 + $0x1e1] sm:$0xff]
    %v222 = vld [vmem:[%s0 + $0x1e9] sm:$0xff]
    %v223 = vld [vmem:[%s0 + $0x1f1] sm:$0xff]
    %v224 = vld [vmem:[%s0 + $0x1f9] sm:$0xff]
    %v225 = vld [vmem:[%s0 + $0x201] sm:$0xff]
    %v226 = vld [vmem:[%s0 + $0x209] sm:$0xff]
    %v227 = vld [vmem:[%s0 + $0x211] sm:$0xff]
    %v228 = vld [vmem:[%s0 + $0x219] sm:$0xff]
    %v229 = vld [vmem:[%s0 + $0x221] sm:$0xff]
    %v230 = vld [vmem:[%s0 + $0x229] sm:$0xff]
    %v231 = vld [vmem:[%s0 + $0x231] sm:$0xff]
    %v232 = vld [vmem:[%s0 + $0x239] sm:$0xff]
    %v233 = vld [vmem:[%s0 + $0x241] sm:$0xff]
    %v234 = vld [vmem:[%s0 + $0x249] sm:$0xff]
    %v235 = vld [vmem:[%s0 + $0x251] sm:$0xff]
    %v236 = vld [vmem:[%s0 + $0x259] sm:$0xff]
    %v237 = vld [vmem:[%s0 + $0x261] sm:$0xff]
    %v238 = vld [vmem:[%s0 + $0x269] sm:$0xff]
    %v239 = vld [vmem:[%s0 + $0x271] sm:$0xff]
    %v240 = vld [vmem:[%s0 + $0x279] sm:$0xff]
    %v241 = vld [vmem:[%s0 + $0x281] sm:$0xff]
    %v242 = vld [vmem:[%s0 + $0x289] sm:$0xff]
    %v243 = vld [vmem:[%s0 + $0x291] sm:$0xff]
    %v244 = vld [vmem:[%s0 + $0x299] sm:$0xff]
    %v245 = vld [vmem:[%s0 + $0x2a1] sm:$0xff]
    %v246 = vld [vmem:[%s0 + $0x2a9] sm:$0xff]
    %v247 = vld [vmem:[%s0 + $0x2b1] sm:$0xff]
    %v248 = vld [vmem:[%s0 + $0x2b9] sm:$0xff]
    %v249 = vld [vmem:[%s0 + $0x2c1] sm:$0xff]
    %v250 = vld [vmem:[%s0 + $0x2c9] sm:$0xff]
    %v251 = vld [vmem:[%s0 + $0x2d1] sm:$0xff]
    %v252 = vld [vmem:[%s0 + $0x2d9] sm:$0xff]
    %v253 = vld [vmem:[%s0 + $0x2e1] sm:$0xff]
    %v254 = vld [vmem:[%s0 + $0x2e9] sm:$0xff]
    %v255 = vld [vmem:[%s0 + $0x2f1] sm:$0xff]
    %v256 = vld [vmem:[%s0 + $0x2f9] sm:$0xff]
    %v257 = vld [vmem:[%s0 + $0x301] sm:$0xff]
    %v258 = vld [vmem:[%s0 + $0x309] sm:$0xff]
    %v259 = vld [vmem:[%s0 + $0x311] sm:$0xff]
    %v260 = vld [vmem:[%s0 + $0x319] sm:$0xff]
    %v261 = vld [vmem:[%s0 + $0x321] sm:$0xff]
    %v262 = vld [vmem:[%s0 + $0x329] sm:$0xff]
    %v263 = vld [vmem:[%s0 + $0x331] sm:$0xff]
    %v264 = vld [vmem:[%s0 + $0x339] sm:$0xff]
    %v265 = vld [vmem:[%s0 + $0x341] sm:$0xff]
    %v266 = vld [vmem:[%s0 + $0x349] sm:$0xff]
    %v267 = vld [vmem:[%s0 + $0x351] sm:$0xff]
    %v268 = vld [vmem:[%s0 + $0x359] sm:$0xff]
    %v269 = vld [vmem:[%s0 + $0x361] sm:$0xff]
    %v270 = vld [vmem:[%s0 + $0x369] sm:$0xff]
    %v271 = vld [vmem:[%s0 + $0x371] sm:$0xff]
    %v272 = vld [vmem:[#allocation7 + $0x10] sm:$0xff]
    %v273 = vld [vmem:[#allocation7 + $0x18] sm:$0xff]
    %vm274 = vcmask 130048
    %v276 = vsel %vm274, %v161, 0
    %v279 = vsel %vm274, %v162, 0
    %v282 = vsel %vm274, %v163, 0
    %v285 = vsel %vm274, %v164, 0
    %v288 = vsel %vm274, %v165, 0
    %v291 = vsel %vm274, %v166, 0
    %v294 = vsel %vm274, %v167, 0
    %v297 = vsel %vm274, %v168, 0
    %v300 = vsel %vm274, %v169, 0
    %v303 = vsel %vm274, %v170, 0
    %v306 = vsel %vm274, %v171, 0
    %v309 = vsel %vm274, %v172, 0
    %v312 = vsel %vm274, %v173, 0
    %v315 = vsel %vm274, %v174, 0
    %v318 = vsel %vm274, %v175, 0
    %v321 = vsel %vm274, %v176, 0
    %v324 = vsel %vm274, %v177, 0
    %v327 = vsel %vm274, %v178, 0
    %v330 = vsel %vm274, %v179, 0
    %v333 = vsel %vm274, %v180, 0
    %v336 = vsel %vm274, %v181, 0
    %v339 = vsel %vm274, %v182, 0
    %v342 = vsel %vm274, %v183, 0
    %v345 = vsel %vm274, %v184, 0
    %v348 = vsel %vm274, %v185, 0
    %v351 = vsel %vm274, %v186, 0
    %v354 = vsel %vm274, %v187, 0
    %v357 = vsel %vm274, %v188, 0
    %v360 = vsel %vm274, %v189, 0
    %v363 = vsel %vm274, %v190, 0
    %v366 = vsel %vm274, %v191, 0
    %v369 = vsel %vm274, %v192, 0
    %v372 = vsel %vm274, %v193, 0
    %v375 = vsel %vm274, %v194, 0
    %v378 = vsel %vm274, %v195, 0
    %v381 = vsel %vm274, %v196, 0
    %v384 = vsel %vm274, %v197, 0
    %v387 = vsel %vm274, %v198, 0
    %v390 = vsel %vm274, %v199, 0
    %v393 = vsel %vm274, %v200, 0
    %v396 = vsel %vm274, %v201, 0
    %v399 = vsel %vm274, %v202, 0
    %v402 = vsel %vm274, %v203, 0
    %v405 = vsel %vm274, %v204, 0
    %v408 = vsel %vm274, %v205, 0
    %v411 = vsel %vm274, %v206, 0
    %v414 = vsel %vm274, %v207, 0
    %v417 = vsel %vm274, %v208, 0
    %v420 = vsel %vm274, %v209, 0
    %v423 = vsel %vm274, %v210, 0
    %v426 = vsel %vm274, %v211, 0
    %v429 = vsel %vm274, %v212, 0
    %v432 = vsel %vm274, %v213, 0
    %v435 = vsel %vm274, %v214, 0
    %v438 = vsel %vm274, %v215, 0
    %v441 = vsel %vm274, %v216, 0
    %v444 = vsel %vm274, %v217, 0
    %v447 = vsel %vm274, %v218, 0
    %v450 = vsel %vm274, %v219, 0
    %v453 = vsel %vm274, %v220, 0
    %v456 = vsel %vm274, %v221, 0
    %v459 = vsel %vm274, %v222, 0
    %v462 = vsel %vm274, %v223, 0
    %v465 = vsel %vm274, %v224, 0
    %v468 = vsel %vm274, %v225, 0
    %v471 = vsel %vm274, %v226, 0
    %v474 = vsel %vm274, %v227, 0
    %v477 = vsel %vm274, %v228, 0
    %v480 = vsel %vm274, %v229, 0
    %v483 = vsel %vm274, %v230, 0
    %v486 = vsel %vm274, %v231, 0
    %v489 = vsel %vm274, %v232, 0
    %v492 = vsel %vm274, %v233, 0
    %v495 = vsel %vm274, %v234, 0
    %v498 = vsel %vm274, %v235, 0
    %v501 = vsel %vm274, %v236, 0
    %v504 = vsel %vm274, %v237, 0
    %v507 = vsel %vm274, %v238, 0
    %v510 = vsel %vm274, %v239, 0
    %v513 = vsel %vm274, %v240, 0
    %v516 = vsel %vm274, %v241, 0
    %v519 = vsel %vm274, %v242, 0
    %v522 = vsel %vm274, %v243, 0
    %v525 = vsel %vm274, %v244, 0
    %v528 = vsel %vm274, %v245, 0
    %v531 = vsel %vm274, %v246, 0
    %v534 = vsel %vm274, %v247, 0
    %v537 = vsel %vm274, %v248, 0
    %v540 = vsel %vm274, %v249, 0
    %v543 = vsel %vm274, %v250, 0
    %v546 = vsel %vm274, %v251, 0
    %v549 = vsel %vm274, %v252, 0
    %v552 = vsel %vm274, %v253, 0
    %v555 = vsel %vm274, %v254, 0
    %v558 = vsel %vm274, %v255, 0
    %v561 = vsel %vm274, %v256, 0
    %v564 = vsel %vm274, %v257, 0
    %v567 = vsel %vm274, %v258, 0
    %v570 = vsel %vm274, %v259, 0
    %v573 = vsel %vm274, %v260, 0
    %v576 = vsel %vm274, %v261, 0
    %v579 = vsel %vm274, %v262, 0
    %v582 = vsel %vm274, %v263, 0
    %v585 = vsel %vm274, %v264, 0
    %v588 = vsel %vm274, %v265, 0
    %v591 = vsel %vm274, %v266, 0
    %v594 = vsel %vm274, %v267, 0
    %v597 = vsel %vm274, %v268, 0
    %v600 = vsel %vm274, %v269, 0
    %v603 = vsel %vm274, %v270, 0
    %v606 = vsel %vm274, %v271, 0
    %608 = vmatprep.subr.mxu0 0.0
    %609 = vmatpush1.msra.mxu0 %v272
    %610 = vmatprep.subr.mxu0 0.0
    %611 = vmatpush1.msra.mxu0 %v273
    %612 = vmatprep.subr.mxu0 0.0
    %613 = vmatpush1.msra.mxu0 0.0
    %614 = vmatprep.subr.mxu0 0.0
    %615 = vmatpush1.msra.mxu0 0.0
    %616 = vmatprep.subr.mxu0 0.0
    %617 = vmatpush1.msra.mxu0 0.0
    %618 = vmatprep.subr.mxu0 0.0
    %619 = vmatpush1.msra.mxu0 0.0
    %620 = vmatprep.subr.mxu0 0.0
    %621 = vmatpush1.msra.mxu0 0.0
    %622 = vmatprep.subr.mxu0 0.0
    %623 = vmatpush1.msra.mxu0 0.0
    %624 = vmatprep.subr.mxu0 0.0
    %625 = vmatpush1.msra.mxu0 0.0
    %626 = vmatprep.subr.mxu0 0.0
    %627 = vmatpush1.msra.mxu0 0.0
    %628 = vmatprep.subr.mxu0 0.0
    %629 = vmatpush1.msra.mxu0 0.0
    %630 = vmatprep.subr.mxu0 0.0
    %631 = vmatpush1.msra.mxu0 0.0
    %632 = vmatprep.subr.mxu0 0.0
    %633 = vmatpush1.msra.mxu0 0.0
    %634 = vmatprep.subr.mxu0 0.0
    %635 = vmatpush1.msra.mxu0 0.0
    %636 = vmatprep.subr.mxu0 0.0
    %637 = vmatpush1.msra.mxu0 0.0
    %638 = vmatprep.subr.mxu0 0.0
    %639 = vmatpush1.msra.mxu0 0.0
    %640 = vmatprep.subr.mxu0 0.0
    %641 = vmatpush1.msra.mxu0 0.0
    %642 = vmatprep.subr.mxu0 0.0
    %643 = vmatpush1.msra.mxu0 0.0
    %644 = vmatprep.subr.mxu0 0.0
    %645 = vmatpush1.msra.mxu0 0.0
    %646 = vmatprep.subr.mxu0 0.0
    %647 = vmatpush1.msra.mxu0 0.0
    %648 = vmatprep.subr.mxu0 0.0
    %649 = vmatpush1.msra.mxu0 0.0
    %650 = vmatprep.subr.mxu0 0.0
    %651 = vmatpush1.msra.mxu0 0.0
    %652 = vmatprep.subr.mxu0 0.0
    %653 = vmatpush1.msra.mxu0 0.0
    %654 = vmatprep.subr.mxu0 0.0
    %655 = vmatpush1.msra.mxu0 0.0
    %656 = vmatprep.subr.mxu0 0.0
    %657 = vmatpush1.msra.mxu0 0.0
    %658 = vmatprep.subr.mxu0 0.0
    %659 = vmatpush1.msra.mxu0 0.0
    %660 = vmatprep.subr.mxu0 0.0
    %661 = vmatpush1.msra.mxu0 0.0
    %662 = vmatprep.subr.mxu0 0.0
    %663 = vmatpush1.msra.mxu0 0.0
    %664 = vmatprep.subr.mxu0 0.0
    %665 = vmatpush1.msra.mxu0 0.0
    %666 = vmatprep.subr.mxu0 0.0
    %667 = vmatpush1.msra.mxu0 0.0
    %668 = vmatprep.subr.mxu0 0.0
    %669 = vmatpush1.msra.mxu0 0.0
    %670 = vmatprep.subr.mxu0 0.0
    %671 = vmatpush1.msra.mxu0 0.0
    %672 = vmatprep.mubr.f32.mxu0 0.0
    %673 = vmatmul.mubr.f32.gmra.mrb[0].mxu0 %v276
    %v674 = vpop.f32.mrb[0].mxu0
    %v675 = vadd.f32 0.0, %v674
    %v676 = vpop.f32.mrb[0].mxu0
    %677 = vmatprep.mubr.f32.mxu0 0.0
    %678 = vmatmul.mubr.f32.gmra.mrb[0].mxu0 %v279
    %v679 = vpop.f32.mrb[0].mxu0
    %v680 = vadd.f32 0.0, %v679
    %v681 = vpop.f32.mrb[0].mxu0
    %682 = vmatprep.mubr.f32.mxu0 0.0
    %683 = vmatmul.mubr.f32.gmra.mrb[0].mxu0 %v282
    %v684 = vpop.f32.mrb[0].mxu0
    %v685 = vadd.f32 0.0, %v684
    %v686 = vpop.f32.mrb[0].mxu0
    %687 = vmatprep.mubr.f32.mxu0 0.0
    %688 = vmatmul.mubr.f32.gmra.mrb[0].mxu0 %v285
    %v689 = vpop.f32.mrb[0].mxu0
    %v690 = vadd.f32 0.0, %v689
    %v691 = vpop.f32.mrb[0].mxu0
    %692 = vmatprep.mubr.f32.mxu0 0.0
    %693 = vmatmul.mubr.f32.gmra.mrb[0].mxu0 %v288
    %v694 = vpop.f32.mrb[0].mxu0
    %v695 = vadd.f32 0.0, %v694
    %v696 = vpop.f32.mrb[0].mxu0
    %697 = vmatprep.mubr.f32.mxu0 0.0
    %698 = vmatmul.mubr.f32.gmra.mrb[0].mxu0 %v291
    %v699 = vpop.f32.mrb[0].mxu0
    %v700 = vadd.f32 0.0, %v699
    %v701 = vpop.f32.mrb[0].mxu0
    %702 = vmatprep.mubr.f32.mxu0 0.0
    %703 = vmatmul.mubr.f32.gmra.mrb[0].mxu0 %v294
    %v704 = vpop.f32.mrb[0].mxu0
    %v705 = vadd.f32 0.0, %v704
    %v706 = vpop.f32.mrb[0].mxu0
    %707 = vmatprep.mubr.f32.mxu0 0.0
    %708 = vmatmul.mubr.f32.gmra.mrb[0].mxu0 %v297
    %v709 = vpop.f32.mrb[0].mxu0
    %v710 = vadd.f32 0.0, %v709
    %v711 = vpop.f32.mrb[0].mxu0
    %712 = vmatprep.mubr.f32.mxu0 0.0
    %713 = vmatmul.mubr.f32.gmra.mrb[0].mxu0 %v300
    %v714 = vpop.f32.mrb[0].mxu0
    %v715 = vadd.f32 0.0, %v714
    %v716 = vpop.f32.mrb[0].mxu0
    %717 = vmatprep.mubr.f32.mxu0 0.0
    %718 = vmatmul.mubr.f32.gmra.mrb[0].mxu0 %v303
    %v719 = vpop.f32.mrb[0].mxu0
    %v720 = vadd.f32 0.0, %v719
    %v721 = vpop.f32.mrb[0].mxu0
    %722 = vmatprep.mubr.f32.mxu0 0.0
    %723 = vmatmul.mubr.f32.gmra.mrb[0].mxu0 %v306
    %v724 = vpop.f32.mrb[0].mxu0
    %v725 = vadd.f32 0.0, %v724
    %v726 = vpop.f32.mrb[0].mxu0
    %727 = vmatprep.mubr.f32.mxu0 0.0
    %728 = vmatmul.mubr.f32.gmra.mrb[0].mxu0 %v309
    %v729 = vpop.f32.mrb[0].mxu0
    %v730 = vadd.f32 0.0, %v729
    %v731 = vpop.f32.mrb[0].mxu0
    %732 = vmatprep.mubr.f32.mxu0 0.0
    %733 = vmatmul.mubr.f32.gmra.mrb[0].mxu0 %v312
    %v734 = vpop.f32.mrb[0].mxu0
    %v735 = vadd.f32 0.0, %v734
    %v736 = vpop.f32.mrb[0].mxu0
    %737 = vmatprep.mubr.f32.mxu0 0.0
    %738 = vmatmul.mubr.f32.gmra.mrb[0].mxu0 %v315
    %v739 = vpop.f32.mrb[0].mxu0
    %v740 = vadd.f32 0.0, %v739
    %v741 = vpop.f32.mrb[0].mxu0
    %742 = vmatprep.mubr.f32.mxu0 0.0
    %743 = vmatmul.mubr.f32.gmra.mrb[0].mxu0 %v318
    %v744 = vpop.f32.mrb[0].mxu0
    %v745 = vadd.f32 0.0, %v744
    %v746 = vpop.f32.mrb[0].mxu0
    %747 = vmatprep.mubr.f32.mxu0 0.0
    %748 = vmatmul.mubr.f32.gmra.mrb[0].mxu0 %v321
    %v749 = vpop.f32.mrb[0].mxu0
    %v750 = vadd.f32 0.0, %v749
    %v751 = vpop.f32.mrb[0].mxu0
    %752 = vmatprep.mubr.f32.mxu0 0.0
    %753 = vmatmul.mubr.f32.gmra.mrb[0].mxu0 %v324
    %v754 = vpop.f32.mrb[0].mxu0
    %v755 = vadd.f32 0.0, %v754
    %v756 = vpop.f32.mrb[0].mxu0
    %757 = vmatprep.mubr.f32.mxu0 0.0
    %758 = vmatmul.mubr.f32.gmra.mrb[0].mxu0 %v327
    %v759 = vpop.f32.mrb[0].mxu0
    %v760 = vadd.f32 0.0, %v759
    %v761 = vpop.f32.mrb[0].mxu0
    %762 = vmatprep.mubr.f32.mxu0 0.0
    %763 = vmatmul.mubr.f32.gmra.mrb[0].mxu0 %v330
    %v764 = vpop.f32.mrb[0].mxu0
    %v765 = vadd.f32 0.0, %v764
    %v766 = vpop.f32.mrb[0].mxu0
    %767 = vmatprep.mubr.f32.mxu0 0.0
    %768 = vmatmul.mubr.f32.gmra.mrb[0].mxu0 %v333
    %v769 = vpop.f32.mrb[0].mxu0
    %v770 = vadd.f32 0.0, %v769
    %v771 = vpop.f32.mrb[0].mxu0
    %772 = vmatprep.mubr.f32.mxu0 0.0
    %773 = vmatmul.mubr.f32.gmra.mrb[0].mxu0 %v336
    %v774 = vpop.f32.mrb[0].mxu0
    %v775 = vadd.f32 0.0, %v774
    %v776 = vpop.f32.mrb[0].mxu0
    %777 = vmatprep.mubr.f32.mxu0 0.0
    %778 = vmatmul.mubr.f32.gmra.mrb[0].mxu0 %v339
    %v779 = vpop.f32.mrb[0].mxu0
    %v780 = vadd.f32 0.0, %v779
    %v781 = vpop.f32.mrb[0].mxu0
    %782 = vmatprep.mubr.f32.mxu0 0.0
    %783 = vmatmul.mubr.f32.gmra.mrb[0].mxu0 %v342
    %v784 = vpop.f32.mrb[0].mxu0
    %v785 = vadd.f32 0.0, %v784
    %v786 = vpop.f32.mrb[0].mxu0
    %787 = vmatprep.mubr.f32.mxu0 0.0
    %788 = vmatmul.mubr.f32.gmra.mrb[0].mxu0 %v345
    %v789 = vpop.f32.mrb[0].mxu0
    %v790 = vadd.f32 0.0, %v789
    %v791 = vpop.f32.mrb[0].mxu0
    %792 = vmatprep.mubr.f32.mxu0 0.0
    %793 = vmatmul.mubr.f32.gmra.mrb[0].mxu0 %v348
    %v794 = vpop.f32.mrb[0].mxu0
    %v795 = vadd.f32 0.0, %v794
    %v796 = vpop.f32.mrb[0].mxu0
    %797 = vmatprep.mubr.f32.mxu0 0.0
    %798 = vmatmul.mubr.f32.gmra.mrb[0].mxu0 %v351
    %v799 = vpop.f32.mrb[0].mxu0
    %v800 = vadd.f32 0.0, %v799
    %v801 = vpop.f32.mrb[0].mxu0
    %802 = vmatprep.mubr.f32.mxu0 0.0
    %803 = vmatmul.mubr.f32.gmra.mrb[0].mxu0 %v354
    %v804 = vpop.f32.mrb[0].mxu0
    %v805 = vadd.f32 0.0, %v804
    %v806 = vpop.f32.mrb[0].mxu0
    %807 = vmatprep.mubr.f32.mxu0 0.0
    %808 = vmatmul.mubr.f32.gmra.mrb[0].mxu0 %v357
    %v809 = vpop.f32.mrb[0].mxu0
    %v810 = vadd.f32 0.0, %v809
    %v811 = vpop.f32.mrb[0].mxu0
    %812 = vmatprep.mubr.f32.mxu0 0.0
    %813 = vmatmul.mubr.f32.gmra.mrb[0].mxu0 %v360
    %v814 = vpop.f32.mrb[0].mxu0
    %v815 = vadd.f32 0.0, %v814
    %v816 = vpop.f32.mrb[0].mxu0
    %817 = vmatprep.mubr.f32.mxu0 0.0
    %818 = vmatmul.mubr.f32.gmra.mrb[0].mxu0 %v363
    %v819 = vpop.f32.mrb[0].mxu0
    %v820 = vadd.f32 0.0, %v819
    %v821 = vpop.f32.mrb[0].mxu0
    %822 = vmatprep.mubr.f32.mxu0 0.0
    %823 = vmatmul.mubr.f32.gmra.mrb[0].mxu0 %v366
    %v824 = vpop.f32.mrb[0].mxu0
    %v825 = vadd.f32 0.0, %v824
    %v826 = vpop.f32.mrb[0].mxu0
    %827 = vmatprep.mubr.f32.mxu0 0.0
    %828 = vmatmul.mubr.f32.gmra.mrb[0].mxu0 %v369
    %v829 = vpop.f32.mrb[0].mxu0
    %v830 = vadd.f32 0.0, %v829
    %v831 = vpop.f32.mrb[0].mxu0
    %832 = vmatprep.mubr.f32.mxu0 0.0
    %833 = vmatmul.mubr.f32.gmra.mrb[0].mxu0 %v372
    %v834 = vpop.f32.mrb[0].mxu0
    %v835 = vadd.f32 0.0, %v834
    %v836 = vpop.f32.mrb[0].mxu0
    %837 = vmatprep.mubr.f32.mxu0 0.0
    %838 = vmatmul.mubr.f32.gmra.mrb[0].mxu0 %v375
    %v839 = vpop.f32.mrb[0].mxu0
    %v840 = vadd.f32 0.0, %v839
    %v841 = vpop.f32.mrb[0].mxu0
    %842 = vmatprep.mubr.f32.mxu0 0.0
    %843 = vmatmul.mubr.f32.gmra.mrb[0].mxu0 %v378
    %v844 = vpop.f32.mrb[0].mxu0
    %v845 = vadd.f32 0.0, %v844
    %v846 = vpop.f32.mrb[0].mxu0
    %847 = vmatprep.mubr.f32.mxu0 0.0
    %848 = vmatmul.mubr.f32.gmra.mrb[0].mxu0 %v381
    %v849 = vpop.f32.mrb[0].mxu0
    %v850 = vadd.f32 0.0, %v849
    %v851 = vpop.f32.mrb[0].mxu0
    %852 = vmatprep.mubr.f32.mxu0 0.0
    %853 = vmatmul.mubr.f32.gmra.mrb[0].mxu0 %v384
    %v854 = vpop.f32.mrb[0].mxu0
    %v855 = vadd.f32 0.0, %v854
    %v856 = vpop.f32.mrb[0].mxu0
    %857 = vmatprep.mubr.f32.mxu0 0.0
    %858 = vmatmul.mubr.f32.gmra.mrb[0].mxu0 %v387
    %v859 = vpop.f32.mrb[0].mxu0
    %v860 = vadd.f32 0.0, %v859
    %v861 = vpop.f32.mrb[0].mxu0
    %862 = vmatprep.mubr.f32.mxu0 0.0
    %863 = vmatmul.mubr.f32.gmra.mrb[0].mxu0 %v390
    %v864 = vpop.f32.mrb[0].mxu0
    %v865 = vadd.f32 0.0, %v864
    %v866 = vpop.f32.mrb[0].mxu0
    %867 = vmatprep.mubr.f32.mxu0 0.0
    %868 = vmatmul.mubr.f32.gmra.mrb[0].mxu0 %v393
    %v869 = vpop.f32.mrb[0].mxu0
    %v870 = vadd.f32 0.0, %v869
    %v871 = vpop.f32.mrb[0].mxu0
    %872 = vmatprep.mubr.f32.mxu0 0.0
    %873 = vmatmul.mubr.f32.gmra.mrb[0].mxu0 %v396
    %v874 = vpop.f32.mrb[0].mxu0
    %v875 = vadd.f32 0.0, %v874
    %v876 = vpop.f32.mrb[0].mxu0
    %877 = vmatprep.mubr.f32.mxu0 0.0
    %878 = vmatmul.mubr.f32.gmra.mrb[0].mxu0 %v399
    %v879 = vpop.f32.mrb[0].mxu0
    %v880 = vadd.f32 0.0, %v879
    %v881 = vpop.f32.mrb[0].mxu0
    %882 = vmatprep.mubr.f32.mxu0 0.0
    %883 = vmatmul.mubr.f32.gmra.mrb[0].mxu0 %v402
    %v884 = vpop.f32.mrb[0].mxu0
    %v885 = vadd.f32 0.0, %v884
    %v886 = vpop.f32.mrb[0].mxu0
    %887 = vmatprep.mubr.f32.mxu0 0.0
    %888 = vmatmul.mubr.f32.gmra.mrb[0].mxu0 %v405
    %v889 = vpop.f32.mrb[0].mxu0
    %v890 = vadd.f32 0.0, %v889
    %v891 = vpop.f32.mrb[0].mxu0
    %892 = vmatprep.mubr.f32.mxu0 0.0
    %893 = vmatmul.mubr.f32.gmra.mrb[0].mxu0 %v408
    %v894 = vpop.f32.mrb[0].mxu0
    %v895 = vadd.f32 0.0, %v894
    %v896 = vpop.f32.mrb[0].mxu0
    %897 = vmatprep.mubr.f32.mxu0 0.0
    %898 = vmatmul.mubr.f32.gmra.mrb[0].mxu0 %v411
    %v899 = vpop.f32.mrb[0].mxu0
    %v900 = vadd.f32 0.0, %v899
    %v901 = vpop.f32.mrb[0].mxu0
    %902 = vmatprep.mubr.f32.mxu0 0.0
    %903 = vmatmul.mubr.f32.gmra.mrb[0].mxu0 %v414
    %v904 = vpop.f32.mrb[0].mxu0
    %v905 = vadd.f32 0.0, %v904
    %v906 = vpop.f32.mrb[0].mxu0
    %907 = vmatprep.mubr.f32.mxu0 0.0
    %908 = vmatmul.mubr.f32.gmra.mrb[0].mxu0 %v417
    %v909 = vpop.f32.mrb[0].mxu0
    %v910 = vadd.f32 0.0, %v909
    %v911 = vpop.f32.mrb[0].mxu0
    %912 = vmatprep.mubr.f32.mxu0 0.0
    %913 = vmatmul.mubr.f32.gmra.mrb[0].mxu0 %v420
    %v914 = vpop.f32.mrb[0].mxu0
    %v915 = vadd.f32 0.0, %v914
    %v916 = vpop.f32.mrb[0].mxu0
    %917 = vmatprep.mubr.f32.mxu0 0.0
    %918 = vmatmul.mubr.f32.gmra.mrb[0].mxu0 %v423
    %v919 = vpop.f32.mrb[0].mxu0
    %v920 = vadd.f32 0.0, %v919
    %v921 = vpop.f32.mrb[0].mxu0
    %922 = vmatprep.mubr.f32.mxu0 0.0
    %923 = vmatmul.mubr.f32.gmra.mrb[0].mxu0 %v426
    %v924 = vpop.f32.mrb[0].mxu0
    %v925 = vadd.f32 0.0, %v924
    %v926 = vpop.f32.mrb[0].mxu0
    %927 = vmatprep.mubr.f32.mxu0 0.0
    %928 = vmatmul.mubr.f32.gmra.mrb[0].mxu0 %v429
    %v929 = vpop.f32.mrb[0].mxu0
    %v930 = vadd.f32 0.0, %v929
    %v931 = vpop.f32.mrb[0].mxu0
    %932 = vmatprep.mubr.f32.mxu0 0.0
    %933 = vmatmul.mubr.f32.gmra.mrb[0].mxu0 %v432
    %v934 = vpop.f32.mrb[0].mxu0
    %v935 = vadd.f32 0.0, %v934
    %v936 = vpop.f32.mrb[0].mxu0
    %937 = vmatprep.mubr.f32.mxu0 0.0
    %938 = vmatmul.mubr.f32.gmra.mrb[0].mxu0 %v435
    %v939 = vpop.f32.mrb[0].mxu0
    %v940 = vadd.f32 0.0, %v939
    %v941 = vpop.f32.mrb[0].mxu0
    %942 = vmatprep.mubr.f32.mxu0 0.0
    %943 = vmatmul.mubr.f32.gmra.mrb[0].mxu0 %v438
    %v944 = vpop.f32.mrb[0].mxu0
    %v945 = vadd.f32 0.0, %v944
    %v946 = vpop.f32.mrb[0].mxu0
    %947 = vmatprep.mubr.f32.mxu0 0.0
    %948 = vmatmul.mubr.f32.gmra.mrb[0].mxu0 %v441
    %v949 = vpop.f32.mrb[0].mxu0
    %v950 = vadd.f32 0.0, %v949
    %v951 = vpop.f32.mrb[0].mxu0
    %952 = vmatprep.mubr.f32.mxu0 0.0
    %953 = vmatmul.mubr.f32.gmra.mrb[0].mxu0 %v444
    %v954 = vpop.f32.mrb[0].mxu0
    %v955 = vadd.f32 0.0, %v954
    %v956 = vpop.f32.mrb[0].mxu0
    %957 = vmatprep.mubr.f32.mxu0 0.0
    %958 = vmatmul.mubr.f32.gmra.mrb[0].mxu0 %v447
    %v959 = vpop.f32.mrb[0].mxu0
    %v960 = vadd.f32 0.0, %v959
    %v961 = vpop.f32.mrb[0].mxu0
    %962 = vmatprep.mubr.f32.mxu0 0.0
    %963 = vmatmul.mubr.f32.gmra.mrb[0].mxu0 %v450
    %v964 = vpop.f32.mrb[0].mxu0
    %v965 = vadd.f32 0.0, %v964
    %v966 = vpop.f32.mrb[0].mxu0
    %967 = vmatprep.mubr.f32.mxu0 0.0
    %968 = vmatmul.mubr.f32.gmra.mrb[0].mxu0 %v453
    %v969 = vpop.f32.mrb[0].mxu0
    %v970 = vadd.f32 0.0, %v969
    %v971 = vpop.f32.mrb[0].mxu0
    %972 = vmatprep.mubr.f32.mxu0 0.0
    %973 = vmatmul.mubr.f32.gmra.mrb[0].mxu0 %v456
    %v974 = vpop.f32.mrb[0].mxu0
    %v975 = vadd.f32 0.0, %v974
    %v976 = vpop.f32.mrb[0].mxu0
    %977 = vmatprep.mubr.f32.mxu0 0.0
    %978 = vmatmul.mubr.f32.gmra.mrb[0].mxu0 %v459
    %v979 = vpop.f32.mrb[0].mxu0
    %v980 = vadd.f32 0.0, %v979
    %v981 = vpop.f32.mrb[0].mxu0
    %982 = vmatprep.mubr.f32.mxu0 0.0
    %983 = vmatmul.mubr.f32.gmra.mrb[0].mxu0 %v462
    %v984 = vpop.f32.mrb[0].mxu0
    %v985 = vadd.f32 0.0, %v984
    %v986 = vpop.f32.mrb[0].mxu0
    %987 = vmatprep.mubr.f32.mxu0 0.0
    %988 = vmatmul.mubr.f32.gmra.mrb[0].mxu0 %v465
    %v989 = vpop.f32.mrb[0].mxu0
    %v990 = vadd.f32 0.0, %v989
    %v991 = vpop.f32.mrb[0].mxu0
    %992 = vmatprep.mubr.f32.mxu0 0.0
    %993 = vmatmul.mubr.f32.gmra.mrb[0].mxu0 %v468
    %v994 = vpop.f32.mrb[0].mxu0
    %v995 = vadd.f32 0.0, %v994
    %v996 = vpop.f32.mrb[0].mxu0
    %997 = vmatprep.mubr.f32.mxu0 0.0
    %998 = vmatmul.mubr.f32.gmra.mrb[0].mxu0 %v471
    %v999 = vpop.f32.mrb[0].mxu0
    %v1000 = vadd.f32 0.0, %v999
    %v1001 = vpop.f32.mrb[0].mxu0
    %1002 = vmatprep.mubr.f32.mxu0 0.0
    %1003 = vmatmul.mubr.f32.gmra.mrb[0].mxu0 %v474
    %v1004 = vpop.f32.mrb[0].mxu0
    %v1005 = vadd.f32 0.0, %v1004
    %v1006 = vpop.f32.mrb[0].mxu0
    %1007 = vmatprep.mubr.f32.mxu0 0.0
    %1008 = vmatmul.mubr.f32.gmra.mrb[0].mxu0 %v477
    %v1009 = vpop.f32.mrb[0].mxu0
    %v1010 = vadd.f32 0.0, %v1009
    %v1011 = vpop.f32.mrb[0].mxu0
    %1012 = vmatprep.mubr.f32.mxu0 0.0
    %1013 = vmatmul.mubr.f32.gmra.mrb[0].mxu0 %v480
    %v1014 = vpop.f32.mrb[0].mxu0
    %v1015 = vadd.f32 0.0, %v1014
    %v1016 = vpop.f32.mrb[0].mxu0
    %1017 = vmatprep.mubr.f32.mxu0 0.0
    %1018 = vmatmul.mubr.f32.gmra.mrb[0].mxu0 %v483
    %v1019 = vpop.f32.mrb[0].mxu0
    %v1020 = vadd.f32 0.0, %v1019
    %v1021 = vpop.f32.mrb[0].mxu0
    %1022 = vmatprep.mubr.f32.mxu0 0.0
    %1023 = vmatmul.mubr.f32.gmra.mrb[0].mxu0 %v486
    %v1024 = vpop.f32.mrb[0].mxu0
    %v1025 = vadd.f32 0.0, %v1024
    %v1026 = vpop.f32.mrb[0].mxu0
    %1027 = vmatprep.mubr.f32.mxu0 0.0
    %1028 = vmatmul.mubr.f32.gmra.mrb[0].mxu0 %v489
    %v1029 = vpop.f32.mrb[0].mxu0
    %v1030 = vadd.f32 0.0, %v1029
    %v1031 = vpop.f32.mrb[0].mxu0
    %1032 = vmatprep.mubr.f32.mxu0 0.0
    %1033 = vmatmul.mubr.f32.gmra.mrb[0].mxu0 %v492
    %v1034 = vpop.f32.mrb[0].mxu0
    %v1035 = vadd.f32 0.0, %v1034
    %v1036 = vpop.f32.mrb[0].mxu0
    %1037 = vmatprep.mubr.f32.mxu0 0.0
    %1038 = vmatmul.mubr.f32.gmra.mrb[0].mxu0 %v495
    %v1039 = vpop.f32.mrb[0].mxu0
    %v1040 = vadd.f32 0.0, %v1039
    %v1041 = vpop.f32.mrb[0].mxu0
    %1042 = vmatprep.mubr.f32.mxu0 0.0
    %1043 = vmatmul.mubr.f32.gmra.mrb[0].mxu0 %v498
    %v1044 = vpop.f32.mrb[0].mxu0
    %v1045 = vadd.f32 0.0, %v1044
    %v1046 = vpop.f32.mrb[0].mxu0
    %1047 = vmatprep.mubr.f32.mxu0 0.0
    %1048 = vmatmul.mubr.f32.gmra.mrb[0].mxu0 %v501
    %v1049 = vpop.f32.mrb[0].mxu0
    %v1050 = vadd.f32 0.0, %v1049
    %v1051 = vpop.f32.mrb[0].mxu0
    %1052 = vmatprep.mubr.f32.mxu0 0.0
    %1053 = vmatmul.mubr.f32.gmra.mrb[0].mxu0 %v504
    %v1054 = vpop.f32.mrb[0].mxu0
    %v1055 = vadd.f32 0.0, %v1054
    %v1056 = vpop.f32.mrb[0].mxu0
    %1057 = vmatprep.mubr.f32.mxu0 0.0
    %1058 = vmatmul.mubr.f32.gmra.mrb[0].mxu0 %v507
    %v1059 = vpop.f32.mrb[0].mxu0
    %v1060 = vadd.f32 0.0, %v1059
    %v1061 = vpop.f32.mrb[0].mxu0
    %1062 = vmatprep.mubr.f32.mxu0 0.0
    %1063 = vmatmul.mubr.f32.gmra.mrb[0].mxu0 %v510
    %v1064 = vpop.f32.mrb[0].mxu0
    %v1065 = vadd.f32 0.0, %v1064
    %v1066 = vpop.f32.mrb[0].mxu0
    %1067 = vmatprep.mubr.f32.mxu0 0.0
    %1068 = vmatmul.mubr.f32.gmra.mrb[0].mxu0 %v513
    %v1069 = vpop.f32.mrb[0].mxu0
    %v1070 = vadd.f32 0.0, %v1069
    %v1071 = vpop.f32.mrb[0].mxu0
    %1072 = vmatprep.mubr.f32.mxu0 0.0
    %1073 = vmatmul.mubr.f32.gmra.mrb[0].mxu0 %v516
    %v1074 = vpop.f32.mrb[0].mxu0
    %v1075 = vadd.f32 0.0, %v1074
    %v1076 = vpop.f32.mrb[0].mxu0
    %1077 = vmatprep.mubr.f32.mxu0 0.0
    %1078 = vmatmul.mubr.f32.gmra.mrb[0].mxu0 %v519
    %v1079 = vpop.f32.mrb[0].mxu0
    %v1080 = vadd.f32 0.0, %v1079
    %v1081 = vpop.f32.mrb[0].mxu0
    %1082 = vmatprep.mubr.f32.mxu0 0.0
    %1083 = vmatmul.mubr.f32.gmra.mrb[0].mxu0 %v522
    %v1084 = vpop.f32.mrb[0].mxu0
    %v1085 = vadd.f32 0.0, %v1084
    %v1086 = vpop.f32.mrb[0].mxu0
    %1087 = vmatprep.mubr.f32.mxu0 0.0
    %1088 = vmatmul.mubr.f32.gmra.mrb[0].mxu0 %v525
    %v1089 = vpop.f32.mrb[0].mxu0
    %v1090 = vadd.f32 0.0, %v1089
    %v1091 = vpop.f32.mrb[0].mxu0
    %1092 = vmatprep.mubr.f32.mxu0 0.0
    %1093 = vmatmul.mubr.f32.gmra.mrb[0].mxu0 %v528
    %v1094 = vpop.f32.mrb[0].mxu0
    %v1095 = vadd.f32 0.0, %v1094
    %v1096 = vpop.f32.mrb[0].mxu0
    %1097 = vmatprep.mubr.f32.mxu0 0.0
    %1098 = vmatmul.mubr.f32.gmra.mrb[0].mxu0 %v531
    %v1099 = vpop.f32.mrb[0].mxu0
    %v1100 = vadd.f32 0.0, %v1099
    %v1101 = vpop.f32.mrb[0].mxu0
    %1102 = vmatprep.mubr.f32.mxu0 0.0
    %1103 = vmatmul.mubr.f32.gmra.mrb[0].mxu0 %v534
    %v1104 = vpop.f32.mrb[0].mxu0
    %v1105 = vadd.f32 0.0, %v1104
    %v1106 = vpop.f32.mrb[0].mxu0
    %1107 = vmatprep.mubr.f32.mxu0 0.0
    %1108 = vmatmul.mubr.f32.gmra.mrb[0].mxu0 %v537
    %v1109 = vpop.f32.mrb[0].mxu0
    %v1110 = vadd.f32 0.0, %v1109
    %v1111 = vpop.f32.mrb[0].mxu0
    %1112 = vmatprep.mubr.f32.mxu0 0.0
    %1113 = vmatmul.mubr.f32.gmra.mrb[0].mxu0 %v540
    %v1114 = vpop.f32.mrb[0].mxu0
    %v1115 = vadd.f32 0.0, %v1114
    %v1116 = vpop.f32.mrb[0].mxu0
    %1117 = vmatprep.mubr.f32.mxu0 0.0
    %1118 = vmatmul.mubr.f32.gmra.mrb[0].mxu0 %v543
    %v1119 = vpop.f32.mrb[0].mxu0
    %v1120 = vadd.f32 0.0, %v1119
    %v1121 = vpop.f32.mrb[0].mxu0
    %1122 = vmatprep.mubr.f32.mxu0 0.0
    %1123 = vmatmul.mubr.f32.gmra.mrb[0].mxu0 %v546
    %v1124 = vpop.f32.mrb[0].mxu0
    %v1125 = vadd.f32 0.0, %v1124
    %v1126 = vpop.f32.mrb[0].mxu0
    %1127 = vmatprep.mubr.f32.mxu0 0.0
    %1128 = vmatmul.mubr.f32.gmra.mrb[0].mxu0 %v549
    %v1129 = vpop.f32.mrb[0].mxu0
    %v1130 = vadd.f32 0.0, %v1129
    %v1131 = vpop.f32.mrb[0].mxu0
    %1132 = vmatprep.mubr.f32.mxu0 0.0
    %1133 = vmatmul.mubr.f32.gmra.mrb[0].mxu0 %v552
    %v1134 = vpop.f32.mrb[0].mxu0
    %v1135 = vadd.f32 0.0, %v1134
    %v1136 = vpop.f32.mrb[0].mxu0
    %1137 = vmatprep.mubr.f32.mxu0 0.0
    %1138 = vmatmul.mubr.f32.gmra.mrb[0].mxu0 %v555
    %v1139 = vpop.f32.mrb[0].mxu0
    %v1140 = vadd.f32 0.0, %v1139
    %v1141 = vpop.f32.mrb[0].mxu0
    %1142 = vmatprep.mubr.f32.mxu0 0.0
    %1143 = vmatmul.mubr.f32.gmra.mrb[0].mxu0 %v558
    %v1144 = vpop.f32.mrb[0].mxu0
    %v1145 = vadd.f32 0.0, %v1144
    %v1146 = vpop.f32.mrb[0].mxu0
    %1147 = vmatprep.mubr.f32.mxu0 0.0
    %1148 = vmatmul.mubr.f32.gmra.mrb[0].mxu0 %v561
    %v1149 = vpop.f32.mrb[0].mxu0
    %v1150 = vadd.f32 0.0, %v1149
    %v1151 = vpop.f32.mrb[0].mxu0
    %1152 = vmatprep.mubr.f32.mxu0 0.0
    %1153 = vmatmul.mubr.f32.gmra.mrb[0].mxu0 %v564
    %v1154 = vpop.f32.mrb[0].mxu0
    %v1155 = vadd.f32 0.0, %v1154
    %v1156 = vpop.f32.mrb[0].mxu0
    %1157 = vmatprep.mubr.f32.mxu0 0.0
    %1158 = vmatmul.mubr.f32.gmra.mrb[0].mxu0 %v567
    %v1159 = vpop.f32.mrb[0].mxu0
    %v1160 = vadd.f32 0.0, %v1159
    %v1161 = vpop.f32.mrb[0].mxu0
    %1162 = vmatprep.mubr.f32.mxu0 0.0
    %1163 = vmatmul.mubr.f32.gmra.mrb[0].mxu0 %v570
    %v1164 = vpop.f32.mrb[0].mxu0
    %v1165 = vadd.f32 0.0, %v1164
    %v1166 = vpop.f32.mrb[0].mxu0
    %1167 = vmatprep.mubr.f32.mxu0 0.0
    %1168 = vmatmul.mubr.f32.gmra.mrb[0].mxu0 %v573
    %v1169 = vpop.f32.mrb[0].mxu0
    %v1170 = vadd.f32 0.0, %v1169
    %v1171 = vpop.f32.mrb[0].mxu0
    %1172 = vmatprep.mubr.f32.mxu0 0.0
    %1173 = vmatmul.mubr.f32.gmra.mrb[0].mxu0 %v576
    %v1174 = vpop.f32.mrb[0].mxu0
    %v1175 = vadd.f32 0.0, %v1174
    %v1176 = vpop.f32.mrb[0].mxu0
    %1177 = vmatprep.mubr.f32.mxu0 0.0
    %1178 = vmatmul.mubr.f32.gmra.mrb[0].mxu0 %v579
    %v1179 = vpop.f32.mrb[0].mxu0
    %v1180 = vadd.f32 0.0, %v1179
    %v1181 = vpop.f32.mrb[0].mxu0
    %1182 = vmatprep.mubr.f32.mxu0 0.0
    %1183 = vmatmul.mubr.f32.gmra.mrb[0].mxu0 %v582
    %v1184 = vpop.f32.mrb[0].mxu0
    %v1185 = vadd.f32 0.0, %v1184
    %v1186 = vpop.f32.mrb[0].mxu0
    %1187 = vmatprep.mubr.f32.mxu0 0.0
    %1188 = vmatmul.mubr.f32.gmra.mrb[0].mxu0 %v585
    %v1189 = vpop.f32.mrb[0].mxu0
    %v1190 = vadd.f32 0.0, %v1189
    %v1191 = vpop.f32.mrb[0].mxu0
    %1192 = vmatprep.mubr.f32.mxu0 0.0
    %1193 = vmatmul.mubr.f32.gmra.mrb[0].mxu0 %v588
    %v1194 = vpop.f32.mrb[0].mxu0
    %v1195 = vadd.f32 0.0, %v1194
    %v1196 = vpop.f32.mrb[0].mxu0
    %1197 = vmatprep.mubr.f32.mxu0 0.0
    %1198 = vmatmul.mubr.f32.gmra.mrb[0].mxu0 %v591
    %v1199 = vpop.f32.mrb[0].mxu0
    %v1200 = vadd.f32 0.0, %v1199
    %v1201 = vpop.f32.mrb[0].mxu0
    %1202 = vmatprep.mubr.f32.mxu0 0.0
    %1203 = vmatmul.mubr.f32.gmra.mrb[0].mxu0 %v594
    %v1204 = vpop.f32.mrb[0].mxu0
    %v1205 = vadd.f32 0.0, %v1204
    %v1206 = vpop.f32.mrb[0].mxu0
    %1207 = vmatprep.mubr.f32.mxu0 0.0
    %1208 = vmatmul.mubr.f32.gmra.mrb[0].mxu0 %v597
    %v1209 = vpop.f32.mrb[0].mxu0
    %v1210 = vadd.f32 0.0, %v1209
    %v1211 = vpop.f32.mrb[0].mxu0
    %1212 = vmatprep.mubr.f32.mxu0 0.0
    %1213 = vmatmul.mubr.f32.gmra.mrb[0].mxu0 %v600
    %v1214 = vpop.f32.mrb[0].mxu0
    %v1215 = vadd.f32 0.0, %v1214
    %v1216 = vpop.f32.mrb[0].mxu0
    %1217 = vmatprep.mubr.f32.mxu0 0.0
    %1218 = vmatmul.mubr.f32.gmra.mrb[0].mxu0 %v603
    %v1219 = vpop.f32.mrb[0].mxu0
    %v1220 = vadd.f32 0.0, %v1219
    %v1221 = vpop.f32.mrb[0].mxu0
    %1222 = vmatprep.mubr.f32.mxu0 0.0
    %1223 = vmatmul.mubr.f32.gmra.mrb[0].mxu0 %v606
    %v1224 = vpop.f32.mrb[0].mxu0
    %v1225 = vadd.f32 0.0, %v1224
    %v1226 = vpop.f32.mrb[0].mxu0
    %1227 = vdwg.mxu0
    %v1229 = vsel %vm274, %v48, 0
    %v1232 = vsel %vm274, %v49, 0
    %v1235 = vsel %vm274, %v50, 0
    %v1238 = vsel %vm274, %v51, 0
    %v1241 = vsel %vm274, %v52, 0
    %v1244 = vsel %vm274, %v53, 0
    %v1247 = vsel %vm274, %v54, 0
    %v1250 = vsel %vm274, %v55, 0
    %v1253 = vsel %vm274, %v56, 0
    %v1256 = vsel %vm274, %v57, 0
    %v1259 = vsel %vm274, %v58, 0
    %v1262 = vsel %vm274, %v59, 0
    %v1265 = vsel %vm274, %v60, 0
    %v1268 = vsel %vm274, %v61, 0
    %v1271 = vsel %vm274, %v62, 0
    %v1274 = vsel %vm274, %v63, 0
    %v1277 = vsel %vm274, %v64, 0
    %v1280 = vsel %vm274, %v65, 0
    %v1283 = vsel %vm274, %v66, 0
    %v1286 = vsel %vm274, %v67, 0
    %v1289 = vsel %vm274, %v68, 0
    %v1292 = vsel %vm274, %v69, 0
    %v1295 = vsel %vm274, %v70, 0
    %v1298 = vsel %vm274, %v71, 0
    %v1301 = vsel %vm274, %v72, 0
    %v1304 = vsel %vm274, %v73, 0
    %v1307 = vsel %vm274, %v74, 0
    %v1310 = vsel %vm274, %v75, 0
    %v1313 = vsel %vm274, %v76, 0
    %v1316 = vsel %vm274, %v77, 0
    %v1319 = vsel %vm274, %v78, 0
    %v1322 = vsel %vm274, %v79, 0
    %v1325 = vsel %vm274, %v80, 0
    %v1328 = vsel %vm274, %v81, 0
    %v1331 = vsel %vm274, %v82, 0
    %v1334 = vsel %vm274, %v83, 0
    %v1337 = vsel %vm274, %v84, 0
    %v1340 = vsel %vm274, %v85, 0
    %v1343 = vsel %vm274, %v86, 0
    %v1346 = vsel %vm274, %v87, 0
    %v1349 = vsel %vm274, %v88, 0
    %v1352 = vsel %vm274, %v89, 0
    %v1355 = vsel %vm274, %v90, 0
    %v1358 = vsel %vm274, %v91, 0
    %v1361 = vsel %vm274, %v92, 0
    %v1364 = vsel %vm274, %v93, 0
    %v1367 = vsel %vm274, %v94, 0
    %v1370 = vsel %vm274, %v95, 0
    %v1373 = vsel %vm274, %v96, 0
    %v1376 = vsel %vm274, %v97, 0
    %v1379 = vsel %vm274, %v98, 0
    %v1382 = vsel %vm274, %v99, 0
    %v1385 = vsel %vm274, %v100, 0
    %v1388 = vsel %vm274, %v101, 0
    %v1391 = vsel %vm274, %v102, 0
    %v1394 = vsel %vm274, %v103, 0
    %v1397 = vsel %vm274, %v104, 0
    %v1400 = vsel %vm274, %v105, 0
    %v1403 = vsel %vm274, %v106, 0
    %v1406 = vsel %vm274, %v107, 0
    %v1409 = vsel %vm274, %v108, 0
    %v1412 = vsel %vm274, %v109, 0
    %v1415 = vsel %vm274, %v110, 0
    %v1418 = vsel %vm274, %v111, 0
    %v1421 = vsel %vm274, %v112, 0
    %v1424 = vsel %vm274, %v113, 0
    %v1427 = vsel %vm274, %v114, 0
    %v1430 = vsel %vm274, %v115, 0
    %v1433 = vsel %vm274, %v116, 0
    %v1436 = vsel %vm274, %v117, 0
    %v1439 = vsel %vm274, %v118, 0
    %v1442 = vsel %vm274, %v119, 0
    %v1445 = vsel %vm274, %v120, 0
    %v1448 = vsel %vm274, %v121, 0
    %v1451 = vsel %vm274, %v122, 0
    %v1454 = vsel %vm274, %v123, 0
    %v1457 = vsel %vm274, %v124, 0
    %v1460 = vsel %vm274, %v125, 0
    %v1463 = vsel %vm274, %v126, 0
    %v1466 = vsel %vm274, %v127, 0
    %v1469 = vsel %vm274, %v128, 0
    %v1472 = vsel %vm274, %v129, 0
    %v1475 = vsel %vm274, %v130, 0
    %v1478 = vsel %vm274, %v131, 0
    %v1481 = vsel %vm274, %v132, 0
    %v1484 = vsel %vm274, %v133, 0
    %v1487 = vsel %vm274, %v134, 0
    %v1490 = vsel %vm274, %v135, 0
    %v1493 = vsel %vm274, %v136, 0
    %v1496 = vsel %vm274, %v137, 0
    %v1499 = vsel %vm274, %v138, 0
    %v1502 = vsel %vm274, %v139, 0
    %v1505 = vsel %vm274, %v140, 0
    %v1508 = vsel %vm274, %v141, 0
    %v1511 = vsel %vm274, %v142, 0
    %v1514 = vsel %vm274, %v143, 0
    %v1517 = vsel %vm274, %v144, 0
    %v1520 = vsel %vm274, %v145, 0
    %v1523 = vsel %vm274, %v146, 0
    %v1526 = vsel %vm274, %v147, 0
    %v1529 = vsel %vm274, %v148, 0
    %v1532 = vsel %vm274, %v149, 0
    %v1535 = vsel %vm274, %v150, 0
    %v1538 = vsel %vm274, %v151, 0
    %v1541 = vsel %vm274, %v152, 0
    %v1544 = vsel %vm274, %v153, 0
    %v1547 = vsel %vm274, %v154, 0
    %v1550 = vsel %vm274, %v155, 0
    %v1553 = vsel %vm274, %v156, 0
    %v1556 = vsel %vm274, %v157, 0
    %v1559 = vsel %vm274, %v158, 0
    %1561 = vmatprep.subr.mxu0 0.0
    %1562 = vmatpush1.msra.mxu0 %v159
    %1563 = vmatprep.subr.mxu0 0.0
    %1564 = vmatpush1.msra.mxu0 %v160
    %1565 = vmatprep.subr.mxu0 0.0
    %1566 = vmatpush1.msra.mxu0 0.0
    %1567 = vmatprep.subr.mxu0 0.0
    %1568 = vmatpush1.msra.mxu0 0.0
    %1569 = vmatprep.subr.mxu0 0.0
    %1570 = vmatpush1.msra.mxu0 0.0
    %1571 = vmatprep.subr.mxu0 0.0
    %1572 = vmatpush1.msra.mxu0 0.0
    %1573 = vmatprep.subr.mxu0 0.0
    %1574 = vmatpush1.msra.mxu0 0.0
    %1575 = vmatprep.subr.mxu0 0.0
    %1576 = vmatpush1.msra.mxu0 0.0
    %1577 = vmatprep.subr.mxu0 0.0
    %1578 = vmatpush1.msra.mxu0 0.0
    %1579 = vmatprep.subr.mxu0 0.0
    %1580 = vmatpush1.msra.mxu0 0.0
    %1581 = vmatprep.subr.mxu0 0.0
    %1582 = vmatpush1.msra.mxu0 0.0
    %1583 = vmatprep.subr.mxu0 0.0
    %1584 = vmatpush1.msra.mxu0 0.0
    %1585 = vmatprep.subr.mxu0 0.0
    %1586 = vmatpush1.msra.mxu0 0.0
    %1587 = vmatprep.subr.mxu0 0.0
    %1588 = vmatpush1.msra.mxu0 0.0
    %1589 = vmatprep.subr.mxu0 0.0
    %1590 = vmatpush1.msra.mxu0 0.0
    %1591 = vmatprep.subr.mxu0 0.0
    %1592 = vmatpush1.msra.mxu0 0.0
    %1593 = vmatprep.subr.mxu0 0.0
    %1594 = vmatpush1.msra.mxu0 0.0
    %1595 = vmatprep.subr.mxu0 0.0
    %1596 = vmatpush1.msra.mxu0 0.0
    %1597 = vmatprep.subr.mxu0 0.0
    %1598 = vmatpush1.msra.mxu0 0.0
    %1599 = vmatprep.subr.mxu0 0.0
    %1600 = vmatpush1.msra.mxu0 0.0
    %1601 = vmatprep.subr.mxu0 0.0
    %1602 = vmatpush1.msra.mxu0 0.0
    %1603 = vmatprep.subr.mxu0 0.0
    %1604 = vmatpush1.msra.mxu0 0.0
    %1605 = vmatprep.subr.mxu0 0.0
    %1606 = vmatpush1.msra.mxu0 0.0
    %1607 = vmatprep.subr.mxu0 0.0
    %1608 = vmatpush1.msra.mxu0 0.0
    %1609 = vmatprep.subr.mxu0 0.0
    %1610 = vmatpush1.msra.mxu0 0.0
    %1611 = vmatprep.subr.mxu0 0.0
    %1612 = vmatpush1.msra.mxu0 0.0
    %1613 = vmatprep.subr.mxu0 0.0
    %1614 = vmatpush1.msra.mxu0 0.0
    %1615 = vmatprep.subr.mxu0 0.0
    %1616 = vmatpush1.msra.mxu0 0.0
    %1617 = vmatprep.subr.mxu0 0.0
    %1618 = vmatpush1.msra.mxu0 0.0
    %1619 = vmatprep.subr.mxu0 0.0
    %1620 = vmatpush1.msra.mxu0 0.0
    %1621 = vmatprep.subr.mxu0 0.0
    %1622 = vmatpush1.msra.mxu0 0.0
    %1623 = vmatprep.subr.mxu0 0.0
    %1624 = vmatpush1.msra.mxu0 0.0
    %1625 = vmatprep.mubr.f32.mxu0 0.0
    %1626 = vmatmul.mubr.f32.gmra.mrb[0].mxu0 %v1229
    %v1627 = vpop.f32.mrb[0].mxu0
    %v1628 = vadd.f32 %v675, %v1627
    %v1629 = vpop.f32.mrb[0].mxu0
    %1630 = vmatprep.mubr.f32.mxu0 0.0
    %1631 = vmatmul.mubr.f32.gmra.mrb[0].mxu0 %v1232
    %v1632 = vpop.f32.mrb[0].mxu0
    %v1633 = vadd.f32 %v680, %v1632
    %v1634 = vpop.f32.mrb[0].mxu0
    %1635 = vmatprep.mubr.f32.mxu0 0.0
    %1636 = vmatmul.mubr.f32.gmra.mrb[0].mxu0 %v1235
    %v1637 = vpop.f32.mrb[0].mxu0
    %v1638 = vadd.f32 %v685, %v1637
    %v1639 = vpop.f32.mrb[0].mxu0
    %1640 = vmatprep.mubr.f32.mxu0 0.0
    %1641 = vmatmul.mubr.f32.gmra.mrb[0].mxu0 %v1238
    %v1642 = vpop.f32.mrb[0].mxu0
    %v1643 = vadd.f32 %v690, %v1642
    %v1644 = vpop.f32.mrb[0].mxu0
    %1645 = vmatprep.mubr.f32.mxu0 0.0
    %1646 = vmatmul.mubr.f32.gmra.mrb[0].mxu0 %v1241
    %v1647 = vpop.f32.mrb[0].mxu0
    %v1648 = vadd.f32 %v695, %v1647
    %v1649 = vpop.f32.mrb[0].mxu0
    %1650 = vmatprep.mubr.f32.mxu0 0.0
    %1651 = vmatmul.mubr.f32.gmra.mrb[0].mxu0 %v1244
    %v1652 = vpop.f32.mrb[0].mxu0
    %v1653 = vadd.f32 %v700, %v1652
    %v1654 = vpop.f32.mrb[0].mxu0
    %1655 = vmatprep.mubr.f32.mxu0 0.0
    %1656 = vmatmul.mubr.f32.gmra.mrb[0].mxu0 %v1247
    %v1657 = vpop.f32.mrb[0].mxu0
    %v1658 = vadd.f32 %v705, %v1657
    %v1659 = vpop.f32.mrb[0].mxu0
    %1660 = vmatprep.mubr.f32.mxu0 0.0
    %1661 = vmatmul.mubr.f32.gmra.mrb[0].mxu0 %v1250
    %v1662 = vpop.f32.mrb[0].mxu0
    %v1663 = vadd.f32 %v710, %v1662
    %v1664 = vpop.f32.mrb[0].mxu0
    %1665 = vmatprep.mubr.f32.mxu0 0.0
    %1666 = vmatmul.mubr.f32.gmra.mrb[0].mxu0 %v1253
    %v1667 = vpop.f32.mrb[0].mxu0
    %v1668 = vadd.f32 %v715, %v1667
    %v1669 = vpop.f32.mrb[0].mxu0
    %1670 = vmatprep.mubr.f32.mxu0 0.0
    %1671 = vmatmul.mubr.f32.gmra.mrb[0].mxu0 %v1256
    %v1672 = vpop.f32.mrb[0].mxu0
    %v1673 = vadd.f32 %v720, %v1672
    %v1674 = vpop.f32.mrb[0].mxu0
    %1675 = vmatprep.mubr.f32.mxu0 0.0
    %1676 = vmatmul.mubr.f32.gmra.mrb[0].mxu0 %v1259
    %v1677 = vpop.f32.mrb[0].mxu0
    %v1678 = vadd.f32 %v725, %v1677
    %v1679 = vpop.f32.mrb[0].mxu0
    %1680 = vmatprep.mubr.f32.mxu0 0.0
    %1681 = vmatmul.mubr.f32.gmra.mrb[0].mxu0 %v1262
    %v1682 = vpop.f32.mrb[0].mxu0
    %v1683 = vadd.f32 %v730, %v1682
    %v1684 = vpop.f32.mrb[0].mxu0
    %1685 = vmatprep.mubr.f32.mxu0 0.0
    %1686 = vmatmul.mubr.f32.gmra.mrb[0].mxu0 %v1265
    %v1687 = vpop.f32.mrb[0].mxu0
    %v1688 = vadd.f32 %v735, %v1687
    %v1689 = vpop.f32.mrb[0].mxu0
    %1690 = vmatprep.mubr.f32.mxu0 0.0
    %1691 = vmatmul.mubr.f32.gmra.mrb[0].mxu0 %v1268
    %v1692 = vpop.f32.mrb[0].mxu0
    %v1693 = vadd.f32 %v740, %v1692
    %v1694 = vpop.f32.mrb[0].mxu0
    %1695 = vmatprep.mubr.f32.mxu0 0.0
    %1696 = vmatmul.mubr.f32.gmra.mrb[0].mxu0 %v1271
    %v1697 = vpop.f32.mrb[0].mxu0
    %v1698 = vadd.f32 %v745, %v1697
    %v1699 = vpop.f32.mrb[0].mxu0
    %1700 = vmatprep.mubr.f32.mxu0 0.0
    %1701 = vmatmul.mubr.f32.gmra.mrb[0].mxu0 %v1274
    %v1702 = vpop.f32.mrb[0].mxu0
    %v1703 = vadd.f32 %v750, %v1702
    %v1704 = vpop.f32.mrb[0].mxu0
    %1705 = vmatprep.mubr.f32.mxu0 0.0
    %1706 = vmatmul.mubr.f32.gmra.mrb[0].mxu0 %v1277
    %v1707 = vpop.f32.mrb[0].mxu0
    %v1708 = vadd.f32 %v755, %v1707
    %v1709 = vpop.f32.mrb[0].mxu0
    %1710 = vmatprep.mubr.f32.mxu0 0.0
    %1711 = vmatmul.mubr.f32.gmra.mrb[0].mxu0 %v1280
    %v1712 = vpop.f32.mrb[0].mxu0
    %v1713 = vadd.f32 %v760, %v1712
    %v1714 = vpop.f32.mrb[0].mxu0
    %1715 = vmatprep.mubr.f32.mxu0 0.0
    %1716 = vmatmul.mubr.f32.gmra.mrb[0].mxu0 %v1283
    %v1717 = vpop.f32.mrb[0].mxu0
    %v1718 = vadd.f32 %v765, %v1717
    %v1719 = vpop.f32.mrb[0].mxu0
    %1720 = vmatprep.mubr.f32.mxu0 0.0
    %1721 = vmatmul.mubr.f32.gmra.mrb[0].mxu0 %v1286
    %v1722 = vpop.f32.mrb[0].mxu0
    %v1723 = vadd.f32 %v770, %v1722
    %v1724 = vpop.f32.mrb[0].mxu0
    %1725 = vmatprep.mubr.f32.mxu0 0.0
    %1726 = vmatmul.mubr.f32.gmra.mrb[0].mxu0 %v1289
    %v1727 = vpop.f32.mrb[0].mxu0
    %v1728 = vadd.f32 %v775, %v1727
    %v1729 = vpop.f32.mrb[0].mxu0
    %1730 = vmatprep.mubr.f32.mxu0 0.0
    %1731 = vmatmul.mubr.f32.gmra.mrb[0].mxu0 %v1292
    %v1732 = vpop.f32.mrb[0].mxu0
    %v1733 = vadd.f32 %v780, %v1732
    %v1734 = vpop.f32.mrb[0].mxu0
    %1735 = vmatprep.mubr.f32.mxu0 0.0
    %1736 = vmatmul.mubr.f32.gmra.mrb[0].mxu0 %v1295
    %v1737 = vpop.f32.mrb[0].mxu0
    %v1738 = vadd.f32 %v785, %v1737
    %v1739 = vpop.f32.mrb[0].mxu0
    %1740 = vmatprep.mubr.f32.mxu0 0.0
    %1741 = vmatmul.mubr.f32.gmra.mrb[0].mxu0 %v1298
    %v1742 = vpop.f32.mrb[0].mxu0
    %v1743 = vadd.f32 %v790, %v1742
    %v1744 = vpop.f32.mrb[0].mxu0
    %1745 = vmatprep.mubr.f32.mxu0 0.0
    %1746 = vmatmul.mubr.f32.gmra.mrb[0].mxu0 %v1301
    %v1747 = vpop.f32.mrb[0].mxu0
    %v1748 = vadd.f32 %v795, %v1747
    %v1749 = vpop.f32.mrb[0].mxu0
    %1750 = vmatprep.mubr.f32.mxu0 0.0
    %1751 = vmatmul.mubr.f32.gmra.mrb[0].mxu0 %v1304
    %v1752 = vpop.f32.mrb[0].mxu0
    %v1753 = vadd.f32 %v800, %v1752
    %v1754 = vpop.f32.mrb[0].mxu0
    %1755 = vmatprep.mubr.f32.mxu0 0.0
    %1756 = vmatmul.mubr.f32.gmra.mrb[0].mxu0 %v1307
    %v1757 = vpop.f32.mrb[0].mxu0
    %v1758 = vadd.f32 %v805, %v1757
    %v1759 = vpop.f32.mrb[0].mxu0
    %1760 = vmatprep.mubr.f32.mxu0 0.0
    %1761 = vmatmul.mubr.f32.gmra.mrb[0].mxu0 %v1310
    %v1762 = vpop.f32.mrb[0].mxu0
    %v1763 = vadd.f32 %v810, %v1762
    %v1764 = vpop.f32.mrb[0].mxu0
    %1765 = vmatprep.mubr.f32.mxu0 0.0
    %1766 = vmatmul.mubr.f32.gmra.mrb[0].mxu0 %v1313
    %v1767 = vpop.f32.mrb[0].mxu0
    %v1768 = vadd.f32 %v815, %v1767
    %v1769 = vpop.f32.mrb[0].mxu0
    %1770 = vmatprep.mubr.f32.mxu0 0.0
    %1771 = vmatmul.mubr.f32.gmra.mrb[0].mxu0 %v1316
    %v1772 = vpop.f32.mrb[0].mxu0
    %v1773 = vadd.f32 %v820, %v1772
    %v1774 = vpop.f32.mrb[0].mxu0
    %1775 = vmatprep.mubr.f32.mxu0 0.0
    %1776 = vmatmul.mubr.f32.gmra.mrb[0].mxu0 %v1319
    %v1777 = vpop.f32.mrb[0].mxu0
    %v1778 = vadd.f32 %v825, %v1777
    %v1779 = vpop.f32.mrb[0].mxu0
    %1780 = vmatprep.mubr.f32.mxu0 0.0
    %1781 = vmatmul.mubr.f32.gmra.mrb[0].mxu0 %v1322
    %v1782 = vpop.f32.mrb[0].mxu0
    %v1783 = vadd.f32 %v830, %v1782
    %v1784 = vpop.f32.mrb[0].mxu0
    %1785 = vmatprep.mubr.f32.mxu0 0.0
    %1786 = vmatmul.mubr.f32.gmra.mrb[0].mxu0 %v1325
    %v1787 = vpop.f32.mrb[0].mxu0
    %v1788 = vadd.f32 %v835, %v1787
    %v1789 = vpop.f32.mrb[0].mxu0
    %1790 = vmatprep.mubr.f32.mxu0 0.0
    %1791 = vmatmul.mubr.f32.gmra.mrb[0].mxu0 %v1328
    %v1792 = vpop.f32.mrb[0].mxu0
    %v1793 = vadd.f32 %v840, %v1792
    %v1794 = vpop.f32.mrb[0].mxu0
    %1795 = vmatprep.mubr.f32.mxu0 0.0
    %1796 = vmatmul.mubr.f32.gmra.mrb[0].mxu0 %v1331
    %v1797 = vpop.f32.mrb[0].mxu0
    %v1798 = vadd.f32 %v845, %v1797
    %v1799 = vpop.f32.mrb[0].mxu0
    %1800 = vmatprep.mubr.f32.mxu0 0.0
    %1801 = vmatmul.mubr.f32.gmra.mrb[0].mxu0 %v1334
    %v1802 = vpop.f32.mrb[0].mxu0
    %v1803 = vadd.f32 %v850, %v1802
    %v1804 = vpop.f32.mrb[0].mxu0
    %1805 = vmatprep.mubr.f32.mxu0 0.0
    %1806 = vmatmul.mubr.f32.gmra.mrb[0].mxu0 %v1337
    %v1807 = vpop.f32.mrb[0].mxu0
    %v1808 = vadd.f32 %v855, %v1807
    %v1809 = vpop.f32.mrb[0].mxu0
    %1810 = vmatprep.mubr.f32.mxu0 0.0
    %1811 = vmatmul.mubr.f32.gmra.mrb[0].mxu0 %v1340
    %v1812 = vpop.f32.mrb[0].mxu0
    %v1813 = vadd.f32 %v860, %v1812
    %v1814 = vpop.f32.mrb[0].mxu0
    %1815 = vmatprep.mubr.f32.mxu0 0.0
    %1816 = vmatmul.mubr.f32.gmra.mrb[0].mxu0 %v1343
    %v1817 = vpop.f32.mrb[0].mxu0
    %v1818 = vadd.f32 %v865, %v1817
    %v1819 = vpop.f32.mrb[0].mxu0
    %1820 = vmatprep.mubr.f32.mxu0 0.0
    %1821 = vmatmul.mubr.f32.gmra.mrb[0].mxu0 %v1346
    %v1822 = vpop.f32.mrb[0].mxu0
    %v1823 = vadd.f32 %v870, %v1822
    %v1824 = vpop.f32.mrb[0].mxu0
    %1825 = vmatprep.mubr.f32.mxu0 0.0
    %1826 = vmatmul.mubr.f32.gmra.mrb[0].mxu0 %v1349
    %v1827 = vpop.f32.mrb[0].mxu0
    %v1828 = vadd.f32 %v875, %v1827
    %v1829 = vpop.f32.mrb[0].mxu0
    %1830 = vmatprep.mubr.f32.mxu0 0.0
    %1831 = vmatmul.mubr.f32.gmra.mrb[0].mxu0 %v1352
    %v1832 = vpop.f32.mrb[0].mxu0
    %v1833 = vadd.f32 %v880, %v1832
    %v1834 = vpop.f32.mrb[0].mxu0
    %1835 = vmatprep.mubr.f32.mxu0 0.0
    %1836 = vmatmul.mubr.f32.gmra.mrb[0].mxu0 %v1355
    %v1837 = vpop.f32.mrb[0].mxu0
    %v1838 = vadd.f32 %v885, %v1837
    %v1839 = vpop.f32.mrb[0].mxu0
    %1840 = vmatprep.mubr.f32.mxu0 0.0
    %1841 = vmatmul.mubr.f32.gmra.mrb[0].mxu0 %v1358
    %v1842 = vpop.f32.mrb[0].mxu0
    %v1843 = vadd.f32 %v890, %v1842
    %v1844 = vpop.f32.mrb[0].mxu0
    %1845 = vmatprep.mubr.f32.mxu0 0.0
    %1846 = vmatmul.mubr.f32.gmra.mrb[0].mxu0 %v1361
    %v1847 = vpop.f32.mrb[0].mxu0
    %v1848 = vadd.f32 %v895, %v1847
    %v1849 = vpop.f32.mrb[0].mxu0
    %1850 = vmatprep.mubr.f32.mxu0 0.0
    %1851 = vmatmul.mubr.f32.gmra.mrb[0].mxu0 %v1364
    %v1852 = vpop.f32.mrb[0].mxu0
    %v1853 = vadd.f32 %v900, %v1852
    %v1854 = vpop.f32.mrb[0].mxu0
    %1855 = vmatprep.mubr.f32.mxu0 0.0
    %1856 = vmatmul.mubr.f32.gmra.mrb[0].mxu0 %v1367
    %v1857 = vpop.f32.mrb[0].mxu0
    %v1858 = vadd.f32 %v905, %v1857
    %v1859 = vpop.f32.mrb[0].mxu0
    %1860 = vmatprep.mubr.f32.mxu0 0.0
    %1861 = vmatmul.mubr.f32.gmra.mrb[0].mxu0 %v1370
    %v1862 = vpop.f32.mrb[0].mxu0
    %v1863 = vadd.f32 %v910, %v1862
    %v1864 = vpop.f32.mrb[0].mxu0
    %1865 = vmatprep.mubr.f32.mxu0 0.0
    %1866 = vmatmul.mubr.f32.gmra.mrb[0].mxu0 %v1373
    %v1867 = vpop.f32.mrb[0].mxu0
    %v1868 = vadd.f32 %v915, %v1867
    %v1869 = vpop.f32.mrb[0].mxu0
    %1870 = vmatprep.mubr.f32.mxu0 0.0
    %1871 = vmatmul.mubr.f32.gmra.mrb[0].mxu0 %v1376
    %v1872 = vpop.f32.mrb[0].mxu0
    %v1873 = vadd.f32 %v920, %v1872
    %v1874 = vpop.f32.mrb[0].mxu0
    %1875 = vmatprep.mubr.f32.mxu0 0.0
    %1876 = vmatmul.mubr.f32.gmra.mrb[0].mxu0 %v1379
    %v1877 = vpop.f32.mrb[0].mxu0
    %v1878 = vadd.f32 %v925, %v1877
    %v1879 = vpop.f32.mrb[0].mxu0
    %1880 = vmatprep.mubr.f32.mxu0 0.0
    %1881 = vmatmul.mubr.f32.gmra.mrb[0].mxu0 %v1382
    %v1882 = vpop.f32.mrb[0].mxu0
    %v1883 = vadd.f32 %v930, %v1882
    %v1884 = vpop.f32.mrb[0].mxu0
    %1885 = vmatprep.mubr.f32.mxu0 0.0
    %1886 = vmatmul.mubr.f32.gmra.mrb[0].mxu0 %v1385
    %v1887 = vpop.f32.mrb[0].mxu0
    %v1888 = vadd.f32 %v935, %v1887
    %v1889 = vpop.f32.mrb[0].mxu0
    %1890 = vmatprep.mubr.f32.mxu0 0.0
    %1891 = vmatmul.mubr.f32.gmra.mrb[0].mxu0 %v1388
    %v1892 = vpop.f32.mrb[0].mxu0
    %v1893 = vadd.f32 %v940, %v1892
    %v1894 = vpop.f32.mrb[0].mxu0
    %1895 = vmatprep.mubr.f32.mxu0 0.0
    %1896 = vmatmul.mubr.f32.gmra.mrb[0].mxu0 %v1391
    %v1897 = vpop.f32.mrb[0].mxu0
    %v1898 = vadd.f32 %v945, %v1897
    %v1899 = vpop.f32.mrb[0].mxu0
    %1900 = vmatprep.mubr.f32.mxu0 0.0
    %1901 = vmatmul.mubr.f32.gmra.mrb[0].mxu0 %v1394
    %v1902 = vpop.f32.mrb[0].mxu0
    %v1903 = vadd.f32 %v950, %v1902
    %v1904 = vpop.f32.mrb[0].mxu0
    %1905 = vmatprep.mubr.f32.mxu0 0.0
    %1906 = vmatmul.mubr.f32.gmra.mrb[0].mxu0 %v1397
    %v1907 = vpop.f32.mrb[0].mxu0
    %v1908 = vadd.f32 %v955, %v1907
    %v1909 = vpop.f32.mrb[0].mxu0
    %1910 = vmatprep.mubr.f32.mxu0 0.0
    %1911 = vmatmul.mubr.f32.gmra.mrb[0].mxu0 %v1400
    %v1912 = vpop.f32.mrb[0].mxu0
    %v1913 = vadd.f32 %v960, %v1912
    %v1914 = vpop.f32.mrb[0].mxu0
    %1915 = vmatprep.mubr.f32.mxu0 0.0
    %1916 = vmatmul.mubr.f32.gmra.mrb[0].mxu0 %v1403
    %v1917 = vpop.f32.mrb[0].mxu0
    %v1918 = vadd.f32 %v965, %v1917
    %v1919 = vpop.f32.mrb[0].mxu0
    %1920 = vmatprep.mubr.f32.mxu0 0.0
    %1921 = vmatmul.mubr.f32.gmra.mrb[0].mxu0 %v1406
    %v1922 = vpop.f32.mrb[0].mxu0
    %v1923 = vadd.f32 %v970, %v1922
    %v1924 = vpop.f32.mrb[0].mxu0
    %1925 = vmatprep.mubr.f32.mxu0 0.0
    %1926 = vmatmul.mubr.f32.gmra.mrb[0].mxu0 %v1409
    %v1927 = vpop.f32.mrb[0].mxu0
    %v1928 = vadd.f32 %v975, %v1927
    %v1929 = vpop.f32.mrb[0].mxu0
    %1930 = vmatprep.mubr.f32.mxu0 0.0
    %1931 = vmatmul.mubr.f32.gmra.mrb[0].mxu0 %v1412
    %v1932 = vpop.f32.mrb[0].mxu0
    %v1933 = vadd.f32 %v980, %v1932
    %v1934 = vpop.f32.mrb[0].mxu0
    %1935 = vmatprep.mubr.f32.mxu0 0.0
    %1936 = vmatmul.mubr.f32.gmra.mrb[0].mxu0 %v1415
    %v1937 = vpop.f32.mrb[0].mxu0
    %v1938 = vadd.f32 %v985, %v1937
    %v1939 = vpop.f32.mrb[0].mxu0
    %1940 = vmatprep.mubr.f32.mxu0 0.0
    %1941 = vmatmul.mubr.f32.gmra.mrb[0].mxu0 %v1418
    %v1942 = vpop.f32.mrb[0].mxu0
    %v1943 = vadd.f32 %v990, %v1942
    %v1944 = vpop.f32.mrb[0].mxu0
    %1945 = vmatprep.mubr.f32.mxu0 0.0
    %1946 = vmatmul.mubr.f32.gmra.mrb[0].mxu0 %v1421
    %v1947 = vpop.f32.mrb[0].mxu0
    %v1948 = vadd.f32 %v995, %v1947
    %v1949 = vpop.f32.mrb[0].mxu0
    %1950 = vmatprep.mubr.f32.mxu0 0.0
    %1951 = vmatmul.mubr.f32.gmra.mrb[0].mxu0 %v1424
    %v1952 = vpop.f32.mrb[0].mxu0
    %v1953 = vadd.f32 %v1000, %v1952
    %v1954 = vpop.f32.mrb[0].mxu0
    %1955 = vmatprep.mubr.f32.mxu0 0.0
    %1956 = vmatmul.mubr.f32.gmra.mrb[0].mxu0 %v1427
    %v1957 = vpop.f32.mrb[0].mxu0
    %v1958 = vadd.f32 %v1005, %v1957
    %v1959 = vpop.f32.mrb[0].mxu0
    %1960 = vmatprep.mubr.f32.mxu0 0.0
    %1961 = vmatmul.mubr.f32.gmra.mrb[0].mxu0 %v1430
    %v1962 = vpop.f32.mrb[0].mxu0
    %v1963 = vadd.f32 %v1010, %v1962
    %v1964 = vpop.f32.mrb[0].mxu0
    %1965 = vmatprep.mubr.f32.mxu0 0.0
    %1966 = vmatmul.mubr.f32.gmra.mrb[0].mxu0 %v1433
    %v1967 = vpop.f32.mrb[0].mxu0
    %v1968 = vadd.f32 %v1015, %v1967
    %v1969 = vpop.f32.mrb[0].mxu0
    %1970 = vmatprep.mubr.f32.mxu0 0.0
    %1971 = vmatmul.mubr.f32.gmra.mrb[0].mxu0 %v1436
    %v1972 = vpop.f32.mrb[0].mxu0
    %v1973 = vadd.f32 %v1020, %v1972
    %v1974 = vpop.f32.mrb[0].mxu0
    %1975 = vmatprep.mubr.f32.mxu0 0.0
    %1976 = vmatmul.mubr.f32.gmra.mrb[0].mxu0 %v1439
    %v1977 = vpop.f32.mrb[0].mxu0
    %v1978 = vadd.f32 %v1025, %v1977
    %v1979 = vpop.f32.mrb[0].mxu0
    %1980 = vmatprep.mubr.f32.mxu0 0.0
    %1981 = vmatmul.mubr.f32.gmra.mrb[0].mxu0 %v1442
    %v1982 = vpop.f32.mrb[0].mxu0
    %v1983 = vadd.f32 %v1030, %v1982
    %v1984 = vpop.f32.mrb[0].mxu0
    %1985 = vmatprep.mubr.f32.mxu0 0.0
    %1986 = vmatmul.mubr.f32.gmra.mrb[0].mxu0 %v1445
    %v1987 = vpop.f32.mrb[0].mxu0
    %v1988 = vadd.f32 %v1035, %v1987
    %v1989 = vpop.f32.mrb[0].mxu0
    %1990 = vmatprep.mubr.f32.mxu0 0.0
    %1991 = vmatmul.mubr.f32.gmra.mrb[0].mxu0 %v1448
    %v1992 = vpop.f32.mrb[0].mxu0
    %v1993 = vadd.f32 %v1040, %v1992
    %v1994 = vpop.f32.mrb[0].mxu0
    %1995 = vmatprep.mubr.f32.mxu0 0.0
    %1996 = vmatmul.mubr.f32.gmra.mrb[0].mxu0 %v1451
    %v1997 = vpop.f32.mrb[0].mxu0
    %v1998 = vadd.f32 %v1045, %v1997
    %v1999 = vpop.f32.mrb[0].mxu0
    %2000 = vmatprep.mubr.f32.mxu0 0.0
    %2001 = vmatmul.mubr.f32.gmra.mrb[0].mxu0 %v1454
    %v2002 = vpop.f32.mrb[0].mxu0
    %v2003 = vadd.f32 %v1050, %v2002
    %v2004 = vpop.f32.mrb[0].mxu0
    %2005 = vmatprep.mubr.f32.mxu0 0.0
    %2006 = vmatmul.mubr.f32.gmra.mrb[0].mxu0 %v1457
    %v2007 = vpop.f32.mrb[0].mxu0
    %v2008 = vadd.f32 %v1055, %v2007
    %v2009 = vpop.f32.mrb[0].mxu0
    %2010 = vmatprep.mubr.f32.mxu0 0.0
    %2011 = vmatmul.mubr.f32.gmra.mrb[0].mxu0 %v1460
    %v2012 = vpop.f32.mrb[0].mxu0
    %v2013 = vadd.f32 %v1060, %v2012
    %v2014 = vpop.f32.mrb[0].mxu0
    %2015 = vmatprep.mubr.f32.mxu0 0.0
    %2016 = vmatmul.mubr.f32.gmra.mrb[0].mxu0 %v1463
    %v2017 = vpop.f32.mrb[0].mxu0
    %v2018 = vadd.f32 %v1065, %v2017
    %v2019 = vpop.f32.mrb[0].mxu0
    %2020 = vmatprep.mubr.f32.mxu0 0.0
    %2021 = vmatmul.mubr.f32.gmra.mrb[0].mxu0 %v1466
    %v2022 = vpop.f32.mrb[0].mxu0
    %v2023 = vadd.f32 %v1070, %v2022
    %v2024 = vpop.f32.mrb[0].mxu0
    %2025 = vmatprep.mubr.f32.mxu0 0.0
    %2026 = vmatmul.mubr.f32.gmra.mrb[0].mxu0 %v1469
    %v2027 = vpop.f32.mrb[0].mxu0
    %v2028 = vadd.f32 %v1075, %v2027
    %v2029 = vpop.f32.mrb[0].mxu0
    %2030 = vmatprep.mubr.f32.mxu0 0.0
    %2031 = vmatmul.mubr.f32.gmra.mrb[0].mxu0 %v1472
    %v2032 = vpop.f32.mrb[0].mxu0
    %v2033 = vadd.f32 %v1080, %v2032
    %v2034 = vpop.f32.mrb[0].mxu0
    %2035 = vmatprep.mubr.f32.mxu0 0.0
    %2036 = vmatmul.mubr.f32.gmra.mrb[0].mxu0 %v1475
    %v2037 = vpop.f32.mrb[0].mxu0
    %v2038 = vadd.f32 %v1085, %v2037
    %v2039 = vpop.f32.mrb[0].mxu0
    %2040 = vmatprep.mubr.f32.mxu0 0.0
    %2041 = vmatmul.mubr.f32.gmra.mrb[0].mxu0 %v1478
    %v2042 = vpop.f32.mrb[0].mxu0
    %v2043 = vadd.f32 %v1090, %v2042
    %v2044 = vpop.f32.mrb[0].mxu0
    %2045 = vmatprep.mubr.f32.mxu0 0.0
    %2046 = vmatmul.mubr.f32.gmra.mrb[0].mxu0 %v1481
    %v2047 = vpop.f32.mrb[0].mxu0
    %v2048 = vadd.f32 %v1095, %v2047
    %v2049 = vpop.f32.mrb[0].mxu0
    %2050 = vmatprep.mubr.f32.mxu0 0.0
    %2051 = vmatmul.mubr.f32.gmra.mrb[0].mxu0 %v1484
    %v2052 = vpop.f32.mrb[0].mxu0
    %v2053 = vadd.f32 %v1100, %v2052
    %v2054 = vpop.f32.mrb[0].mxu0
    %2055 = vmatprep.mubr.f32.mxu0 0.0
    %2056 = vmatmul.mubr.f32.gmra.mrb[0].mxu0 %v1487
    %v2057 = vpop.f32.mrb[0].mxu0
    %v2058 = vadd.f32 %v1105, %v2057
    %v2059 = vpop.f32.mrb[0].mxu0
    %2060 = vmatprep.mubr.f32.mxu0 0.0
    %2061 = vmatmul.mubr.f32.gmra.mrb[0].mxu0 %v1490
    %v2062 = vpop.f32.mrb[0].mxu0
    %v2063 = vadd.f32 %v1110, %v2062
    %v2064 = vpop.f32.mrb[0].mxu0
    %2065 = vmatprep.mubr.f32.mxu0 0.0
    %2066 = vmatmul.mubr.f32.gmra.mrb[0].mxu0 %v1493
    %v2067 = vpop.f32.mrb[0].mxu0
    %v2068 = vadd.f32 %v1115, %v2067
    %v2069 = vpop.f32.mrb[0].mxu0
    %2070 = vmatprep.mubr.f32.mxu0 0.0
    %2071 = vmatmul.mubr.f32.gmra.mrb[0].mxu0 %v1496
    %v2072 = vpop.f32.mrb[0].mxu0
    %v2073 = vadd.f32 %v1120, %v2072
    %v2074 = vpop.f32.mrb[0].mxu0
    %2075 = vmatprep.mubr.f32.mxu0 0.0
    %2076 = vmatmul.mubr.f32.gmra.mrb[0].mxu0 %v1499
    %v2077 = vpop.f32.mrb[0].mxu0
    %v2078 = vadd.f32 %v1125, %v2077
    %v2079 = vpop.f32.mrb[0].mxu0
    %2080 = vmatprep.mubr.f32.mxu0 0.0
    %2081 = vmatmul.mubr.f32.gmra.mrb[0].mxu0 %v1502
    %v2082 = vpop.f32.mrb[0].mxu0
    %v2083 = vadd.f32 %v1130, %v2082
    %v2084 = vpop.f32.mrb[0].mxu0
    %2085 = vmatprep.mubr.f32.mxu0 0.0
    %2086 = vmatmul.mubr.f32.gmra.mrb[0].mxu0 %v1505
    %v2087 = vpop.f32.mrb[0].mxu0
    %v2088 = vadd.f32 %v1135, %v2087
    %v2089 = vpop.f32.mrb[0].mxu0
    %2090 = vmatprep.mubr.f32.mxu0 0.0
    %2091 = vmatmul.mubr.f32.gmra.mrb[0].mxu0 %v1508
    %v2092 = vpop.f32.mrb[0].mxu0
    %v2093 = vadd.f32 %v1140, %v2092
    %v2094 = vpop.f32.mrb[0].mxu0
    %2095 = vmatprep.mubr.f32.mxu0 0.0
    %2096 = vmatmul.mubr.f32.gmra.mrb[0].mxu0 %v1511
    %v2097 = vpop.f32.mrb[0].mxu0
    %v2098 = vadd.f32 %v1145, %v2097
    %v2099 = vpop.f32.mrb[0].mxu0
    %2100 = vmatprep.mubr.f32.mxu0 0.0
    %2101 = vmatmul.mubr.f32.gmra.mrb[0].mxu0 %v1514
    %v2102 = vpop.f32.mrb[0].mxu0
    %v2103 = vadd.f32 %v1150, %v2102
    %v2104 = vpop.f32.mrb[0].mxu0
    %2105 = vmatprep.mubr.f32.mxu0 0.0
    %2106 = vmatmul.mubr.f32.gmra.mrb[0].mxu0 %v1517
    %v2107 = vpop.f32.mrb[0].mxu0
    %v2108 = vadd.f32 %v1155, %v2107
    %v2109 = vpop.f32.mrb[0].mxu0
    %2110 = vmatprep.mubr.f32.mxu0 0.0
    %2111 = vmatmul.mubr.f32.gmra.mrb[0].mxu0 %v1520
    %v2112 = vpop.f32.mrb[0].mxu0
    %v2113 = vadd.f32 %v1160, %v2112
    %v2114 = vpop.f32.mrb[0].mxu0
    %2115 = vmatprep.mubr.f32.mxu0 0.0
    %2116 = vmatmul.mubr.f32.gmra.mrb[0].mxu0 %v1523
    %v2117 = vpop.f32.mrb[0].mxu0
    %v2118 = vadd.f32 %v1165, %v2117
    %v2119 = vpop.f32.mrb[0].mxu0
    %2120 = vmatprep.mubr.f32.mxu0 0.0
    %2121 = vmatmul.mubr.f32.gmra.mrb[0].mxu0 %v1526
    %v2122 = vpop.f32.mrb[0].mxu0
    %v2123 = vadd.f32 %v1170, %v2122
    %v2124 = vpop.f32.mrb[0].mxu0
    %2125 = vmatprep.mubr.f32.mxu0 0.0
    %2126 = vmatmul.mubr.f32.gmra.mrb[0].mxu0 %v1529
    %v2127 = vpop.f32.mrb[0].mxu0
    %v2128 = vadd.f32 %v1175, %v2127
    %v2129 = vpop.f32.mrb[0].mxu0
    %2130 = vmatprep.mubr.f32.mxu0 0.0
    %2131 = vmatmul.mubr.f32.gmra.mrb[0].mxu0 %v1532
    %v2132 = vpop.f32.mrb[0].mxu0
    %v2133 = vadd.f32 %v1180, %v2132
    %v2134 = vpop.f32.mrb[0].mxu0
    %2135 = vmatprep.mubr.f32.mxu0 0.0
    %2136 = vmatmul.mubr.f32.gmra.mrb[0].mxu0 %v1535
    %v2137 = vpop.f32.mrb[0].mxu0
    %v2138 = vadd.f32 %v1185, %v2137
    %v2139 = vpop.f32.mrb[0].mxu0
    %2140 = vmatprep.mubr.f32.mxu0 0.0
    %2141 = vmatmul.mubr.f32.gmra.mrb[0].mxu0 %v1538
    %v2142 = vpop.f32.mrb[0].mxu0
    %v2143 = vadd.f32 %v1190, %v2142
    %v2144 = vpop.f32.mrb[0].mxu0
    %2145 = vmatprep.mubr.f32.mxu0 0.0
    %2146 = vmatmul.mubr.f32.gmra.mrb[0].mxu0 %v1541
    %v2147 = vpop.f32.mrb[0].mxu0
    %v2148 = vadd.f32 %v1195, %v2147
    %v2149 = vpop.f32.mrb[0].mxu0
    %2150 = vmatprep.mubr.f32.mxu0 0.0
    %2151 = vmatmul.mubr.f32.gmra.mrb[0].mxu0 %v1544
    %v2152 = vpop.f32.mrb[0].mxu0
    %v2153 = vadd.f32 %v1200, %v2152
    %v2154 = vpop.f32.mrb[0].mxu0
    %2155 = vmatprep.mubr.f32.mxu0 0.0
    %2156 = vmatmul.mubr.f32.gmra.mrb[0].mxu0 %v1547
    %v2157 = vpop.f32.mrb[0].mxu0
    %v2158 = vadd.f32 %v1205, %v2157
    %v2159 = vpop.f32.mrb[0].mxu0
    %2160 = vmatprep.mubr.f32.mxu0 0.0
    %2161 = vmatmul.mubr.f32.gmra.mrb[0].mxu0 %v1550
    %v2162 = vpop.f32.mrb[0].mxu0
    %v2163 = vadd.f32 %v1210, %v2162
    %v2164 = vpop.f32.mrb[0].mxu0
    %2165 = vmatprep.mubr.f32.mxu0 0.0
    %2166 = vmatmul.mubr.f32.gmra.mrb[0].mxu0 %v1553
    %v2167 = vpop.f32.mrb[0].mxu0
    %v2168 = vadd.f32 %v1215, %v2167
    %v2169 = vpop.f32.mrb[0].mxu0
    %2170 = vmatprep.mubr.f32.mxu0 0.0
    %2171 = vmatmul.mubr.f32.gmra.mrb[0].mxu0 %v1556
    %v2172 = vpop.f32.mrb[0].mxu0
    %v2173 = vadd.f32 %v1220, %v2172
    %v2174 = vpop.f32.mrb[0].mxu0
    %2175 = vmatprep.mubr.f32.mxu0 0.0
    %2176 = vmatmul.mubr.f32.gmra.mrb[0].mxu0 %v1559
    %v2177 = vpop.f32.mrb[0].mxu0
    %v2178 = vadd.f32 %v1225, %v2177
    %v2179 = vpop.f32.mrb[0].mxu0
    %2180 = vdwg.mxu0
    %v2181 = vld [vmem:[%s0 + $0x2] sm:$0xff]
    %v2182 = vld [vmem:[%s0 + $0xa] sm:$0xff]
    %v2183 = vld [vmem:[%s0 + $0x12] sm:$0xff]
    %v2184 = vld [vmem:[%s0 + $0x1a] sm:$0xff]
    %v2185 = vld [vmem:[%s0 + $0x22] sm:$0xff]
    %v2186 = vld [vmem:[%s0 + $0x2a] sm:$0xff]
    %v2187 = vld [vmem:[%s0 + $0x32] sm:$0xff]
    %v2188 = vld [vmem:[%s0 + $0x3a] sm:$0xff]
    %v2189 = vld [vmem:[%s0 + $0x42] sm:$0xff]
    %v2190 = vld [vmem:[%s0 + $0x4a] sm:$0xff]
    %v2191 = vld [vmem:[%s0 + $0x52] sm:$0xff]
    %v2192 = vld [vmem:[%s0 + $0x5a] sm:$0xff]
    %v2193 = vld [vmem:[%s0 + $0x62] sm:$0xff]
    %v2194 = vld [vmem:[%s0 + $0x6a] sm:$0xff]
    %v2195 = vld [vmem:[%s0 + $0x72] sm:$0xff]
    %v2196 = vld [vmem:[%s0 + $0x7a] sm:$0xff]
    %v2197 = vld [vmem:[%s0 + $0x82] sm:$0xff]
    %v2198 = vld [vmem:[%s0 + $0x8a] sm:$0xff]
    %v2199 = vld [vmem:[%s0 + $0x92] sm:$0xff]
    %v2200 = vld [vmem:[%s0 + $0x9a] sm:$0xff]
    %v2201 = vld [vmem:[%s0 + $0xa2] sm:$0xff]
    %v2202 = vld [vmem:[%s0 + $0xaa] sm:$0xff]
    %v2203 = vld [vmem:[%s0 + $0xb2] sm:$0xff]
    %v2204 = vld [vmem:[%s0 + $0xba] sm:$0xff]
    %v2205 = vld [vmem:[%s0 + $0xc2] sm:$0xff]
    %v2206 = vld [vmem:[%s0 + $0xca] sm:$0xff]
    %v2207 = vld [vmem:[%s0 + $0xd2] sm:$0xff]
    %v2208 = vld [vmem:[%s0 + $0xda] sm:$0xff]
    %v2209 = vld [vmem:[%s0 + $0xe2] sm:$0xff]
    %v2210 = vld [vmem:[%s0 + $0xea] sm:$0xff]
    %v2211 = vld [vmem:[%s0 + $0xf2] sm:$0xff]
    %v2212 = vld [vmem:[%s0 + $0xfa] sm:$0xff]
    %v2213 = vld [vmem:[%s0 + $0x102] sm:$0xff]
    %v2214 = vld [vmem:[%s0 + $0x10a] sm:$0xff]
    %v2215 = vld [vmem:[%s0 + $0x112] sm:$0xff]
    %v2216 = vld [vmem:[%s0 + $0x11a] sm:$0xff]
    %v2217 = vld [vmem:[%s0 + $0x122] sm:$0xff]
    %v2218 = vld [vmem:[%s0 + $0x12a] sm:$0xff]
    %v2219 = vld [vmem:[%s0 + $0x132] sm:$0xff]
    %v2220 = vld [vmem:[%s0 + $0x13a] sm:$0xff]
    %v2221 = vld [vmem:[%s0 + $0x142] sm:$0xff]
    %v2222 = vld [vmem:[%s0 + $0x14a] sm:$0xff]
    %v2223 = vld [vmem:[%s0 + $0x152] sm:$0xff]
    %v2224 = vld [vmem:[%s0 + $0x15a] sm:$0xff]
    %v2225 = vld [vmem:[%s0 + $0x162] sm:$0xff]
    %v2226 = vld [vmem:[%s0 + $0x16a] sm:$0xff]
    %v2227 = vld [vmem:[%s0 + $0x172] sm:$0xff]
    %v2228 = vld [vmem:[%s0 + $0x17a] sm:$0xff]
    %v2229 = vld [vmem:[%s0 + $0x182] sm:$0xff]
    %v2230 = vld [vmem:[%s0 + $0x18a] sm:$0xff]
    %v2231 = vld [vmem:[%s0 + $0x192] sm:$0xff]
    %v2232 = vld [vmem:[%s0 + $0x19a] sm:$0xff]
    %v2233 = vld [vmem:[%s0 + $0x1a2] sm:$0xff]
    %v2234 = vld [vmem:[%s0 + $0x1aa] sm:$0xff]
    %v2235 = vld [vmem:[%s0 + $0x1b2] sm:$0xff]
    %v2236 = vld [vmem:[%s0 + $0x1ba] sm:$0xff]
    %v2237 = vld [vmem:[%s0 + $0x1c2] sm:$0xff]
    %v2238 = vld [vmem:[%s0 + $0x1ca] sm:$0xff]
    %v2239 = vld [vmem:[%s0 + $0x1d2] sm:$0xff]
    %v2240 = vld [vmem:[%s0 + $0x1da] sm:$0xff]
    %v2241 = vld [vmem:[%s0 + $0x1e2] sm:$0xff]
    %v2242 = vld [vmem:[%s0 + $0x1ea] sm:$0xff]
    %v2243 = vld [vmem:[%s0 + $0x1f2] sm:$0xff]
    %v2244 = vld [vmem:[%s0 + $0x1fa] sm:$0xff]
    %v2245 = vld [vmem:[%s0 + $0x202] sm:$0xff]
    %v2246 = vld [vmem:[%s0 + $0x20a] sm:$0xff]
    %v2247 = vld [vmem:[%s0 + $0x212] sm:$0xff]
    %v2248 = vld [vmem:[%s0 + $0x21a] sm:$0xff]
    %v2249 = vld [vmem:[%s0 + $0x222] sm:$0xff]
    %v2250 = vld [vmem:[%s0 + $0x22a] sm:$0xff]
    %v2251 = vld [vmem:[%s0 + $0x232] sm:$0xff]
    %v2252 = vld [vmem:[%s0 + $0x23a] sm:$0xff]
    %v2253 = vld [vmem:[%s0 + $0x242] sm:$0xff]
    %v2254 = vld [vmem:[%s0 + $0x24a] sm:$0xff]
    %v2255 = vld [vmem:[%s0 + $0x252] sm:$0xff]
    %v2256 = vld [vmem:[%s0 + $0x25a] sm:$0xff]
    %v2257 = vld [vmem:[%s0 + $0x262] sm:$0xff]
    %v2258 = vld [vmem:[%s0 + $0x26a] sm:$0xff]
    %v2259 = vld [vmem:[%s0 + $0x272] sm:$0xff]
    %v2260 = vld [vmem:[%s0 + $0x27a] sm:$0xff]
    %v2261 = vld [vmem:[%s0 + $0x282] sm:$0xff]
    %v2262 = vld [vmem:[%s0 + $0x28a] sm:$0xff]
    %v2263 = vld [vmem:[%s0 + $0x292] sm:$0xff]
    %v2264 = vld [vmem:[%s0 + $0x29a] sm:$0xff]
    %v2265 = vld [vmem:[%s0 + $0x2a2] sm:$0xff]
    %v2266 = vld [vmem:[%s0 + $0x2aa] sm:$0xff]
    %v2267 = vld [vmem:[%s0 + $0x2b2] sm:$0xff]
    %v2268 = vld [vmem:[%s0 + $0x2ba] sm:$0xff]
    %v2269 = vld [vmem:[%s0 + $0x2c2] sm:$0xff]
    %v2270 = vld [vmem:[%s0 + $0x2ca] sm:$0xff]
    %v2271 = vld [vmem:[%s0 + $0x2d2] sm:$0xff]
    %v2272 = vld [vmem:[%s0 + $0x2da] sm:$0xff]
    %v2273 = vld [vmem:[%s0 + $0x2e2] sm:$0xff]
    %v2274 = vld [vmem:[%s0 + $0x2ea] sm:$0xff]
    %v2275 = vld [vmem:[%s0 + $0x2f2] sm:$0xff]
    %v2276 = vld [vmem:[%s0 + $0x2fa] sm:$0xff]
    %v2277 = vld [vmem:[%s0 + $0x302] sm:$0xff]
    %v2278 = vld [vmem:[%s0 + $0x30a] sm:$0xff]
    %v2279 = vld [vmem:[%s0 + $0x312] sm:$0xff]
    %v2280 = vld [vmem:[%s0 + $0x31a] sm:$0xff]
    %v2281 = vld [vmem:[%s0 + $0x322] sm:$0xff]
    %v2282 = vld [vmem:[%s0 + $0x32a] sm:$0xff]
    %v2283 = vld [vmem:[%s0 + $0x332] sm:$0xff]
    %v2284 = vld [vmem:[%s0 + $0x33a] sm:$0xff]
    %v2285 = vld [vmem:[%s0 + $0x342] sm:$0xff]
    %v2286 = vld [vmem:[%s0 + $0x34a] sm:$0xff]
    %v2287 = vld [vmem:[%s0 + $0x352] sm:$0xff]
    %v2288 = vld [vmem:[%s0 + $0x35a] sm:$0xff]
    %v2289 = vld [vmem:[%s0 + $0x362] sm:$0xff]
    %v2290 = vld [vmem:[%s0 + $0x36a] sm:$0xff]
    %v2291 = vld [vmem:[%s0 + $0x372] sm:$0xff]
    %v2292 = vld [vmem:[#allocation7 + $0x20] sm:$0xff]
    %v2293 = vld [vmem:[#allocation7 + $0x28] sm:$0xff]
    %v2295 = vsel %vm274, %v2181, 0
    %v2298 = vsel %vm274, %v2182, 0
    %v2301 = vsel %vm274, %v2183, 0
    %v2304 = vsel %vm274, %v2184, 0
    %v2307 = vsel %vm274, %v2185, 0
    %v2310 = vsel %vm274, %v2186, 0
    %v2313 = vsel %vm274, %v2187, 0
    %v2316 = vsel %vm274, %v2188, 0
    %v2319 = vsel %vm274, %v2189, 0
    %v2322 = vsel %vm274, %v2190, 0
    %v2325 = vsel %vm274, %v2191, 0
    %v2328 = vsel %vm274, %v2192, 0
    %v2331 = vsel %vm274, %v2193, 0
    %v2334 = vsel %vm274, %v2194, 0
    %v2337 = vsel %vm274, %v2195, 0
    %v2340 = vsel %vm274, %v2196, 0
    %v2343 = vsel %vm274, %v2197, 0
    %v2346 = vsel %vm274, %v2198, 0
    %v2349 = vsel %vm274, %v2199, 0
    %v2352 = vsel %vm274, %v2200, 0
    %v2355 = vsel %vm274, %v2201, 0
    %v2358 = vsel %vm274, %v2202, 0
    %v2361 = vsel %vm274, %v2203, 0
    %v2364 = vsel %vm274, %v2204, 0
    %v2367 = vsel %vm274, %v2205, 0
    %v2370 = vsel %vm274, %v2206, 0
    %v2373 = vsel %vm274, %v2207, 0
    %v2376 = vsel %vm274, %v2208, 0
    %v2379 = vsel %vm274, %v2209, 0
    %v2382 = vsel %vm274, %v2210, 0
    %v2385 = vsel %vm274, %v2211, 0
    %v2388 = vsel %vm274, %v2212, 0
    %v2391 = vsel %vm274, %v2213, 0
    %v2394 = vsel %vm274, %v2214, 0
    %v2397 = vsel %vm274, %v2215, 0
    %v2400 = vsel %vm274, %v2216, 0
    %v2403 = vsel %vm274, %v2217, 0
    %v2406 = vsel %vm274, %v2218, 0
    %v2409 = vsel %vm274, %v2219, 0
    %v2412 = vsel %vm274, %v2220, 0
    %v2415 = vsel %vm274, %v2221, 0
    %v2418 = vsel %vm274, %v2222, 0
    %v2421 = vsel %vm274, %v2223, 0
    %v2424 = vsel %vm274, %v2224, 0
    %v2427 = vsel %vm274, %v2225, 0
    %v2430 = vsel %vm274, %v2226, 0
    %v2433 = vsel %vm274, %v2227, 0
    %v2436 = vsel %vm274, %v2228, 0
    %v2439 = vsel %vm274, %v2229, 0
    %v2442 = vsel %vm274, %v2230, 0
    %v2445 = vsel %vm274, %v2231, 0
    %v2448 = vsel %vm274, %v2232, 0
    %v2451 = vsel %vm274, %v2233, 0
    %v2454 = vsel %vm274, %v2234, 0
    %v2457 = vsel %vm274, %v2235, 0
    %v2460 = vsel %vm274, %v2236, 0
    %v2463 = vsel %vm274, %v2237, 0
    %v2466 = vsel %vm274, %v2238, 0
    %v2469 = vsel %vm274, %v2239, 0
    %v2472 = vsel %vm274, %v2240, 0
    %v2475 = vsel %vm274, %v2241, 0
    %v2478 = vsel %vm274, %v2242, 0
    %v2481 = vsel %vm274, %v2243, 0
    %v2484 = vsel %vm274, %v2244, 0
    %v2487 = vsel %vm274, %v2245, 0
    %v2490 = vsel %vm274, %v2246, 0
    %v2493 = vsel %vm274, %v2247, 0
    %v2496 = vsel %vm274, %v2248, 0
    %v2499 = vsel %vm274, %v2249, 0
    %v2502 = vsel %vm274, %v2250, 0
    %v2505 = vsel %vm274, %v2251, 0
    %v2508 = vsel %vm274, %v2252, 0
    %v2511 = vsel %vm274, %v2253, 0
    %v2514 = vsel %vm274, %v2254, 0
    %v2517 = vsel %vm274, %v2255, 0
    %v2520 = vsel %vm274, %v2256, 0
    %v2523 = vsel %vm274, %v2257, 0
    %v2526 = vsel %vm274, %v2258, 0
    %v2529 = vsel %vm274, %v2259, 0
    %v2532 = vsel %vm274, %v2260, 0
    %v2535 = vsel %vm274, %v2261, 0
    %v2538 = vsel %vm274, %v2262, 0
    %v2541 = vsel %vm274, %v2263, 0
    %v2544 = vsel %vm274, %v2264, 0
    %v2547 = vsel %vm274, %v2265, 0
    %v2550 = vsel %vm274, %v2266, 0
    %v2553 = vsel %vm274, %v2267, 0
    %v2556 = vsel %vm274, %v2268, 0
    %v2559 = vsel %vm274, %v2269, 0
    %v2562 = vsel %vm274, %v2270, 0
    %v2565 = vsel %vm274, %v2271, 0
    %v2568 = vsel %vm274, %v2272, 0
    %v2571 = vsel %vm274, %v2273, 0
    %v2574 = vsel %vm274, %v2274, 0
    %v2577 = vsel %vm274, %v2275, 0
    %v2580 = vsel %vm274, %v2276, 0
    %v2583 = vsel %vm274, %v2277, 0
    %v2586 = vsel %vm274, %v2278, 0
    %v2589 = vsel %vm274, %v2279, 0
    %v2592 = vsel %vm274, %v2280, 0
    %v2595 = vsel %vm274, %v2281, 0
    %v2598 = vsel %vm274, %v2282, 0
    %v2601 = vsel %vm274, %v2283, 0
    %v2604 = vsel %vm274, %v2284, 0
    %v2607 = vsel %vm274, %v2285, 0
    %v2610 = vsel %vm274, %v2286, 0
    %v2613 = vsel %vm274, %v2287, 0
    %v2616 = vsel %vm274, %v2288, 0
    %v2619 = vsel %vm274, %v2289, 0
    %v2622 = vsel %vm274, %v2290, 0
    %v2625 = vsel %vm274, %v2291, 0
    %2627 = vmatprep.subr.mxu0 0.0
    %2628 = vmatpush1.msra.mxu0 %v2292
    %2629 = vmatprep.subr.mxu0 0.0
    %2630 = vmatpush1.msra.mxu0 %v2293
    %2631 = vmatprep.subr.mxu0 0.0
    %2632 = vmatpush1.msra.mxu0 0.0
    %2633 = vmatprep.subr.mxu0 0.0
    %2634 = vmatpush1.msra.mxu0 0.0
    %2635 = vmatprep.subr.mxu0 0.0
    %2636 = vmatpush1.msra.mxu0 0.0
    %2637 = vmatprep.subr.mxu0 0.0
    %2638 = vmatpush1.msra.mxu0 0.0
    %2639 = vmatprep.subr.mxu0 0.0
    %2640 = vmatpush1.msra.mxu0 0.0
    %2641 = vmatprep.subr.mxu0 0.0
    %2642 = vmatpush1.msra.mxu0 0.0
    %2643 = vmatprep.subr.mxu0 0.0
    %2644 = vmatpush1.msra.mxu0 0.0
    %2645 = vmatprep.subr.mxu0 0.0
    %2646 = vmatpush1.msra.mxu0 0.0
    %2647 = vmatprep.subr.mxu0 0.0
    %2648 = vmatpush1.msra.mxu0 0.0
    %2649 = vmatprep.subr.mxu0 0.0
    %2650 = vmatpush1.msra.mxu0 0.0
    %2651 = vmatprep.subr.mxu0 0.0
    %2652 = vmatpush1.msra.mxu0 0.0
    %2653 = vmatprep.subr.mxu0 0.0
    %2654 = vmatpush1.msra.mxu0 0.0
    %2655 = vmatprep.subr.mxu0 0.0
    %2656 = vmatpush1.msra.mxu0 0.0
    %2657 = vmatprep.subr.mxu0 0.0
    %2658 = vmatpush1.msra.mxu0 0.0
    %2659 = vmatprep.subr.mxu0 0.0
    %2660 = vmatpush1.msra.mxu0 0.0
    %2661 = vmatprep.subr.mxu0 0.0
    %2662 = vmatpush1.msra.mxu0 0.0
    %2663 = vmatprep.subr.mxu0 0.0
    %2664 = vmatpush1.msra.mxu0 0.0
    %2665 = vmatprep.subr.mxu0 0.0
    %2666 = vmatpush1.msra.mxu0 0.0
    %2667 = vmatprep.subr.mxu0 0.0
    %2668 = vmatpush1.msra.mxu0 0.0
    %2669 = vmatprep.subr.mxu0 0.0
    %2670 = vmatpush1.msra.mxu0 0.0
    %2671 = vmatprep.subr.mxu0 0.0
    %2672 = vmatpush1.msra.mxu0 0.0
    %2673 = vmatprep.subr.mxu0 0.0
    %2674 = vmatpush1.msra.mxu0 0.0
    %2675 = vmatprep.subr.mxu0 0.0
    %2676 = vmatpush1.msra.mxu0 0.0
    %2677 = vmatprep.subr.mxu0 0.0
    %2678 = vmatpush1.msra.mxu0 0.0
    %2679 = vmatprep.subr.mxu0 0.0
    %2680 = vmatpush1.msra.mxu0 0.0
    %2681 = vmatprep.subr.mxu0 0.0
    %2682 = vmatpush1.msra.mxu0 0.0
    %2683 = vmatprep.subr.mxu0 0.0
    %2684 = vmatpush1.msra.mxu0 0.0
    %2685 = vmatprep.subr.mxu0 0.0
    %2686 = vmatpush1.msra.mxu0 0.0
    %2687 = vmatprep.subr.mxu0 0.0
    %2688 = vmatpush1.msra.mxu0 0.0
    %2689 = vmatprep.subr.mxu0 0.0
    %2690 = vmatpush1.msra.mxu0 0.0
    %2691 = vmatprep.mubr.f32.mxu0 0.0
    %2692 = vmatmul.mubr.f32.gmra.mrb[0].mxu0 %v2295
    %v2693 = vpop.f32.mrb[0].mxu0
    %v2694 = vadd.f32 0.0, %v2693
    %v2695 = vpop.f32.mrb[0].mxu0
    %2696 = vmatprep.mubr.f32.mxu0 0.0
    %2697 = vmatmul.mubr.f32.gmra.mrb[0].mxu0 %v2298
    %v2698 = vpop.f32.mrb[0].mxu0
    %v2699 = vadd.f32 0.0, %v2698
    %v2700 = vpop.f32.mrb[0].mxu0
    %2701 = vmatprep.mubr.f32.mxu0 0.0
    %2702 = vmatmul.mubr.f32.gmra.mrb[0].mxu0 %v2301
    %v2703 = vpop.f32.mrb[0].mxu0
    %v2704 = vadd.f32 0.0, %v2703
    %v2705 = vpop.f32.mrb[0].mxu0
    %2706 = vmatprep.mubr.f32.mxu0 0.0
    %2707 = vmatmul.mubr.f32.gmra.mrb[0].mxu0 %v2304
    %v2708 = vpop.f32.mrb[0].mxu0
    %v2709 = vadd.f32 0.0, %v2708
    %v2710 = vpop.f32.mrb[0].mxu0
    %2711 = vmatprep.mubr.f32.mxu0 0.0
    %2712 = vmatmul.mubr.f32.gmra.mrb[0].mxu0 %v2307
    %v2713 = vpop.f32.mrb[0].mxu0
    %v2714 = vadd.f32 0.0, %v2713
    %v2715 = vpop.f32.mrb[0].mxu0
    %2716 = vmatprep.mubr.f32.mxu0 0.0
    %2717 = vmatmul.mubr.f32.gmra.mrb[0].mxu0 %v2310
    %v2718 = vpop.f32.mrb[0].mxu0
    %v2719 = vadd.f32 0.0, %v2718
    %v2720 = vpop.f32.mrb[0].mxu0
    %2721 = vmatprep.mubr.f32.mxu0 0.0
    %2722 = vmatmul.mubr.f32.gmra.mrb[0].mxu0 %v2313
    %v2723 = vpop.f32.mrb[0].mxu0
    %v2724 = vadd.f32 0.0, %v2723
    %v2725 = vpop.f32.mrb[0].mxu0
    %2726 = vmatprep.mubr.f32.mxu0 0.0
    %2727 = vmatmul.mubr.f32.gmra.mrb[0].mxu0 %v2316
    %v2728 = vpop.f32.mrb[0].mxu0
    %v2729 = vadd.f32 0.0, %v2728
    %v2730 = vpop.f32.mrb[0].mxu0
    %2731 = vmatprep.mubr.f32.mxu0 0.0
    %2732 = vmatmul.mubr.f32.gmra.mrb[0].mxu0 %v2319
    %v2733 = vpop.f32.mrb[0].mxu0
    %v2734 = vadd.f32 0.0, %v2733
    %v2735 = vpop.f32.mrb[0].mxu0
    %2736 = vmatprep.mubr.f32.mxu0 0.0
    %2737 = vmatmul.mubr.f32.gmra.mrb[0].mxu0 %v2322
    %v2738 = vpop.f32.mrb[0].mxu0
    %v2739 = vadd.f32 0.0, %v2738
    %v2740 = vpop.f32.mrb[0].mxu0
    %2741 = vmatprep.mubr.f32.mxu0 0.0
    %2742 = vmatmul.mubr.f32.gmra.mrb[0].mxu0 %v2325
    %v2743 = vpop.f32.mrb[0].mxu0
    %v2744 = vadd.f32 0.0, %v2743
    %v2745 = vpop.f32.mrb[0].mxu0
    %2746 = vmatprep.mubr.f32.mxu0 0.0
    %2747 = vmatmul.mubr.f32.gmra.mrb[0].mxu0 %v2328
    %v2748 = vpop.f32.mrb[0].mxu0
    %v2749 = vadd.f32 0.0, %v2748
    %v2750 = vpop.f32.mrb[0].mxu0
    %2751 = vmatprep.mubr.f32.mxu0 0.0
    %2752 = vmatmul.mubr.f32.gmra.mrb[0].mxu0 %v2331
    %v2753 = vpop.f32.mrb[0].mxu0
    %v2754 = vadd.f32 0.0, %v2753
    %v2755 = vpop.f32.mrb[0].mxu0
    %2756 = vmatprep.mubr.f32.mxu0 0.0
    %2757 = vmatmul.mubr.f32.gmra.mrb[0].mxu0 %v2334
    %v2758 = vpop.f32.mrb[0].mxu0
    %v2759 = vadd.f32 0.0, %v2758
    %v2760 = vpop.f32.mrb[0].mxu0
    %2761 = vmatprep.mubr.f32.mxu0 0.0
    %2762 = vmatmul.mubr.f32.gmra.mrb[0].mxu0 %v2337
    %v2763 = vpop.f32.mrb[0].mxu0
    %v2764 = vadd.f32 0.0, %v2763
    %v2765 = vpop.f32.mrb[0].mxu0
    %2766 = vmatprep.mubr.f32.mxu0 0.0
    %2767 = vmatmul.mubr.f32.gmra.mrb[0].mxu0 %v2340
    %v2768 = vpop.f32.mrb[0].mxu0
    %v2769 = vadd.f32 0.0, %v2768
    %v2770 = vpop.f32.mrb[0].mxu0
    %2771 = vmatprep.mubr.f32.mxu0 0.0
    %2772 = vmatmul.mubr.f32.gmra.mrb[0].mxu0 %v2343
    %v2773 = vpop.f32.mrb[0].mxu0
    %v2774 = vadd.f32 0.0, %v2773
    %v2775 = vpop.f32.mrb[0].mxu0
    %2776 = vmatprep.mubr.f32.mxu0 0.0
    %2777 = vmatmul.mubr.f32.gmra.mrb[0].mxu0 %v2346
    %v2778 = vpop.f32.mrb[0].mxu0
    %v2779 = vadd.f32 0.0, %v2778
    %v2780 = vpop.f32.mrb[0].mxu0
    %2781 = vmatprep.mubr.f32.mxu0 0.0
    %2782 = vmatmul.mubr.f32.gmra.mrb[0].mxu0 %v2349
    %v2783 = vpop.f32.mrb[0].mxu0
    %v2784 = vadd.f32 0.0, %v2783
    %v2785 = vpop.f32.mrb[0].mxu0
    %2786 = vmatprep.mubr.f32.mxu0 0.0
    %2787 = vmatmul.mubr.f32.gmra.mrb[0].mxu0 %v2352
    %v2788 = vpop.f32.mrb[0].mxu0
    %v2789 = vadd.f32 0.0, %v2788
    %v2790 = vpop.f32.mrb[0].mxu0
    %2791 = vmatprep.mubr.f32.mxu0 0.0
    %2792 = vmatmul.mubr.f32.gmra.mrb[0].mxu0 %v2355
    %v2793 = vpop.f32.mrb[0].mxu0
    %v2794 = vadd.f32 0.0, %v2793
    %v2795 = vpop.f32.mrb[0].mxu0
    %2796 = vmatprep.mubr.f32.mxu0 0.0
    %2797 = vmatmul.mubr.f32.gmra.mrb[0].mxu0 %v2358
    %v2798 = vpop.f32.mrb[0].mxu0
    %v2799 = vadd.f32 0.0, %v2798
    %v2800 = vpop.f32.mrb[0].mxu0
    %2801 = vmatprep.mubr.f32.mxu0 0.0
    %2802 = vmatmul.mubr.f32.gmra.mrb[0].mxu0 %v2361
    %v2803 = vpop.f32.mrb[0].mxu0
    %v2804 = vadd.f32 0.0, %v2803
    %v2805 = vpop.f32.mrb[0].mxu0
    %2806 = vmatprep.mubr.f32.mxu0 0.0
    %2807 = vmatmul.mubr.f32.gmra.mrb[0].mxu0 %v2364
    %v2808 = vpop.f32.mrb[0].mxu0
    %v2809 = vadd.f32 0.0, %v2808
    %v2810 = vpop.f32.mrb[0].mxu0
    %2811 = vmatprep.mubr.f32.mxu0 0.0
    %2812 = vmatmul.mubr.f32.gmra.mrb[0].mxu0 %v2367
    %v2813 = vpop.f32.mrb[0].mxu0
    %v2814 = vadd.f32 0.0, %v2813
    %v2815 = vpop.f32.mrb[0].mxu0
    %2816 = vmatprep.mubr.f32.mxu0 0.0
    %2817 = vmatmul.mubr.f32.gmra.mrb[0].mxu0 %v2370
    %v2818 = vpop.f32.mrb[0].mxu0
    %v2819 = vadd.f32 0.0, %v2818
    %v2820 = vpop.f32.mrb[0].mxu0
    %2821 = vmatprep.mubr.f32.mxu0 0.0
    %2822 = vmatmul.mubr.f32.gmra.mrb[0].mxu0 %v2373
    %v2823 = vpop.f32.mrb[0].mxu0
    %v2824 = vadd.f32 0.0, %v2823
    %v2825 = vpop.f32.mrb[0].mxu0
    %2826 = vmatprep.mubr.f32.mxu0 0.0
    %2827 = vmatmul.mubr.f32.gmra.mrb[0].mxu0 %v2376
    %v2828 = vpop.f32.mrb[0].mxu0
    %v2829 = vadd.f32 0.0, %v2828
    %v2830 = vpop.f32.mrb[0].mxu0
    %2831 = vmatprep.mubr.f32.mxu0 0.0
    %2832 = vmatmul.mubr.f32.gmra.mrb[0].mxu0 %v2379
    %v2833 = vpop.f32.mrb[0].mxu0
    %v2834 = vadd.f32 0.0, %v2833
    %v2835 = vpop.f32.mrb[0].mxu0
    %2836 = vmatprep.mubr.f32.mxu0 0.0
    %2837 = vmatmul.mubr.f32.gmra.mrb[0].mxu0 %v2382
    %v2838 = vpop.f32.mrb[0].mxu0
    %v2839 = vadd.f32 0.0, %v2838
    %v2840 = vpop.f32.mrb[0].mxu0
    %2841 = vmatprep.mubr.f32.mxu0 0.0
    %2842 = vmatmul.mubr.f32.gmra.mrb[0].mxu0 %v2385
    %v2843 = vpop.f32.mrb[0].mxu0
    %v2844 = vadd.f32 0.0, %v2843
    %v2845 = vpop.f32.mrb[0].mxu0
    %2846 = vmatprep.mubr.f32.mxu0 0.0
    %2847 = vmatmul.mubr.f32.gmra.mrb[0].mxu0 %v2388
    %v2848 = vpop.f32.mrb[0].mxu0
    %v2849 = vadd.f32 0.0, %v2848
    %v2850 = vpop.f32.mrb[0].mxu0
    %2851 = vmatprep.mubr.f32.mxu0 0.0
    %2852 = vmatmul.mubr.f32.gmra.mrb[0].mxu0 %v2391
    %v2853 = vpop.f32.mrb[0].mxu0
    %v2854 = vadd.f32 0.0, %v2853
    %v2855 = vpop.f32.mrb[0].mxu0
    %2856 = vmatprep.mubr.f32.mxu0 0.0
    %2857 = vmatmul.mubr.f32.gmra.mrb[0].mxu0 %v2394
    %v2858 = vpop.f32.mrb[0].mxu0
    %v2859 = vadd.f32 0.0, %v2858
    %v2860 = vpop.f32.mrb[0].mxu0
    %2861 = vmatprep.mubr.f32.mxu0 0.0
    %2862 = vmatmul.mubr.f32.gmra.mrb[0].mxu0 %v2397
    %v2863 = vpop.f32.mrb[0].mxu0
    %v2864 = vadd.f32 0.0, %v2863
    %v2865 = vpop.f32.mrb[0].mxu0
    %2866 = vmatprep.mubr.f32.mxu0 0.0
    %2867 = vmatmul.mubr.f32.gmra.mrb[0].mxu0 %v2400
    %v2868 = vpop.f32.mrb[0].mxu0
    %v2869 = vadd.f32 0.0, %v2868
    %v2870 = vpop.f32.mrb[0].mxu0
    %2871 = vmatprep.mubr.f32.mxu0 0.0
    %2872 = vmatmul.mubr.f32.gmra.mrb[0].mxu0 %v2403
    %v2873 = vpop.f32.mrb[0].mxu0
    %v2874 = vadd.f32 0.0, %v2873
    %v2875 = vpop.f32.mrb[0].mxu0
    %2876 = vmatprep.mubr.f32.mxu0 0.0
    %2877 = vmatmul.mubr.f32.gmra.mrb[0].mxu0 %v2406
    %v2878 = vpop.f32.mrb[0].mxu0
    %v2879 = vadd.f32 0.0, %v2878
    %v2880 = vpop.f32.mrb[0].mxu0
    %2881 = vmatprep.mubr.f32.mxu0 0.0
    %2882 = vmatmul.mubr.f32.gmra.mrb[0].mxu0 %v2409
    %v2883 = vpop.f32.mrb[0].mxu0
    %v2884 = vadd.f32 0.0, %v2883
    %v2885 = vpop.f32.mrb[0].mxu0
    %2886 = vmatprep.mubr.f32.mxu0 0.0
    %2887 = vmatmul.mubr.f32.gmra.mrb[0].mxu0 %v2412
    %v2888 = vpop.f32.mrb[0].mxu0
    %v2889 = vadd.f32 0.0, %v2888
    %v2890 = vpop.f32.mrb[0].mxu0
    %2891 = vmatprep.mubr.f32.mxu0 0.0
    %2892 = vmatmul.mubr.f32.gmra.mrb[0].mxu0 %v2415
    %v2893 = vpop.f32.mrb[0].mxu0
    %v2894 = vadd.f32 0.0, %v2893
    %v2895 = vpop.f32.mrb[0].mxu0
    %2896 = vmatprep.mubr.f32.mxu0 0.0
    %2897 = vmatmul.mubr.f32.gmra.mrb[0].mxu0 %v2418
    %v2898 = vpop.f32.mrb[0].mxu0
    %v2899 = vadd.f32 0.0, %v2898
    %v2900 = vpop.f32.mrb[0].mxu0
    %2901 = vmatprep.mubr.f32.mxu0 0.0
    %2902 = vmatmul.mubr.f32.gmra.mrb[0].mxu0 %v2421
    %v2903 = vpop.f32.mrb[0].mxu0
    %v2904 = vadd.f32 0.0, %v2903
    %v2905 = vpop.f32.mrb[0].mxu0
    %2906 = vmatprep.mubr.f32.mxu0 0.0
    %2907 = vmatmul.mubr.f32.gmra.mrb[0].mxu0 %v2424
    %v2908 = vpop.f32.mrb[0].mxu0
    %v2909 = vadd.f32 0.0, %v2908
    %v2910 = vpop.f32.mrb[0].mxu0
    %2911 = vmatprep.mubr.f32.mxu0 0.0
    %2912 = vmatmul.mubr.f32.gmra.mrb[0].mxu0 %v2427
    %v2913 = vpop.f32.mrb[0].mxu0
    %v2914 = vadd.f32 0.0, %v2913
    %v2915 = vpop.f32.mrb[0].mxu0
    %2916 = vmatprep.mubr.f32.mxu0 0.0
    %2917 = vmatmul.mubr.f32.gmra.mrb[0].mxu0 %v2430
    %v2918 = vpop.f32.mrb[0].mxu0
    %v2919 = vadd.f32 0.0, %v2918
    %v2920 = vpop.f32.mrb[0].mxu0
    %2921 = vmatprep.mubr.f32.mxu0 0.0
    %2922 = vmatmul.mubr.f32.gmra.mrb[0].mxu0 %v2433
    %v2923 = vpop.f32.mrb[0].mxu0
    %v2924 = vadd.f32 0.0, %v2923
    %v2925 = vpop.f32.mrb[0].mxu0
    %2926 = vmatprep.mubr.f32.mxu0 0.0
    %2927 = vmatmul.mubr.f32.gmra.mrb[0].mxu0 %v2436
    %v2928 = vpop.f32.mrb[0].mxu0
    %v2929 = vadd.f32 0.0, %v2928
    %v2930 = vpop.f32.mrb[0].mxu0
    %2931 = vmatprep.mubr.f32.mxu0 0.0
    %2932 = vmatmul.mubr.f32.gmra.mrb[0].mxu0 %v2439
    %v2933 = vpop.f32.mrb[0].mxu0
    %v2934 = vadd.f32 0.0, %v2933
    %v2935 = vpop.f32.mrb[0].mxu0
    %2936 = vmatprep.mubr.f32.mxu0 0.0
    %2937 = vmatmul.mubr.f32.gmra.mrb[0].mxu0 %v2442
    %v2938 = vpop.f32.mrb[0].mxu0
    %v2939 = vadd.f32 0.0, %v2938
    %v2940 = vpop.f32.mrb[0].mxu0
    %2941 = vmatprep.mubr.f32.mxu0 0.0
    %2942 = vmatmul.mubr.f32.gmra.mrb[0].mxu0 %v2445
    %v2943 = vpop.f32.mrb[0].mxu0
    %v2944 = vadd.f32 0.0, %v2943
    %v2945 = vpop.f32.mrb[0].mxu0
    %2946 = vmatprep.mubr.f32.mxu0 0.0
    %2947 = vmatmul.mubr.f32.gmra.mrb[0].mxu0 %v2448
    %v2948 = vpop.f32.mrb[0].mxu0
    %v2949 = vadd.f32 0.0, %v2948
    %v2950 = vpop.f32.mrb[0].mxu0
    %2951 = vmatprep.mubr.f32.mxu0 0.0
    %2952 = vmatmul.mubr.f32.gmra.mrb[0].mxu0 %v2451
    %v2953 = vpop.f32.mrb[0].mxu0
    %v2954 = vadd.f32 0.0, %v2953
    %v2955 = vpop.f32.mrb[0].mxu0
    %2956 = vmatprep.mubr.f32.mxu0 0.0
    %2957 = vmatmul.mubr.f32.gmra.mrb[0].mxu0 %v2454
    %v2958 = vpop.f32.mrb[0].mxu0
    %v2959 = vadd.f32 0.0, %v2958
    %v2960 = vpop.f32.mrb[0].mxu0
    %2961 = vmatprep.mubr.f32.mxu0 0.0
    %2962 = vmatmul.mubr.f32.gmra.mrb[0].mxu0 %v2457
    %v2963 = vpop.f32.mrb[0].mxu0
    %v2964 = vadd.f32 0.0, %v2963
    %v2965 = vpop.f32.mrb[0].mxu0
    %2966 = vmatprep.mubr.f32.mxu0 0.0
    %2967 = vmatmul.mubr.f32.gmra.mrb[0].mxu0 %v2460
    %v2968 = vpop.f32.mrb[0].mxu0
    %v2969 = vadd.f32 0.0, %v2968
    %v2970 = vpop.f32.mrb[0].mxu0
    %2971 = vmatprep.mubr.f32.mxu0 0.0
    %2972 = vmatmul.mubr.f32.gmra.mrb[0].mxu0 %v2463
    %v2973 = vpop.f32.mrb[0].mxu0
    %v2974 = vadd.f32 0.0, %v2973
    %v2975 = vpop.f32.mrb[0].mxu0
    %2976 = vmatprep.mubr.f32.mxu0 0.0
    %2977 = vmatmul.mubr.f32.gmra.mrb[0].mxu0 %v2466
    %v2978 = vpop.f32.mrb[0].mxu0
    %v2979 = vadd.f32 0.0, %v2978
    %v2980 = vpop.f32.mrb[0].mxu0
    %2981 = vmatprep.mubr.f32.mxu0 0.0
    %2982 = vmatmul.mubr.f32.gmra.mrb[0].mxu0 %v2469
    %v2983 = vpop.f32.mrb[0].mxu0
    %v2984 = vadd.f32 0.0, %v2983
    %v2985 = vpop.f32.mrb[0].mxu0
    %2986 = vmatprep.mubr.f32.mxu0 0.0
    %2987 = vmatmul.mubr.f32.gmra.mrb[0].mxu0 %v2472
    %v2988 = vpop.f32.mrb[0].mxu0
    %v2989 = vadd.f32 0.0, %v2988
    %v2990 = vpop.f32.mrb[0].mxu0
    %2991 = vmatprep.mubr.f32.mxu0 0.0
    %2992 = vmatmul.mubr.f32.gmra.mrb[0].mxu0 %v2475
    %v2993 = vpop.f32.mrb[0].mxu0
    %v2994 = vadd.f32 0.0, %v2993
    %v2995 = vpop.f32.mrb[0].mxu0
    %2996 = vmatprep.mubr.f32.mxu0 0.0
    %2997 = vmatmul.mubr.f32.gmra.mrb[0].mxu0 %v2478
    %v2998 = vpop.f32.mrb[0].mxu0
    %v2999 = vadd.f32 0.0, %v2998
    %v3000 = vpop.f32.mrb[0].mxu0
    %3001 = vmatprep.mubr.f32.mxu0 0.0
    %3002 = vmatmul.mubr.f32.gmra.mrb[0].mxu0 %v2481
    %v3003 = vpop.f32.mrb[0].mxu0
    %v3004 = vadd.f32 0.0, %v3003
    %v3005 = vpop.f32.mrb[0].mxu0
    %3006 = vmatprep.mubr.f32.mxu0 0.0
    %3007 = vmatmul.mubr.f32.gmra.mrb[0].mxu0 %v2484
    %v3008 = vpop.f32.mrb[0].mxu0
    %v3009 = vadd.f32 0.0, %v3008
    %v3010 = vpop.f32.mrb[0].mxu0
    %3011 = vmatprep.mubr.f32.mxu0 0.0
    %3012 = vmatmul.mubr.f32.gmra.mrb[0].mxu0 %v2487
    %v3013 = vpop.f32.mrb[0].mxu0
    %v3014 = vadd.f32 0.0, %v3013
    %v3015 = vpop.f32.mrb[0].mxu0
    %3016 = vmatprep.mubr.f32.mxu0 0.0
    %3017 = vmatmul.mubr.f32.gmra.mrb[0].mxu0 %v2490
    %v3018 = vpop.f32.mrb[0].mxu0
    %v3019 = vadd.f32 0.0, %v3018
    %v3020 = vpop.f32.mrb[0].mxu0
    %3021 = vmatprep.mubr.f32.mxu0 0.0
    %3022 = vmatmul.mubr.f32.gmra.mrb[0].mxu0 %v2493
    %v3023 = vpop.f32.mrb[0].mxu0
    %v3024 = vadd.f32 0.0, %v3023
    %v3025 = vpop.f32.mrb[0].mxu0
    %3026 = vmatprep.mubr.f32.mxu0 0.0
    %3027 = vmatmul.mubr.f32.gmra.mrb[0].mxu0 %v2496
    %v3028 = vpop.f32.mrb[0].mxu0
    %v3029 = vadd.f32 0.0, %v3028
    %v3030 = vpop.f32.mrb[0].mxu0
    %3031 = vmatprep.mubr.f32.mxu0 0.0
    %3032 = vmatmul.mubr.f32.gmra.mrb[0].mxu0 %v2499
    %v3033 = vpop.f32.mrb[0].mxu0
    %v3034 = vadd.f32 0.0, %v3033
    %v3035 = vpop.f32.mrb[0].mxu0
    %3036 = vmatprep.mubr.f32.mxu0 0.0
    %3037 = vmatmul.mubr.f32.gmra.mrb[0].mxu0 %v2502
    %v3038 = vpop.f32.mrb[0].mxu0
    %v3039 = vadd.f32 0.0, %v3038
    %v3040 = vpop.f32.mrb[0].mxu0
    %3041 = vmatprep.mubr.f32.mxu0 0.0
    %3042 = vmatmul.mubr.f32.gmra.mrb[0].mxu0 %v2505
    %v3043 = vpop.f32.mrb[0].mxu0
    %v3044 = vadd.f32 0.0, %v3043
    %v3045 = vpop.f32.mrb[0].mxu0
    %3046 = vmatprep.mubr.f32.mxu0 0.0
    %3047 = vmatmul.mubr.f32.gmra.mrb[0].mxu0 %v2508
    %v3048 = vpop.f32.mrb[0].mxu0
    %v3049 = vadd.f32 0.0, %v3048
    %v3050 = vpop.f32.mrb[0].mxu0
    %3051 = vmatprep.mubr.f32.mxu0 0.0
    %3052 = vmatmul.mubr.f32.gmra.mrb[0].mxu0 %v2511
    %v3053 = vpop.f32.mrb[0].mxu0
    %v3054 = vadd.f32 0.0, %v3053
    %v3055 = vpop.f32.mrb[0].mxu0
    %3056 = vmatprep.mubr.f32.mxu0 0.0
    %3057 = vmatmul.mubr.f32.gmra.mrb[0].mxu0 %v2514
    %v3058 = vpop.f32.mrb[0].mxu0
    %v3059 = vadd.f32 0.0, %v3058
    %v3060 = vpop.f32.mrb[0].mxu0
    %3061 = vmatprep.mubr.f32.mxu0 0.0
    %3062 = vmatmul.mubr.f32.gmra.mrb[0].mxu0 %v2517
    %v3063 = vpop.f32.mrb[0].mxu0
    %v3064 = vadd.f32 0.0, %v3063
    %v3065 = vpop.f32.mrb[0].mxu0
    %3066 = vmatprep.mubr.f32.mxu0 0.0
    %3067 = vmatmul.mubr.f32.gmra.mrb[0].mxu0 %v2520
    %v3068 = vpop.f32.mrb[0].mxu0
    %v3069 = vadd.f32 0.0, %v3068
    %v3070 = vpop.f32.mrb[0].mxu0
    %3071 = vmatprep.mubr.f32.mxu0 0.0
    %3072 = vmatmul.mubr.f32.gmra.mrb[0].mxu0 %v2523
    %v3073 = vpop.f32.mrb[0].mxu0
    %v3074 = vadd.f32 0.0, %v3073
    %v3075 = vpop.f32.mrb[0].mxu0
    %3076 = vmatprep.mubr.f32.mxu0 0.0
    %3077 = vmatmul.mubr.f32.gmra.mrb[0].mxu0 %v2526
    %v3078 = vpop.f32.mrb[0].mxu0
    %v3079 = vadd.f32 0.0, %v3078
    %v3080 = vpop.f32.mrb[0].mxu0
    %3081 = vmatprep.mubr.f32.mxu0 0.0
    %3082 = vmatmul.mubr.f32.gmra.mrb[0].mxu0 %v2529
    %v3083 = vpop.f32.mrb[0].mxu0
    %v3084 = vadd.f32 0.0, %v3083
    %v3085 = vpop.f32.mrb[0].mxu0
    %3086 = vmatprep.mubr.f32.mxu0 0.0
    %3087 = vmatmul.mubr.f32.gmra.mrb[0].mxu0 %v2532
    %v3088 = vpop.f32.mrb[0].mxu0
    %v3089 = vadd.f32 0.0, %v3088
    %v3090 = vpop.f32.mrb[0].mxu0
    %3091 = vmatprep.mubr.f32.mxu0 0.0
    %3092 = vmatmul.mubr.f32.gmra.mrb[0].mxu0 %v2535
    %v3093 = vpop.f32.mrb[0].mxu0
    %v3094 = vadd.f32 0.0, %v3093
    %v3095 = vpop.f32.mrb[0].mxu0
    %3096 = vmatprep.mubr.f32.mxu0 0.0
    %3097 = vmatmul.mubr.f32.gmra.mrb[0].mxu0 %v2538
    %v3098 = vpop.f32.mrb[0].mxu0
    %v3099 = vadd.f32 0.0, %v3098
    %v3100 = vpop.f32.mrb[0].mxu0
    %3101 = vmatprep.mubr.f32.mxu0 0.0
    %3102 = vmatmul.mubr.f32.gmra.mrb[0].mxu0 %v2541
    %v3103 = vpop.f32.mrb[0].mxu0
    %v3104 = vadd.f32 0.0, %v3103
    %v3105 = vpop.f32.mrb[0].mxu0
    %3106 = vmatprep.mubr.f32.mxu0 0.0
    %3107 = vmatmul.mubr.f32.gmra.mrb[0].mxu0 %v2544
    %v3108 = vpop.f32.mrb[0].mxu0
    %v3109 = vadd.f32 0.0, %v3108
    %v3110 = vpop.f32.mrb[0].mxu0
    %3111 = vmatprep.mubr.f32.mxu0 0.0
    %3112 = vmatmul.mubr.f32.gmra.mrb[0].mxu0 %v2547
    %v3113 = vpop.f32.mrb[0].mxu0
    %v3114 = vadd.f32 0.0, %v3113
    %v3115 = vpop.f32.mrb[0].mxu0
    %3116 = vmatprep.mubr.f32.mxu0 0.0
    %3117 = vmatmul.mubr.f32.gmra.mrb[0].mxu0 %v2550
    %v3118 = vpop.f32.mrb[0].mxu0
    %v3119 = vadd.f32 0.0, %v3118
    %v3120 = vpop.f32.mrb[0].mxu0
    %3121 = vmatprep.mubr.f32.mxu0 0.0
    %3122 = vmatmul.mubr.f32.gmra.mrb[0].mxu0 %v2553
    %v3123 = vpop.f32.mrb[0].mxu0
    %v3124 = vadd.f32 0.0, %v3123
    %v3125 = vpop.f32.mrb[0].mxu0
    %3126 = vmatprep.mubr.f32.mxu0 0.0
    %3127 = vmatmul.mubr.f32.gmra.mrb[0].mxu0 %v2556
    %v3128 = vpop.f32.mrb[0].mxu0
    %v3129 = vadd.f32 0.0, %v3128
    %v3130 = vpop.f32.mrb[0].mxu0
    %3131 = vmatprep.mubr.f32.mxu0 0.0
    %3132 = vmatmul.mubr.f32.gmra.mrb[0].mxu0 %v2559
    %v3133 = vpop.f32.mrb[0].mxu0
    %v3134 = vadd.f32 0.0, %v3133
    %v3135 = vpop.f32.mrb[0].mxu0
    %3136 = vmatprep.mubr.f32.mxu0 0.0
    %3137 = vmatmul.mubr.f32.gmra.mrb[0].mxu0 %v2562
    %v3138 = vpop.f32.mrb[0].mxu0
    %v3139 = vadd.f32 0.0, %v3138
    %v3140 = vpop.f32.mrb[0].mxu0
    %3141 = vmatprep.mubr.f32.mxu0 0.0
    %3142 = vmatmul.mubr.f32.gmra.mrb[0].mxu0 %v2565
    %v3143 = vpop.f32.mrb[0].mxu0
    %v3144 = vadd.f32 0.0, %v3143
    %v3145 = vpop.f32.mrb[0].mxu0
    %3146 = vmatprep.mubr.f32.mxu0 0.0
    %3147 = vmatmul.mubr.f32.gmra.mrb[0].mxu0 %v2568
    %v3148 = vpop.f32.mrb[0].mxu0
    %v3149 = vadd.f32 0.0, %v3148
    %v3150 = vpop.f32.mrb[0].mxu0
    %3151 = vmatprep.mubr.f32.mxu0 0.0
    %3152 = vmatmul.mubr.f32.gmra.mrb[0].mxu0 %v2571
    %v3153 = vpop.f32.mrb[0].mxu0
    %v3154 = vadd.f32 0.0, %v3153
    %v3155 = vpop.f32.mrb[0].mxu0
    %3156 = vmatprep.mubr.f32.mxu0 0.0
    %3157 = vmatmul.mubr.f32.gmra.mrb[0].mxu0 %v2574
    %v3158 = vpop.f32.mrb[0].mxu0
    %v3159 = vadd.f32 0.0, %v3158
    %v3160 = vpop.f32.mrb[0].mxu0
    %3161 = vmatprep.mubr.f32.mxu0 0.0
    %3162 = vmatmul.mubr.f32.gmra.mrb[0].mxu0 %v2577
    %v3163 = vpop.f32.mrb[0].mxu0
    %v3164 = vadd.f32 0.0, %v3163
    %v3165 = vpop.f32.mrb[0].mxu0
    %3166 = vmatprep.mubr.f32.mxu0 0.0
    %3167 = vmatmul.mubr.f32.gmra.mrb[0].mxu0 %v2580
    %v3168 = vpop.f32.mrb[0].mxu0
    %v3169 = vadd.f32 0.0, %v3168
    %v3170 = vpop.f32.mrb[0].mxu0
    %3171 = vmatprep.mubr.f32.mxu0 0.0
    %3172 = vmatmul.mubr.f32.gmra.mrb[0].mxu0 %v2583
    %v3173 = vpop.f32.mrb[0].mxu0
    %v3174 = vadd.f32 0.0, %v3173
    %v3175 = vpop.f32.mrb[0].mxu0
    %3176 = vmatprep.mubr.f32.mxu0 0.0
    %3177 = vmatmul.mubr.f32.gmra.mrb[0].mxu0 %v2586
    %v3178 = vpop.f32.mrb[0].mxu0
    %v3179 = vadd.f32 0.0, %v3178
    %v3180 = vpop.f32.mrb[0].mxu0
    %3181 = vmatprep.mubr.f32.mxu0 0.0
    %3182 = vmatmul.mubr.f32.gmra.mrb[0].mxu0 %v2589
    %v3183 = vpop.f32.mrb[0].mxu0
    %v3184 = vadd.f32 0.0, %v3183
    %v3185 = vpop.f32.mrb[0].mxu0
    %3186 = vmatprep.mubr.f32.mxu0 0.0
    %3187 = vmatmul.mubr.f32.gmra.mrb[0].mxu0 %v2592
    %v3188 = vpop.f32.mrb[0].mxu0
    %v3189 = vadd.f32 0.0, %v3188
    %v3190 = vpop.f32.mrb[0].mxu0
    %3191 = vmatprep.mubr.f32.mxu0 0.0
    %3192 = vmatmul.mubr.f32.gmra.mrb[0].mxu0 %v2595
    %v3193 = vpop.f32.mrb[0].mxu0
    %v3194 = vadd.f32 0.0, %v3193
    %v3195 = vpop.f32.mrb[0].mxu0
    %3196 = vmatprep.mubr.f32.mxu0 0.0
    %3197 = vmatmul.mubr.f32.gmra.mrb[0].mxu0 %v2598
    %v3198 = vpop.f32.mrb[0].mxu0
    %v3199 = vadd.f32 0.0, %v3198
    %v3200 = vpop.f32.mrb[0].mxu0
    %3201 = vmatprep.mubr.f32.mxu0 0.0
    %3202 = vmatmul.mubr.f32.gmra.mrb[0].mxu0 %v2601
    %v3203 = vpop.f32.mrb[0].mxu0
    %v3204 = vadd.f32 0.0, %v3203
    %v3205 = vpop.f32.mrb[0].mxu0
    %3206 = vmatprep.mubr.f32.mxu0 0.0
    %3207 = vmatmul.mubr.f32.gmra.mrb[0].mxu0 %v2604
    %v3208 = vpop.f32.mrb[0].mxu0
    %v3209 = vadd.f32 0.0, %v3208
    %v3210 = vpop.f32.mrb[0].mxu0
    %3211 = vmatprep.mubr.f32.mxu0 0.0
    %3212 = vmatmul.mubr.f32.gmra.mrb[0].mxu0 %v2607
    %v3213 = vpop.f32.mrb[0].mxu0
    %v3214 = vadd.f32 0.0, %v3213
    %v3215 = vpop.f32.mrb[0].mxu0
    %3216 = vmatprep.mubr.f32.mxu0 0.0
    %3217 = vmatmul.mubr.f32.gmra.mrb[0].mxu0 %v2610
    %v3218 = vpop.f32.mrb[0].mxu0
    %v3219 = vadd.f32 0.0, %v3218
    %v3220 = vpop.f32.mrb[0].mxu0
    %3221 = vmatprep.mubr.f32.mxu0 0.0
    %3222 = vmatmul.mubr.f32.gmra.mrb[0].mxu0 %v2613
    %v3223 = vpop.f32.mrb[0].mxu0
    %v3224 = vadd.f32 0.0, %v3223
    %v3225 = vpop.f32.mrb[0].mxu0
    %3226 = vmatprep.mubr.f32.mxu0 0.0
    %3227 = vmatmul.mubr.f32.gmra.mrb[0].mxu0 %v2616
    %v3228 = vpop.f32.mrb[0].mxu0
    %v3229 = vadd.f32 0.0, %v3228
    %v3230 = vpop.f32.mrb[0].mxu0
    %3231 = vmatprep.mubr.f32.mxu0 0.0
    %3232 = vmatmul.mubr.f32.gmra.mrb[0].mxu0 %v2619
    %v3233 = vpop.f32.mrb[0].mxu0
    %v3234 = vadd.f32 0.0, %v3233
    %v3235 = vpop.f32.mrb[0].mxu0
    %3236 = vmatprep.mubr.f32.mxu0 0.0
    %3237 = vmatmul.mubr.f32.gmra.mrb[0].mxu0 %v2622
    %v3238 = vpop.f32.mrb[0].mxu0
    %v3239 = vadd.f32 0.0, %v3238
    %v3240 = vpop.f32.mrb[0].mxu0
    %3241 = vmatprep.mubr.f32.mxu0 0.0
    %3242 = vmatmul.mubr.f32.gmra.mrb[0].mxu0 %v2625
    %v3243 = vpop.f32.mrb[0].mxu0
    %v3244 = vadd.f32 0.0, %v3243
    %v3245 = vpop.f32.mrb[0].mxu0
    %3246 = vdwg.mxu0
    %v3247 = vadd.f32 %v1628, %v2694
    %v3248 = vadd.f32 %v1633, %v2699
    %v3249 = vadd.f32 %v1638, %v2704
    %v3250 = vadd.f32 %v1643, %v2709
    %v3251 = vadd.f32 %v1648, %v2714
    %v3252 = vadd.f32 %v1653, %v2719
    %v3253 = vadd.f32 %v1658, %v2724
    %v3254 = vadd.f32 %v1663, %v2729
    %v3255 = vadd.f32 %v1668, %v2734
    %v3256 = vadd.f32 %v1673, %v2739
    %v3257 = vadd.f32 %v1678, %v2744
    %v3258 = vadd.f32 %v1683, %v2749
    %v3259 = vadd.f32 %v1688, %v2754
    %v3260 = vadd.f32 %v1693, %v2759
    %v3261 = vadd.f32 %v1698, %v2764
    %v3262 = vadd.f32 %v1703, %v2769
    %v3263 = vadd.f32 %v1708, %v2774
    %v3264 = vadd.f32 %v1713, %v2779
    %v3265 = vadd.f32 %v1718, %v2784
    %v3266 = vadd.f32 %v1723, %v2789
    %v3267 = vadd.f32 %v1728, %v2794
    %v3268 = vadd.f32 %v1733, %v2799
    %v3269 = vadd.f32 %v1738, %v2804
    %v3270 = vadd.f32 %v1743, %v2809
    %v3271 = vadd.f32 %v1748, %v2814
    %v3272 = vadd.f32 %v1753, %v2819
    %v3273 = vadd.f32 %v1758, %v2824
    %v3274 = vadd.f32 %v1763, %v2829
    %v3275 = vadd.f32 %v1768, %v2834
    %v3276 = vadd.f32 %v1773, %v2839
    %v3277 = vadd.f32 %v1778, %v2844
    %v3278 = vadd.f32 %v1783, %v2849
    %v3279 = vadd.f32 %v1788, %v2854
    %v3280 = vadd.f32 %v1793, %v2859
    %v3281 = vadd.f32 %v1798, %v2864
    %v3282 = vadd.f32 %v1803, %v2869
    %v3283 = vadd.f32 %v1808, %v2874
    %v3284 = vadd.f32 %v1813, %v2879
    %v3285 = vadd.f32 %v1818, %v2884
    %v3286 = vadd.f32 %v1823, %v2889
    %v3287 = vadd.f32 %v1828, %v2894
    %v3288 = vadd.f32 %v1833, %v2899
    %v3289 = vadd.f32 %v1838, %v2904
    %v3290 = vadd.f32 %v1843, %v2909
    %v3291 = vadd.f32 %v1848, %v2914
    %v3292 = vadd.f32 %v1853, %v2919
    %v3293 = vadd.f32 %v1858, %v2924
    %v3294 = vadd.f32 %v1863, %v2929
    %v3295 = vadd.f32 %v1868, %v2934
    %v3296 = vadd.f32 %v1873, %v2939
    %v3297 = vadd.f32 %v1878, %v2944
    %v3298 = vadd.f32 %v1883, %v2949
    %v3299 = vadd.f32 %v1888, %v2954
    %v3300 = vadd.f32 %v1893, %v2959
    %v3301 = vadd.f32 %v1898, %v2964
    %v3302 = vadd.f32 %v1903, %v2969
    %v3303 = vadd.f32 %v1908, %v2974
    %v3304 = vadd.f32 %v1913, %v2979
    %v3305 = vadd.f32 %v1918, %v2984
    %v3306 = vadd.f32 %v1923, %v2989
    %v3307 = vadd.f32 %v1928, %v2994
    %v3308 = vadd.f32 %v1933, %v2999
    %v3309 = vadd.f32 %v1938, %v3004
    %v3310 = vadd.f32 %v1943, %v3009
    %v3311 = vadd.f32 %v1948, %v3014
    %v3312 = vadd.f32 %v1953, %v3019
    %v3313 = vadd.f32 %v1958, %v3024
    %v3314 = vadd.f32 %v1963, %v3029
    %v3315 = vadd.f32 %v1968, %v3034
    %v3316 = vadd.f32 %v1973, %v3039
    %v3317 = vadd.f32 %v1978, %v3044
    %v3318 = vadd.f32 %v1983, %v3049
    %v3319 = vadd.f32 %v1988, %v3054
    %v3320 = vadd.f32 %v1993, %v3059
    %v3321 = vadd.f32 %v1998, %v3064
    %v3322 = vadd.f32 %v2003, %v3069
    %v3323 = vadd.f32 %v2008, %v3074
    %v3324 = vadd.f32 %v2013, %v3079
    %v3325 = vadd.f32 %v2018, %v3084
    %v3326 = vadd.f32 %v2023, %v3089
    %v3327 = vadd.f32 %v2028, %v3094
    %v3328 = vadd.f32 %v2033, %v3099
    %v3329 = vadd.f32 %v2038, %v3104
    %v3330 = vadd.f32 %v2043, %v3109
    %v3331 = vadd.f32 %v2048, %v3114
    %v3332 = vadd.f32 %v2053, %v3119
    %v3333 = vadd.f32 %v2058, %v3124
    %v3334 = vadd.f32 %v2063, %v3129
    %v3335 = vadd.f32 %v2068, %v3134
    %v3336 = vadd.f32 %v2073, %v3139
    %v3337 = vadd.f32 %v2078, %v3144
    %v3338 = vadd.f32 %v2083, %v3149
    %v3339 = vadd.f32 %v2088, %v3154
    %v3340 = vadd.f32 %v2093, %v3159
    %v3341 = vadd.f32 %v2098, %v3164
    %v3342 = vadd.f32 %v2103, %v3169
    %v3343 = vadd.f32 %v2108, %v3174
    %v3344 = vadd.f32 %v2113, %v3179
    %v3345 = vadd.f32 %v2118, %v3184
    %v3346 = vadd.f32 %v2123, %v3189
    %v3347 = vadd.f32 %v2128, %v3194
    %v3348 = vadd.f32 %v2133, %v3199
    %v3349 = vadd.f32 %v2138, %v3204
    %v3350 = vadd.f32 %v2143, %v3209
    %v3351 = vadd.f32 %v2148, %v3214
    %v3352 = vadd.f32 %v2153, %v3219
    %v3353 = vadd.f32 %v2158, %v3224
    %v3354 = vadd.f32 %v2163, %v3229
    %v3355 = vadd.f32 %v2168, %v3234
    %v3356 = vadd.f32 %v2173, %v3239
    %v3357 = vadd.f32 %v2178, %v3244
    %v3358 = vld [vmem:[%s2] sm:$0x1]
    %v3360 = vlaneseq
    %v3361 = vshrl.u32 %v3360, 7
    %v3362 = vsub.s32 0, %v3361
    %v3363 = vrot.slane %v3358, %v3362
    %v3365 = vadd.f32 %v3247, %v3363
    %v3366 = vadd.f32 %v3248, %v3363
    %v3367 = vadd.f32 %v3249, %v3363
    %v3368 = vadd.f32 %v3250, %v3363
    %v3369 = vadd.f32 %v3251, %v3363
    %v3370 = vadd.f32 %v3252, %v3363
    %v3371 = vadd.f32 %v3253, %v3363
    %v3372 = vadd.f32 %v3254, %v3363
    %v3373 = vadd.f32 %v3255, %v3363
    %v3374 = vadd.f32 %v3256, %v3363
    %v3375 = vadd.f32 %v3257, %v3363
    %v3376 = vadd.f32 %v3258, %v3363
    %v3377 = vadd.f32 %v3259, %v3363
    %v3378 = vadd.f32 %v3260, %v3363
    %v3379 = vadd.f32 %v3261, %v3363
    %v3380 = vadd.f32 %v3262, %v3363
    %v3381 = vadd.f32 %v3263, %v3363
    %v3382 = vadd.f32 %v3264, %v3363
    %v3383 = vadd.f32 %v3265, %v3363
    %v3384 = vadd.f32 %v3266, %v3363
    %v3385 = vadd.f32 %v3267, %v3363
    %v3386 = vadd.f32 %v3268, %v3363
    %v3387 = vadd.f32 %v3269, %v3363
    %v3388 = vadd.f32 %v3270, %v3363
    %v3389 = vadd.f32 %v3271, %v3363
    %v3390 = vadd.f32 %v3272, %v3363
    %v3391 = vadd.f32 %v3273, %v3363
    %v3392 = vadd.f32 %v3274, %v3363
    %v3393 = vadd.f32 %v3275, %v3363
    %v3394 = vadd.f32 %v3276, %v3363
    %v3395 = vadd.f32 %v3277, %v3363
    %v3396 = vadd.f32 %v3278, %v3363
    %v3397 = vadd.f32 %v3279, %v3363
    %v3398 = vadd.f32 %v3280, %v3363
    %v3399 = vadd.f32 %v3281, %v3363
    %v3400 = vadd.f32 %v3282, %v3363
    %v3401 = vadd.f32 %v3283, %v3363
    %v3402 = vadd.f32 %v3284, %v3363
    %v3403 = vadd.f32 %v3285, %v3363
    %v3404 = vadd.f32 %v3286, %v3363
    %v3405 = vadd.f32 %v3287, %v3363
    %v3406 = vadd.f32 %v3288, %v3363
    %v3407 = vadd.f32 %v3289, %v3363
    %v3408 = vadd.f32 %v3290, %v3363
    %v3409 = vadd.f32 %v3291, %v3363
    %v3410 = vadd.f32 %v3292, %v3363
    %v3411 = vadd.f32 %v3293, %v3363
    %v3412 = vadd.f32 %v3294, %v3363
    %v3413 = vadd.f32 %v3295, %v3363
    %v3414 = vadd.f32 %v3296, %v3363
    %v3415 = vadd.f32 %v3297, %v3363
    %v3416 = vadd.f32 %v3298, %v3363
    %v3417 = vadd.f32 %v3299, %v3363
    %v3418 = vadd.f32 %v3300, %v3363
    %v3419 = vadd.f32 %v3301, %v3363
    %v3420 = vadd.f32 %v3302, %v3363
    %v3421 = vadd.f32 %v3303, %v3363
    %v3422 = vadd.f32 %v3304, %v3363
    %v3423 = vadd.f32 %v3305, %v3363
    %v3424 = vadd.f32 %v3306, %v3363
    %v3425 = vadd.f32 %v3307, %v3363
    %v3426 = vadd.f32 %v3308, %v3363
    %v3427 = vadd.f32 %v3309, %v3363
    %v3428 = vadd.f32 %v3310, %v3363
    %v3429 = vadd.f32 %v3311, %v3363
    %v3430 = vadd.f32 %v3312, %v3363
    %v3431 = vadd.f32 %v3313, %v3363
    %v3432 = vadd.f32 %v3314, %v3363
    %v3433 = vadd.f32 %v3315, %v3363
    %v3434 = vadd.f32 %v3316, %v3363
    %v3435 = vadd.f32 %v3317, %v3363
    %v3436 = vadd.f32 %v3318, %v3363
    %v3437 = vadd.f32 %v3319, %v3363
    %v3438 = vadd.f32 %v3320, %v3363
    %v3439 = vadd.f32 %v3321, %v3363
    %v3440 = vadd.f32 %v3322, %v3363
    %v3441 = vadd.f32 %v3323, %v3363
    %v3442 = vadd.f32 %v3324, %v3363
    %v3443 = vadd.f32 %v3325, %v3363
    %v3444 = vadd.f32 %v3326, %v3363
    %v3445 = vadd.f32 %v3327, %v3363
    %v3446 = vadd.f32 %v3328, %v3363
    %v3447 = vadd.f32 %v3329, %v3363
    %v3448 = vadd.f32 %v3330, %v3363
    %v3449 = vadd.f32 %v3331, %v3363
    %v3450 = vadd.f32 %v3332, %v3363
    %v3451 = vadd.f32 %v3333, %v3363
    %v3452 = vadd.f32 %v3334, %v3363
    %v3453 = vadd.f32 %v3335, %v3363
    %v3454 = vadd.f32 %v3336, %v3363
    %v3455 = vadd.f32 %v3337, %v3363
    %v3456 = vadd.f32 %v3338, %v3363
    %v3457 = vadd.f32 %v3339, %v3363
    %v3458 = vadd.f32 %v3340, %v3363
    %v3459 = vadd.f32 %v3341, %v3363
    %v3460 = vadd.f32 %v3342, %v3363
    %v3461 = vadd.f32 %v3343, %v3363
    %v3462 = vadd.f32 %v3344, %v3363
    %v3463 = vadd.f32 %v3345, %v3363
    %v3464 = vadd.f32 %v3346, %v3363
    %v3465 = vadd.f32 %v3347, %v3363
    %v3466 = vadd.f32 %v3348, %v3363
    %v3467 = vadd.f32 %v3349, %v3363
    %v3468 = vadd.f32 %v3350, %v3363
    %v3469 = vadd.f32 %v3351, %v3363
    %v3470 = vadd.f32 %v3352, %v3363
    %v3471 = vadd.f32 %v3353, %v3363
    %v3472 = vadd.f32 %v3354, %v3363
    %v3473 = vadd.f32 %v3355, %v3363
    %v3474 = vadd.f32 %v3356, %v3363
    %v3475 = vadd.f32 %v3357, %v3363
    %v3476 = vmax.f32 %v3365, 0.0
    %v3477 = vmax.f32 %v3366, 0.0
    %v3478 = vmax.f32 %v3367, 0.0
    %v3479 = vmax.f32 %v3368, 0.0
    %v3480 = vmax.f32 %v3369, 0.0
    %v3481 = vmax.f32 %v3370, 0.0
    %v3482 = vmax.f32 %v3371, 0.0
    %v3483 = vmax.f32 %v3372, 0.0
    %v3484 = vmax.f32 %v3373, 0.0
    %v3485 = vmax.f32 %v3374, 0.0
    %v3486 = vmax.f32 %v3375, 0.0
    %v3487 = vmax.f32 %v3376, 0.0
    %v3488 = vmax.f32 %v3377, 0.0
    %v3489 = vmax.f32 %v3378, 0.0
    %v3490 = vmax.f32 %v3379, 0.0
    %v3491 = vmax.f32 %v3380, 0.0
    %v3492 = vmax.f32 %v3381, 0.0
    %v3493 = vmax.f32 %v3382, 0.0
    %v3494 = vmax.f32 %v3383, 0.0
    %v3495 = vmax.f32 %v3384, 0.0
    %v3496 = vmax.f32 %v3385, 0.0
    %v3497 = vmax.f32 %v3386, 0.0
    %v3498 = vmax.f32 %v3387, 0.0
    %v3499 = vmax.f32 %v3388, 0.0
    %v3500 = vmax.f32 %v3389, 0.0
    %v3501 = vmax.f32 %v3390, 0.0
    %v3502 = vmax.f32 %v3391, 0.0
    %v3503 = vmax.f32 %v3392, 0.0
    %v3504 = vmax.f32 %v3393, 0.0
    %v3505 = vmax.f32 %v3394, 0.0
    %v3506 = vmax.f32 %v3395, 0.0
    %v3507 = vmax.f32 %v3396, 0.0
    %v3508 = vmax.f32 %v3397, 0.0
    %v3509 = vmax.f32 %v3398, 0.0
    %v3510 = vmax.f32 %v3399, 0.0
    %v3511 = vmax.f32 %v3400, 0.0
    %v3512 = vmax.f32 %v3401, 0.0
    %v3513 = vmax.f32 %v3402, 0.0
    %v3514 = vmax.f32 %v3403, 0.0
    %v3515 = vmax.f32 %v3404, 0.0
    %v3516 = vmax.f32 %v3405, 0.0
    %v3517 = vmax.f32 %v3406, 0.0
    %v3518 = vmax.f32 %v3407, 0.0
    %v3519 = vmax.f32 %v3408, 0.0
    %v3520 = vmax.f32 %v3409, 0.0
    %v3521 = vmax.f32 %v3410, 0.0
    %v3522 = vmax.f32 %v3411, 0.0
    %v3523 = vmax.f32 %v3412, 0.0
    %v3524 = vmax.f32 %v3413, 0.0
    %v3525 = vmax.f32 %v3414, 0.0
    %v3526 = vmax.f32 %v3415, 0.0
    %v3527 = vmax.f32 %v3416, 0.0
    %v3528 = vmax.f32 %v3417, 0.0
    %v3529 = vmax.f32 %v3418, 0.0
    %v3530 = vmax.f32 %v3419, 0.0
    %v3531 = vmax.f32 %v3420, 0.0
    %v3532 = vmax.f32 %v3421, 0.0
    %v3533 = vmax.f32 %v3422, 0.0
    %v3534 = vmax.f32 %v3423, 0.0
    %v3535 = vmax.f32 %v3424, 0.0
    %v3536 = vmax.f32 %v3425, 0.0
    %v3537 = vmax.f32 %v3426, 0.0
    %v3538 = vmax.f32 %v3427, 0.0
    %v3539 = vmax.f32 %v3428, 0.0
    %v3540 = vmax.f32 %v3429, 0.0
    %v3541 = vmax.f32 %v3430, 0.0
    %v3542 = vmax.f32 %v3431, 0.0
    %v3543 = vmax.f32 %v3432, 0.0
    %v3544 = vmax.f32 %v3433, 0.0
    %v3545 = vmax.f32 %v3434, 0.0
    %v3546 = vmax.f32 %v3435, 0.0
    %v3547 = vmax.f32 %v3436, 0.0
    %v3548 = vmax.f32 %v3437, 0.0
    %v3549 = vmax.f32 %v3438, 0.0
    %v3550 = vmax.f32 %v3439, 0.0
    %v3551 = vmax.f32 %v3440, 0.0
    %v3552 = vmax.f32 %v3441, 0.0
    %v3553 = vmax.f32 %v3442, 0.0
    %v3554 = vmax.f32 %v3443, 0.0
    %v3555 = vmax.f32 %v3444, 0.0
    %v3556 = vmax.f32 %v3445, 0.0
    %v3557 = vmax.f32 %v3446, 0.0
    %v3558 = vmax.f32 %v3447, 0.0
    %v3559 = vmax.f32 %v3448, 0.0
    %v3560 = vmax.f32 %v3449, 0.0
    %v3561 = vmax.f32 %v3450, 0.0
    %v3562 = vmax.f32 %v3451, 0.0
    %v3563 = vmax.f32 %v3452, 0.0
    %v3564 = vmax.f32 %v3453, 0.0
    %v3565 = vmax.f32 %v3454, 0.0
    %v3566 = vmax.f32 %v3455, 0.0
    %v3567 = vmax.f32 %v3456, 0.0
    %v3568 = vmax.f32 %v3457, 0.0
    %v3569 = vmax.f32 %v3458, 0.0
    %v3570 = vmax.f32 %v3459, 0.0
    %v3571 = vmax.f32 %v3460, 0.0
    %v3572 = vmax.f32 %v3461, 0.0
    %v3573 = vmax.f32 %v3462, 0.0
    %v3574 = vmax.f32 %v3463, 0.0
    %v3575 = vmax.f32 %v3464, 0.0
    %v3576 = vmax.f32 %v3465, 0.0
    %v3577 = vmax.f32 %v3466, 0.0
    %v3578 = vmax.f32 %v3467, 0.0
    %v3579 = vmax.f32 %v3468, 0.0
    %v3580 = vmax.f32 %v3469, 0.0
    %v3581 = vmax.f32 %v3470, 0.0
    %v3582 = vmax.f32 %v3471, 0.0
    %v3583 = vmax.f32 %v3472, 0.0
    %v3584 = vmax.f32 %v3473, 0.0
    %v3585 = vmax.f32 %v3474, 0.0
    %v3586 = vmax.f32 %v3475, 0.0
    %vm3587 = vcmask 523264
    %3588 = vst.msk [vmem:[#allocation2] sm:$0xff] %vm3587, %v3476
    %3589 = vst.msk [vmem:[#allocation2 + $0x8] sm:$0xff] %vm3587, %v3477
    %3590 = vst.msk [vmem:[#allocation2 + $0x10] sm:$0xff] %vm3587, %v3478
    %3591 = vst.msk [vmem:[#allocation2 + $0x18] sm:$0xff] %vm3587, %v3479
    %3592 = vst.msk [vmem:[#allocation2 + $0x20] sm:$0xff] %vm3587, %v3480
    %3593 = vst.msk [vmem:[#allocation2 + $0x28] sm:$0xff] %vm3587, %v3481
    %3594 = vst.msk [vmem:[#allocation2 + $0x30] sm:$0xff] %vm3587, %v3482
    %3595 = vst.msk [vmem:[#allocation2 + $0x38] sm:$0xff] %vm3587, %v3483
    %3596 = vst.msk [vmem:[#allocation2 + $0x40] sm:$0xff] %vm3587, %v3484
    %3597 = vst.msk [vmem:[#allocation2 + $0x48] sm:$0xff] %vm3587, %v3485
    %3598 = vst.msk [vmem:[#allocation2 + $0x50] sm:$0xff] %vm3587, %v3486
    %3599 = vst.msk [vmem:[#allocation2 + $0x58] sm:$0xff] %vm3587, %v3487
    %3600 = vst.msk [vmem:[#allocation2 + $0x60] sm:$0xff] %vm3587, %v3488
    %3601 = vst.msk [vmem:[#allocation2 + $0x68] sm:$0xff] %vm3587, %v3489
    %3602 = vst.msk [vmem:[#allocation2 + $0x70] sm:$0xff] %vm3587, %v3490
    %3603 = vst.msk [vmem:[#allocation2 + $0x78] sm:$0xff] %vm3587, %v3491
    %3604 = vst.msk [vmem:[#allocation2 + $0x80] sm:$0xff] %vm3587, %v3492
    %3605 = vst.msk [vmem:[#allocation2 + $0x88] sm:$0xff] %vm3587, %v3493
    %3606 = vst.msk [vmem:[#allocation2 + $0x90] sm:$0xff] %vm3587, %v3494
    %3607 = vst.msk [vmem:[#allocation2 + $0x98] sm:$0xff] %vm3587, %v3495
    %3608 = vst.msk [vmem:[#allocation2 + $0xa0] sm:$0xff] %vm3587, %v3496
    %3609 = vst.msk [vmem:[#allocation2 + $0xa8] sm:$0xff] %vm3587, %v3497
    %3610 = vst.msk [vmem:[#allocation2 + $0xb0] sm:$0xff] %vm3587, %v3498
    %3611 = vst.msk [vmem:[#allocation2 + $0xb8] sm:$0xff] %vm3587, %v3499
    %3612 = vst.msk [vmem:[#allocation2 + $0xc0] sm:$0xff] %vm3587, %v3500
    %3613 = vst.msk [vmem:[#allocation2 + $0xc8] sm:$0xff] %vm3587, %v3501
    %3614 = vst.msk [vmem:[#allocation2 + $0xd0] sm:$0xff] %vm3587, %v3502
    %3615 = vst.msk [vmem:[#allocation2 + $0xd8] sm:$0xff] %vm3587, %v3503
    %3616 = vst.msk [vmem:[#allocation2 + $0xe0] sm:$0xff] %vm3587, %v3504
    %3617 = vst.msk [vmem:[#allocation2 + $0xe8] sm:$0xff] %vm3587, %v3505
    %3618 = vst.msk [vmem:[#allocation2 + $0xf0] sm:$0xff] %vm3587, %v3506
    %3619 = vst.msk [vmem:[#allocation2 + $0xf8] sm:$0xff] %vm3587, %v3507
    %3620 = vst.msk [vmem:[#allocation2 + $0x100] sm:$0xff] %vm3587, %v3508
    %3621 = vst.msk [vmem:[#allocation2 + $0x108] sm:$0xff] %vm3587, %v3509
    %3622 = vst.msk [vmem:[#allocation2 + $0x110] sm:$0xff] %vm3587, %v3510
    %3623 = vst.msk [vmem:[#allocation2 + $0x118] sm:$0xff] %vm3587, %v3511
    %3624 = vst.msk [vmem:[#allocation2 + $0x120] sm:$0xff] %vm3587, %v3512
    %3625 = vst.msk [vmem:[#allocation2 + $0x128] sm:$0xff] %vm3587, %v3513
    %3626 = vst.msk [vmem:[#allocation2 + $0x130] sm:$0xff] %vm3587, %v3514
    %3627 = vst.msk [vmem:[#allocation2 + $0x138] sm:$0xff] %vm3587, %v3515
    %3628 = vst.msk [vmem:[#allocation2 + $0x140] sm:$0xff] %vm3587, %v3516
    %3629 = vst.msk [vmem:[#allocation2 + $0x148] sm:$0xff] %vm3587, %v3517
    %3630 = vst.msk [vmem:[#allocation2 + $0x150] sm:$0xff] %vm3587, %v3518
    %3631 = vst.msk [vmem:[#allocation2 + $0x158] sm:$0xff] %vm3587, %v3519
    %3632 = vst.msk [vmem:[#allocation2 + $0x160] sm:$0xff] %vm3587, %v3520
    %3633 = vst.msk [vmem:[#allocation2 + $0x168] sm:$0xff] %vm3587, %v3521
    %3634 = vst.msk [vmem:[#allocation2 + $0x170] sm:$0xff] %vm3587, %v3522
    %3635 = vst.msk [vmem:[#allocation2 + $0x178] sm:$0xff] %vm3587, %v3523
    %3636 = vst.msk [vmem:[#allocation2 + $0x180] sm:$0xff] %vm3587, %v3524
    %3637 = vst.msk [vmem:[#allocation2 + $0x188] sm:$0xff] %vm3587, %v3525
    %3638 = vst.msk [vmem:[#allocation2 + $0x190] sm:$0xff] %vm3587, %v3526
    %3639 = vst.msk [vmem:[#allocation2 + $0x198] sm:$0xff] %vm3587, %v3527
    %3640 = vst.msk [vmem:[#allocation2 + $0x1a0] sm:$0xff] %vm3587, %v3528
    %3641 = vst.msk [vmem:[#allocation2 + $0x1a8] sm:$0xff] %vm3587, %v3529
    %3642 = vst.msk [vmem:[#allocation2 + $0x1b0] sm:$0xff] %vm3587, %v3530
    %3643 = vst.msk [vmem:[#allocation2 + $0x1b8] sm:$0xff] %vm3587, %v3531
    %3644 = vst.msk [vmem:[#allocation2 + $0x1c0] sm:$0xff] %vm3587, %v3532
    %3645 = vst.msk [vmem:[#allocation2 + $0x1c8] sm:$0xff] %vm3587, %v3533
    %3646 = vst.msk [vmem:[#allocation2 + $0x1d0] sm:$0xff] %vm3587, %v3534
    %3647 = vst.msk [vmem:[#allocation2 + $0x1d8] sm:$0xff] %vm3587, %v3535
    %3648 = vst.msk [vmem:[#allocation2 + $0x1e0] sm:$0xff] %vm3587, %v3536
    %3649 = vst.msk [vmem:[#allocation2 + $0x1e8] sm:$0xff] %vm3587, %v3537
    %3650 = vst.msk [vmem:[#allocation2 + $0x1f0] sm:$0xff] %vm3587, %v3538
    %3651 = vst.msk [vmem:[#allocation2 + $0x1f8] sm:$0xff] %vm3587, %v3539
    %3652 = vst.msk [vmem:[#allocation2 + $0x200] sm:$0xff] %vm3587, %v3540
    %3653 = vst.msk [vmem:[#allocation2 + $0x208] sm:$0xff] %vm3587, %v3541
    %3654 = vst.msk [vmem:[#allocation2 + $0x210] sm:$0xff] %vm3587, %v3542
    %3655 = vst.msk [vmem:[#allocation2 + $0x218] sm:$0xff] %vm3587, %v3543
    %3656 = vst.msk [vmem:[#allocation2 + $0x220] sm:$0xff] %vm3587, %v3544
    %3657 = vst.msk [vmem:[#allocation2 + $0x228] sm:$0xff] %vm3587, %v3545
    %3658 = vst.msk [vmem:[#allocation2 + $0x230] sm:$0xff] %vm3587, %v3546
    %3659 = vst.msk [vmem:[#allocation2 + $0x238] sm:$0xff] %vm3587, %v3547
    %3660 = vst.msk [vmem:[#allocation2 + $0x240] sm:$0xff] %vm3587, %v3548
    %3661 = vst.msk [vmem:[#allocation2 + $0x248] sm:$0xff] %vm3587, %v3549
    %3662 = vst.msk [vmem:[#allocation2 + $0x250] sm:$0xff] %vm3587, %v3550
    %3663 = vst.msk [vmem:[#allocation2 + $0x258] sm:$0xff] %vm3587, %v3551
    %3664 = vst.msk [vmem:[#allocation2 + $0x260] sm:$0xff] %vm3587, %v3552
    %3665 = vst.msk [vmem:[#allocation2 + $0x268] sm:$0xff] %vm3587, %v3553
    %3666 = vst.msk [vmem:[#allocation2 + $0x270] sm:$0xff] %vm3587, %v3554
    %3667 = vst.msk [vmem:[#allocation2 + $0x278] sm:$0xff] %vm3587, %v3555
    %3668 = vst.msk [vmem:[#allocation2 + $0x280] sm:$0xff] %vm3587, %v3556
    %3669 = vst.msk [vmem:[#allocation2 + $0x288] sm:$0xff] %vm3587, %v3557
    %3670 = vst.msk [vmem:[#allocation2 + $0x290] sm:$0xff] %vm3587, %v3558
    %3671 = vst.msk [vmem:[#allocation2 + $0x298] sm:$0xff] %vm3587, %v3559
    %3672 = vst.msk [vmem:[#allocation2 + $0x2a0] sm:$0xff] %vm3587, %v3560
    %3673 = vst.msk [vmem:[#allocation2 + $0x2a8] sm:$0xff] %vm3587, %v3561
    %3674 = vst.msk [vmem:[#allocation2 + $0x2b0] sm:$0xff] %vm3587, %v3562
    %3675 = vst.msk [vmem:[#allocation2 + $0x2b8] sm:$0xff] %vm3587, %v3563
    %3676 = vst.msk [vmem:[#allocation2 + $0x2c0] sm:$0xff] %vm3587, %v3564
    %3677 = vst.msk [vmem:[#allocation2 + $0x2c8] sm:$0xff] %vm3587, %v3565
    %3678 = vst.msk [vmem:[#allocation2 + $0x2d0] sm:$0xff] %vm3587, %v3566
    %3679 = vst.msk [vmem:[#allocation2 + $0x2d8] sm:$0xff] %vm3587, %v3567
    %3680 = vst.msk [vmem:[#allocation2 + $0x2e0] sm:$0xff] %vm3587, %v3568
    %3681 = vst.msk [vmem:[#allocation2 + $0x2e8] sm:$0xff] %vm3587, %v3569
    %3682 = vst.msk [vmem:[#allocation2 + $0x2f0] sm:$0xff] %vm3587, %v3570
    %3683 = vst.msk [vmem:[#allocation2 + $0x2f8] sm:$0xff] %vm3587, %v3571
    %3684 = vst.msk [vmem:[#allocation2 + $0x300] sm:$0xff] %vm3587, %v3572
    %3685 = vst.msk [vmem:[#allocation2 + $0x308] sm:$0xff] %vm3587, %v3573
    %3686 = vst.msk [vmem:[#allocation2 + $0x310] sm:$0xff] %vm3587, %v3574
    %3687 = vst.msk [vmem:[#allocation2 + $0x318] sm:$0xff] %vm3587, %v3575
    %3688 = vst.msk [vmem:[#allocation2 + $0x320] sm:$0xff] %vm3587, %v3576
    %3689 = vst.msk [vmem:[#allocation2 + $0x328] sm:$0xff] %vm3587, %v3577
    %3690 = vst.msk [vmem:[#allocation2 + $0x330] sm:$0xff] %vm3587, %v3578
    %3691 = vst.msk [vmem:[#allocation2 + $0x338] sm:$0xff] %vm3587, %v3579
    %3692 = vst.msk [vmem:[#allocation2 + $0x340] sm:$0xff] %vm3587, %v3580
    %3693 = vst.msk [vmem:[#allocation2 + $0x348] sm:$0xff] %vm3587, %v3581
    %3694 = vst.msk [vmem:[#allocation2 + $0x350] sm:$0xff] %vm3587, %v3582
    %3695 = vst.msk [vmem:[#allocation2 + $0x358] sm:$0xff] %vm3587, %v3583
    %3696 = vst.msk [vmem:[#allocation2 + $0x360] sm:$0xff] %vm3587, %v3584
    %3697 = vst.msk [vmem:[#allocation2 + $0x368] sm:$0xff] %vm3587, %v3585
    %3698 = vst.msk [vmem:[#allocation2 + $0x370] sm:$0xff] %vm3587, %v3586
    %3699 = vst.msk [vmem:[#allocation2 + $0x378] sm:$0xff] %vm3587, 0.0
    %3700 = vst.msk [vmem:[#allocation2 + $0x380] sm:$0xff] %vm3587, 0.0
    %v3701 = vld [vmem:[#allocation2] ss:$2 sm:$0xff]
    %s3702 = scalar_lea.vmem [#allocation2], 16
    %v3703 = vld [vmem:[%s3702] ss:$2 sm:$0xff]
    %s3704 = scalar_lea.vmem [#allocation2], 32
    %v3705 = vld [vmem:[%s3704] ss:$2 sm:$0xff]
    %s3706 = scalar_lea.vmem [#allocation2], 48
    %v3707 = vld [vmem:[%s3706] ss:$2 sm:$0xff]
    %s3708 = scalar_lea.vmem [#allocation2], 64
    %v3709 = vld [vmem:[%s3708] ss:$2 sm:$0xff]
    %s3710 = scalar_lea.vmem [#allocation2], 80
    %v3711 = vld [vmem:[%s3710] ss:$2 sm:$0xff]
    %s3712 = scalar_lea.vmem [#allocation2], 96
    %v3713 = vld [vmem:[%s3712] ss:$2 sm:$0xff]
    %s3714 = scalar_lea.vmem [#allocation2], 112
    %v3715 = vld [vmem:[%s3714] ss:$2 sm:$0xff]
    %s3716 = scalar_lea.vmem [#allocation2], 128
    %v3717 = vld [vmem:[%s3716] ss:$2 sm:$0xff]
    %s3718 = scalar_lea.vmem [#allocation2], 144
    %v3719 = vld [vmem:[%s3718] ss:$2 sm:$0xff]
    %s3720 = scalar_lea.vmem [#allocation2], 160
    %v3721 = vld [vmem:[%s3720] ss:$2 sm:$0xff]
    %s3722 = scalar_lea.vmem [#allocation2], 176
    %v3723 = vld [vmem:[%s3722] ss:$2 sm:$0xff]
    %s3724 = scalar_lea.vmem [#allocation2], 192
    %v3725 = vld [vmem:[%s3724] ss:$2 sm:$0xff]
    %s3726 = scalar_lea.vmem [#allocation2], 208
    %v3727 = vld [vmem:[%s3726] ss:$2 sm:$0xff]
    %s3728 = scalar_lea.vmem [#allocation2], 224
    %v3729 = vld [vmem:[%s3728] ss:$2 sm:$0xff]
    %s3730 = scalar_lea.vmem [#allocation2], 240
    %v3731 = vld [vmem:[%s3730] ss:$2 sm:$0xff]
    %s3732 = scalar_lea.vmem [#allocation2], 256
    %v3733 = vld [vmem:[%s3732] ss:$2 sm:$0xff]
    %s3734 = scalar_lea.vmem [#allocation2], 272
    %v3735 = vld [vmem:[%s3734] ss:$2 sm:$0xff]
    %s3736 = scalar_lea.vmem [#allocation2], 288
    %v3737 = vld [vmem:[%s3736] ss:$2 sm:$0xff]
    %s3738 = scalar_lea.vmem [#allocation2], 304
    %v3739 = vld [vmem:[%s3738] ss:$2 sm:$0xff]
    %s3740 = scalar_lea.vmem [#allocation2], 320
    %v3741 = vld [vmem:[%s3740] ss:$2 sm:$0xff]
    %s3742 = scalar_lea.vmem [#allocation2], 336
    %v3743 = vld [vmem:[%s3742] ss:$2 sm:$0xff]
    %s3744 = scalar_lea.vmem [#allocation2], 352
    %v3745 = vld [vmem:[%s3744] ss:$2 sm:$0xff]
    %s3746 = scalar_lea.vmem [#allocation2], 368
    %v3747 = vld [vmem:[%s3746] ss:$2 sm:$0xff]
    %s3748 = scalar_lea.vmem [#allocation2], 384
    %v3749 = vld [vmem:[%s3748] ss:$2 sm:$0xff]
    %s3750 = scalar_lea.vmem [#allocation2], 400
    %v3751 = vld [vmem:[%s3750] ss:$2 sm:$0xff]
    %s3752 = scalar_lea.vmem [#allocation2], 416
    %v3753 = vld [vmem:[%s3752] ss:$2 sm:$0xff]
    %s3754 = scalar_lea.vmem [#allocation2], 432
    %v3755 = vld [vmem:[%s3754] ss:$2 sm:$0xff]
    %s3756 = scalar_lea.vmem [#allocation2], 448
    %v3757 = vld [vmem:[%s3756] ss:$2 sm:$0xff]
    %s3758 = scalar_lea.vmem [#allocation2], 464
    %v3759 = vld [vmem:[%s3758] ss:$2 sm:$0xff]
    %s3760 = scalar_lea.vmem [#allocation2], 480
    %v3761 = vld [vmem:[%s3760] ss:$2 sm:$0xff]
    %s3762 = scalar_lea.vmem [#allocation2], 496
    %v3763 = vld [vmem:[%s3762] ss:$2 sm:$0xff]
    %s3764 = scalar_lea.vmem [#allocation2], 512
    %v3765 = vld [vmem:[%s3764] ss:$2 sm:$0xff]
    %s3766 = scalar_lea.vmem [#allocation2], 528
    %v3767 = vld [vmem:[%s3766] ss:$2 sm:$0xff]
    %s3768 = scalar_lea.vmem [#allocation2], 544
    %v3769 = vld [vmem:[%s3768] ss:$2 sm:$0xff]
    %s3770 = scalar_lea.vmem [#allocation2], 560
    %v3771 = vld [vmem:[%s3770] ss:$2 sm:$0xff]
    %s3772 = scalar_lea.vmem [#allocation2], 576
    %v3773 = vld [vmem:[%s3772] ss:$2 sm:$0xff]
    %s3774 = scalar_lea.vmem [#allocation2], 592
    %v3775 = vld [vmem:[%s3774] ss:$2 sm:$0xff]
    %s3776 = scalar_lea.vmem [#allocation2], 608
    %v3777 = vld [vmem:[%s3776] ss:$2 sm:$0xff]
    %s3778 = scalar_lea.vmem [#allocation2], 624
    %v3779 = vld [vmem:[%s3778] ss:$2 sm:$0xff]
    %s3780 = scalar_lea.vmem [#allocation2], 640
    %v3781 = vld [vmem:[%s3780] ss:$2 sm:$0xff]
    %s3782 = scalar_lea.vmem [#allocation2], 656
    %v3783 = vld [vmem:[%s3782] ss:$2 sm:$0xff]
    %s3784 = scalar_lea.vmem [#allocation2], 672
    %v3785 = vld [vmem:[%s3784] ss:$2 sm:$0xff]
    %s3786 = scalar_lea.vmem [#allocation2], 688
    %v3787 = vld [vmem:[%s3786] ss:$2 sm:$0xff]
    %s3788 = scalar_lea.vmem [#allocation2], 704
    %v3789 = vld [vmem:[%s3788] ss:$2 sm:$0xff]
    %s3790 = scalar_lea.vmem [#allocation2], 720
    %v3791 = vld [vmem:[%s3790] ss:$2 sm:$0xff]
    %s3792 = scalar_lea.vmem [#allocation2], 736
    %v3793 = vld [vmem:[%s3792] ss:$2 sm:$0xff]
    %s3794 = scalar_lea.vmem [#allocation2], 752
    %v3795 = vld [vmem:[%s3794] ss:$2 sm:$0xff]
    %s3796 = scalar_lea.vmem [#allocation2], 768
    %v3797 = vld [vmem:[%s3796] ss:$2 sm:$0xff]
    %s3798 = scalar_lea.vmem [#allocation2], 784
    %v3799 = vld [vmem:[%s3798] ss:$2 sm:$0xff]
    %s3800 = scalar_lea.vmem [#allocation2], 800
    %v3801 = vld [vmem:[%s3800] ss:$2 sm:$0xff]
    %s3802 = scalar_lea.vmem [#allocation2], 816
    %v3803 = vld [vmem:[%s3802] ss:$2 sm:$0xff]
    %s3804 = scalar_lea.vmem [#allocation2], 832
    %v3805 = vld [vmem:[%s3804] ss:$2 sm:$0xff]
    %s3806 = scalar_lea.vmem [#allocation2], 848
    %v3807 = vld [vmem:[%s3806] ss:$2 sm:$0xff]
    %s3808 = scalar_lea.vmem [#allocation2], 864
    %v3809 = vld [vmem:[%s3808] ss:$2 sm:$0xff]
    %s3810 = scalar_lea.vmem [#allocation2], 880
    %v3811 = vld [vmem:[%s3810] ss:$2 sm:$0xff]
    %s3812 = scalar_lea.vmem [#allocation2], 1
    %v3813 = vld [vmem:[%s3812] ss:$2 sm:$0xff]
    %s3814 = scalar_lea.vmem [#allocation2], 17
    %v3815 = vld [vmem:[%s3814] ss:$2 sm:$0xff]
    %s3816 = scalar_lea.vmem [#allocation2], 33
    %v3817 = vld [vmem:[%s3816] ss:$2 sm:$0xff]
    %s3818 = scalar_lea.vmem [#allocation2], 49
    %v3819 = vld [vmem:[%s3818] ss:$2 sm:$0xff]
    %s3820 = scalar_lea.vmem [#allocation2], 65
    %v3821 = vld [vmem:[%s3820] ss:$2 sm:$0xff]
    %s3822 = scalar_lea.vmem [#allocation2], 81
    %v3823 = vld [vmem:[%s3822] ss:$2 sm:$0xff]
    %s3824 = scalar_lea.vmem [#allocation2], 97
    %v3825 = vld [vmem:[%s3824] ss:$2 sm:$0xff]
    %s3826 = scalar_lea.vmem [#allocation2], 113
    %v3827 = vld [vmem:[%s3826] ss:$2 sm:$0xff]
    %s3828 = scalar_lea.vmem [#allocation2], 129
    %v3829 = vld [vmem:[%s3828] ss:$2 sm:$0xff]
    %s3830 = scalar_lea.vmem [#allocation2], 145
    %v3831 = vld [vmem:[%s3830] ss:$2 sm:$0xff]
    %s3832 = scalar_lea.vmem [#allocation2], 161
    %v3833 = vld [vmem:[%s3832] ss:$2 sm:$0xff]
    %s3834 = scalar_lea.vmem [#allocation2], 177
    %v3835 = vld [vmem:[%s3834] ss:$2 sm:$0xff]
    %s3836 = scalar_lea.vmem [#allocation2], 193
    %v3837 = vld [vmem:[%s3836] ss:$2 sm:$0xff]
    %s3838 = scalar_lea.vmem [#allocation2], 209
    %v3839 = vld [vmem:[%s3838] ss:$2 sm:$0xff]
    %s3840 = scalar_lea.vmem [#allocation2], 225
    %v3841 = vld [vmem:[%s3840] ss:$2 sm:$0xff]
    %s3842 = scalar_lea.vmem [#allocation2], 241
    %v3843 = vld [vmem:[%s3842] ss:$2 sm:$0xff]
    %s3844 = scalar_lea.vmem [#allocation2], 257
    %v3845 = vld [vmem:[%s3844] ss:$2 sm:$0xff]
    %s3846 = scalar_lea.vmem [#allocation2], 273
    %v3847 = vld [vmem:[%s3846] ss:$2 sm:$0xff]
    %s3848 = scalar_lea.vmem [#allocation2], 289
    %v3849 = vld [vmem:[%s3848] ss:$2 sm:$0xff]
    %s3850 = scalar_lea.vmem [#allocation2], 305
    %v3851 = vld [vmem:[%s3850] ss:$2 sm:$0xff]
    %s3852 = scalar_lea.vmem [#allocation2], 321
    %v3853 = vld [vmem:[%s3852] ss:$2 sm:$0xff]
    %s3854 = scalar_lea.vmem [#allocation2], 337
    %v3855 = vld [vmem:[%s3854] ss:$2 sm:$0xff]
    %s3856 = scalar_lea.vmem [#allocation2], 353
    %v3857 = vld [vmem:[%s3856] ss:$2 sm:$0xff]
    %s3858 = scalar_lea.vmem [#allocation2], 369
    %v3859 = vld [vmem:[%s3858] ss:$2 sm:$0xff]
    %s3860 = scalar_lea.vmem [#allocation2], 385
    %v3861 = vld [vmem:[%s3860] ss:$2 sm:$0xff]
    %s3862 = scalar_lea.vmem [#allocation2], 401
    %v3863 = vld [vmem:[%s3862] ss:$2 sm:$0xff]
    %s3864 = scalar_lea.vmem [#allocation2], 417
    %v3865 = vld [vmem:[%s3864] ss:$2 sm:$0xff]
    %s3866 = scalar_lea.vmem [#allocation2], 433
    %v3867 = vld [vmem:[%s3866] ss:$2 sm:$0xff]
    %s3868 = scalar_lea.vmem [#allocation2], 449
    %v3869 = vld [vmem:[%s3868] ss:$2 sm:$0xff]
    %s3870 = scalar_lea.vmem [#allocation2], 465
    %v3871 = vld [vmem:[%s3870] ss:$2 sm:$0xff]
    %s3872 = scalar_lea.vmem [#allocation2], 481
    %v3873 = vld [vmem:[%s3872] ss:$2 sm:$0xff]
    %s3874 = scalar_lea.vmem [#allocation2], 497
    %v3875 = vld [vmem:[%s3874] ss:$2 sm:$0xff]
    %s3876 = scalar_lea.vmem [#allocation2], 513
    %v3877 = vld [vmem:[%s3876] ss:$2 sm:$0xff]
    %s3878 = scalar_lea.vmem [#allocation2], 529
    %v3879 = vld [vmem:[%s3878] ss:$2 sm:$0xff]
    %s3880 = scalar_lea.vmem [#allocation2], 545
    %v3881 = vld [vmem:[%s3880] ss:$2 sm:$0xff]
    %s3882 = scalar_lea.vmem [#allocation2], 561
    %v3883 = vld [vmem:[%s3882] ss:$2 sm:$0xff]
    %s3884 = scalar_lea.vmem [#allocation2], 577
    %v3885 = vld [vmem:[%s3884] ss:$2 sm:$0xff]
    %s3886 = scalar_lea.vmem [#allocation2], 593
    %v3887 = vld [vmem:[%s3886] ss:$2 sm:$0xff]
    %s3888 = scalar_lea.vmem [#allocation2], 609
    %v3889 = vld [vmem:[%s3888] ss:$2 sm:$0xff]
    %s3890 = scalar_lea.vmem [#allocation2], 625
    %v3891 = vld [vmem:[%s3890] ss:$2 sm:$0xff]
    %s3892 = scalar_lea.vmem [#allocation2], 641
    %v3893 = vld [vmem:[%s3892] ss:$2 sm:$0xff]
    %s3894 = scalar_lea.vmem [#allocation2], 657
    %v3895 = vld [vmem:[%s3894] ss:$2 sm:$0xff]
    %s3896 = scalar_lea.vmem [#allocation2], 673
    %v3897 = vld [vmem:[%s3896] ss:$2 sm:$0xff]
    %s3898 = scalar_lea.vmem [#allocation2], 689
    %v3899 = vld [vmem:[%s3898] ss:$2 sm:$0xff]
    %s3900 = scalar_lea.vmem [#allocation2], 705
    %v3901 = vld [vmem:[%s3900] ss:$2 sm:$0xff]
    %s3902 = scalar_lea.vmem [#allocation2], 721
    %v3903 = vld [vmem:[%s3902] ss:$2 sm:$0xff]
    %s3904 = scalar_lea.vmem [#allocation2], 737
    %v3905 = vld [vmem:[%s3904] ss:$2 sm:$0xff]
    %s3906 = scalar_lea.vmem [#allocation2], 753
    %v3907 = vld [vmem:[%s3906] ss:$2 sm:$0xff]
    %s3908 = scalar_lea.vmem [#allocation2], 769
    %v3909 = vld [vmem:[%s3908] ss:$2 sm:$0xff]
    %s3910 = scalar_lea.vmem [#allocation2], 785
    %v3911 = vld [vmem:[%s3910] ss:$2 sm:$0xff]
    %s3912 = scalar_lea.vmem [#allocation2], 801
    %v3913 = vld [vmem:[%s3912] ss:$2 sm:$0xff]
    %s3914 = scalar_lea.vmem [#allocation2], 817
    %v3915 = vld [vmem:[%s3914] ss:$2 sm:$0xff]
    %s3916 = scalar_lea.vmem [#allocation2], 833
    %v3917 = vld [vmem:[%s3916] ss:$2 sm:$0xff]
    %s3918 = scalar_lea.vmem [#allocation2], 849
    %v3919 = vld [vmem:[%s3918] ss:$2 sm:$0xff]
    %s3920 = scalar_lea.vmem [#allocation2], 865
    %v3921 = vld [vmem:[%s3920] ss:$2 sm:$0xff]
    %s3922 = scalar_lea.vmem [#allocation2], 881
    %v3923 = vld [vmem:[%s3922] ss:$2 sm:$0xff]
    %v3924 = vmax.f32 %v3701, %v3813
    %v3925 = vmax.f32 %v3703, %v3815
    %v3926 = vmax.f32 %v3705, %v3817
    %v3927 = vmax.f32 %v3707, %v3819
    %v3928 = vmax.f32 %v3709, %v3821
    %v3929 = vmax.f32 %v3711, %v3823
    %v3930 = vmax.f32 %v3713, %v3825
    %v3931 = vmax.f32 %v3715, %v3827
    %v3932 = vmax.f32 %v3717, %v3829
    %v3933 = vmax.f32 %v3719, %v3831
    %v3934 = vmax.f32 %v3721, %v3833
    %v3935 = vmax.f32 %v3723, %v3835
    %v3936 = vmax.f32 %v3725, %v3837
    %v3937 = vmax.f32 %v3727, %v3839
    %v3938 = vmax.f32 %v3729, %v3841
    %v3939 = vmax.f32 %v3731, %v3843
    %v3940 = vmax.f32 %v3733, %v3845
    %v3941 = vmax.f32 %v3735, %v3847
    %v3942 = vmax.f32 %v3737, %v3849
    %v3943 = vmax.f32 %v3739, %v3851
    %v3944 = vmax.f32 %v3741, %v3853
    %v3945 = vmax.f32 %v3743, %v3855
    %v3946 = vmax.f32 %v3745, %v3857
    %v3947 = vmax.f32 %v3747, %v3859
    %v3948 = vmax.f32 %v3749, %v3861
    %v3949 = vmax.f32 %v3751, %v3863
    %v3950 = vmax.f32 %v3753, %v3865
    %v3951 = vmax.f32 %v3755, %v3867
    %v3952 = vmax.f32 %v3757, %v3869
    %v3953 = vmax.f32 %v3759, %v3871
    %v3954 = vmax.f32 %v3761, %v3873
    %v3955 = vmax.f32 %v3763, %v3875
    %v3956 = vmax.f32 %v3765, %v3877
    %v3957 = vmax.f32 %v3767, %v3879
    %v3958 = vmax.f32 %v3769, %v3881
    %v3959 = vmax.f32 %v3771, %v3883
    %v3960 = vmax.f32 %v3773, %v3885
    %v3961 = vmax.f32 %v3775, %v3887
    %v3962 = vmax.f32 %v3777, %v3889
    %v3963 = vmax.f32 %v3779, %v3891
    %v3964 = vmax.f32 %v3781, %v3893
    %v3965 = vmax.f32 %v3783, %v3895
    %v3966 = vmax.f32 %v3785, %v3897
    %v3967 = vmax.f32 %v3787, %v3899
    %v3968 = vmax.f32 %v3789, %v3901
    %v3969 = vmax.f32 %v3791, %v3903
    %v3970 = vmax.f32 %v3793, %v3905
    %v3971 = vmax.f32 %v3795, %v3907
    %v3972 = vmax.f32 %v3797, %v3909
    %v3973 = vmax.f32 %v3799, %v3911
    %v3974 = vmax.f32 %v3801, %v3913
    %v3975 = vmax.f32 %v3803, %v3915
    %v3976 = vmax.f32 %v3805, %v3917
    %v3977 = vmax.f32 %v3807, %v3919
    %v3978 = vmax.f32 %v3809, %v3921
    %v3979 = vmax.f32 %v3811, %v3923
    %s3980 = scalar_lea.vmem [#allocation2], 2
    %v3981 = vld [vmem:[%s3980] ss:$2 sm:$0xff]
    %s3982 = scalar_lea.vmem [#allocation2], 18
    %v3983 = vld [vmem:[%s3982] ss:$2 sm:$0xff]
    %s3984 = scalar_lea.vmem [#allocation2], 34
    %v3985 = vld [vmem:[%s3984] ss:$2 sm:$0xff]
    %s3986 = scalar_lea.vmem [#allocation2], 50
    %v3987 = vld [vmem:[%s3986] ss:$2 sm:$0xff]
    %s3988 = scalar_lea.vmem [#allocation2], 66
    %v3989 = vld [vmem:[%s3988] ss:$2 sm:$0xff]
    %s3990 = scalar_lea.vmem [#allocation2], 82
    %v3991 = vld [vmem:[%s3990] ss:$2 sm:$0xff]
    %s3992 = scalar_lea.vmem [#allocation2], 98
    %v3993 = vld [vmem:[%s3992] ss:$2 sm:$0xff]
    %s3994 = scalar_lea.vmem [#allocation2], 114
    %v3995 = vld [vmem:[%s3994] ss:$2 sm:$0xff]
    %s3996 = scalar_lea.vmem [#allocation2], 130
    %v3997 = vld [vmem:[%s3996] ss:$2 sm:$0xff]
    %s3998 = scalar_lea.vmem [#allocation2], 146
    %v3999 = vld [vmem:[%s3998] ss:$2 sm:$0xff]
    %s4000 = scalar_lea.vmem [#allocation2], 162
    %v4001 = vld [vmem:[%s4000] ss:$2 sm:$0xff]
    %s4002 = scalar_lea.vmem [#allocation2], 178
    %v4003 = vld [vmem:[%s4002] ss:$2 sm:$0xff]
    %s4004 = scalar_lea.vmem [#allocation2], 194
    %v4005 = vld [vmem:[%s4004] ss:$2 sm:$0xff]
    %s4006 = scalar_lea.vmem [#allocation2], 210
    %v4007 = vld [vmem:[%s4006] ss:$2 sm:$0xff]
    %s4008 = scalar_lea.vmem [#allocation2], 226
    %v4009 = vld [vmem:[%s4008] ss:$2 sm:$0xff]
    %s4010 = scalar_lea.vmem [#allocation2], 242
    %v4011 = vld [vmem:[%s4010] ss:$2 sm:$0xff]
    %s4012 = scalar_lea.vmem [#allocation2], 258
    %v4013 = vld [vmem:[%s4012] ss:$2 sm:$0xff]
    %s4014 = scalar_lea.vmem [#allocation2], 274
    %v4015 = vld [vmem:[%s4014] ss:$2 sm:$0xff]
    %s4016 = scalar_lea.vmem [#allocation2], 290
    %v4017 = vld [vmem:[%s4016] ss:$2 sm:$0xff]
    %s4018 = scalar_lea.vmem [#allocation2], 306
    %v4019 = vld [vmem:[%s4018] ss:$2 sm:$0xff]
    %s4020 = scalar_lea.vmem [#allocation2], 322
    %v4021 = vld [vmem:[%s4020] ss:$2 sm:$0xff]
    %s4022 = scalar_lea.vmem [#allocation2], 338
    %v4023 = vld [vmem:[%s4022] ss:$2 sm:$0xff]
    %s4024 = scalar_lea.vmem [#allocation2], 354
    %v4025 = vld [vmem:[%s4024] ss:$2 sm:$0xff]
    %s4026 = scalar_lea.vmem [#allocation2], 370
    %v4027 = vld [vmem:[%s4026] ss:$2 sm:$0xff]
    %s4028 = scalar_lea.vmem [#allocation2], 386
    %v4029 = vld [vmem:[%s4028] ss:$2 sm:$0xff]
    %s4030 = scalar_lea.vmem [#allocation2], 402
    %v4031 = vld [vmem:[%s4030] ss:$2 sm:$0xff]
    %s4032 = scalar_lea.vmem [#allocation2], 418
    %v4033 = vld [vmem:[%s4032] ss:$2 sm:$0xff]
    %s4034 = scalar_lea.vmem [#allocation2], 434
    %v4035 = vld [vmem:[%s4034] ss:$2 sm:$0xff]
    %s4036 = scalar_lea.vmem [#allocation2], 450
    %v4037 = vld [vmem:[%s4036] ss:$2 sm:$0xff]
    %s4038 = scalar_lea.vmem [#allocation2], 466
    %v4039 = vld [vmem:[%s4038] ss:$2 sm:$0xff]
    %s4040 = scalar_lea.vmem [#allocation2], 482
    %v4041 = vld [vmem:[%s4040] ss:$2 sm:$0xff]
    %s4042 = scalar_lea.vmem [#allocation2], 498
    %v4043 = vld [vmem:[%s4042] ss:$2 sm:$0xff]
    %s4044 = scalar_lea.vmem [#allocation2], 514
    %v4045 = vld [vmem:[%s4044] ss:$2 sm:$0xff]
    %s4046 = scalar_lea.vmem [#allocation2], 530
    %v4047 = vld [vmem:[%s4046] ss:$2 sm:$0xff]
    %s4048 = scalar_lea.vmem [#allocation2], 546
    %v4049 = vld [vmem:[%s4048] ss:$2 sm:$0xff]
    %s4050 = scalar_lea.vmem [#allocation2], 562
    %v4051 = vld [vmem:[%s4050] ss:$2 sm:$0xff]
    %s4052 = scalar_lea.vmem [#allocation2], 578
    %v4053 = vld [vmem:[%s4052] ss:$2 sm:$0xff]
    %s4054 = scalar_lea.vmem [#allocation2], 594
    %v4055 = vld [vmem:[%s4054] ss:$2 sm:$0xff]
    %s4056 = scalar_lea.vmem [#allocation2], 610
    %v4057 = vld [vmem:[%s4056] ss:$2 sm:$0xff]
    %s4058 = scalar_lea.vmem [#allocation2], 626
    %v4059 = vld [vmem:[%s4058] ss:$2 sm:$0xff]
    %s4060 = scalar_lea.vmem [#allocation2], 642
    %v4061 = vld [vmem:[%s4060] ss:$2 sm:$0xff]
    %s4062 = scalar_lea.vmem [#allocation2], 658
    %v4063 = vld [vmem:[%s4062] ss:$2 sm:$0xff]
    %s4064 = scalar_lea.vmem [#allocation2], 674
    %v4065 = vld [vmem:[%s4064] ss:$2 sm:$0xff]
    %s4066 = scalar_lea.vmem [#allocation2], 690
    %v4067 = vld [vmem:[%s4066] ss:$2 sm:$0xff]
    %s4068 = scalar_lea.vmem [#allocation2], 706
    %v4069 = vld [vmem:[%s4068] ss:$2 sm:$0xff]
    %s4070 = scalar_lea.vmem [#allocation2], 722
    %v4071 = vld [vmem:[%s4070] ss:$2 sm:$0xff]
    %s4072 = scalar_lea.vmem [#allocation2], 738
    %v4073 = vld [vmem:[%s4072] ss:$2 sm:$0xff]
    %s4074 = scalar_lea.vmem [#allocation2], 754
    %v4075 = vld [vmem:[%s4074] ss:$2 sm:$0xff]
    %s4076 = scalar_lea.vmem [#allocation2], 770
    %v4077 = vld [vmem:[%s4076] ss:$2 sm:$0xff]
    %s4078 = scalar_lea.vmem [#allocation2], 786
    %v4079 = vld [vmem:[%s4078] ss:$2 sm:$0xff]
    %s4080 = scalar_lea.vmem [#allocation2], 802
    %v4081 = vld [vmem:[%s4080] ss:$2 sm:$0xff]
    %s4082 = scalar_lea.vmem [#allocation2], 818
    %v4083 = vld [vmem:[%s4082] ss:$2 sm:$0xff]
    %s4084 = scalar_lea.vmem [#allocation2], 834
    %v4085 = vld [vmem:[%s4084] ss:$2 sm:$0xff]
    %s4086 = scalar_lea.vmem [#allocation2], 850
    %v4087 = vld [vmem:[%s4086] ss:$2 sm:$0xff]
    %s4088 = scalar_lea.vmem [#allocation2], 866
    %v4089 = vld [vmem:[%s4088] ss:$2 sm:$0xff]
    %s4090 = scalar_lea.vmem [#allocation2], 882
    %v4091 = vld [vmem:[%s4090] ss:$2 sm:$0xff]
    %v4092 = vmax.f32 %v3924, %v3981
    %v4093 = vmax.f32 %v3925, %v3983
    %v4094 = vmax.f32 %v3926, %v3985
    %v4095 = vmax.f32 %v3927, %v3987
    %v4096 = vmax.f32 %v3928, %v3989
    %v4097 = vmax.f32 %v3929, %v3991
    %v4098 = vmax.f32 %v3930, %v3993
    %v4099 = vmax.f32 %v3931, %v3995
    %v4100 = vmax.f32 %v3932, %v3997
    %v4101 = vmax.f32 %v3933, %v3999
    %v4102 = vmax.f32 %v3934, %v4001
    %v4103 = vmax.f32 %v3935, %v4003
    %v4104 = vmax.f32 %v3936, %v4005
    %v4105 = vmax.f32 %v3937, %v4007
    %v4106 = vmax.f32 %v3938, %v4009
    %v4107 = vmax.f32 %v3939, %v4011
    %v4108 = vmax.f32 %v3940, %v4013
    %v4109 = vmax.f32 %v3941, %v4015
    %v4110 = vmax.f32 %v3942, %v4017
    %v4111 = vmax.f32 %v3943, %v4019
    %v4112 = vmax.f32 %v3944, %v4021
    %v4113 = vmax.f32 %v3945, %v4023
    %v4114 = vmax.f32 %v3946, %v4025
    %v4115 = vmax.f32 %v3947, %v4027
    %v4116 = vmax.f32 %v3948, %v4029
    %v4117 = vmax.f32 %v3949, %v4031
    %v4118 = vmax.f32 %v3950, %v4033
    %v4119 = vmax.f32 %v3951, %v4035
    %v4120 = vmax.f32 %v3952, %v4037
    %v4121 = vmax.f32 %v3953, %v4039
    %v4122 = vmax.f32 %v3954, %v4041
    %v4123 = vmax.f32 %v3955, %v4043
    %v4124 = vmax.f32 %v3956, %v4045
    %v4125 = vmax.f32 %v3957, %v4047
    %v4126 = vmax.f32 %v3958, %v4049
    %v4127 = vmax.f32 %v3959, %v4051
    %v4128 = vmax.f32 %v3960, %v4053
    %v4129 = vmax.f32 %v3961, %v4055
    %v4130 = vmax.f32 %v3962, %v4057
    %v4131 = vmax.f32 %v3963, %v4059
    %v4132 = vmax.f32 %v3964, %v4061
    %v4133 = vmax.f32 %v3965, %v4063
    %v4134 = vmax.f32 %v3966, %v4065
    %v4135 = vmax.f32 %v3967, %v4067
    %v4136 = vmax.f32 %v3968, %v4069
    %v4137 = vmax.f32 %v3969, %v4071
    %v4138 = vmax.f32 %v3970, %v4073
    %v4139 = vmax.f32 %v3971, %v4075
    %v4140 = vmax.f32 %v3972, %v4077
    %v4141 = vmax.f32 %v3973, %v4079
    %v4142 = vmax.f32 %v3974, %v4081
    %v4143 = vmax.f32 %v3975, %v4083
    %v4144 = vmax.f32 %v3976, %v4085
    %v4145 = vmax.f32 %v3977, %v4087
    %v4146 = vmax.f32 %v3978, %v4089
    %v4147 = vmax.f32 %v3979, %v4091
    %v4148 = vlaneseq
    %v4149 = vshrl.u32 %v4148, 7
    %v4150 = vadd.s32 %v4149, 8
    %v4151 = vadd.s32 %v4149, 16
    %v4152 = vadd.s32 %v4149, 24
    %v4153 = vadd.s32 %v4149, 32
    %v4154 = vadd.s32 %v4149, 40
    %v4155 = vadd.s32 %v4149, 48
    %v4156 = vadd.s32 %v4149, 56
    %v4157 = vadd.s32 %v4149, 64
    %v4158 = vadd.s32 %v4149, 72
    %v4159 = vadd.s32 %v4149, 80
    %v4160 = vadd.s32 %v4149, 88
    %v4161 = vadd.s32 %v4149, 96
    %v4162 = vadd.s32 %v4149, 104
    %v4163 = vadd.s32 %v4149, 112
    %v4164 = vadd.s32 %v4149, 120
    %v4165 = vadd.s32 %v4149, 128
    %v4166 = vadd.s32 %v4149, 136
    %v4167 = vadd.s32 %v4149, 144
    %v4168 = vadd.s32 %v4149, 152
    %v4169 = vadd.s32 %v4149, 160
    %v4170 = vadd.s32 %v4149, 168
    %v4171 = vadd.s32 %v4149, 176
    %v4172 = vadd.s32 %v4149, 184
    %v4173 = vadd.s32 %v4149, 192
    %v4174 = vadd.s32 %v4149, 200
    %v4175 = vadd.s32 %v4149, 208
    %v4176 = vadd.s32 %v4149, 216
    %v4177 = vadd.s32 %v4149, 224
    %v4178 = vadd.s32 %v4149, 232
    %v4179 = vadd.s32 %v4149, 240
    %v4180 = vadd.s32 %v4149, 248
    %v4181 = vadd.s32 %v4149, 256
    %v4182 = vadd.s32 %v4149, 264
    %v4183 = vadd.s32 %v4149, 272
    %v4184 = vadd.s32 %v4149, 280
    %v4185 = vadd.s32 %v4149, 288
    %v4186 = vadd.s32 %v4149, 296
    %v4187 = vadd.s32 %v4149, 304
    %v4188 = vadd.s32 %v4149, 312
    %v4189 = vadd.s32 %v4149, 320
    %v4190 = vadd.s32 %v4149, 328
    %v4191 = vadd.s32 %v4149, 336
    %v4192 = vadd.s32 %v4149, 344
    %v4193 = vadd.s32 %v4149, 352
    %v4194 = vadd.s32 %v4149, 360
    %v4195 = vadd.s32 %v4149, 368
    %v4196 = vadd.s32 %v4149, 376
    %v4197 = vadd.s32 %v4149, 384
    %v4198 = vadd.s32 %v4149, 392
    %v4199 = vadd.s32 %v4149, 400
    %v4200 = vadd.s32 %v4149, 408
    %v4201 = vadd.s32 %v4149, 416
    %v4202 = vadd.s32 %v4149, 424
    %v4203 = vadd.s32 %v4149, 432
    %v4204 = vadd.s32 %v4149, 440
    %vm4205 = vcmp.lt.s32.totalorder %v4149, 0
    %v4206 = vsub.s32 0, %v4149
    %v4207 = vsel %vm4205, %v4206, %v4149
    %v4208 = vmul.u32.u64.compose %v4207, 2454267026
    %v4209 = vextract.low.u32 %v4208
    %v4210 = vextract.high.u32 %v4208
    %vm4211 = vc.u32 %v4209, 2454267026
    %v4212 = vsel %vm4211, 1, 0
    %v4213 = vadd.s32 %v4210, %v4212
    %v4214 = vshrl.u32 %v4213, 5
    %v4215 = vmul.u32 %v4214, 56
    %v4216 = vsub.s32 %v4207, %v4215
    %v4217 = vsub.s32 0, %v4216
    %v4218 = vsel %vm4205, %v4217, %v4216
    %vm4219 = vcmp.lt.s32.totalorder %v4150, 0
    %v4220 = vsub.s32 0, %v4150
    %v4221 = vsel %vm4219, %v4220, %v4150
    %v4222 = vmul.u32.u64.compose %v4221, 2454267026
    %v4223 = vextract.low.u32 %v4222
    %v4224 = vextract.high.u32 %v4222
    %vm4225 = vc.u32 %v4223, 2454267026
    %v4226 = vsel %vm4225, 1, 0
    %v4227 = vadd.s32 %v4224, %v4226
    %v4228 = vshrl.u32 %v4227, 5
    %v4229 = vmul.u32 %v4228, 56
    %v4230 = vsub.s32 %v4221, %v4229
    %v4231 = vsub.s32 0, %v4230
    %v4232 = vsel %vm4219, %v4231, %v4230
    %vm4233 = vcmp.lt.s32.totalorder %v4151, 0
    %v4234 = vsub.s32 0, %v4151
    %v4235 = vsel %vm4233, %v4234, %v4151
    %v4236 = vmul.u32.u64.compose %v4235, 2454267026
    %v4237 = vextract.low.u32 %v4236
    %v4238 = vextract.high.u32 %v4236
    %vm4239 = vc.u32 %v4237, 2454267026
    %v4240 = vsel %vm4239, 1, 0
    %v4241 = vadd.s32 %v4238, %v4240
    %v4242 = vshrl.u32 %v4241, 5
    %v4243 = vmul.u32 %v4242, 56
    %v4244 = vsub.s32 %v4235, %v4243
    %v4245 = vsub.s32 0, %v4244
    %v4246 = vsel %vm4233, %v4245, %v4244
    %vm4247 = vcmp.lt.s32.totalorder %v4152, 0
    %v4248 = vsub.s32 0, %v4152
    %v4249 = vsel %vm4247, %v4248, %v4152
    %v4250 = vmul.u32.u64.compose %v4249, 2454267026
    %v4251 = vextract.low.u32 %v4250
    %v4252 = vextract.high.u32 %v4250
    %vm4253 = vc.u32 %v4251, 2454267026
    %v4254 = vsel %vm4253, 1, 0
    %v4255 = vadd.s32 %v4252, %v4254
    %v4256 = vshrl.u32 %v4255, 5
    %v4257 = vmul.u32 %v4256, 56
    %v4258 = vsub.s32 %v4249, %v4257
    %v4259 = vsub.s32 0, %v4258
    %v4260 = vsel %vm4247, %v4259, %v4258
    %vm4261 = vcmp.lt.s32.totalorder %v4153, 0
    %v4262 = vsub.s32 0, %v4153
    %v4263 = vsel %vm4261, %v4262, %v4153
    %v4264 = vmul.u32.u64.compose %v4263, 2454267026
    %v4265 = vextract.low.u32 %v4264
    %v4266 = vextract.high.u32 %v4264
    %vm4267 = vc.u32 %v4265, 2454267026
    %v4268 = vsel %vm4267, 1, 0
    %v4269 = vadd.s32 %v4266, %v4268
    %v4270 = vshrl.u32 %v4269, 5
    %v4271 = vmul.u32 %v4270, 56
    %v4272 = vsub.s32 %v4263, %v4271
    %v4273 = vsub.s32 0, %v4272
    %v4274 = vsel %vm4261, %v4273, %v4272
    %vm4275 = vcmp.lt.s32.totalorder %v4154, 0
    %v4276 = vsub.s32 0, %v4154
    %v4277 = vsel %vm4275, %v4276, %v4154
    %v4278 = vmul.u32.u64.compose %v4277, 2454267026
    %v4279 = vextract.low.u32 %v4278
    %v4280 = vextract.high.u32 %v4278
    %vm4281 = vc.u32 %v4279, 2454267026
    %v4282 = vsel %vm4281, 1, 0
    %v4283 = vadd.s32 %v4280, %v4282
    %v4284 = vshrl.u32 %v4283, 5
    %v4285 = vmul.u32 %v4284, 56
    %v4286 = vsub.s32 %v4277, %v4285
    %v4287 = vsub.s32 0, %v4286
    %v4288 = vsel %vm4275, %v4287, %v4286
    %vm4289 = vcmp.lt.s32.totalorder %v4155, 0
    %v4290 = vsub.s32 0, %v4155
    %v4291 = vsel %vm4289, %v4290, %v4155
    %v4292 = vmul.u32.u64.compose %v4291, 2454267026
    %v4293 = vextract.low.u32 %v4292
    %v4294 = vextract.high.u32 %v4292
    %vm4295 = vc.u32 %v4293, 2454267026
    %v4296 = vsel %vm4295, 1, 0
    %v4297 = vadd.s32 %v4294, %v4296
    %v4298 = vshrl.u32 %v4297, 5
    %v4299 = vmul.u32 %v4298, 56
    %v4300 = vsub.s32 %v4291, %v4299
    %v4301 = vsub.s32 0, %v4300
    %v4302 = vsel %vm4289, %v4301, %v4300
    %vm4303 = vcmp.lt.s32.totalorder %v4156, 0
    %v4304 = vsub.s32 0, %v4156
    %v4305 = vsel %vm4303, %v4304, %v4156
    %v4306 = vmul.u32.u64.compose %v4305, 2454267026
    %v4307 = vextract.low.u32 %v4306
    %v4308 = vextract.high.u32 %v4306
    %vm4309 = vc.u32 %v4307, 2454267026
    %v4310 = vsel %vm4309, 1, 0
    %v4311 = vadd.s32 %v4308, %v4310
    %v4312 = vshrl.u32 %v4311, 5
    %v4313 = vmul.u32 %v4312, 56
    %v4314 = vsub.s32 %v4305, %v4313
    %v4315 = vsub.s32 0, %v4314
    %v4316 = vsel %vm4303, %v4315, %v4314
    %vm4317 = vcmp.lt.s32.totalorder %v4157, 0
    %v4318 = vsub.s32 0, %v4157
    %v4319 = vsel %vm4317, %v4318, %v4157
    %v4320 = vmul.u32.u64.compose %v4319, 2454267026
    %v4321 = vextract.low.u32 %v4320
    %v4322 = vextract.high.u32 %v4320
    %vm4323 = vc.u32 %v4321, 2454267026
    %v4324 = vsel %vm4323, 1, 0
    %v4325 = vadd.s32 %v4322, %v4324
    %v4326 = vshrl.u32 %v4325, 5
    %v4327 = vmul.u32 %v4326, 56
    %v4328 = vsub.s32 %v4319, %v4327
    %v4329 = vsub.s32 0, %v4328
    %v4330 = vsel %vm4317, %v4329, %v4328
    %vm4331 = vcmp.lt.s32.totalorder %v4158, 0
    %v4332 = vsub.s32 0, %v4158
    %v4333 = vsel %vm4331, %v4332, %v4158
    %v4334 = vmul.u32.u64.compose %v4333, 2454267026
    %v4335 = vextract.low.u32 %v4334
    %v4336 = vextract.high.u32 %v4334
    %vm4337 = vc.u32 %v4335, 2454267026
    %v4338 = vsel %vm4337, 1, 0
    %v4339 = vadd.s32 %v4336, %v4338
    %v4340 = vshrl.u32 %v4339, 5
    %v4341 = vmul.u32 %v4340, 56
    %v4342 = vsub.s32 %v4333, %v4341
    %v4343 = vsub.s32 0, %v4342
    %v4344 = vsel %vm4331, %v4343, %v4342
    %vm4345 = vcmp.lt.s32.totalorder %v4159, 0
    %v4346 = vsub.s32 0, %v4159
    %v4347 = vsel %vm4345, %v4346, %v4159
    %v4348 = vmul.u32.u64.compose %v4347, 2454267026
    %v4349 = vextract.low.u32 %v4348
    %v4350 = vextract.high.u32 %v4348
    %vm4351 = vc.u32 %v4349, 2454267026
    %v4352 = vsel %vm4351, 1, 0
    %v4353 = vadd.s32 %v4350, %v4352
    %v4354 = vshrl.u32 %v4353, 5
    %v4355 = vmul.u32 %v4354, 56
    %v4356 = vsub.s32 %v4347, %v4355
    %v4357 = vsub.s32 0, %v4356
    %v4358 = vsel %vm4345, %v4357, %v4356
    %vm4359 = vcmp.lt.s32.totalorder %v4160, 0
    %v4360 = vsub.s32 0, %v4160
    %v4361 = vsel %vm4359, %v4360, %v4160
    %v4362 = vmul.u32.u64.compose %v4361, 2454267026
    %v4363 = vextract.low.u32 %v4362
    %v4364 = vextract.high.u32 %v4362
    %vm4365 = vc.u32 %v4363, 2454267026
    %v4366 = vsel %vm4365, 1, 0
    %v4367 = vadd.s32 %v4364, %v4366
    %v4368 = vshrl.u32 %v4367, 5
    %v4369 = vmul.u32 %v4368, 56
    %v4370 = vsub.s32 %v4361, %v4369
    %v4371 = vsub.s32 0, %v4370
    %v4372 = vsel %vm4359, %v4371, %v4370
    %vm4373 = vcmp.lt.s32.totalorder %v4161, 0
    %v4374 = vsub.s32 0, %v4161
    %v4375 = vsel %vm4373, %v4374, %v4161
    %v4376 = vmul.u32.u64.compose %v4375, 2454267026
    %v4377 = vextract.low.u32 %v4376
    %v4378 = vextract.high.u32 %v4376
    %vm4379 = vc.u32 %v4377, 2454267026
    %v4380 = vsel %vm4379, 1, 0
    %v4381 = vadd.s32 %v4378, %v4380
    %v4382 = vshrl.u32 %v4381, 5
    %v4383 = vmul.u32 %v4382, 56
    %v4384 = vsub.s32 %v4375, %v4383
    %v4385 = vsub.s32 0, %v4384
    %v4386 = vsel %vm4373, %v4385, %v4384
    %vm4387 = vcmp.lt.s32.totalorder %v4162, 0
    %v4388 = vsub.s32 0, %v4162
    %v4389 = vsel %vm4387, %v4388, %v4162
    %v4390 = vmul.u32.u64.compose %v4389, 2454267026
    %v4391 = vextract.low.u32 %v4390
    %v4392 = vextract.high.u32 %v4390
    %vm4393 = vc.u32 %v4391, 2454267026
    %v4394 = vsel %vm4393, 1, 0
    %v4395 = vadd.s32 %v4392, %v4394
    %v4396 = vshrl.u32 %v4395, 5
    %v4397 = vmul.u32 %v4396, 56
    %v4398 = vsub.s32 %v4389, %v4397
    %v4399 = vsub.s32 0, %v4398
    %v4400 = vsel %vm4387, %v4399, %v4398
    %vm4401 = vcmp.lt.s32.totalorder %v4163, 0
    %v4402 = vsub.s32 0, %v4163
    %v4403 = vsel %vm4401, %v4402, %v4163
    %v4404 = vmul.u32.u64.compose %v4403, 2454267026
    %v4405 = vextract.low.u32 %v4404
    %v4406 = vextract.high.u32 %v4404
    %vm4407 = vc.u32 %v4405, 2454267026
    %v4408 = vsel %vm4407, 1, 0
    %v4409 = vadd.s32 %v4406, %v4408
    %v4410 = vshrl.u32 %v4409, 5
    %v4411 = vmul.u32 %v4410, 56
    %v4412 = vsub.s32 %v4403, %v4411
    %v4413 = vsub.s32 0, %v4412
    %v4414 = vsel %vm4401, %v4413, %v4412
    %vm4415 = vcmp.lt.s32.totalorder %v4164, 0
    %v4416 = vsub.s32 0, %v4164
    %v4417 = vsel %vm4415, %v4416, %v4164
    %v4418 = vmul.u32.u64.compose %v4417, 2454267026
    %v4419 = vextract.low.u32 %v4418
    %v4420 = vextract.high.u32 %v4418
    %vm4421 = vc.u32 %v4419, 2454267026
    %v4422 = vsel %vm4421, 1, 0
    %v4423 = vadd.s32 %v4420, %v4422
    %v4424 = vshrl.u32 %v4423, 5
    %v4425 = vmul.u32 %v4424, 56
    %v4426 = vsub.s32 %v4417, %v4425
    %v4427 = vsub.s32 0, %v4426
    %v4428 = vsel %vm4415, %v4427, %v4426
    %vm4429 = vcmp.lt.s32.totalorder %v4165, 0
    %v4430 = vsub.s32 0, %v4165
    %v4431 = vsel %vm4429, %v4430, %v4165
    %v4432 = vmul.u32.u64.compose %v4431, 2454267026
    %v4433 = vextract.low.u32 %v4432
    %v4434 = vextract.high.u32 %v4432
    %vm4435 = vc.u32 %v4433, 2454267026
    %v4436 = vsel %vm4435, 1, 0
    %v4437 = vadd.s32 %v4434, %v4436
    %v4438 = vshrl.u32 %v4437, 5
    %v4439 = vmul.u32 %v4438, 56
    %v4440 = vsub.s32 %v4431, %v4439
    %v4441 = vsub.s32 0, %v4440
    %v4442 = vsel %vm4429, %v4441, %v4440
    %vm4443 = vcmp.lt.s32.totalorder %v4166, 0
    %v4444 = vsub.s32 0, %v4166
    %v4445 = vsel %vm4443, %v4444, %v4166
    %v4446 = vmul.u32.u64.compose %v4445, 2454267026
    %v4447 = vextract.low.u32 %v4446
    %v4448 = vextract.high.u32 %v4446
    %vm4449 = vc.u32 %v4447, 2454267026
    %v4450 = vsel %vm4449, 1, 0
    %v4451 = vadd.s32 %v4448, %v4450
    %v4452 = vshrl.u32 %v4451, 5
    %v4453 = vmul.u32 %v4452, 56
    %v4454 = vsub.s32 %v4445, %v4453
    %v4455 = vsub.s32 0, %v4454
    %v4456 = vsel %vm4443, %v4455, %v4454
    %vm4457 = vcmp.lt.s32.totalorder %v4167, 0
    %v4458 = vsub.s32 0, %v4167
    %v4459 = vsel %vm4457, %v4458, %v4167
    %v4460 = vmul.u32.u64.compose %v4459, 2454267026
    %v4461 = vextract.low.u32 %v4460
    %v4462 = vextract.high.u32 %v4460
    %vm4463 = vc.u32 %v4461, 2454267026
    %v4464 = vsel %vm4463, 1, 0
    %v4465 = vadd.s32 %v4462, %v4464
    %v4466 = vshrl.u32 %v4465, 5
    %v4467 = vmul.u32 %v4466, 56
    %v4468 = vsub.s32 %v4459, %v4467
    %v4469 = vsub.s32 0, %v4468
    %v4470 = vsel %vm4457, %v4469, %v4468
    %vm4471 = vcmp.lt.s32.totalorder %v4168, 0
    %v4472 = vsub.s32 0, %v4168
    %v4473 = vsel %vm4471, %v4472, %v4168
    %v4474 = vmul.u32.u64.compose %v4473, 2454267026
    %v4475 = vextract.low.u32 %v4474
    %v4476 = vextract.high.u32 %v4474
    %vm4477 = vc.u32 %v4475, 2454267026
    %v4478 = vsel %vm4477, 1, 0
    %v4479 = vadd.s32 %v4476, %v4478
    %v4480 = vshrl.u32 %v4479, 5
    %v4481 = vmul.u32 %v4480, 56
    %v4482 = vsub.s32 %v4473, %v4481
    %v4483 = vsub.s32 0, %v4482
    %v4484 = vsel %vm4471, %v4483, %v4482
    %vm4485 = vcmp.lt.s32.totalorder %v4169, 0
    %v4486 = vsub.s32 0, %v4169
    %v4487 = vsel %vm4485, %v4486, %v4169
    %v4488 = vmul.u32.u64.compose %v4487, 2454267026
    %v4489 = vextract.low.u32 %v4488
    %v4490 = vextract.high.u32 %v4488
    %vm4491 = vc.u32 %v4489, 2454267026
    %v4492 = vsel %vm4491, 1, 0
    %v4493 = vadd.s32 %v4490, %v4492
    %v4494 = vshrl.u32 %v4493, 5
    %v4495 = vmul.u32 %v4494, 56
    %v4496 = vsub.s32 %v4487, %v4495
    %v4497 = vsub.s32 0, %v4496
    %v4498 = vsel %vm4485, %v4497, %v4496
    %vm4499 = vcmp.lt.s32.totalorder %v4170, 0
    %v4500 = vsub.s32 0, %v4170
    %v4501 = vsel %vm4499, %v4500, %v4170
    %v4502 = vmul.u32.u64.compose %v4501, 2454267026
    %v4503 = vextract.low.u32 %v4502
    %v4504 = vextract.high.u32 %v4502
    %vm4505 = vc.u32 %v4503, 2454267026
    %v4506 = vsel %vm4505, 1, 0
    %v4507 = vadd.s32 %v4504, %v4506
    %v4508 = vshrl.u32 %v4507, 5
    %v4509 = vmul.u32 %v4508, 56
    %v4510 = vsub.s32 %v4501, %v4509
    %v4511 = vsub.s32 0, %v4510
    %v4512 = vsel %vm4499, %v4511, %v4510
    %vm4513 = vcmp.lt.s32.totalorder %v4171, 0
    %v4514 = vsub.s32 0, %v4171
    %v4515 = vsel %vm4513, %v4514, %v4171
    %v4516 = vmul.u32.u64.compose %v4515, 2454267026
    %v4517 = vextract.low.u32 %v4516
    %v4518 = vextract.high.u32 %v4516
    %vm4519 = vc.u32 %v4517, 2454267026
    %v4520 = vsel %vm4519, 1, 0
    %v4521 = vadd.s32 %v4518, %v4520
    %v4522 = vshrl.u32 %v4521, 5
    %v4523 = vmul.u32 %v4522, 56
    %v4524 = vsub.s32 %v4515, %v4523
    %v4525 = vsub.s32 0, %v4524
    %v4526 = vsel %vm4513, %v4525, %v4524
    %vm4527 = vcmp.lt.s32.totalorder %v4172, 0
    %v4528 = vsub.s32 0, %v4172
    %v4529 = vsel %vm4527, %v4528, %v4172
    %v4530 = vmul.u32.u64.compose %v4529, 2454267026
    %v4531 = vextract.low.u32 %v4530
    %v4532 = vextract.high.u32 %v4530
    %vm4533 = vc.u32 %v4531, 2454267026
    %v4534 = vsel %vm4533, 1, 0
    %v4535 = vadd.s32 %v4532, %v4534
    %v4536 = vshrl.u32 %v4535, 5
    %v4537 = vmul.u32 %v4536, 56
    %v4538 = vsub.s32 %v4529, %v4537
    %v4539 = vsub.s32 0, %v4538
    %v4540 = vsel %vm4527, %v4539, %v4538
    %vm4541 = vcmp.lt.s32.totalorder %v4173, 0
    %v4542 = vsub.s32 0, %v4173
    %v4543 = vsel %vm4541, %v4542, %v4173
    %v4544 = vmul.u32.u64.compose %v4543, 2454267026
    %v4545 = vextract.low.u32 %v4544
    %v4546 = vextract.high.u32 %v4544
    %vm4547 = vc.u32 %v4545, 2454267026
    %v4548 = vsel %vm4547, 1, 0
    %v4549 = vadd.s32 %v4546, %v4548
    %v4550 = vshrl.u32 %v4549, 5
    %v4551 = vmul.u32 %v4550, 56
    %v4552 = vsub.s32 %v4543, %v4551
    %v4553 = vsub.s32 0, %v4552
    %v4554 = vsel %vm4541, %v4553, %v4552
    %vm4555 = vcmp.lt.s32.totalorder %v4174, 0
    %v4556 = vsub.s32 0, %v4174
    %v4557 = vsel %vm4555, %v4556, %v4174
    %v4558 = vmul.u32.u64.compose %v4557, 2454267026
    %v4559 = vextract.low.u32 %v4558
    %v4560 = vextract.high.u32 %v4558
    %vm4561 = vc.u32 %v4559, 2454267026
    %v4562 = vsel %vm4561, 1, 0
    %v4563 = vadd.s32 %v4560, %v4562
    %v4564 = vshrl.u32 %v4563, 5
    %v4565 = vmul.u32 %v4564, 56
    %v4566 = vsub.s32 %v4557, %v4565
    %v4567 = vsub.s32 0, %v4566
    %v4568 = vsel %vm4555, %v4567, %v4566
    %vm4569 = vcmp.lt.s32.totalorder %v4175, 0
    %v4570 = vsub.s32 0, %v4175
    %v4571 = vsel %vm4569, %v4570, %v4175
    %v4572 = vmul.u32.u64.compose %v4571, 2454267026
    %v4573 = vextract.low.u32 %v4572
    %v4574 = vextract.high.u32 %v4572
    %vm4575 = vc.u32 %v4573, 2454267026
    %v4576 = vsel %vm4575, 1, 0
    %v4577 = vadd.s32 %v4574, %v4576
    %v4578 = vshrl.u32 %v4577, 5
    %v4579 = vmul.u32 %v4578, 56
    %v4580 = vsub.s32 %v4571, %v4579
    %v4581 = vsub.s32 0, %v4580
    %v4582 = vsel %vm4569, %v4581, %v4580
    %vm4583 = vcmp.lt.s32.totalorder %v4176, 0
    %v4584 = vsub.s32 0, %v4176
    %v4585 = vsel %vm4583, %v4584, %v4176
    %v4586 = vmul.u32.u64.compose %v4585, 2454267026
    %v4587 = vextract.low.u32 %v4586
    %v4588 = vextract.high.u32 %v4586
    %vm4589 = vc.u32 %v4587, 2454267026
    %v4590 = vsel %vm4589, 1, 0
    %v4591 = vadd.s32 %v4588, %v4590
    %v4592 = vshrl.u32 %v4591, 5
    %v4593 = vmul.u32 %v4592, 56
    %v4594 = vsub.s32 %v4585, %v4593
    %v4595 = vsub.s32 0, %v4594
    %v4596 = vsel %vm4583, %v4595, %v4594
    %vm4597 = vcmp.lt.s32.totalorder %v4177, 0
    %v4598 = vsub.s32 0, %v4177
    %v4599 = vsel %vm4597, %v4598, %v4177
    %v4600 = vmul.u32.u64.compose %v4599, 2454267026
    %v4601 = vextract.low.u32 %v4600
    %v4602 = vextract.high.u32 %v4600
    %vm4603 = vc.u32 %v4601, 2454267026
    %v4604 = vsel %vm4603, 1, 0
    %v4605 = vadd.s32 %v4602, %v4604
    %v4606 = vshrl.u32 %v4605, 5
    %v4607 = vmul.u32 %v4606, 56
    %v4608 = vsub.s32 %v4599, %v4607
    %v4609 = vsub.s32 0, %v4608
    %v4610 = vsel %vm4597, %v4609, %v4608
    %vm4611 = vcmp.lt.s32.totalorder %v4178, 0
    %v4612 = vsub.s32 0, %v4178
    %v4613 = vsel %vm4611, %v4612, %v4178
    %v4614 = vmul.u32.u64.compose %v4613, 2454267026
    %v4615 = vextract.low.u32 %v4614
    %v4616 = vextract.high.u32 %v4614
    %vm4617 = vc.u32 %v4615, 2454267026
    %v4618 = vsel %vm4617, 1, 0
    %v4619 = vadd.s32 %v4616, %v4618
    %v4620 = vshrl.u32 %v4619, 5
    %v4621 = vmul.u32 %v4620, 56
    %v4622 = vsub.s32 %v4613, %v4621
    %v4623 = vsub.s32 0, %v4622
    %v4624 = vsel %vm4611, %v4623, %v4622
    %vm4625 = vcmp.lt.s32.totalorder %v4179, 0
    %v4626 = vsub.s32 0, %v4179
    %v4627 = vsel %vm4625, %v4626, %v4179
    %v4628 = vmul.u32.u64.compose %v4627, 2454267026
    %v4629 = vextract.low.u32 %v4628
    %v4630 = vextract.high.u32 %v4628
    %vm4631 = vc.u32 %v4629, 2454267026
    %v4632 = vsel %vm4631, 1, 0
    %v4633 = vadd.s32 %v4630, %v4632
    %v4634 = vshrl.u32 %v4633, 5
    %v4635 = vmul.u32 %v4634, 56
    %v4636 = vsub.s32 %v4627, %v4635
    %v4637 = vsub.s32 0, %v4636
    %v4638 = vsel %vm4625, %v4637, %v4636
    %vm4639 = vcmp.lt.s32.totalorder %v4180, 0
    %v4640 = vsub.s32 0, %v4180
    %v4641 = vsel %vm4639, %v4640, %v4180
    %v4642 = vmul.u32.u64.compose %v4641, 2454267026
    %v4643 = vextract.low.u32 %v4642
    %v4644 = vextract.high.u32 %v4642
    %vm4645 = vc.u32 %v4643, 2454267026
    %v4646 = vsel %vm4645, 1, 0
    %v4647 = vadd.s32 %v4644, %v4646
    %v4648 = vshrl.u32 %v4647, 5
    %v4649 = vmul.u32 %v4648, 56
    %v4650 = vsub.s32 %v4641, %v4649
    %v4651 = vsub.s32 0, %v4650
    %v4652 = vsel %vm4639, %v4651, %v4650
    %vm4653 = vcmp.lt.s32.totalorder %v4181, 0
    %v4654 = vsub.s32 0, %v4181
    %v4655 = vsel %vm4653, %v4654, %v4181
    %v4656 = vmul.u32.u64.compose %v4655, 2454267026
    %v4657 = vextract.low.u32 %v4656
    %v4658 = vextract.high.u32 %v4656
    %vm4659 = vc.u32 %v4657, 2454267026
    %v4660 = vsel %vm4659, 1, 0
    %v4661 = vadd.s32 %v4658, %v4660
    %v4662 = vshrl.u32 %v4661, 5
    %v4663 = vmul.u32 %v4662, 56
    %v4664 = vsub.s32 %v4655, %v4663
    %v4665 = vsub.s32 0, %v4664
    %v4666 = vsel %vm4653, %v4665, %v4664
    %vm4667 = vcmp.lt.s32.totalorder %v4182, 0
    %v4668 = vsub.s32 0, %v4182
    %v4669 = vsel %vm4667, %v4668, %v4182
    %v4670 = vmul.u32.u64.compose %v4669, 2454267026
    %v4671 = vextract.low.u32 %v4670
    %v4672 = vextract.high.u32 %v4670
    %vm4673 = vc.u32 %v4671, 2454267026
    %v4674 = vsel %vm4673, 1, 0
    %v4675 = vadd.s32 %v4672, %v4674
    %v4676 = vshrl.u32 %v4675, 5
    %v4677 = vmul.u32 %v4676, 56
    %v4678 = vsub.s32 %v4669, %v4677
    %v4679 = vsub.s32 0, %v4678
    %v4680 = vsel %vm4667, %v4679, %v4678
    %vm4681 = vcmp.lt.s32.totalorder %v4183, 0
    %v4682 = vsub.s32 0, %v4183
    %v4683 = vsel %vm4681, %v4682, %v4183
    %v4684 = vmul.u32.u64.compose %v4683, 2454267026
    %v4685 = vextract.low.u32 %v4684
    %v4686 = vextract.high.u32 %v4684
    %vm4687 = vc.u32 %v4685, 2454267026
    %v4688 = vsel %vm4687, 1, 0
    %v4689 = vadd.s32 %v4686, %v4688
    %v4690 = vshrl.u32 %v4689, 5
    %v4691 = vmul.u32 %v4690, 56
    %v4692 = vsub.s32 %v4683, %v4691
    %v4693 = vsub.s32 0, %v4692
    %v4694 = vsel %vm4681, %v4693, %v4692
    %vm4695 = vcmp.lt.s32.totalorder %v4184, 0
    %v4696 = vsub.s32 0, %v4184
    %v4697 = vsel %vm4695, %v4696, %v4184
    %v4698 = vmul.u32.u64.compose %v4697, 2454267026
    %v4699 = vextract.low.u32 %v4698
    %v4700 = vextract.high.u32 %v4698
    %vm4701 = vc.u32 %v4699, 2454267026
    %v4702 = vsel %vm4701, 1, 0
    %v4703 = vadd.s32 %v4700, %v4702
    %v4704 = vshrl.u32 %v4703, 5
    %v4705 = vmul.u32 %v4704, 56
    %v4706 = vsub.s32 %v4697, %v4705
    %v4707 = vsub.s32 0, %v4706
    %v4708 = vsel %vm4695, %v4707, %v4706
    %vm4709 = vcmp.lt.s32.totalorder %v4185, 0
    %v4710 = vsub.s32 0, %v4185
    %v4711 = vsel %vm4709, %v4710, %v4185
    %v4712 = vmul.u32.u64.compose %v4711, 2454267026
    %v4713 = vextract.low.u32 %v4712
    %v4714 = vextract.high.u32 %v4712
    %vm4715 = vc.u32 %v4713, 2454267026
    %v4716 = vsel %vm4715, 1, 0
    %v4717 = vadd.s32 %v4714, %v4716
    %v4718 = vshrl.u32 %v4717, 5
    %v4719 = vmul.u32 %v4718, 56
    %v4720 = vsub.s32 %v4711, %v4719
    %v4721 = vsub.s32 0, %v4720
    %v4722 = vsel %vm4709, %v4721, %v4720
    %vm4723 = vcmp.lt.s32.totalorder %v4186, 0
    %v4724 = vsub.s32 0, %v4186
    %v4725 = vsel %vm4723, %v4724, %v4186
    %v4726 = vmul.u32.u64.compose %v4725, 2454267026
    %v4727 = vextract.low.u32 %v4726
    %v4728 = vextract.high.u32 %v4726
    %vm4729 = vc.u32 %v4727, 2454267026
    %v4730 = vsel %vm4729, 1, 0
    %v4731 = vadd.s32 %v4728, %v4730
    %v4732 = vshrl.u32 %v4731, 5
    %v4733 = vmul.u32 %v4732, 56
    %v4734 = vsub.s32 %v4725, %v4733
    %v4735 = vsub.s32 0, %v4734
    %v4736 = vsel %vm4723, %v4735, %v4734
    %vm4737 = vcmp.lt.s32.totalorder %v4187, 0
    %v4738 = vsub.s32 0, %v4187
    %v4739 = vsel %vm4737, %v4738, %v4187
    %v4740 = vmul.u32.u64.compose %v4739, 2454267026
    %v4741 = vextract.low.u32 %v4740
    %v4742 = vextract.high.u32 %v4740
    %vm4743 = vc.u32 %v4741, 2454267026
    %v4744 = vsel %vm4743, 1, 0
    %v4745 = vadd.s32 %v4742, %v4744
    %v4746 = vshrl.u32 %v4745, 5
    %v4747 = vmul.u32 %v4746, 56
    %v4748 = vsub.s32 %v4739, %v4747
    %v4749 = vsub.s32 0, %v4748
    %v4750 = vsel %vm4737, %v4749, %v4748
    %vm4751 = vcmp.lt.s32.totalorder %v4188, 0
    %v4752 = vsub.s32 0, %v4188
    %v4753 = vsel %vm4751, %v4752, %v4188
    %v4754 = vmul.u32.u64.compose %v4753, 2454267026
    %v4755 = vextract.low.u32 %v4754
    %v4756 = vextract.high.u32 %v4754
    %vm4757 = vc.u32 %v4755, 2454267026
    %v4758 = vsel %vm4757, 1, 0
    %v4759 = vadd.s32 %v4756, %v4758
    %v4760 = vshrl.u32 %v4759, 5
    %v4761 = vmul.u32 %v4760, 56
    %v4762 = vsub.s32 %v4753, %v4761
    %v4763 = vsub.s32 0, %v4762
    %v4764 = vsel %vm4751, %v4763, %v4762
    %vm4765 = vcmp.lt.s32.totalorder %v4189, 0
    %v4766 = vsub.s32 0, %v4189
    %v4767 = vsel %vm4765, %v4766, %v4189
    %v4768 = vmul.u32.u64.compose %v4767, 2454267026
    %v4769 = vextract.low.u32 %v4768
    %v4770 = vextract.high.u32 %v4768
    %vm4771 = vc.u32 %v4769, 2454267026
    %v4772 = vsel %vm4771, 1, 0
    %v4773 = vadd.s32 %v4770, %v4772
    %v4774 = vshrl.u32 %v4773, 5
    %v4775 = vmul.u32 %v4774, 56
    %v4776 = vsub.s32 %v4767, %v4775
    %v4777 = vsub.s32 0, %v4776
    %v4778 = vsel %vm4765, %v4777, %v4776
    %vm4779 = vcmp.lt.s32.totalorder %v4190, 0
    %v4780 = vsub.s32 0, %v4190
    %v4781 = vsel %vm4779, %v4780, %v4190
    %v4782 = vmul.u32.u64.compose %v4781, 2454267026
    %v4783 = vextract.low.u32 %v4782
    %v4784 = vextract.high.u32 %v4782
    %vm4785 = vc.u32 %v4783, 2454267026
    %v4786 = vsel %vm4785, 1, 0
    %v4787 = vadd.s32 %v4784, %v4786
    %v4788 = vshrl.u32 %v4787, 5
    %v4789 = vmul.u32 %v4788, 56
    %v4790 = vsub.s32 %v4781, %v4789
    %v4791 = vsub.s32 0, %v4790
    %v4792 = vsel %vm4779, %v4791, %v4790
    %vm4793 = vcmp.lt.s32.totalorder %v4191, 0
    %v4794 = vsub.s32 0, %v4191
    %v4795 = vsel %vm4793, %v4794, %v4191
    %v4796 = vmul.u32.u64.compose %v4795, 2454267026
    %v4797 = vextract.low.u32 %v4796
    %v4798 = vextract.high.u32 %v4796
    %vm4799 = vc.u32 %v4797, 2454267026
    %v4800 = vsel %vm4799, 1, 0
    %v4801 = vadd.s32 %v4798, %v4800
    %v4802 = vshrl.u32 %v4801, 5
    %v4803 = vmul.u32 %v4802, 56
    %v4804 = vsub.s32 %v4795, %v4803
    %v4805 = vsub.s32 0, %v4804
    %v4806 = vsel %vm4793, %v4805, %v4804
    %vm4807 = vcmp.lt.s32.totalorder %v4192, 0
    %v4808 = vsub.s32 0, %v4192
    %v4809 = vsel %vm4807, %v4808, %v4192
    %v4810 = vmul.u32.u64.compose %v4809, 2454267026
    %v4811 = vextract.low.u32 %v4810
    %v4812 = vextract.high.u32 %v4810
    %vm4813 = vc.u32 %v4811, 2454267026
    %v4814 = vsel %vm4813, 1, 0
    %v4815 = vadd.s32 %v4812, %v4814
    %v4816 = vshrl.u32 %v4815, 5
    %v4817 = vmul.u32 %v4816, 56
    %v4818 = vsub.s32 %v4809, %v4817
    %v4819 = vsub.s32 0, %v4818
    %v4820 = vsel %vm4807, %v4819, %v4818
    %vm4821 = vcmp.lt.s32.totalorder %v4193, 0
    %v4822 = vsub.s32 0, %v4193
    %v4823 = vsel %vm4821, %v4822, %v4193
    %v4824 = vmul.u32.u64.compose %v4823, 2454267026
    %v4825 = vextract.low.u32 %v4824
    %v4826 = vextract.high.u32 %v4824
    %vm4827 = vc.u32 %v4825, 2454267026
    %v4828 = vsel %vm4827, 1, 0
    %v4829 = vadd.s32 %v4826, %v4828
    %v4830 = vshrl.u32 %v4829, 5
    %v4831 = vmul.u32 %v4830, 56
    %v4832 = vsub.s32 %v4823, %v4831
    %v4833 = vsub.s32 0, %v4832
    %v4834 = vsel %vm4821, %v4833, %v4832
    %vm4835 = vcmp.lt.s32.totalorder %v4194, 0
    %v4836 = vsub.s32 0, %v4194
    %v4837 = vsel %vm4835, %v4836, %v4194
    %v4838 = vmul.u32.u64.compose %v4837, 2454267026
    %v4839 = vextract.low.u32 %v4838
    %v4840 = vextract.high.u32 %v4838
    %vm4841 = vc.u32 %v4839, 2454267026
    %v4842 = vsel %vm4841, 1, 0
    %v4843 = vadd.s32 %v4840, %v4842
    %v4844 = vshrl.u32 %v4843, 5
    %v4845 = vmul.u32 %v4844, 56
    %v4846 = vsub.s32 %v4837, %v4845
    %v4847 = vsub.s32 0, %v4846
    %v4848 = vsel %vm4835, %v4847, %v4846
    %vm4849 = vcmp.lt.s32.totalorder %v4195, 0
    %v4850 = vsub.s32 0, %v4195
    %v4851 = vsel %vm4849, %v4850, %v4195
    %v4852 = vmul.u32.u64.compose %v4851, 2454267026
    %v4853 = vextract.low.u32 %v4852
    %v4854 = vextract.high.u32 %v4852
    %vm4855 = vc.u32 %v4853, 2454267026
    %v4856 = vsel %vm4855, 1, 0
    %v4857 = vadd.s32 %v4854, %v4856
    %v4858 = vshrl.u32 %v4857, 5
    %v4859 = vmul.u32 %v4858, 56
    %v4860 = vsub.s32 %v4851, %v4859
    %v4861 = vsub.s32 0, %v4860
    %v4862 = vsel %vm4849, %v4861, %v4860
    %vm4863 = vcmp.lt.s32.totalorder %v4196, 0
    %v4864 = vsub.s32 0, %v4196
    %v4865 = vsel %vm4863, %v4864, %v4196
    %v4866 = vmul.u32.u64.compose %v4865, 2454267026
    %v4867 = vextract.low.u32 %v4866
    %v4868 = vextract.high.u32 %v4866
    %vm4869 = vc.u32 %v4867, 2454267026
    %v4870 = vsel %vm4869, 1, 0
    %v4871 = vadd.s32 %v4868, %v4870
    %v4872 = vshrl.u32 %v4871, 5
    %v4873 = vmul.u32 %v4872, 56
    %v4874 = vsub.s32 %v4865, %v4873
    %v4875 = vsub.s32 0, %v4874
    %v4876 = vsel %vm4863, %v4875, %v4874
    %vm4877 = vcmp.lt.s32.totalorder %v4197, 0
    %v4878 = vsub.s32 0, %v4197
    %v4879 = vsel %vm4877, %v4878, %v4197
    %v4880 = vmul.u32.u64.compose %v4879, 2454267026
    %v4881 = vextract.low.u32 %v4880
    %v4882 = vextract.high.u32 %v4880
    %vm4883 = vc.u32 %v4881, 2454267026
    %v4884 = vsel %vm4883, 1, 0
    %v4885 = vadd.s32 %v4882, %v4884
    %v4886 = vshrl.u32 %v4885, 5
    %v4887 = vmul.u32 %v4886, 56
    %v4888 = vsub.s32 %v4879, %v4887
    %v4889 = vsub.s32 0, %v4888
    %v4890 = vsel %vm4877, %v4889, %v4888
    %vm4891 = vcmp.lt.s32.totalorder %v4198, 0
    %v4892 = vsub.s32 0, %v4198
    %v4893 = vsel %vm4891, %v4892, %v4198
    %v4894 = vmul.u32.u64.compose %v4893, 2454267026
    %v4895 = vextract.low.u32 %v4894
    %v4896 = vextract.high.u32 %v4894
    %vm4897 = vc.u32 %v4895, 2454267026
    %v4898 = vsel %vm4897, 1, 0
    %v4899 = vadd.s32 %v4896, %v4898
    %v4900 = vshrl.u32 %v4899, 5
    %v4901 = vmul.u32 %v4900, 56
    %v4902 = vsub.s32 %v4893, %v4901
    %v4903 = vsub.s32 0, %v4902
    %v4904 = vsel %vm4891, %v4903, %v4902
    %vm4905 = vcmp.lt.s32.totalorder %v4199, 0
    %v4906 = vsub.s32 0, %v4199
    %v4907 = vsel %vm4905, %v4906, %v4199
    %v4908 = vmul.u32.u64.compose %v4907, 2454267026
    %v4909 = vextract.low.u32 %v4908
    %v4910 = vextract.high.u32 %v4908
    %vm4911 = vc.u32 %v4909, 2454267026
    %v4912 = vsel %vm4911, 1, 0
    %v4913 = vadd.s32 %v4910, %v4912
    %v4914 = vshrl.u32 %v4913, 5
    %v4915 = vmul.u32 %v4914, 56
    %v4916 = vsub.s32 %v4907, %v4915
    %v4917 = vsub.s32 0, %v4916
    %v4918 = vsel %vm4905, %v4917, %v4916
    %vm4919 = vcmp.lt.s32.totalorder %v4200, 0
    %v4920 = vsub.s32 0, %v4200
    %v4921 = vsel %vm4919, %v4920, %v4200
    %v4922 = vmul.u32.u64.compose %v4921, 2454267026
    %v4923 = vextract.low.u32 %v4922
    %v4924 = vextract.high.u32 %v4922
    %vm4925 = vc.u32 %v4923, 2454267026
    %v4926 = vsel %vm4925, 1, 0
    %v4927 = vadd.s32 %v4924, %v4926
    %v4928 = vshrl.u32 %v4927, 5
    %v4929 = vmul.u32 %v4928, 56
    %v4930 = vsub.s32 %v4921, %v4929
    %v4931 = vsub.s32 0, %v4930
    %v4932 = vsel %vm4919, %v4931, %v4930
    %vm4933 = vcmp.lt.s32.totalorder %v4201, 0
    %v4934 = vsub.s32 0, %v4201
    %v4935 = vsel %vm4933, %v4934, %v4201
    %v4936 = vmul.u32.u64.compose %v4935, 2454267026
    %v4937 = vextract.low.u32 %v4936
    %v4938 = vextract.high.u32 %v4936
    %vm4939 = vc.u32 %v4937, 2454267026
    %v4940 = vsel %vm4939, 1, 0
    %v4941 = vadd.s32 %v4938, %v4940
    %v4942 = vshrl.u32 %v4941, 5
    %v4943 = vmul.u32 %v4942, 56
    %v4944 = vsub.s32 %v4935, %v4943
    %v4945 = vsub.s32 0, %v4944
    %v4946 = vsel %vm4933, %v4945, %v4944
    %vm4947 = vcmp.lt.s32.totalorder %v4202, 0
    %v4948 = vsub.s32 0, %v4202
    %v4949 = vsel %vm4947, %v4948, %v4202
    %v4950 = vmul.u32.u64.compose %v4949, 2454267026
    %v4951 = vextract.low.u32 %v4950
    %v4952 = vextract.high.u32 %v4950
    %vm4953 = vc.u32 %v4951, 2454267026
    %v4954 = vsel %vm4953, 1, 0
    %v4955 = vadd.s32 %v4952, %v4954
    %v4956 = vshrl.u32 %v4955, 5
    %v4957 = vmul.u32 %v4956, 56
    %v4958 = vsub.s32 %v4949, %v4957
    %v4959 = vsub.s32 0, %v4958
    %v4960 = vsel %vm4947, %v4959, %v4958
    %vm4961 = vcmp.lt.s32.totalorder %v4203, 0
    %v4962 = vsub.s32 0, %v4203
    %v4963 = vsel %vm4961, %v4962, %v4203
    %v4964 = vmul.u32.u64.compose %v4963, 2454267026
    %v4965 = vextract.low.u32 %v4964
    %v4966 = vextract.high.u32 %v4964
    %vm4967 = vc.u32 %v4965, 2454267026
    %v4968 = vsel %vm4967, 1, 0
    %v4969 = vadd.s32 %v4966, %v4968
    %v4970 = vshrl.u32 %v4969, 5
    %v4971 = vmul.u32 %v4970, 56
    %v4972 = vsub.s32 %v4963, %v4971
    %v4973 = vsub.s32 0, %v4972
    %v4974 = vsel %vm4961, %v4973, %v4972
    %vm4975 = vcmp.lt.s32.totalorder %v4204, 0
    %v4976 = vsub.s32 0, %v4204
    %v4977 = vsel %vm4975, %v4976, %v4204
    %v4978 = vmul.u32.u64.compose %v4977, 2454267026
    %v4979 = vextract.low.u32 %v4978
    %v4980 = vextract.high.u32 %v4978
    %vm4981 = vc.u32 %v4979, 2454267026
    %v4982 = vsel %vm4981, 1, 0
    %v4983 = vadd.s32 %v4980, %v4982
    %v4984 = vshrl.u32 %v4983, 5
    %v4985 = vmul.u32 %v4984, 56
    %v4986 = vsub.s32 %v4977, %v4985
    %v4987 = vsub.s32 0, %v4986
    %v4988 = vsel %vm4975, %v4987, %v4986
    %vm4989 = vcmp.ne.s32.totalorder %v4218, 0
    %vm4990 = vcmp.ne.s32.totalorder %v4232, 0
    %vm4991 = vcmp.ne.s32.totalorder %v4246, 0
    %vm4992 = vcmp.ne.s32.totalorder %v4260, 0
    %vm4993 = vcmp.ne.s32.totalorder %v4274, 0
    %vm4994 = vcmp.ne.s32.totalorder %v4288, 0
    %vm4995 = vcmp.ne.s32.totalorder %v4302, 0
    %vm4996 = vcmp.ne.s32.totalorder %v4316, 0
    %vm4997 = vcmp.ne.s32.totalorder %v4330, 0
    %vm4998 = vcmp.ne.s32.totalorder %v4344, 0
    %vm4999 = vcmp.ne.s32.totalorder %v4358, 0
    %vm5000 = vcmp.ne.s32.totalorder %v4372, 0
    %vm5001 = vcmp.ne.s32.totalorder %v4386, 0
    %vm5002 = vcmp.ne.s32.totalorder %v4400, 0
    %vm5003 = vcmp.ne.s32.totalorder %v4414, 0
    %vm5004 = vcmp.ne.s32.totalorder %v4428, 0
    %vm5005 = vcmp.ne.s32.totalorder %v4442, 0
    %vm5006 = vcmp.ne.s32.totalorder %v4456, 0
    %vm5007 = vcmp.ne.s32.totalorder %v4470, 0
    %vm5008 = vcmp.ne.s32.totalorder %v4484, 0
    %vm5009 = vcmp.ne.s32.totalorder %v4498, 0
    %vm5010 = vcmp.ne.s32.totalorder %v4512, 0
    %vm5011 = vcmp.ne.s32.totalorder %v4526, 0
    %vm5012 = vcmp.ne.s32.totalorder %v4540, 0
    %vm5013 = vcmp.ne.s32.totalorder %v4554, 0
    %vm5014 = vcmp.ne.s32.totalorder %v4568, 0
    %vm5015 = vcmp.ne.s32.totalorder %v4582, 0
    %vm5016 = vcmp.ne.s32.totalorder %v4596, 0
    %vm5017 = vcmp.ne.s32.totalorder %v4610, 0
    %vm5018 = vcmp.ne.s32.totalorder %v4624, 0
    %vm5019 = vcmp.ne.s32.totalorder %v4638, 0
    %vm5020 = vcmp.ne.s32.totalorder %v4652, 0
    %vm5021 = vcmp.ne.s32.totalorder %v4666, 0
    %vm5022 = vcmp.ne.s32.totalorder %v4680, 0
    %vm5023 = vcmp.ne.s32.totalorder %v4694, 0
    %vm5024 = vcmp.ne.s32.totalorder %v4708, 0
    %vm5025 = vcmp.ne.s32.totalorder %v4722, 0
    %vm5026 = vcmp.ne.s32.totalorder %v4736, 0
    %vm5027 = vcmp.ne.s32.totalorder %v4750, 0
    %vm5028 = vcmp.ne.s32.totalorder %v4764, 0
    %vm5029 = vcmp.ne.s32.totalorder %v4778, 0
    %vm5030 = vcmp.ne.s32.totalorder %v4792, 0
    %vm5031 = vcmp.ne.s32.totalorder %v4806, 0
    %vm5032 = vcmp.ne.s32.totalorder %v4820, 0
    %vm5033 = vcmp.ne.s32.totalorder %v4834, 0
    %vm5034 = vcmp.ne.s32.totalorder %v4848, 0
    %vm5035 = vcmp.ne.s32.totalorder %v4862, 0
    %vm5036 = vcmp.ne.s32.totalorder %v4876, 0
    %vm5037 = vcmp.ne.s32.totalorder %v4890, 0
    %vm5038 = vcmp.ne.s32.totalorder %v4904, 0
    %vm5039 = vcmp.ne.s32.totalorder %v4918, 0
    %vm5040 = vcmp.ne.s32.totalorder %v4932, 0
    %vm5041 = vcmp.ne.s32.totalorder %v4946, 0
    %vm5042 = vcmp.ne.s32.totalorder %v4960, 0
    %vm5043 = vcmp.ne.s32.totalorder %v4974, 0
    %vm5044 = vcmp.ne.s32.totalorder %v4988, 0
    %vm5045 = vcmp.lt.s32.totalorder %v4218, 0
    %vm5046 = vcmp.lt.s32.totalorder %v4232, 0
    %vm5047 = vcmp.lt.s32.totalorder %v4246, 0
    %vm5048 = vcmp.lt.s32.totalorder %v4260, 0
    %vm5049 = vcmp.lt.s32.totalorder %v4274, 0
    %vm5050 = vcmp.lt.s32.totalorder %v4288, 0
    %vm5051 = vcmp.lt.s32.totalorder %v4302, 0
    %vm5052 = vcmp.lt.s32.totalorder %v4316, 0
    %vm5053 = vcmp.lt.s32.totalorder %v4330, 0
    %vm5054 = vcmp.lt.s32.totalorder %v4344, 0
    %vm5055 = vcmp.lt.s32.totalorder %v4358, 0
    %vm5056 = vcmp.lt.s32.totalorder %v4372, 0
    %vm5057 = vcmp.lt.s32.totalorder %v4386, 0
    %vm5058 = vcmp.lt.s32.totalorder %v4400, 0
    %vm5059 = vcmp.lt.s32.totalorder %v4414, 0
    %vm5060 = vcmp.lt.s32.totalorder %v4428, 0
    %vm5061 = vcmp.lt.s32.totalorder %v4442, 0
    %vm5062 = vcmp.lt.s32.totalorder %v4456, 0
    %vm5063 = vcmp.lt.s32.totalorder %v4470, 0
    %vm5064 = vcmp.lt.s32.totalorder %v4484, 0
    %vm5065 = vcmp.lt.s32.totalorder %v4498, 0
    %vm5066 = vcmp.lt.s32.totalorder %v4512, 0
    %vm5067 = vcmp.lt.s32.totalorder %v4526, 0
    %vm5068 = vcmp.lt.s32.totalorder %v4540, 0
    %vm5069 = vcmp.lt.s32.totalorder %v4554, 0
    %vm5070 = vcmp.lt.s32.totalorder %v4568, 0
    %vm5071 = vcmp.lt.s32.totalorder %v4582, 0
    %vm5072 = vcmp.lt.s32.totalorder %v4596, 0
    %vm5073 = vcmp.lt.s32.totalorder %v4610, 0
    %vm5074 = vcmp.lt.s32.totalorder %v4624, 0
    %vm5075 = vcmp.lt.s32.totalorder %v4638, 0
    %vm5076 = vcmp.lt.s32.totalorder %v4652, 0
    %vm5077 = vcmp.lt.s32.totalorder %v4666, 0
    %vm5078 = vcmp.lt.s32.totalorder %v4680, 0
    %vm5079 = vcmp.lt.s32.totalorder %v4694, 0
    %vm5080 = vcmp.lt.s32.totalorder %v4708, 0
    %vm5081 = vcmp.lt.s32.totalorder %v4722, 0
    %vm5082 = vcmp.lt.s32.totalorder %v4736, 0
    %vm5083 = vcmp.lt.s32.totalorder %v4750, 0
    %vm5084 = vcmp.lt.s32.totalorder %v4764, 0
    %vm5085 = vcmp.lt.s32.totalorder %v4778, 0
    %vm5086 = vcmp.lt.s32.totalorder %v4792, 0
    %vm5087 = vcmp.lt.s32.totalorder %v4806, 0
    %vm5088 = vcmp.lt.s32.totalorder %v4820, 0
    %vm5089 = vcmp.lt.s32.totalorder %v4834, 0
    %vm5090 = vcmp.lt.s32.totalorder %v4848, 0
    %vm5091 = vcmp.lt.s32.totalorder %v4862, 0
    %vm5092 = vcmp.lt.s32.totalorder %v4876, 0
    %vm5093 = vcmp.lt.s32.totalorder %v4890, 0
    %vm5094 = vcmp.lt.s32.totalorder %v4904, 0
    %vm5095 = vcmp.lt.s32.totalorder %v4918, 0
    %vm5096 = vcmp.lt.s32.totalorder %v4932, 0
    %vm5097 = vcmp.lt.s32.totalorder %v4946, 0
    %vm5098 = vcmp.lt.s32.totalorder %v4960, 0
    %vm5099 = vcmp.lt.s32.totalorder %v4974, 0
    %vm5100 = vcmp.lt.s32.totalorder %v4988, 0
    %vm5101 = vmand %vm5045, %vm4989
    %vm5102 = vmand %vm5046, %vm4990
    %vm5103 = vmand %vm5047, %vm4991
    %vm5104 = vmand %vm5048, %vm4992
    %vm5105 = vmand %vm5049, %vm4993
    %vm5106 = vmand %vm5050, %vm4994
    %vm5107 = vmand %vm5051, %vm4995
    %vm5108 = vmand %vm5052, %vm4996
    %vm5109 = vmand %vm5053, %vm4997
    %vm5110 = vmand %vm5054, %vm4998
    %vm5111 = vmand %vm5055, %vm4999
    %vm5112 = vmand %vm5056, %vm5000
    %vm5113 = vmand %vm5057, %vm5001
    %vm5114 = vmand %vm5058, %vm5002
    %vm5115 = vmand %vm5059, %vm5003
    %vm5116 = vmand %vm5060, %vm5004
    %vm5117 = vmand %vm5061, %vm5005
    %vm5118 = vmand %vm5062, %vm5006
    %vm5119 = vmand %vm5063, %vm5007
    %vm5120 = vmand %vm5064, %vm5008
    %vm5121 = vmand %vm5065, %vm5009
    %vm5122 = vmand %vm5066, %vm5010
    %vm5123 = vmand %vm5067, %vm5011
    %vm5124 = vmand %vm5068, %vm5012
    %vm5125 = vmand %vm5069, %vm5013
    %vm5126 = vmand %vm5070, %vm5014
    %vm5127 = vmand %vm5071, %vm5015
    %vm5128 = vmand %vm5072, %vm5016
    %vm5129 = vmand %vm5073, %vm5017
    %vm5130 = vmand %vm5074, %vm5018
    %vm5131 = vmand %vm5075, %vm5019
    %vm5132 = vmand %vm5076, %vm5020
    %vm5133 = vmand %vm5077, %vm5021
    %vm5134 = vmand %vm5078, %vm5022
    %vm5135 = vmand %vm5079, %vm5023
    %vm5136 = vmand %vm5080, %vm5024
    %vm5137 = vmand %vm5081, %vm5025
    %vm5138 = vmand %vm5082, %vm5026
    %vm5139 = vmand %vm5083, %vm5027
    %vm5140 = vmand %vm5084, %vm5028
    %vm5141 = vmand %vm5085, %vm5029
    %vm5142 = vmand %vm5086, %vm5030
    %vm5143 = vmand %vm5087, %vm5031
    %vm5144 = vmand %vm5088, %vm5032
    %vm5145 = vmand %vm5089, %vm5033
    %vm5146 = vmand %vm5090, %vm5034
    %vm5147 = vmand %vm5091, %vm5035
    %vm5148 = vmand %vm5092, %vm5036
    %vm5149 = vmand %vm5093, %vm5037
    %vm5150 = vmand %vm5094, %vm5038
    %vm5151 = vmand %vm5095, %vm5039
    %vm5152 = vmand %vm5096, %vm5040
    %vm5153 = vmand %vm5097, %vm5041
    %vm5154 = vmand %vm5098, %vm5042
    %vm5155 = vmand %vm5099, %vm5043
    %vm5156 = vmand %vm5100, %vm5044
    %v5157 = vadd.s32 %v4218, 56
    %v5158 = vadd.s32 %v4232, 56
    %v5159 = vadd.s32 %v4246, 56
    %v5160 = vadd.s32 %v4260, 56
    %v5161 = vadd.s32 %v4274, 56
    %v5162 = vadd.s32 %v4288, 56
    %v5163 = vadd.s32 %v4302, 56
    %v5164 = vadd.s32 %v4316, 56
    %v5165 = vadd.s32 %v4330, 56
    %v5166 = vadd.s32 %v4344, 56
    %v5167 = vadd.s32 %v4358, 56
    %v5168 = vadd.s32 %v4372, 56
    %v5169 = vadd.s32 %v4386, 56
    %v5170 = vadd.s32 %v4400, 56
    %v5171 = vadd.s32 %v4414, 56
    %v5172 = vadd.s32 %v4428, 56
    %v5173 = vadd.s32 %v4442, 56
    %v5174 = vadd.s32 %v4456, 56
    %v5175 = vadd.s32 %v4470, 56
    %v5176 = vadd.s32 %v4484, 56
    %v5177 = vadd.s32 %v4498, 56
    %v5178 = vadd.s32 %v4512, 56
    %v5179 = vadd.s32 %v4526, 56
    %v5180 = vadd.s32 %v4540, 56
    %v5181 = vadd.s32 %v4554, 56
    %v5182 = vadd.s32 %v4568, 56
    %v5183 = vadd.s32 %v4582, 56
    %v5184 = vadd.s32 %v4596, 56
    %v5185 = vadd.s32 %v4610, 56
    %v5186 = vadd.s32 %v4624, 56
    %v5187 = vadd.s32 %v4638, 56
    %v5188 = vadd.s32 %v4652, 56
    %v5189 = vadd.s32 %v4666, 56
    %v5190 = vadd.s32 %v4680, 56
    %v5191 = vadd.s32 %v4694, 56
    %v5192 = vadd.s32 %v4708, 56
    %v5193 = vadd.s32 %v4722, 56
    %v5194 = vadd.s32 %v4736, 56
    %v5195 = vadd.s32 %v4750, 56
    %v5196 = vadd.s32 %v4764, 56
    %v5197 = vadd.s32 %v4778, 56
    %v5198 = vadd.s32 %v4792, 56
    %v5199 = vadd.s32 %v4806, 56
    %v5200 = vadd.s32 %v4820, 56
    %v5201 = vadd.s32 %v4834, 56
    %v5202 = vadd.s32 %v4848, 56
    %v5203 = vadd.s32 %v4862, 56
    %v5204 = vadd.s32 %v4876, 56
    %v5205 = vadd.s32 %v4890, 56
    %v5206 = vadd.s32 %v4904, 56
    %v5207 = vadd.s32 %v4918, 56
    %v5208 = vadd.s32 %v4932, 56
    %v5209 = vadd.s32 %v4946, 56
    %v5210 = vadd.s32 %v4960, 56
    %v5211 = vadd.s32 %v4974, 56
    %v5212 = vadd.s32 %v4988, 56
    %v5213 = vsel %vm5101, %v5157, %v4218
    %v5214 = vsel %vm5102, %v5158, %v4232
    %v5215 = vsel %vm5103, %v5159, %v4246
    %v5216 = vsel %vm5104, %v5160, %v4260
    %v5217 = vsel %vm5105, %v5161, %v4274
    %v5218 = vsel %vm5106, %v5162, %v4288
    %v5219 = vsel %vm5107, %v5163, %v4302
    %v5220 = vsel %vm5108, %v5164, %v4316
    %v5221 = vsel %vm5109, %v5165, %v4330
    %v5222 = vsel %vm5110, %v5166, %v4344
    %v5223 = vsel %vm5111, %v5167, %v4358
    %v5224 = vsel %vm5112, %v5168, %v4372
    %v5225 = vsel %vm5113, %v5169, %v4386
    %v5226 = vsel %vm5114, %v5170, %v4400
    %v5227 = vsel %vm5115, %v5171, %v4414
    %v5228 = vsel %vm5116, %v5172, %v4428
    %v5229 = vsel %vm5117, %v5173, %v4442
    %v5230 = vsel %vm5118, %v5174, %v4456
    %v5231 = vsel %vm5119, %v5175, %v4470
    %v5232 = vsel %vm5120, %v5176, %v4484
    %v5233 = vsel %vm5121, %v5177, %v4498
    %v5234 = vsel %vm5122, %v5178, %v4512
    %v5235 = vsel %vm5123, %v5179, %v4526
    %v5236 = vsel %vm5124, %v5180, %v4540
    %v5237 = vsel %vm5125, %v5181, %v4554
    %v5238 = vsel %vm5126, %v5182, %v4568
    %v5239 = vsel %vm5127, %v5183, %v4582
    %v5240 = vsel %vm5128, %v5184, %v4596
    %v5241 = vsel %vm5129, %v5185, %v4610
    %v5242 = vsel %vm5130, %v5186, %v4624
    %v5243 = vsel %vm5131, %v5187, %v4638
    %v5244 = vsel %vm5132, %v5188, %v4652
    %v5245 = vsel %vm5133, %v5189, %v4666
    %v5246 = vsel %vm5134, %v5190, %v4680
    %v5247 = vsel %vm5135, %v5191, %v4694
    %v5248 = vsel %vm5136, %v5192, %v4708
    %v5249 = vsel %vm5137, %v5193, %v4722
    %v5250 = vsel %vm5138, %v5194, %v4736
    %v5251 = vsel %vm5139, %v5195, %v4750
    %v5252 = vsel %vm5140, %v5196, %v4764
    %v5253 = vsel %vm5141, %v5197, %v4778
    %v5254 = vsel %vm5142, %v5198, %v4792
    %v5255 = vsel %vm5143, %v5199, %v4806
    %v5256 = vsel %vm5144, %v5200, %v4820
    %v5257 = vsel %vm5145, %v5201, %v4834
    %v5258 = vsel %vm5146, %v5202, %v4848
    %v5259 = vsel %vm5147, %v5203, %v4862
    %v5260 = vsel %vm5148, %v5204, %v4876
    %v5261 = vsel %vm5149, %v5205, %v4890
    %v5262 = vsel %vm5150, %v5206, %v4904
    %v5263 = vsel %vm5151, %v5207, %v4918
    %v5264 = vsel %vm5152, %v5208, %v4932
    %v5265 = vsel %vm5153, %v5209, %v4946
    %v5266 = vsel %vm5154, %v5210, %v4960
    %v5267 = vsel %vm5155, %v5211, %v4974
    %v5268 = vsel %vm5156, %v5212, %v4988
    %vm5269 = vcmp.lt.s32.totalorder %v5213, 50
    %vm5270 = vcmp.lt.s32.totalorder %v5214, 50
    %vm5271 = vcmp.lt.s32.totalorder %v5215, 50
    %vm5272 = vcmp.lt.s32.totalorder %v5216, 50
    %vm5273 = vcmp.lt.s32.totalorder %v5217, 50
    %vm5274 = vcmp.lt.s32.totalorder %v5218, 50
    %vm5275 = vcmp.lt.s32.totalorder %v5219, 50
    %vm5276 = vcmp.lt.s32.totalorder %v5220, 50
    %vm5277 = vcmp.lt.s32.totalorder %v5221, 50
    %vm5278 = vcmp.lt.s32.totalorder %v5222, 50
    %vm5279 = vcmp.lt.s32.totalorder %v5223, 50
    %vm5280 = vcmp.lt.s32.totalorder %v5224, 50
    %vm5281 = vcmp.lt.s32.totalorder %v5225, 50
    %vm5282 = vcmp.lt.s32.totalorder %v5226, 50
    %vm5283 = vcmp.lt.s32.totalorder %v5227, 50
    %vm5284 = vcmp.lt.s32.totalorder %v5228, 50
    %vm5285 = vcmp.lt.s32.totalorder %v5229, 50
    %vm5286 = vcmp.lt.s32.totalorder %v5230, 50
    %vm5287 = vcmp.lt.s32.totalorder %v5231, 50
    %vm5288 = vcmp.lt.s32.totalorder %v5232, 50
    %vm5289 = vcmp.lt.s32.totalorder %v5233, 50
    %vm5290 = vcmp.lt.s32.totalorder %v5234, 50
    %vm5291 = vcmp.lt.s32.totalorder %v5235, 50
    %vm5292 = vcmp.lt.s32.totalorder %v5236, 50
    %vm5293 = vcmp.lt.s32.totalorder %v5237, 50
    %vm5294 = vcmp.lt.s32.totalorder %v5238, 50
    %vm5295 = vcmp.lt.s32.totalorder %v5239, 50
    %vm5296 = vcmp.lt.s32.totalorder %v5240, 50
    %vm5297 = vcmp.lt.s32.totalorder %v5241, 50
    %vm5298 = vcmp.lt.s32.totalorder %v5242, 50
    %vm5299 = vcmp.lt.s32.totalorder %v5243, 50
    %vm5300 = vcmp.lt.s32.totalorder %v5244, 50
    %vm5301 = vcmp.lt.s32.totalorder %v5245, 50
    %vm5302 = vcmp.lt.s32.totalorder %v5246, 50
    %vm5303 = vcmp.lt.s32.totalorder %v5247, 50
    %vm5304 = vcmp.lt.s32.totalorder %v5248, 50
    %vm5305 = vcmp.lt.s32.totalorder %v5249, 50
    %vm5306 = vcmp.lt.s32.totalorder %v5250, 50
    %vm5307 = vcmp.lt.s32.totalorder %v5251, 50
    %vm5308 = vcmp.lt.s32.totalorder %v5252, 50
    %vm5309 = vcmp.lt.s32.totalorder %v5253, 50
    %vm5310 = vcmp.lt.s32.totalorder %v5254, 50
    %vm5311 = vcmp.lt.s32.totalorder %v5255, 50
    %vm5312 = vcmp.lt.s32.totalorder %v5256, 50
    %vm5313 = vcmp.lt.s32.totalorder %v5257, 50
    %vm5314 = vcmp.lt.s32.totalorder %v5258, 50
    %vm5315 = vcmp.lt.s32.totalorder %v5259, 50
    %vm5316 = vcmp.lt.s32.totalorder %v5260, 50
    %vm5317 = vcmp.lt.s32.totalorder %v5261, 50
    %vm5318 = vcmp.lt.s32.totalorder %v5262, 50
    %vm5319 = vcmp.lt.s32.totalorder %v5263, 50
    %vm5320 = vcmp.lt.s32.totalorder %v5264, 50
    %vm5321 = vcmp.lt.s32.totalorder %v5265, 50
    %vm5322 = vcmp.lt.s32.totalorder %v5266, 50
    %vm5323 = vcmp.lt.s32.totalorder %v5267, 50
    %vm5324 = vcmp.lt.s32.totalorder %v5268, 50
    %v5325 = vsel %vm5269, 1, 0
    %v5326 = vsel %vm5270, 1, 0
    %v5327 = vsel %vm5271, 1, 0
    %v5328 = vsel %vm5272, 1, 0
    %v5329 = vsel %vm5273, 1, 0
    %v5330 = vsel %vm5274, 1, 0
    %v5331 = vsel %vm5275, 1, 0
    %v5332 = vsel %vm5276, 1, 0
    %v5333 = vsel %vm5277, 1, 0
    %v5334 = vsel %vm5278, 1, 0
    %v5335 = vsel %vm5279, 1, 0
    %v5336 = vsel %vm5280, 1, 0
    %v5337 = vsel %vm5281, 1, 0
    %v5338 = vsel %vm5282, 1, 0
    %v5339 = vsel %vm5283, 1, 0
    %v5340 = vsel %vm5284, 1, 0
    %v5341 = vsel %vm5285, 1, 0
    %v5342 = vsel %vm5286, 1, 0
    %v5343 = vsel %vm5287, 1, 0
    %v5344 = vsel %vm5288, 1, 0
    %v5345 = vsel %vm5289, 1, 0
    %v5346 = vsel %vm5290, 1, 0
    %v5347 = vsel %vm5291, 1, 0
    %v5348 = vsel %vm5292, 1, 0
    %v5349 = vsel %vm5293, 1, 0
    %v5350 = vsel %vm5294, 1, 0
    %v5351 = vsel %vm5295, 1, 0
    %v5352 = vsel %vm5296, 1, 0
    %v5353 = vsel %vm5297, 1, 0
    %v5354 = vsel %vm5298, 1, 0
    %v5355 = vsel %vm5299, 1, 0
    %v5356 = vsel %vm5300, 1, 0
    %v5357 = vsel %vm5301, 1, 0
    %v5358 = vsel %vm5302, 1, 0
    %v5359 = vsel %vm5303, 1, 0
    %v5360 = vsel %vm5304, 1, 0
    %v5361 = vsel %vm5305, 1, 0
    %v5362 = vsel %vm5306, 1, 0
    %v5363 = vsel %vm5307, 1, 0
    %v5364 = vsel %vm5308, 1, 0
    %v5365 = vsel %vm5309, 1, 0
    %v5366 = vsel %vm5310, 1, 0
    %v5367 = vsel %vm5311, 1, 0
    %v5368 = vsel %vm5312, 1, 0
    %v5369 = vsel %vm5313, 1, 0
    %v5370 = vsel %vm5314, 1, 0
    %v5371 = vsel %vm5315, 1, 0
    %v5372 = vsel %vm5316, 1, 0
    %v5373 = vsel %vm5317, 1, 0
    %v5374 = vsel %vm5318, 1, 0
    %v5375 = vsel %vm5319, 1, 0
    %v5376 = vsel %vm5320, 1, 0
    %v5377 = vsel %vm5321, 1, 0
    %v5378 = vsel %vm5322, 1, 0
    %v5379 = vsel %vm5323, 1, 0
    %v5380 = vsel %vm5324, 1, 0
    %vm5381 = vcmp.eq.s32.totalorder %v5325, 1
    %vm5382 = vcmp.eq.s32.totalorder %v5326, 1
    %vm5383 = vcmp.eq.s32.totalorder %v5327, 1
    %vm5384 = vcmp.eq.s32.totalorder %v5328, 1
    %vm5385 = vcmp.eq.s32.totalorder %v5329, 1
    %vm5386 = vcmp.eq.s32.totalorder %v5330, 1
    %vm5387 = vcmp.eq.s32.totalorder %v5331, 1
    %vm5388 = vcmp.eq.s32.totalorder %v5332, 1
    %vm5389 = vcmp.eq.s32.totalorder %v5333, 1
    %vm5390 = vcmp.eq.s32.totalorder %v5334, 1
    %vm5391 = vcmp.eq.s32.totalorder %v5335, 1
    %vm5392 = vcmp.eq.s32.totalorder %v5336, 1
    %vm5393 = vcmp.eq.s32.totalorder %v5337, 1
    %vm5394 = vcmp.eq.s32.totalorder %v5338, 1
    %vm5395 = vcmp.eq.s32.totalorder %v5339, 1
    %vm5396 = vcmp.eq.s32.totalorder %v5340, 1
    %vm5397 = vcmp.eq.s32.totalorder %v5341, 1
    %vm5398 = vcmp.eq.s32.totalorder %v5342, 1
    %vm5399 = vcmp.eq.s32.totalorder %v5343, 1
    %vm5400 = vcmp.eq.s32.totalorder %v5344, 1
    %vm5401 = vcmp.eq.s32.totalorder %v5345, 1
    %vm5402 = vcmp.eq.s32.totalorder %v5346, 1
    %vm5403 = vcmp.eq.s32.totalorder %v5347, 1
    %vm5404 = vcmp.eq.s32.totalorder %v5348, 1
    %vm5405 = vcmp.eq.s32.totalorder %v5349, 1
    %vm5406 = vcmp.eq.s32.totalorder %v5350, 1
    %vm5407 = vcmp.eq.s32.totalorder %v5351, 1
    %vm5408 = vcmp.eq.s32.totalorder %v5352, 1
    %vm5409 = vcmp.eq.s32.totalorder %v5353, 1
    %vm5410 = vcmp.eq.s32.totalorder %v5354, 1
    %vm5411 = vcmp.eq.s32.totalorder %v5355, 1
    %vm5412 = vcmp.eq.s32.totalorder %v5356, 1
    %vm5413 = vcmp.eq.s32.totalorder %v5357, 1
    %vm5414 = vcmp.eq.s32.totalorder %v5358, 1
    %vm5415 = vcmp.eq.s32.totalorder %v5359, 1
    %vm5416 = vcmp.eq.s32.totalorder %v5360, 1
    %vm5417 = vcmp.eq.s32.totalorder %v5361, 1
    %vm5418 = vcmp.eq.s32.totalorder %v5362, 1
    %vm5419 = vcmp.eq.s32.totalorder %v5363, 1
    %vm5420 = vcmp.eq.s32.totalorder %v5364, 1
    %vm5421 = vcmp.eq.s32.totalorder %v5365, 1
    %vm5422 = vcmp.eq.s32.totalorder %v5366, 1
    %vm5423 = vcmp.eq.s32.totalorder %v5367, 1
    %vm5424 = vcmp.eq.s32.totalorder %v5368, 1
    %vm5425 = vcmp.eq.s32.totalorder %v5369, 1
    %vm5426 = vcmp.eq.s32.totalorder %v5370, 1
    %vm5427 = vcmp.eq.s32.totalorder %v5371, 1
    %vm5428 = vcmp.eq.s32.totalorder %v5372, 1
    %vm5429 = vcmp.eq.s32.totalorder %v5373, 1
    %vm5430 = vcmp.eq.s32.totalorder %v5374, 1
    %vm5431 = vcmp.eq.s32.totalorder %v5375, 1
    %vm5432 = vcmp.eq.s32.totalorder %v5376, 1
    %vm5433 = vcmp.eq.s32.totalorder %v5377, 1
    %vm5434 = vcmp.eq.s32.totalorder %v5378, 1
    %vm5435 = vcmp.eq.s32.totalorder %v5379, 1
    %vm5436 = vcmp.eq.s32.totalorder %v5380, 1
    %v5437 = vsel %vm5381, %v4092, 0.0
    %v5438 = vsel %vm5382, %v4093, 0.0
    %v5439 = vsel %vm5383, %v4094, 0.0
    %v5440 = vsel %vm5384, %v4095, 0.0
    %v5441 = vsel %vm5385, %v4096, 0.0
    %v5442 = vsel %vm5386, %v4097, 0.0
    %v5443 = vsel %vm5387, %v4098, 0.0
    %v5444 = vsel %vm5388, %v4099, 0.0
    %v5445 = vsel %vm5389, %v4100, 0.0
    %v5446 = vsel %vm5390, %v4101, 0.0
    %v5447 = vsel %vm5391, %v4102, 0.0
    %v5448 = vsel %vm5392, %v4103, 0.0
    %v5449 = vsel %vm5393, %v4104, 0.0
    %v5450 = vsel %vm5394, %v4105, 0.0
    %v5451 = vsel %vm5395, %v4106, 0.0
    %v5452 = vsel %vm5396, %v4107, 0.0
    %v5453 = vsel %vm5397, %v4108, 0.0
    %v5454 = vsel %vm5398, %v4109, 0.0
    %v5455 = vsel %vm5399, %v4110, 0.0
    %v5456 = vsel %vm5400, %v4111, 0.0
    %v5457 = vsel %vm5401, %v4112, 0.0
    %v5458 = vsel %vm5402, %v4113, 0.0
    %v5459 = vsel %vm5403, %v4114, 0.0
    %v5460 = vsel %vm5404, %v4115, 0.0
    %v5461 = vsel %vm5405, %v4116, 0.0
    %v5462 = vsel %vm5406, %v4117, 0.0
    %v5463 = vsel %vm5407, %v4118, 0.0
    %v5464 = vsel %vm5408, %v4119, 0.0
    %v5465 = vsel %vm5409, %v4120, 0.0
    %v5466 = vsel %vm5410, %v4121, 0.0
    %v5467 = vsel %vm5411, %v4122, 0.0
    %v5468 = vsel %vm5412, %v4123, 0.0
    %v5469 = vsel %vm5413, %v4124, 0.0
    %v5470 = vsel %vm5414, %v4125, 0.0
    %v5471 = vsel %vm5415, %v4126, 0.0
    %v5472 = vsel %vm5416, %v4127, 0.0
    %v5473 = vsel %vm5417, %v4128, 0.0
    %v5474 = vsel %vm5418, %v4129, 0.0
    %v5475 = vsel %vm5419, %v4130, 0.0
    %v5476 = vsel %vm5420, %v4131, 0.0
    %v5477 = vsel %vm5421, %v4132, 0.0
    %v5478 = vsel %vm5422, %v4133, 0.0
    %v5479 = vsel %vm5423, %v4134, 0.0
    %v5480 = vsel %vm5424, %v4135, 0.0
    %v5481 = vsel %vm5425, %v4136, 0.0
    %v5482 = vsel %vm5426, %v4137, 0.0
    %v5483 = vsel %vm5427, %v4138, 0.0
    %v5484 = vsel %vm5428, %v4139, 0.0
    %v5485 = vsel %vm5429, %v4140, 0.0
    %v5486 = vsel %vm5430, %v4141, 0.0
    %v5487 = vsel %vm5431, %v4142, 0.0
    %v5488 = vsel %vm5432, %v4143, 0.0
    %v5489 = vsel %vm5433, %v4144, 0.0
    %v5490 = vsel %vm5434, %v4145, 0.0
    %v5491 = vsel %vm5435, %v4146, 0.0
    %v5492 = vsel %vm5436, %v4147, 0.0
    %5493 = vst.msk [vmem:[#allocation3 + $0x1] sm:$0xff] %vm3587, %v5437
    %5494 = vst.msk [vmem:[#allocation3 + $0x9] sm:$0xff] %vm3587, %v5438
    %5495 = vst.msk [vmem:[#allocation3 + $0x11] sm:$0xff] %vm3587, %v5439
    %5496 = vst.msk [vmem:[#allocation3 + $0x19] sm:$0xff] %vm3587, %v5440
    %5497 = vst.msk [vmem:[#allocation3 + $0x21] sm:$0xff] %vm3587, %v5441
    %5498 = vst.msk [vmem:[#allocation3 + $0x29] sm:$0xff] %vm3587, %v5442
    %5499 = vst.msk [vmem:[#allocation3 + $0x31] sm:$0xff] %vm3587, %v5443
    %5500 = vst.msk [vmem:[#allocation3 + $0x39] sm:$0xff] %vm3587, %v5444
    %5501 = vst.msk [vmem:[#allocation3 + $0x41] sm:$0xff] %vm3587, %v5445
    %5502 = vst.msk [vmem:[#allocation3 + $0x49] sm:$0xff] %vm3587, %v5446
    %5503 = vst.msk [vmem:[#allocation3 + $0x51] sm:$0xff] %vm3587, %v5447
    %5504 = vst.msk [vmem:[#allocation3 + $0x59] sm:$0xff] %vm3587, %v5448
    %5505 = vst.msk [vmem:[#allocation3 + $0x61] sm:$0xff] %vm3587, %v5449
    %5506 = vst.msk [vmem:[#allocation3 + $0x69] sm:$0xff] %vm3587, %v5450
    %5507 = vst.msk [vmem:[#allocation3 + $0x71] sm:$0xff] %vm3587, %v5451
    %5508 = vst.msk [vmem:[#allocation3 + $0x79] sm:$0xff] %vm3587, %v5452
    %5509 = vst.msk [vmem:[#allocation3 + $0x81] sm:$0xff] %vm3587, %v5453
    %5510 = vst.msk [vmem:[#allocation3 + $0x89] sm:$0xff] %vm3587, %v5454
    %5511 = vst.msk [vmem:[#allocation3 + $0x91] sm:$0xff] %vm3587, %v5455
    %5512 = vst.msk [vmem:[#allocation3 + $0x99] sm:$0xff] %vm3587, %v5456
    %5513 = vst.msk [vmem:[#allocation3 + $0xa1] sm:$0xff] %vm3587, %v5457
    %5514 = vst.msk [vmem:[#allocation3 + $0xa9] sm:$0xff] %vm3587, %v5458
    %5515 = vst.msk [vmem:[#allocation3 + $0xb1] sm:$0xff] %vm3587, %v5459
    %5516 = vst.msk [vmem:[#allocation3 + $0xb9] sm:$0xff] %vm3587, %v5460
    %5517 = vst.msk [vmem:[#allocation3 + $0xc1] sm:$0xff] %vm3587, %v5461
    %5518 = vst.msk [vmem:[#allocation3 + $0xc9] sm:$0xff] %vm3587, %v5462
    %5519 = vst.msk [vmem:[#allocation3 + $0xd1] sm:$0xff] %vm3587, %v5463
    %5520 = vst.msk [vmem:[#allocation3 + $0xd9] sm:$0xff] %vm3587, %v5464
    %5521 = vst.msk [vmem:[#allocation3 + $0xe1] sm:$0xff] %vm3587, %v5465
    %5522 = vst.msk [vmem:[#allocation3 + $0xe9] sm:$0xff] %vm3587, %v5466
    %5523 = vst.msk [vmem:[#allocation3 + $0xf1] sm:$0xff] %vm3587, %v5467
    %5524 = vst.msk [vmem:[#allocation3 + $0xf9] sm:$0xff] %vm3587, %v5468
    %5525 = vst.msk [vmem:[#allocation3 + $0x101] sm:$0xff] %vm3587, %v5469
    %5526 = vst.msk [vmem:[#allocation3 + $0x109] sm:$0xff] %vm3587, %v5470
    %5527 = vst.msk [vmem:[#allocation3 + $0x111] sm:$0xff] %vm3587, %v5471
    %5528 = vst.msk [vmem:[#allocation3 + $0x119] sm:$0xff] %vm3587, %v5472
    %5529 = vst.msk [vmem:[#allocation3 + $0x121] sm:$0xff] %vm3587, %v5473
    %5530 = vst.msk [vmem:[#allocation3 + $0x129] sm:$0xff] %vm3587, %v5474
    %5531 = vst.msk [vmem:[#allocation3 + $0x131] sm:$0xff] %vm3587, %v5475
    %5532 = vst.msk [vmem:[#allocation3 + $0x139] sm:$0xff] %vm3587, %v5476
    %5533 = vst.msk [vmem:[#allocation3 + $0x141] sm:$0xff] %vm3587, %v5477
    %5534 = vst.msk [vmem:[#allocation3 + $0x149] sm:$0xff] %vm3587, %v5478
    %5535 = vst.msk [vmem:[#allocation3 + $0x151] sm:$0xff] %vm3587, %v5479
    %5536 = vst.msk [vmem:[#allocation3 + $0x159] sm:$0xff] %vm3587, %v5480
    %5537 = vst.msk [vmem:[#allocation3 + $0x161] sm:$0xff] %vm3587, %v5481
    %5538 = vst.msk [vmem:[#allocation3 + $0x169] sm:$0xff] %vm3587, %v5482
    %5539 = vst.msk [vmem:[#allocation3 + $0x171] sm:$0xff] %vm3587, %v5483
    %5540 = vst.msk [vmem:[#allocation3 + $0x179] sm:$0xff] %vm3587, %v5484
    %5541 = vst.msk [vmem:[#allocation3 + $0x181] sm:$0xff] %vm3587, %v5485
    %5542 = vst.msk [vmem:[#allocation3 + $0x189] sm:$0xff] %vm3587, %v5486
    %5543 = vst.msk [vmem:[#allocation3 + $0x191] sm:$0xff] %vm3587, %v5487
    %5544 = vst.msk [vmem:[#allocation3 + $0x199] sm:$0xff] %vm3587, %v5488
    %5545 = vst.msk [vmem:[#allocation3 + $0x1a1] sm:$0xff] %vm3587, %v5489
    %5546 = vst.msk [vmem:[#allocation3 + $0x1a9] sm:$0xff] %vm3587, %v5490
    %5547 = vst.msk [vmem:[#allocation3 + $0x1b1] sm:$0xff] %vm3587, %v5491
    %5548 = vst.msk [vmem:[#allocation3 + $0x1b9] sm:$0xff] %vm3587, %v5492
    %vm5549 = vcmask 516096
    %5550 = vst.msk [vmem:[#allocation3] sm:$0x1] %vm5549, 0.0
    %5551 = vst.msk [vmem:[#allocation3 + $0x1c0] sm:$0xff] %vm3587, 0.0
    %v5552 = vld [vmem:[#allocation3] sm:$0xff]
    %v5553 = vld [vmem:[#allocation3 + $0x8] sm:$0xff]
    %v5554 = vld [vmem:[#allocation3 + $0x10] sm:$0xff]
    %v5555 = vld [vmem:[#allocation3 + $0x18] sm:$0xff]
    %v5556 = vld [vmem:[#allocation3 + $0x20] sm:$0xff]
    %v5557 = vld [vmem:[#allocation3 + $0x28] sm:$0xff]
    %v5558 = vld [vmem:[#allocation3 + $0x30] sm:$0xff]
    %v5559 = vld [vmem:[#allocation3 + $0x38] sm:$0xff]
    %v5560 = vld [vmem:[#allocation3 + $0x40] sm:$0xff]
    %v5561 = vld [vmem:[#allocation3 + $0x48] sm:$0xff]
    %v5562 = vld [vmem:[#allocation3 + $0x50] sm:$0xff]
    %v5563 = vld [vmem:[#allocation3 + $0x58] sm:$0xff]
    %v5564 = vld [vmem:[#allocation3 + $0x60] sm:$0xff]
    %v5565 = vld [vmem:[#allocation3 + $0x68] sm:$0xff]
    %v5566 = vld [vmem:[#allocation3 + $0x70] sm:$0xff]
    %v5567 = vld [vmem:[#allocation3 + $0x78] sm:$0xff]
    %v5568 = vld [vmem:[#allocation3 + $0x80] sm:$0xff]
    %v5569 = vld [vmem:[#allocation3 + $0x88] sm:$0xff]
    %v5570 = vld [vmem:[#allocation3 + $0x90] sm:$0xff]
    %v5571 = vld [vmem:[#allocation3 + $0x98] sm:$0xff]
    %v5572 = vld [vmem:[#allocation3 + $0xa0] sm:$0xff]
    %v5573 = vld [vmem:[#allocation3 + $0xa8] sm:$0xff]
    %v5574 = vld [vmem:[#allocation3 + $0xb0] sm:$0xff]
    %v5575 = vld [vmem:[#allocation3 + $0xb8] sm:$0xff]
    %v5576 = vld [vmem:[#allocation3 + $0xc0] sm:$0xff]
    %v5577 = vld [vmem:[#allocation3 + $0xc8] sm:$0xff]
    %v5578 = vld [vmem:[#allocation3 + $0xd0] sm:$0xff]
    %v5579 = vld [vmem:[#allocation3 + $0xd8] sm:$0xff]
    %v5580 = vld [vmem:[#allocation3 + $0xe0] sm:$0xff]
    %v5581 = vld [vmem:[#allocation3 + $0xe8] sm:$0xff]
    %v5582 = vld [vmem:[#allocation3 + $0xf0] sm:$0xff]
    %v5583 = vld [vmem:[#allocation3 + $0xf8] sm:$0xff]
    %v5584 = vld [vmem:[#allocation3 + $0x100] sm:$0xff]
    %v5585 = vld [vmem:[#allocation3 + $0x108] sm:$0xff]
    %v5586 = vld [vmem:[#allocation3 + $0x110] sm:$0xff]
    %v5587 = vld [vmem:[#allocation3 + $0x118] sm:$0xff]
    %v5588 = vld [vmem:[#allocation3 + $0x120] sm:$0xff]
    %v5589 = vld [vmem:[#allocation3 + $0x128] sm:$0xff]
    %v5590 = vld [vmem:[#allocation3 + $0x130] sm:$0xff]
    %v5591 = vld [vmem:[#allocation3 + $0x138] sm:$0xff]
    %v5592 = vld [vmem:[#allocation3 + $0x140] sm:$0xff]
    %v5593 = vld [vmem:[#allocation3 + $0x148] sm:$0xff]
    %v5594 = vld [vmem:[#allocation3 + $0x150] sm:$0xff]
    %v5595 = vld [vmem:[#allocation3 + $0x158] sm:$0xff]
    %v5596 = vld [vmem:[#allocation3 + $0x160] sm:$0xff]
    %v5597 = vld [vmem:[#allocation3 + $0x168] sm:$0xff]
    %v5598 = vld [vmem:[#allocation3 + $0x170] sm:$0xff]
    %v5599 = vld [vmem:[#allocation3 + $0x178] sm:$0xff]
    %v5600 = vld [vmem:[#allocation3 + $0x180] sm:$0xff]
    %v5601 = vld [vmem:[#allocation3 + $0x188] sm:$0xff]
    %v5602 = vld [vmem:[#allocation3 + $0x190] sm:$0xff]
    %v5603 = vld [vmem:[#allocation3 + $0x198] sm:$0xff]
    %v5604 = vld [vmem:[#allocation3 + $0x1a0] sm:$0xff]
    %v5605 = vld [vmem:[#allocation3 + $0x1a8] sm:$0xff]
    %v5606 = vld [vmem:[#allocation3 + $0x1b0] sm:$0xff]
    %v5607 = vld [vmem:[#allocation3 + $0x1b8] sm:$0xff]
    %v5608 = vld [vmem:[%s3] sm:$0xff]
    %v5609 = vld [vmem:[%s3 + $0x8] sm:$0xff]
    %v5610 = vld [vmem:[%s3 + $0x10] sm:$0xff]
    %v5611 = vld [vmem:[%s3 + $0x18] sm:$0xff]
    %v5612 = vld [vmem:[%s3 + $0x20] sm:$0xff]
    %v5613 = vld [vmem:[%s3 + $0x28] sm:$0xff]
    %v5614 = vld [vmem:[%s3 + $0x30] sm:$0xff]
    %v5615 = vld [vmem:[%s3 + $0x38] sm:$0xff]
    %v5616 = vld [vmem:[#allocation3 + $0x1] sm:$0xff]
    %v5617 = vld [vmem:[#allocation3 + $0x9] sm:$0xff]
    %v5618 = vld [vmem:[#allocation3 + $0x11] sm:$0xff]
    %v5619 = vld [vmem:[#allocation3 + $0x19] sm:$0xff]
    %v5620 = vld [vmem:[#allocation3 + $0x21] sm:$0xff]
    %v5621 = vld [vmem:[#allocation3 + $0x29] sm:$0xff]
    %v5622 = vld [vmem:[#allocation3 + $0x31] sm:$0xff]
    %v5623 = vld [vmem:[#allocation3 + $0x39] sm:$0xff]
    %v5624 = vld [vmem:[#allocation3 + $0x41] sm:$0xff]
    %v5625 = vld [vmem:[#allocation3 + $0x49] sm:$0xff]
    %v5626 = vld [vmem:[#allocation3 + $0x51] sm:$0xff]
    %v5627 = vld [vmem:[#allocation3 + $0x59] sm:$0xff]
    %v5628 = vld [vmem:[#allocation3 + $0x61] sm:$0xff]
    %v5629 = vld [vmem:[#allocation3 + $0x69] sm:$0xff]
    %v5630 = vld [vmem:[#allocation3 + $0x71] sm:$0xff]
    %v5631 = vld [vmem:[#allocation3 + $0x79] sm:$0xff]
    %v5632 = vld [vmem:[#allocation3 + $0x81] sm:$0xff]
    %v5633 = vld [vmem:[#allocation3 + $0x89] sm:$0xff]
    %v5634 = vld [vmem:[#allocation3 + $0x91] sm:$0xff]
    %v5635 = vld [vmem:[#allocation3 + $0x99] sm:$0xff]
    %v5636 = vld [vmem:[#allocation3 + $0xa1] sm:$0xff]
    %v5637 = vld [vmem:[#allocation3 + $0xa9] sm:$0xff]
    %v5638 = vld [vmem:[#allocation3 + $0xb1] sm:$0xff]
    %v5639 = vld [vmem:[#allocation3 + $0xb9] sm:$0xff]
    %v5640 = vld [vmem:[#allocation3 + $0xc1] sm:$0xff]
    %v5641 = vld [vmem:[#allocation3 + $0xc9] sm:$0xff]
    %v5642 = vld [vmem:[#allocation3 + $0xd1] sm:$0xff]
    %v5643 = vld [vmem:[#allocation3 + $0xd9] sm:$0xff]
    %v5644 = vld [vmem:[#allocation3 + $0xe1] sm:$0xff]
    %v5645 = vld [vmem:[#allocation3 + $0xe9] sm:$0xff]
    %v5646 = vld [vmem:[#allocation3 + $0xf1] sm:$0xff]
    %v5647 = vld [vmem:[#allocation3 + $0xf9] sm:$0xff]
    %v5648 = vld [vmem:[#allocation3 + $0x101] sm:$0xff]
    %v5649 = vld [vmem:[#allocation3 + $0x109] sm:$0xff]
    %v5650 = vld [vmem:[#allocation3 + $0x111] sm:$0xff]
    %v5651 = vld [vmem:[#allocation3 + $0x119] sm:$0xff]
    %v5652 = vld [vmem:[#allocation3 + $0x121] sm:$0xff]
    %v5653 = vld [vmem:[#allocation3 + $0x129] sm:$0xff]
    %v5654 = vld [vmem:[#allocation3 + $0x131] sm:$0xff]
    %v5655 = vld [vmem:[#allocation3 + $0x139] sm:$0xff]
    %v5656 = vld [vmem:[#allocation3 + $0x141] sm:$0xff]
    %v5657 = vld [vmem:[#allocation3 + $0x149] sm:$0xff]
    %v5658 = vld [vmem:[#allocation3 + $0x151] sm:$0xff]
    %v5659 = vld [vmem:[#allocation3 + $0x159] sm:$0xff]
    %v5660 = vld [vmem:[#allocation3 + $0x161] sm:$0xff]
    %v5661 = vld [vmem:[#allocation3 + $0x169] sm:$0xff]
    %v5662 = vld [vmem:[#allocation3 + $0x171] sm:$0xff]
    %v5663 = vld [vmem:[#allocation3 + $0x179] sm:$0xff]
    %v5664 = vld [vmem:[#allocation3 + $0x181] sm:$0xff]
    %v5665 = vld [vmem:[#allocation3 + $0x189] sm:$0xff]
    %v5666 = vld [vmem:[#allocation3 + $0x191] sm:$0xff]
    %v5667 = vld [vmem:[#allocation3 + $0x199] sm:$0xff]
    %v5668 = vld [vmem:[#allocation3 + $0x1a1] sm:$0xff]
    %v5669 = vld [vmem:[#allocation3 + $0x1a9] sm:$0xff]
    %v5670 = vld [vmem:[#allocation3 + $0x1b1] sm:$0xff]
    %v5671 = vld [vmem:[#allocation3 + $0x1b9] sm:$0xff]
    %v5672 = vld [vmem:[%s3 + $0x40] sm:$0xff]
    %v5673 = vld [vmem:[%s3 + $0x48] sm:$0xff]
    %v5674 = vld [vmem:[%s3 + $0x50] sm:$0xff]
    %v5675 = vld [vmem:[%s3 + $0x58] sm:$0xff]
    %v5676 = vld [vmem:[%s3 + $0x60] sm:$0xff]
    %v5677 = vld [vmem:[%s3 + $0x68] sm:$0xff]
    %v5678 = vld [vmem:[%s3 + $0x70] sm:$0xff]
    %v5679 = vld [vmem:[%s3 + $0x78] sm:$0xff]
    %v5681 = vsel %vm3587, %v5616, 0
    %v5684 = vsel %vm3587, %v5617, 0
    %v5687 = vsel %vm3587, %v5618, 0
    %v5690 = vsel %vm3587, %v5619, 0
    %v5693 = vsel %vm3587, %v5620, 0
    %v5696 = vsel %vm3587, %v5621, 0
    %v5699 = vsel %vm3587, %v5622, 0
    %v5702 = vsel %vm3587, %v5623, 0
    %v5705 = vsel %vm3587, %v5624, 0
    %v5708 = vsel %vm3587, %v5625, 0
    %v5711 = vsel %vm3587, %v5626, 0
    %v5714 = vsel %vm3587, %v5627, 0
    %v5717 = vsel %vm3587, %v5628, 0
    %v5720 = vsel %vm3587, %v5629, 0
    %v5723 = vsel %vm3587, %v5630, 0
    %v5726 = vsel %vm3587, %v5631, 0
    %v5729 = vsel %vm3587, %v5632, 0
    %v5732 = vsel %vm3587, %v5633, 0
    %v5735 = vsel %vm3587, %v5634, 0
    %v5738 = vsel %vm3587, %v5635, 0
    %v5741 = vsel %vm3587, %v5636, 0
    %v5744 = vsel %vm3587, %v5637, 0
    %v5747 = vsel %vm3587, %v5638, 0
    %v5750 = vsel %vm3587, %v5639, 0
    %v5753 = vsel %vm3587, %v5640, 0
    %v5756 = vsel %vm3587, %v5641, 0
    %v5759 = vsel %vm3587, %v5642, 0
    %v5762 = vsel %vm3587, %v5643, 0
    %v5765 = vsel %vm3587, %v5644, 0
    %v5768 = vsel %vm3587, %v5645, 0
    %v5771 = vsel %vm3587, %v5646, 0
    %v5774 = vsel %vm3587, %v5647, 0
    %v5777 = vsel %vm3587, %v5648, 0
    %v5780 = vsel %vm3587, %v5649, 0
    %v5783 = vsel %vm3587, %v5650, 0
    %v5786 = vsel %vm3587, %v5651, 0
    %v5789 = vsel %vm3587, %v5652, 0
    %v5792 = vsel %vm3587, %v5653, 0
    %v5795 = vsel %vm3587, %v5654, 0
    %v5798 = vsel %vm3587, %v5655, 0
    %v5801 = vsel %vm3587, %v5656, 0
    %v5804 = vsel %vm3587, %v5657, 0
    %v5807 = vsel %vm3587, %v5658, 0
    %v5810 = vsel %vm3587, %v5659, 0
    %v5813 = vsel %vm3587, %v5660, 0
    %v5816 = vsel %vm3587, %v5661, 0
    %v5819 = vsel %vm3587, %v5662, 0
    %v5822 = vsel %vm3587, %v5663, 0
    %v5825 = vsel %vm3587, %v5664, 0
    %v5828 = vsel %vm3587, %v5665, 0
    %v5831 = vsel %vm3587, %v5666, 0
    %v5834 = vsel %vm3587, %v5667, 0
    %v5837 = vsel %vm3587, %v5668, 0
    %v5840 = vsel %vm3587, %v5669, 0
    %v5843 = vsel %vm3587, %v5670, 0
    %v5846 = vsel %vm3587, %v5671, 0
    %5848 = vmatprep.subr.mxu0 0.0
    %5849 = vmatpush1.msra.mxu0 %v5672
    %5850 = vmatprep.subr.mxu0 0.0
    %5851 = vmatpush1.msra.mxu0 %v5673
    %5852 = vmatprep.subr.mxu0 0.0
    %5853 = vmatpush1.msra.mxu0 %v5674
    %5854 = vmatprep.subr.mxu0 0.0
    %5855 = vmatpush1.msra.mxu0 %v5675
    %5856 = vmatprep.subr.mxu0 0.0
    %5857 = vmatpush1.msra.mxu0 %v5676
    %5858 = vmatprep.subr.mxu0 0.0
    %5859 = vmatpush1.msra.mxu0 %v5677
    %5860 = vmatprep.subr.mxu0 0.0
    %5861 = vmatpush1.msra.mxu0 %v5678
    %5862 = vmatprep.subr.mxu0 0.0
    %5863 = vmatpush1.msra.mxu0 %v5679
    %5864 = vmatprep.subr.mxu0 0.0
    %5865 = vmatpush1.msra.mxu0 0.0
    %5866 = vmatprep.subr.mxu0 0.0
    %5867 = vmatpush1.msra.mxu0 0.0
    %5868 = vmatprep.subr.mxu0 0.0
    %5869 = vmatpush1.msra.mxu0 0.0
    %5870 = vmatprep.subr.mxu0 0.0
    %5871 = vmatpush1.msra.mxu0 0.0
    %5872 = vmatprep.subr.mxu0 0.0
    %5873 = vmatpush1.msra.mxu0 0.0
    %5874 = vmatprep.subr.mxu0 0.0
    %5875 = vmatpush1.msra.mxu0 0.0
    %5876 = vmatprep.subr.mxu0 0.0
    %5877 = vmatpush1.msra.mxu0 0.0
    %5878 = vmatprep.subr.mxu0 0.0
    %5879 = vmatpush1.msra.mxu0 0.0
    %5880 = vmatprep.subr.mxu0 0.0
    %5881 = vmatpush1.msra.mxu0 0.0
    %5882 = vmatprep.subr.mxu0 0.0
    %5883 = vmatpush1.msra.mxu0 0.0
    %5884 = vmatprep.subr.mxu0 0.0
    %5885 = vmatpush1.msra.mxu0 0.0
    %5886 = vmatprep.subr.mxu0 0.0
    %5887 = vmatpush1.msra.mxu0 0.0
    %5888 = vmatprep.subr.mxu0 0.0
    %5889 = vmatpush1.msra.mxu0 0.0
    %5890 = vmatprep.subr.mxu0 0.0
    %5891 = vmatpush1.msra.mxu0 0.0
    %5892 = vmatprep.subr.mxu0 0.0
    %5893 = vmatpush1.msra.mxu0 0.0
    %5894 = vmatprep.subr.mxu0 0.0
    %5895 = vmatpush1.msra.mxu0 0.0
    %5896 = vmatprep.subr.mxu0 0.0
    %5897 = vmatpush1.msra.mxu0 0.0
    %5898 = vmatprep.subr.mxu0 0.0
    %5899 = vmatpush1.msra.mxu0 0.0
    %5900 = vmatprep.subr.mxu0 0.0
    %5901 = vmatpush1.msra.mxu0 0.0
    %5902 = vmatprep.subr.mxu0 0.0
    %5903 = vmatpush1.msra.mxu0 0.0
    %5904 = vmatprep.subr.mxu0 0.0
    %5905 = vmatpush1.msra.mxu0 0.0
    %5906 = vmatprep.subr.mxu0 0.0
    %5907 = vmatpush1.msra.mxu0 0.0
    %5908 = vmatprep.subr.mxu0 0.0
    %5909 = vmatpush1.msra.mxu0 0.0
    %5910 = vmatprep.subr.mxu0 0.0
    %5911 = vmatpush1.msra.mxu0 0.0
    %5912 = vmatprep.mubr.f32.mxu0 0.0
    %5913 = vmatmul.mubr.f32.gmra.mrb[0].mxu0 %v5681
    %v5914 = vpop.f32.mrb[0].mxu0
    %v5915 = vadd.f32 0.0, %v5914
    %v5916 = vpop.f32.mrb[0].mxu0
    %5917 = vmatprep.mubr.f32.mxu0 0.0
    %5918 = vmatmul.mubr.f32.gmra.mrb[0].mxu0 %v5684
    %v5919 = vpop.f32.mrb[0].mxu0
    %v5920 = vadd.f32 0.0, %v5919
    %v5921 = vpop.f32.mrb[0].mxu0
    %5922 = vmatprep.mubr.f32.mxu0 0.0
    %5923 = vmatmul.mubr.f32.gmra.mrb[0].mxu0 %v5687
    %v5924 = vpop.f32.mrb[0].mxu0
    %v5925 = vadd.f32 0.0, %v5924
    %v5926 = vpop.f32.mrb[0].mxu0
    %5927 = vmatprep.mubr.f32.mxu0 0.0
    %5928 = vmatmul.mubr.f32.gmra.mrb[0].mxu0 %v5690
    %v5929 = vpop.f32.mrb[0].mxu0
    %v5930 = vadd.f32 0.0, %v5929
    %v5931 = vpop.f32.mrb[0].mxu0
    %5932 = vmatprep.mubr.f32.mxu0 0.0
    %5933 = vmatmul.mubr.f32.gmra.mrb[0].mxu0 %v5693
    %v5934 = vpop.f32.mrb[0].mxu0
    %v5935 = vadd.f32 0.0, %v5934
    %v5936 = vpop.f32.mrb[0].mxu0
    %5937 = vmatprep.mubr.f32.mxu0 0.0
    %5938 = vmatmul.mubr.f32.gmra.mrb[0].mxu0 %v5696
    %v5939 = vpop.f32.mrb[0].mxu0
    %v5940 = vadd.f32 0.0, %v5939
    %v5941 = vpop.f32.mrb[0].mxu0
    %5942 = vmatprep.mubr.f32.mxu0 0.0
    %5943 = vmatmul.mubr.f32.gmra.mrb[0].mxu0 %v5699
    %v5944 = vpop.f32.mrb[0].mxu0
    %v5945 = vadd.f32 0.0, %v5944
    %v5946 = vpop.f32.mrb[0].mxu0
    %5947 = vmatprep.mubr.f32.mxu0 0.0
    %5948 = vmatmul.mubr.f32.gmra.mrb[0].mxu0 %v5702
    %v5949 = vpop.f32.mrb[0].mxu0
    %v5950 = vadd.f32 0.0, %v5949
    %v5951 = vpop.f32.mrb[0].mxu0
    %5952 = vmatprep.mubr.f32.mxu0 0.0
    %5953 = vmatmul.mubr.f32.gmra.mrb[0].mxu0 %v5705
    %v5954 = vpop.f32.mrb[0].mxu0
    %v5955 = vadd.f32 0.0, %v5954
    %v5956 = vpop.f32.mrb[0].mxu0
    %5957 = vmatprep.mubr.f32.mxu0 0.0
    %5958 = vmatmul.mubr.f32.gmra.mrb[0].mxu0 %v5708
    %v5959 = vpop.f32.mrb[0].mxu0
    %v5960 = vadd.f32 0.0, %v5959
    %v5961 = vpop.f32.mrb[0].mxu0
    %5962 = vmatprep.mubr.f32.mxu0 0.0
    %5963 = vmatmul.mubr.f32.gmra.mrb[0].mxu0 %v5711
    %v5964 = vpop.f32.mrb[0].mxu0
    %v5965 = vadd.f32 0.0, %v5964
    %v5966 = vpop.f32.mrb[0].mxu0
    %5967 = vmatprep.mubr.f32.mxu0 0.0
    %5968 = vmatmul.mubr.f32.gmra.mrb[0].mxu0 %v5714
    %v5969 = vpop.f32.mrb[0].mxu0
    %v5970 = vadd.f32 0.0, %v5969
    %v5971 = vpop.f32.mrb[0].mxu0
    %5972 = vmatprep.mubr.f32.mxu0 0.0
    %5973 = vmatmul.mubr.f32.gmra.mrb[0].mxu0 %v5717
    %v5974 = vpop.f32.mrb[0].mxu0
    %v5975 = vadd.f32 0.0, %v5974
    %v5976 = vpop.f32.mrb[0].mxu0
    %5977 = vmatprep.mubr.f32.mxu0 0.0
    %5978 = vmatmul.mubr.f32.gmra.mrb[0].mxu0 %v5720
    %v5979 = vpop.f32.mrb[0].mxu0
    %v5980 = vadd.f32 0.0, %v5979
    %v5981 = vpop.f32.mrb[0].mxu0
    %5982 = vmatprep.mubr.f32.mxu0 0.0
    %5983 = vmatmul.mubr.f32.gmra.mrb[0].mxu0 %v5723
    %v5984 = vpop.f32.mrb[0].mxu0
    %v5985 = vadd.f32 0.0, %v5984
    %v5986 = vpop.f32.mrb[0].mxu0
    %5987 = vmatprep.mubr.f32.mxu0 0.0
    %5988 = vmatmul.mubr.f32.gmra.mrb[0].mxu0 %v5726
    %v5989 = vpop.f32.mrb[0].mxu0
    %v5990 = vadd.f32 0.0, %v5989
    %v5991 = vpop.f32.mrb[0].mxu0
    %5992 = vmatprep.mubr.f32.mxu0 0.0
    %5993 = vmatmul.mubr.f32.gmra.mrb[0].mxu0 %v5729
    %v5994 = vpop.f32.mrb[0].mxu0
    %v5995 = vadd.f32 0.0, %v5994
    %v5996 = vpop.f32.mrb[0].mxu0
    %5997 = vmatprep.mubr.f32.mxu0 0.0
    %5998 = vmatmul.mubr.f32.gmra.mrb[0].mxu0 %v5732
    %v5999 = vpop.f32.mrb[0].mxu0
    %v6000 = vadd.f32 0.0, %v5999
    %v6001 = vpop.f32.mrb[0].mxu0
    %6002 = vmatprep.mubr.f32.mxu0 0.0
    %6003 = vmatmul.mubr.f32.gmra.mrb[0].mxu0 %v5735
    %v6004 = vpop.f32.mrb[0].mxu0
    %v6005 = vadd.f32 0.0, %v6004
    %v6006 = vpop.f32.mrb[0].mxu0
    %6007 = vmatprep.mubr.f32.mxu0 0.0
    %6008 = vmatmul.mubr.f32.gmra.mrb[0].mxu0 %v5738
    %v6009 = vpop.f32.mrb[0].mxu0
    %v6010 = vadd.f32 0.0, %v6009
    %v6011 = vpop.f32.mrb[0].mxu0
    %6012 = vmatprep.mubr.f32.mxu0 0.0
    %6013 = vmatmul.mubr.f32.gmra.mrb[0].mxu0 %v5741
    %v6014 = vpop.f32.mrb[0].mxu0
    %v6015 = vadd.f32 0.0, %v6014
    %v6016 = vpop.f32.mrb[0].mxu0
    %6017 = vmatprep.mubr.f32.mxu0 0.0
    %6018 = vmatmul.mubr.f32.gmra.mrb[0].mxu0 %v5744
    %v6019 = vpop.f32.mrb[0].mxu0
    %v6020 = vadd.f32 0.0, %v6019
    %v6021 = vpop.f32.mrb[0].mxu0
    %6022 = vmatprep.mubr.f32.mxu0 0.0
    %6023 = vmatmul.mubr.f32.gmra.mrb[0].mxu0 %v5747
    %v6024 = vpop.f32.mrb[0].mxu0
    %v6025 = vadd.f32 0.0, %v6024
    %v6026 = vpop.f32.mrb[0].mxu0
    %6027 = vmatprep.mubr.f32.mxu0 0.0
    %6028 = vmatmul.mubr.f32.gmra.mrb[0].mxu0 %v5750
    %v6029 = vpop.f32.mrb[0].mxu0
    %v6030 = vadd.f32 0.0, %v6029
    %v6031 = vpop.f32.mrb[0].mxu0
    %6032 = vmatprep.mubr.f32.mxu0 0.0
    %6033 = vmatmul.mubr.f32.gmra.mrb[0].mxu0 %v5753
    %v6034 = vpop.f32.mrb[0].mxu0
    %v6035 = vadd.f32 0.0, %v6034
    %v6036 = vpop.f32.mrb[0].mxu0
    %6037 = vmatprep.mubr.f32.mxu0 0.0
    %6038 = vmatmul.mubr.f32.gmra.mrb[0].mxu0 %v5756
    %v6039 = vpop.f32.mrb[0].mxu0
    %v6040 = vadd.f32 0.0, %v6039
    %v6041 = vpop.f32.mrb[0].mxu0
    %6042 = vmatprep.mubr.f32.mxu0 0.0
    %6043 = vmatmul.mubr.f32.gmra.mrb[0].mxu0 %v5759
    %v6044 = vpop.f32.mrb[0].mxu0
    %v6045 = vadd.f32 0.0, %v6044
    %v6046 = vpop.f32.mrb[0].mxu0
    %6047 = vmatprep.mubr.f32.mxu0 0.0
    %6048 = vmatmul.mubr.f32.gmra.mrb[0].mxu0 %v5762
    %v6049 = vpop.f32.mrb[0].mxu0
    %v6050 = vadd.f32 0.0, %v6049
    %v6051 = vpop.f32.mrb[0].mxu0
    %6052 = vmatprep.mubr.f32.mxu0 0.0
    %6053 = vmatmul.mubr.f32.gmra.mrb[0].mxu0 %v5765
    %v6054 = vpop.f32.mrb[0].mxu0
    %v6055 = vadd.f32 0.0, %v6054
    %v6056 = vpop.f32.mrb[0].mxu0
    %6057 = vmatprep.mubr.f32.mxu0 0.0
    %6058 = vmatmul.mubr.f32.gmra.mrb[0].mxu0 %v5768
    %v6059 = vpop.f32.mrb[0].mxu0
    %v6060 = vadd.f32 0.0, %v6059
    %v6061 = vpop.f32.mrb[0].mxu0
    %6062 = vmatprep.mubr.f32.mxu0 0.0
    %6063 = vmatmul.mubr.f32.gmra.mrb[0].mxu0 %v5771
    %v6064 = vpop.f32.mrb[0].mxu0
    %v6065 = vadd.f32 0.0, %v6064
    %v6066 = vpop.f32.mrb[0].mxu0
    %6067 = vmatprep.mubr.f32.mxu0 0.0
    %6068 = vmatmul.mubr.f32.gmra.mrb[0].mxu0 %v5774
    %v6069 = vpop.f32.mrb[0].mxu0
    %v6070 = vadd.f32 0.0, %v6069
    %v6071 = vpop.f32.mrb[0].mxu0
    %6072 = vmatprep.mubr.f32.mxu0 0.0
    %6073 = vmatmul.mubr.f32.gmra.mrb[0].mxu0 %v5777
    %v6074 = vpop.f32.mrb[0].mxu0
    %v6075 = vadd.f32 0.0, %v6074
    %v6076 = vpop.f32.mrb[0].mxu0
    %6077 = vmatprep.mubr.f32.mxu0 0.0
    %6078 = vmatmul.mubr.f32.gmra.mrb[0].mxu0 %v5780
    %v6079 = vpop.f32.mrb[0].mxu0
    %v6080 = vadd.f32 0.0, %v6079
    %v6081 = vpop.f32.mrb[0].mxu0
    %6082 = vmatprep.mubr.f32.mxu0 0.0
    %6083 = vmatmul.mubr.f32.gmra.mrb[0].mxu0 %v5783
    %v6084 = vpop.f32.mrb[0].mxu0
    %v6085 = vadd.f32 0.0, %v6084
    %v6086 = vpop.f32.mrb[0].mxu0
    %6087 = vmatprep.mubr.f32.mxu0 0.0
    %6088 = vmatmul.mubr.f32.gmra.mrb[0].mxu0 %v5786
    %v6089 = vpop.f32.mrb[0].mxu0
    %v6090 = vadd.f32 0.0, %v6089
    %v6091 = vpop.f32.mrb[0].mxu0
    %6092 = vmatprep.mubr.f32.mxu0 0.0
    %6093 = vmatmul.mubr.f32.gmra.mrb[0].mxu0 %v5789
    %v6094 = vpop.f32.mrb[0].mxu0
    %v6095 = vadd.f32 0.0, %v6094
    %v6096 = vpop.f32.mrb[0].mxu0
    %6097 = vmatprep.mubr.f32.mxu0 0.0
    %6098 = vmatmul.mubr.f32.gmra.mrb[0].mxu0 %v5792
    %v6099 = vpop.f32.mrb[0].mxu0
    %v6100 = vadd.f32 0.0, %v6099
    %v6101 = vpop.f32.mrb[0].mxu0
    %6102 = vmatprep.mubr.f32.mxu0 0.0
    %6103 = vmatmul.mubr.f32.gmra.mrb[0].mxu0 %v5795
    %v6104 = vpop.f32.mrb[0].mxu0
    %v6105 = vadd.f32 0.0, %v6104
    %v6106 = vpop.f32.mrb[0].mxu0
    %6107 = vmatprep.mubr.f32.mxu0 0.0
    %6108 = vmatmul.mubr.f32.gmra.mrb[0].mxu0 %v5798
    %v6109 = vpop.f32.mrb[0].mxu0
    %v6110 = vadd.f32 0.0, %v6109
    %v6111 = vpop.f32.mrb[0].mxu0
    %6112 = vmatprep.mubr.f32.mxu0 0.0
    %6113 = vmatmul.mubr.f32.gmra.mrb[0].mxu0 %v5801
    %v6114 = vpop.f32.mrb[0].mxu0
    %v6115 = vadd.f32 0.0, %v6114
    %v6116 = vpop.f32.mrb[0].mxu0
    %6117 = vmatprep.mubr.f32.mxu0 0.0
    %6118 = vmatmul.mubr.f32.gmra.mrb[0].mxu0 %v5804
    %v6119 = vpop.f32.mrb[0].mxu0
    %v6120 = vadd.f32 0.0, %v6119
    %v6121 = vpop.f32.mrb[0].mxu0
    %6122 = vmatprep.mubr.f32.mxu0 0.0
    %6123 = vmatmul.mubr.f32.gmra.mrb[0].mxu0 %v5807
    %v6124 = vpop.f32.mrb[0].mxu0
    %v6125 = vadd.f32 0.0, %v6124
    %v6126 = vpop.f32.mrb[0].mxu0
    %6127 = vmatprep.mubr.f32.mxu0 0.0
    %6128 = vmatmul.mubr.f32.gmra.mrb[0].mxu0 %v5810
    %v6129 = vpop.f32.mrb[0].mxu0
    %v6130 = vadd.f32 0.0, %v6129
    %v6131 = vpop.f32.mrb[0].mxu0
    %6132 = vmatprep.mubr.f32.mxu0 0.0
    %6133 = vmatmul.mubr.f32.gmra.mrb[0].mxu0 %v5813
    %v6134 = vpop.f32.mrb[0].mxu0
    %v6135 = vadd.f32 0.0, %v6134
    %v6136 = vpop.f32.mrb[0].mxu0
    %6137 = vmatprep.mubr.f32.mxu0 0.0
    %6138 = vmatmul.mubr.f32.gmra.mrb[0].mxu0 %v5816
    %v6139 = vpop.f32.mrb[0].mxu0
    %v6140 = vadd.f32 0.0, %v6139
    %v6141 = vpop.f32.mrb[0].mxu0
    %6142 = vmatprep.mubr.f32.mxu0 0.0
    %6143 = vmatmul.mubr.f32.gmra.mrb[0].mxu0 %v5819
    %v6144 = vpop.f32.mrb[0].mxu0
    %v6145 = vadd.f32 0.0, %v6144
    %v6146 = vpop.f32.mrb[0].mxu0
    %6147 = vmatprep.mubr.f32.mxu0 0.0
    %6148 = vmatmul.mubr.f32.gmra.mrb[0].mxu0 %v5822
    %v6149 = vpop.f32.mrb[0].mxu0
    %v6150 = vadd.f32 0.0, %v6149
    %v6151 = vpop.f32.mrb[0].mxu0
    %6152 = vmatprep.mubr.f32.mxu0 0.0
    %6153 = vmatmul.mubr.f32.gmra.mrb[0].mxu0 %v5825
    %v6154 = vpop.f32.mrb[0].mxu0
    %v6155 = vadd.f32 0.0, %v6154
    %v6156 = vpop.f32.mrb[0].mxu0
    %6157 = vmatprep.mubr.f32.mxu0 0.0
    %6158 = vmatmul.mubr.f32.gmra.mrb[0].mxu0 %v5828
    %v6159 = vpop.f32.mrb[0].mxu0
    %v6160 = vadd.f32 0.0, %v6159
    %v6161 = vpop.f32.mrb[0].mxu0
    %6162 = vmatprep.mubr.f32.mxu0 0.0
    %6163 = vmatmul.mubr.f32.gmra.mrb[0].mxu0 %v5831
    %v6164 = vpop.f32.mrb[0].mxu0
    %v6165 = vadd.f32 0.0, %v6164
    %v6166 = vpop.f32.mrb[0].mxu0
    %6167 = vmatprep.mubr.f32.mxu0 0.0
    %6168 = vmatmul.mubr.f32.gmra.mrb[0].mxu0 %v5834
    %v6169 = vpop.f32.mrb[0].mxu0
    %v6170 = vadd.f32 0.0, %v6169
    %v6171 = vpop.f32.mrb[0].mxu0
    %6172 = vmatprep.mubr.f32.mxu0 0.0
    %6173 = vmatmul.mubr.f32.gmra.mrb[0].mxu0 %v5837
    %v6174 = vpop.f32.mrb[0].mxu0
    %v6175 = vadd.f32 0.0, %v6174
    %v6176 = vpop.f32.mrb[0].mxu0
    %6177 = vmatprep.mubr.f32.mxu0 0.0
    %6178 = vmatmul.mubr.f32.gmra.mrb[0].mxu0 %v5840
    %v6179 = vpop.f32.mrb[0].mxu0
    %v6180 = vadd.f32 0.0, %v6179
    %v6181 = vpop.f32.mrb[0].mxu0
    %6182 = vmatprep.mubr.f32.mxu0 0.0
    %6183 = vmatmul.mubr.f32.gmra.mrb[0].mxu0 %v5843
    %v6184 = vpop.f32.mrb[0].mxu0
    %v6185 = vadd.f32 0.0, %v6184
    %v6186 = vpop.f32.mrb[0].mxu0
    %6187 = vmatprep.mubr.f32.mxu0 0.0
    %6188 = vmatmul.mubr.f32.gmra.mrb[0].mxu0 %v5846
    %v6189 = vpop.f32.mrb[0].mxu0
    %v6190 = vadd.f32 0.0, %v6189
    %v6191 = vpop.f32.mrb[0].mxu0
    %6192 = vdwg.mxu0
    %v6194 = vsel %vm3587, %v5552, 0
    %v6197 = vsel %vm3587, %v5553, 0
    %v6200 = vsel %vm3587, %v5554, 0
    %v6203 = vsel %vm3587, %v5555, 0
    %v6206 = vsel %vm3587, %v5556, 0
    %v6209 = vsel %vm3587, %v5557, 0
    %v6212 = vsel %vm3587, %v5558, 0
    %v6215 = vsel %vm3587, %v5559, 0
    %v6218 = vsel %vm3587, %v5560, 0
    %v6221 = vsel %vm3587, %v5561, 0
    %v6224 = vsel %vm3587, %v5562, 0
    %v6227 = vsel %vm3587, %v5563, 0
    %v6230 = vsel %vm3587, %v5564, 0
    %v6233 = vsel %vm3587, %v5565, 0
    %v6236 = vsel %vm3587, %v5566, 0
    %v6239 = vsel %vm3587, %v5567, 0
    %v6242 = vsel %vm3587, %v5568, 0
    %v6245 = vsel %vm3587, %v5569, 0
    %v6248 = vsel %vm3587, %v5570, 0
    %v6251 = vsel %vm3587, %v5571, 0
    %v6254 = vsel %vm3587, %v5572, 0
    %v6257 = vsel %vm3587, %v5573, 0
    %v6260 = vsel %vm3587, %v5574, 0
    %v6263 = vsel %vm3587, %v5575, 0
    %v6266 = vsel %vm3587, %v5576, 0
    %v6269 = vsel %vm3587, %v5577, 0
    %v6272 = vsel %vm3587, %v5578, 0
    %v6275 = vsel %vm3587, %v5579, 0
    %v6278 = vsel %vm3587, %v5580, 0
    %v6281 = vsel %vm3587, %v5581, 0
    %v6284 = vsel %vm3587, %v5582, 0
    %v6287 = vsel %vm3587, %v5583, 0
    %v6290 = vsel %vm3587, %v5584, 0
    %v6293 = vsel %vm3587, %v5585, 0
    %v6296 = vsel %vm3587, %v5586, 0
    %v6299 = vsel %vm3587, %v5587, 0
    %v6302 = vsel %vm3587, %v5588, 0
    %v6305 = vsel %vm3587, %v5589, 0
    %v6308 = vsel %vm3587, %v5590, 0
    %v6311 = vsel %vm3587, %v5591, 0
    %v6314 = vsel %vm3587, %v5592, 0
    %v6317 = vsel %vm3587, %v5593, 0
    %v6320 = vsel %vm3587, %v5594, 0
    %v6323 = vsel %vm3587, %v5595, 0
    %v6326 = vsel %vm3587, %v5596, 0
    %v6329 = vsel %vm3587, %v5597, 0
    %v6332 = vsel %vm3587, %v5598, 0
    %v6335 = vsel %vm3587, %v5599, 0
    %v6338 = vsel %vm3587, %v5600, 0
    %v6341 = vsel %vm3587, %v5601, 0
    %v6344 = vsel %vm3587, %v5602, 0
    %v6347 = vsel %vm3587, %v5603, 0
    %v6350 = vsel %vm3587, %v5604, 0
    %v6353 = vsel %vm3587, %v5605, 0
    %v6356 = vsel %vm3587, %v5606, 0
    %v6359 = vsel %vm3587, %v5607, 0
    %6361 = vmatprep.subr.mxu0 0.0
    %6362 = vmatpush1.msra.mxu0 %v5608
    %6363 = vmatprep.subr.mxu0 0.0
    %6364 = vmatpush1.msra.mxu0 %v5609
    %6365 = vmatprep.subr.mxu0 0.0
    %6366 = vmatpush1.msra.mxu0 %v5610
    %6367 = vmatprep.subr.mxu0 0.0
    %6368 = vmatpush1.msra.mxu0 %v5611
    %6369 = vmatprep.subr.mxu0 0.0
    %6370 = vmatpush1.msra.mxu0 %v5612
    %6371 = vmatprep.subr.mxu0 0.0
    %6372 = vmatpush1.msra.mxu0 %v5613
    %6373 = vmatprep.subr.mxu0 0.0
    %6374 = vmatpush1.msra.mxu0 %v5614
    %6375 = vmatprep.subr.mxu0 0.0
    %6376 = vmatpush1.msra.mxu0 %v5615
    %6377 = vmatprep.subr.mxu0 0.0
    %6378 = vmatpush1.msra.mxu0 0.0
    %6379 = vmatprep.subr.mxu0 0.0
    %6380 = vmatpush1.msra.mxu0 0.0
    %6381 = vmatprep.subr.mxu0 0.0
    %6382 = vmatpush1.msra.mxu0 0.0
    %6383 = vmatprep.subr.mxu0 0.0
    %6384 = vmatpush1.msra.mxu0 0.0
    %6385 = vmatprep.subr.mxu0 0.0
    %6386 = vmatpush1.msra.mxu0 0.0
    %6387 = vmatprep.subr.mxu0 0.0
    %6388 = vmatpush1.msra.mxu0 0.0
    %6389 = vmatprep.subr.mxu0 0.0
    %6390 = vmatpush1.msra.mxu0 0.0
    %6391 = vmatprep.subr.mxu0 0.0
    %6392 = vmatpush1.msra.mxu0 0.0
    %6393 = vmatprep.subr.mxu0 0.0
    %6394 = vmatpush1.msra.mxu0 0.0
    %6395 = vmatprep.subr.mxu0 0.0
    %6396 = vmatpush1.msra.mxu0 0.0
    %6397 = vmatprep.subr.mxu0 0.0
    %6398 = vmatpush1.msra.mxu0 0.0
    %6399 = vmatprep.subr.mxu0 0.0
    %6400 = vmatpush1.msra.mxu0 0.0
    %6401 = vmatprep.subr.mxu0 0.0
    %6402 = vmatpush1.msra.mxu0 0.0
    %6403 = vmatprep.subr.mxu0 0.0
    %6404 = vmatpush1.msra.mxu0 0.0
    %6405 = vmatprep.subr.mxu0 0.0
    %6406 = vmatpush1.msra.mxu0 0.0
    %6407 = vmatprep.subr.mxu0 0.0
    %6408 = vmatpush1.msra.mxu0 0.0
    %6409 = vmatprep.subr.mxu0 0.0
    %6410 = vmatpush1.msra.mxu0 0.0
    %6411 = vmatprep.subr.mxu0 0.0
    %6412 = vmatpush1.msra.mxu0 0.0
    %6413 = vmatprep.subr.mxu0 0.0
    %6414 = vmatpush1.msra.mxu0 0.0
    %6415 = vmatprep.subr.mxu0 0.0
    %6416 = vmatpush1.msra.mxu0 0.0
    %6417 = vmatprep.subr.mxu0 0.0
    %6418 = vmatpush1.msra.mxu0 0.0
    %6419 = vmatprep.subr.mxu0 0.0
    %6420 = vmatpush1.msra.mxu0 0.0
    %6421 = vmatprep.subr.mxu0 0.0
    %6422 = vmatpush1.msra.mxu0 0.0
    %6423 = vmatprep.subr.mxu0 0.0
    %6424 = vmatpush1.msra.mxu0 0.0
    %6425 = vmatprep.mubr.f32.mxu0 0.0
    %6426 = vmatmul.mubr.f32.gmra.mrb[0].mxu0 %v6194
    %v6427 = vpop.f32.mrb[0].mxu0
    %v6428 = vadd.f32 %v5915, %v6427
    %v6429 = vpop.f32.mrb[0].mxu0
    %6430 = vmatprep.mubr.f32.mxu0 0.0
    %6431 = vmatmul.mubr.f32.gmra.mrb[0].mxu0 %v6197
    %v6432 = vpop.f32.mrb[0].mxu0
    %v6433 = vadd.f32 %v5920, %v6432
    %v6434 = vpop.f32.mrb[0].mxu0
    %6435 = vmatprep.mubr.f32.mxu0 0.0
    %6436 = vmatmul.mubr.f32.gmra.mrb[0].mxu0 %v6200
    %v6437 = vpop.f32.mrb[0].mxu0
    %v6438 = vadd.f32 %v5925, %v6437
    %v6439 = vpop.f32.mrb[0].mxu0
    %6440 = vmatprep.mubr.f32.mxu0 0.0
    %6441 = vmatmul.mubr.f32.gmra.mrb[0].mxu0 %v6203
    %v6442 = vpop.f32.mrb[0].mxu0
    %v6443 = vadd.f32 %v5930, %v6442
    %v6444 = vpop.f32.mrb[0].mxu0
    %6445 = vmatprep.mubr.f32.mxu0 0.0
    %6446 = vmatmul.mubr.f32.gmra.mrb[0].mxu0 %v6206
    %v6447 = vpop.f32.mrb[0].mxu0
    %v6448 = vadd.f32 %v5935, %v6447
    %v6449 = vpop.f32.mrb[0].mxu0
    %6450 = vmatprep.mubr.f32.mxu0 0.0
    %6451 = vmatmul.mubr.f32.gmra.mrb[0].mxu0 %v6209
    %v6452 = vpop.f32.mrb[0].mxu0
    %v6453 = vadd.f32 %v5940, %v6452
    %v6454 = vpop.f32.mrb[0].mxu0
    %6455 = vmatprep.mubr.f32.mxu0 0.0
    %6456 = vmatmul.mubr.f32.gmra.mrb[0].mxu0 %v6212
    %v6457 = vpop.f32.mrb[0].mxu0
    %v6458 = vadd.f32 %v5945, %v6457
    %v6459 = vpop.f32.mrb[0].mxu0
    %6460 = vmatprep.mubr.f32.mxu0 0.0
    %6461 = vmatmul.mubr.f32.gmra.mrb[0].mxu0 %v6215
    %v6462 = vpop.f32.mrb[0].mxu0
    %v6463 = vadd.f32 %v5950, %v6462
    %v6464 = vpop.f32.mrb[0].mxu0
    %6465 = vmatprep.mubr.f32.mxu0 0.0
    %6466 = vmatmul.mubr.f32.gmra.mrb[0].mxu0 %v6218
    %v6467 = vpop.f32.mrb[0].mxu0
    %v6468 = vadd.f32 %v5955, %v6467
    %v6469 = vpop.f32.mrb[0].mxu0
    %6470 = vmatprep.mubr.f32.mxu0 0.0
    %6471 = vmatmul.mubr.f32.gmra.mrb[0].mxu0 %v6221
    %v6472 = vpop.f32.mrb[0].mxu0
    %v6473 = vadd.f32 %v5960, %v6472
    %v6474 = vpop.f32.mrb[0].mxu0
    %6475 = vmatprep.mubr.f32.mxu0 0.0
    %6476 = vmatmul.mubr.f32.gmra.mrb[0].mxu0 %v6224
    %v6477 = vpop.f32.mrb[0].mxu0
    %v6478 = vadd.f32 %v5965, %v6477
    %v6479 = vpop.f32.mrb[0].mxu0
    %6480 = vmatprep.mubr.f32.mxu0 0.0
    %6481 = vmatmul.mubr.f32.gmra.mrb[0].mxu0 %v6227
    %v6482 = vpop.f32.mrb[0].mxu0
    %v6483 = vadd.f32 %v5970, %v6482
    %v6484 = vpop.f32.mrb[0].mxu0
    %6485 = vmatprep.mubr.f32.mxu0 0.0
    %6486 = vmatmul.mubr.f32.gmra.mrb[0].mxu0 %v6230
    %v6487 = vpop.f32.mrb[0].mxu0
    %v6488 = vadd.f32 %v5975, %v6487
    %v6489 = vpop.f32.mrb[0].mxu0
    %6490 = vmatprep.mubr.f32.mxu0 0.0
    %6491 = vmatmul.mubr.f32.gmra.mrb[0].mxu0 %v6233
    %v6492 = vpop.f32.mrb[0].mxu0
    %v6493 = vadd.f32 %v5980, %v6492
    %v6494 = vpop.f32.mrb[0].mxu0
    %6495 = vmatprep.mubr.f32.mxu0 0.0
    %6496 = vmatmul.mubr.f32.gmra.mrb[0].mxu0 %v6236
    %v6497 = vpop.f32.mrb[0].mxu0
    %v6498 = vadd.f32 %v5985, %v6497
    %v6499 = vpop.f32.mrb[0].mxu0
    %6500 = vmatprep.mubr.f32.mxu0 0.0
    %6501 = vmatmul.mubr.f32.gmra.mrb[0].mxu0 %v6239
    %v6502 = vpop.f32.mrb[0].mxu0
    %v6503 = vadd.f32 %v5990, %v6502
    %v6504 = vpop.f32.mrb[0].mxu0
    %6505 = vmatprep.mubr.f32.mxu0 0.0
    %6506 = vmatmul.mubr.f32.gmra.mrb[0].mxu0 %v6242
    %v6507 = vpop.f32.mrb[0].mxu0
    %v6508 = vadd.f32 %v5995, %v6507
    %v6509 = vpop.f32.mrb[0].mxu0
    %6510 = vmatprep.mubr.f32.mxu0 0.0
    %6511 = vmatmul.mubr.f32.gmra.mrb[0].mxu0 %v6245
    %v6512 = vpop.f32.mrb[0].mxu0
    %v6513 = vadd.f32 %v6000, %v6512
    %v6514 = vpop.f32.mrb[0].mxu0
    %6515 = vmatprep.mubr.f32.mxu0 0.0
    %6516 = vmatmul.mubr.f32.gmra.mrb[0].mxu0 %v6248
    %v6517 = vpop.f32.mrb[0].mxu0
    %v6518 = vadd.f32 %v6005, %v6517
    %v6519 = vpop.f32.mrb[0].mxu0
    %6520 = vmatprep.mubr.f32.mxu0 0.0
    %6521 = vmatmul.mubr.f32.gmra.mrb[0].mxu0 %v6251
    %v6522 = vpop.f32.mrb[0].mxu0
    %v6523 = vadd.f32 %v6010, %v6522
    %v6524 = vpop.f32.mrb[0].mxu0
    %6525 = vmatprep.mubr.f32.mxu0 0.0
    %6526 = vmatmul.mubr.f32.gmra.mrb[0].mxu0 %v6254
    %v6527 = vpop.f32.mrb[0].mxu0
    %v6528 = vadd.f32 %v6015, %v6527
    %v6529 = vpop.f32.mrb[0].mxu0
    %6530 = vmatprep.mubr.f32.mxu0 0.0
    %6531 = vmatmul.mubr.f32.gmra.mrb[0].mxu0 %v6257
    %v6532 = vpop.f32.mrb[0].mxu0
    %v6533 = vadd.f32 %v6020, %v6532
    %v6534 = vpop.f32.mrb[0].mxu0
    %6535 = vmatprep.mubr.f32.mxu0 0.0
    %6536 = vmatmul.mubr.f32.gmra.mrb[0].mxu0 %v6260
    %v6537 = vpop.f32.mrb[0].mxu0
    %v6538 = vadd.f32 %v6025, %v6537
    %v6539 = vpop.f32.mrb[0].mxu0
    %6540 = vmatprep.mubr.f32.mxu0 0.0
    %6541 = vmatmul.mubr.f32.gmra.mrb[0].mxu0 %v6263
    %v6542 = vpop.f32.mrb[0].mxu0
    %v6543 = vadd.f32 %v6030, %v6542
    %v6544 = vpop.f32.mrb[0].mxu0
    %6545 = vmatprep.mubr.f32.mxu0 0.0
    %6546 = vmatmul.mubr.f32.gmra.mrb[0].mxu0 %v6266
    %v6547 = vpop.f32.mrb[0].mxu0
    %v6548 = vadd.f32 %v6035, %v6547
    %v6549 = vpop.f32.mrb[0].mxu0
    %6550 = vmatprep.mubr.f32.mxu0 0.0
    %6551 = vmatmul.mubr.f32.gmra.mrb[0].mxu0 %v6269
    %v6552 = vpop.f32.mrb[0].mxu0
    %v6553 = vadd.f32 %v6040, %v6552
    %v6554 = vpop.f32.mrb[0].mxu0
    %6555 = vmatprep.mubr.f32.mxu0 0.0
    %6556 = vmatmul.mubr.f32.gmra.mrb[0].mxu0 %v6272
    %v6557 = vpop.f32.mrb[0].mxu0
    %v6558 = vadd.f32 %v6045, %v6557
    %v6559 = vpop.f32.mrb[0].mxu0
    %6560 = vmatprep.mubr.f32.mxu0 0.0
    %6561 = vmatmul.mubr.f32.gmra.mrb[0].mxu0 %v6275
    %v6562 = vpop.f32.mrb[0].mxu0
    %v6563 = vadd.f32 %v6050, %v6562
    %v6564 = vpop.f32.mrb[0].mxu0
    %6565 = vmatprep.mubr.f32.mxu0 0.0
    %6566 = vmatmul.mubr.f32.gmra.mrb[0].mxu0 %v6278
    %v6567 = vpop.f32.mrb[0].mxu0
    %v6568 = vadd.f32 %v6055, %v6567
    %v6569 = vpop.f32.mrb[0].mxu0
    %6570 = vmatprep.mubr.f32.mxu0 0.0
    %6571 = vmatmul.mubr.f32.gmra.mrb[0].mxu0 %v6281
    %v6572 = vpop.f32.mrb[0].mxu0
    %v6573 = vadd.f32 %v6060, %v6572
    %v6574 = vpop.f32.mrb[0].mxu0
    %6575 = vmatprep.mubr.f32.mxu0 0.0
    %6576 = vmatmul.mubr.f32.gmra.mrb[0].mxu0 %v6284
    %v6577 = vpop.f32.mrb[0].mxu0
    %v6578 = vadd.f32 %v6065, %v6577
    %v6579 = vpop.f32.mrb[0].mxu0
    %6580 = vmatprep.mubr.f32.mxu0 0.0
    %6581 = vmatmul.mubr.f32.gmra.mrb[0].mxu0 %v6287
    %v6582 = vpop.f32.mrb[0].mxu0
    %v6583 = vadd.f32 %v6070, %v6582
    %v6584 = vpop.f32.mrb[0].mxu0
    %6585 = vmatprep.mubr.f32.mxu0 0.0
    %6586 = vmatmul.mubr.f32.gmra.mrb[0].mxu0 %v6290
    %v6587 = vpop.f32.mrb[0].mxu0
    %v6588 = vadd.f32 %v6075, %v6587
    %v6589 = vpop.f32.mrb[0].mxu0
    %6590 = vmatprep.mubr.f32.mxu0 0.0
    %6591 = vmatmul.mubr.f32.gmra.mrb[0].mxu0 %v6293
    %v6592 = vpop.f32.mrb[0].mxu0
    %v6593 = vadd.f32 %v6080, %v6592
    %v6594 = vpop.f32.mrb[0].mxu0
    %6595 = vmatprep.mubr.f32.mxu0 0.0
    %6596 = vmatmul.mubr.f32.gmra.mrb[0].mxu0 %v6296
    %v6597 = vpop.f32.mrb[0].mxu0
    %v6598 = vadd.f32 %v6085, %v6597
    %v6599 = vpop.f32.mrb[0].mxu0
    %6600 = vmatprep.mubr.f32.mxu0 0.0
    %6601 = vmatmul.mubr.f32.gmra.mrb[0].mxu0 %v6299
    %v6602 = vpop.f32.mrb[0].mxu0
    %v6603 = vadd.f32 %v6090, %v6602
    %v6604 = vpop.f32.mrb[0].mxu0
    %6605 = vmatprep.mubr.f32.mxu0 0.0
    %6606 = vmatmul.mubr.f32.gmra.mrb[0].mxu0 %v6302
    %v6607 = vpop.f32.mrb[0].mxu0
    %v6608 = vadd.f32 %v6095, %v6607
    %v6609 = vpop.f32.mrb[0].mxu0
    %6610 = vmatprep.mubr.f32.mxu0 0.0
    %6611 = vmatmul.mubr.f32.gmra.mrb[0].mxu0 %v6305
    %v6612 = vpop.f32.mrb[0].mxu0
    %v6613 = vadd.f32 %v6100, %v6612
    %v6614 = vpop.f32.mrb[0].mxu0
    %6615 = vmatprep.mubr.f32.mxu0 0.0
    %6616 = vmatmul.mubr.f32.gmra.mrb[0].mxu0 %v6308
    %v6617 = vpop.f32.mrb[0].mxu0
    %v6618 = vadd.f32 %v6105, %v6617
    %v6619 = vpop.f32.mrb[0].mxu0
    %6620 = vmatprep.mubr.f32.mxu0 0.0
    %6621 = vmatmul.mubr.f32.gmra.mrb[0].mxu0 %v6311
    %v6622 = vpop.f32.mrb[0].mxu0
    %v6623 = vadd.f32 %v6110, %v6622
    %v6624 = vpop.f32.mrb[0].mxu0
    %6625 = vmatprep.mubr.f32.mxu0 0.0
    %6626 = vmatmul.mubr.f32.gmra.mrb[0].mxu0 %v6314
    %v6627 = vpop.f32.mrb[0].mxu0
    %v6628 = vadd.f32 %v6115, %v6627
    %v6629 = vpop.f32.mrb[0].mxu0
    %6630 = vmatprep.mubr.f32.mxu0 0.0
    %6631 = vmatmul.mubr.f32.gmra.mrb[0].mxu0 %v6317
    %v6632 = vpop.f32.mrb[0].mxu0
    %v6633 = vadd.f32 %v6120, %v6632
    %v6634 = vpop.f32.mrb[0].mxu0
    %6635 = vmatprep.mubr.f32.mxu0 0.0
    %6636 = vmatmul.mubr.f32.gmra.mrb[0].mxu0 %v6320
    %v6637 = vpop.f32.mrb[0].mxu0
    %v6638 = vadd.f32 %v6125, %v6637
    %v6639 = vpop.f32.mrb[0].mxu0
    %6640 = vmatprep.mubr.f32.mxu0 0.0
    %6641 = vmatmul.mubr.f32.gmra.mrb[0].mxu0 %v6323
    %v6642 = vpop.f32.mrb[0].mxu0
    %v6643 = vadd.f32 %v6130, %v6642
    %v6644 = vpop.f32.mrb[0].mxu0
    %6645 = vmatprep.mubr.f32.mxu0 0.0
    %6646 = vmatmul.mubr.f32.gmra.mrb[0].mxu0 %v6326
    %v6647 = vpop.f32.mrb[0].mxu0
    %v6648 = vadd.f32 %v6135, %v6647
    %v6649 = vpop.f32.mrb[0].mxu0
    %6650 = vmatprep.mubr.f32.mxu0 0.0
    %6651 = vmatmul.mubr.f32.gmra.mrb[0].mxu0 %v6329
    %v6652 = vpop.f32.mrb[0].mxu0
    %v6653 = vadd.f32 %v6140, %v6652
    %v6654 = vpop.f32.mrb[0].mxu0
    %6655 = vmatprep.mubr.f32.mxu0 0.0
    %6656 = vmatmul.mubr.f32.gmra.mrb[0].mxu0 %v6332
    %v6657 = vpop.f32.mrb[0].mxu0
    %v6658 = vadd.f32 %v6145, %v6657
    %v6659 = vpop.f32.mrb[0].mxu0
    %6660 = vmatprep.mubr.f32.mxu0 0.0
    %6661 = vmatmul.mubr.f32.gmra.mrb[0].mxu0 %v6335
    %v6662 = vpop.f32.mrb[0].mxu0
    %v6663 = vadd.f32 %v6150, %v6662
    %v6664 = vpop.f32.mrb[0].mxu0
    %6665 = vmatprep.mubr.f32.mxu0 0.0
    %6666 = vmatmul.mubr.f32.gmra.mrb[0].mxu0 %v6338
    %v6667 = vpop.f32.mrb[0].mxu0
    %v6668 = vadd.f32 %v6155, %v6667
    %v6669 = vpop.f32.mrb[0].mxu0
    %6670 = vmatprep.mubr.f32.mxu0 0.0
    %6671 = vmatmul.mubr.f32.gmra.mrb[0].mxu0 %v6341
    %v6672 = vpop.f32.mrb[0].mxu0
    %v6673 = vadd.f32 %v6160, %v6672
    %v6674 = vpop.f32.mrb[0].mxu0
    %6675 = vmatprep.mubr.f32.mxu0 0.0
    %6676 = vmatmul.mubr.f32.gmra.mrb[0].mxu0 %v6344
    %v6677 = vpop.f32.mrb[0].mxu0
    %v6678 = vadd.f32 %v6165, %v6677
    %v6679 = vpop.f32.mrb[0].mxu0
    %6680 = vmatprep.mubr.f32.mxu0 0.0
    %6681 = vmatmul.mubr.f32.gmra.mrb[0].mxu0 %v6347
    %v6682 = vpop.f32.mrb[0].mxu0
    %v6683 = vadd.f32 %v6170, %v6682
    %v6684 = vpop.f32.mrb[0].mxu0
    %6685 = vmatprep.mubr.f32.mxu0 0.0
    %6686 = vmatmul.mubr.f32.gmra.mrb[0].mxu0 %v6350
    %v6687 = vpop.f32.mrb[0].mxu0
    %v6688 = vadd.f32 %v6175, %v6687
    %v6689 = vpop.f32.mrb[0].mxu0
    %6690 = vmatprep.mubr.f32.mxu0 0.0
    %6691 = vmatmul.mubr.f32.gmra.mrb[0].mxu0 %v6353
    %v6692 = vpop.f32.mrb[0].mxu0
    %v6693 = vadd.f32 %v6180, %v6692
    %v6694 = vpop.f32.mrb[0].mxu0
    %6695 = vmatprep.mubr.f32.mxu0 0.0
    %6696 = vmatmul.mubr.f32.gmra.mrb[0].mxu0 %v6356
    %v6697 = vpop.f32.mrb[0].mxu0
    %v6698 = vadd.f32 %v6185, %v6697
    %v6699 = vpop.f32.mrb[0].mxu0
    %6700 = vmatprep.mubr.f32.mxu0 0.0
    %6701 = vmatmul.mubr.f32.gmra.mrb[0].mxu0 %v6359
    %v6702 = vpop.f32.mrb[0].mxu0
    %v6703 = vadd.f32 %v6190, %v6702
    %v6704 = vpop.f32.mrb[0].mxu0
    %6705 = vdwg.mxu0
    %v6706 = vld [vmem:[#allocation3 + $0x2] sm:$0xff]
    %v6707 = vld [vmem:[#allocation3 + $0xa] sm:$0xff]
    %v6708 = vld [vmem:[#allocation3 + $0x12] sm:$0xff]
    %v6709 = vld [vmem:[#allocation3 + $0x1a] sm:$0xff]
    %v6710 = vld [vmem:[#allocation3 + $0x22] sm:$0xff]
    %v6711 = vld [vmem:[#allocation3 + $0x2a] sm:$0xff]
    %v6712 = vld [vmem:[#allocation3 + $0x32] sm:$0xff]
    %v6713 = vld [vmem:[#allocation3 + $0x3a] sm:$0xff]
    %v6714 = vld [vmem:[#allocation3 + $0x42] sm:$0xff]
    %v6715 = vld [vmem:[#allocation3 + $0x4a] sm:$0xff]
    %v6716 = vld [vmem:[#allocation3 + $0x52] sm:$0xff]
    %v6717 = vld [vmem:[#allocation3 + $0x5a] sm:$0xff]
    %v6718 = vld [vmem:[#allocation3 + $0x62] sm:$0xff]
    %v6719 = vld [vmem:[#allocation3 + $0x6a] sm:$0xff]
    %v6720 = vld [vmem:[#allocation3 + $0x72] sm:$0xff]
    %v6721 = vld [vmem:[#allocation3 + $0x7a] sm:$0xff]
    %v6722 = vld [vmem:[#allocation3 + $0x82] sm:$0xff]
    %v6723 = vld [vmem:[#allocation3 + $0x8a] sm:$0xff]
    %v6724 = vld [vmem:[#allocation3 + $0x92] sm:$0xff]
    %v6725 = vld [vmem:[#allocation3 + $0x9a] sm:$0xff]
    %v6726 = vld [vmem:[#allocation3 + $0xa2] sm:$0xff]
    %v6727 = vld [vmem:[#allocation3 + $0xaa] sm:$0xff]
    %v6728 = vld [vmem:[#allocation3 + $0xb2] sm:$0xff]
    %v6729 = vld [vmem:[#allocation3 + $0xba] sm:$0xff]
    %v6730 = vld [vmem:[#allocation3 + $0xc2] sm:$0xff]
    %v6731 = vld [vmem:[#allocation3 + $0xca] sm:$0xff]
    %v6732 = vld [vmem:[#allocation3 + $0xd2] sm:$0xff]
    %v6733 = vld [vmem:[#allocation3 + $0xda] sm:$0xff]
    %v6734 = vld [vmem:[#allocation3 + $0xe2] sm:$0xff]
    %v6735 = vld [vmem:[#allocation3 + $0xea] sm:$0xff]
    %v6736 = vld [vmem:[#allocation3 + $0xf2] sm:$0xff]
    %v6737 = vld [vmem:[#allocation3 + $0xfa] sm:$0xff]
    %v6738 = vld [vmem:[#allocation3 + $0x102] sm:$0xff]
    %v6739 = vld [vmem:[#allocation3 + $0x10a] sm:$0xff]
    %v6740 = vld [vmem:[#allocation3 + $0x112] sm:$0xff]
    %v6741 = vld [vmem:[#allocation3 + $0x11a] sm:$0xff]
    %v6742 = vld [vmem:[#allocation3 + $0x122] sm:$0xff]
    %v6743 = vld [vmem:[#allocation3 + $0x12a] sm:$0xff]
    %v6744 = vld [vmem:[#allocation3 + $0x132] sm:$0xff]
    %v6745 = vld [vmem:[#allocation3 + $0x13a] sm:$0xff]
    %v6746 = vld [vmem:[#allocation3 + $0x142] sm:$0xff]
    %v6747 = vld [vmem:[#allocation3 + $0x14a] sm:$0xff]
    %v6748 = vld [vmem:[#allocation3 + $0x152] sm:$0xff]
    %v6749 = vld [vmem:[#allocation3 + $0x15a] sm:$0xff]
    %v6750 = vld [vmem:[#allocation3 + $0x162] sm:$0xff]
    %v6751 = vld [vmem:[#allocation3 + $0x16a] sm:$0xff]
    %v6752 = vld [vmem:[#allocation3 + $0x172] sm:$0xff]
    %v6753 = vld [vmem:[#allocation3 + $0x17a] sm:$0xff]
    %v6754 = vld [vmem:[#allocation3 + $0x182] sm:$0xff]
    %v6755 = vld [vmem:[#allocation3 + $0x18a] sm:$0xff]
    %v6756 = vld [vmem:[#allocation3 + $0x192] sm:$0xff]
    %v6757 = vld [vmem:[#allocation3 + $0x19a] sm:$0xff]
    %v6758 = vld [vmem:[#allocation3 + $0x1a2] sm:$0xff]
    %v6759 = vld [vmem:[#allocation3 + $0x1aa] sm:$0xff]
    %v6760 = vld [vmem:[#allocation3 + $0x1b2] sm:$0xff]
    %v6761 = vld [vmem:[#allocation3 + $0x1ba] sm:$0xff]
    %v6762 = vld [vmem:[%s3 + $0x80] sm:$0xff]
    %v6763 = vld [vmem:[%s3 + $0x88] sm:$0xff]
    %v6764 = vld [vmem:[%s3 + $0x90] sm:$0xff]
    %v6765 = vld [vmem:[%s3 + $0x98] sm:$0xff]
    %v6766 = vld [vmem:[%s3 + $0xa0] sm:$0xff]
    %v6767 = vld [vmem:[%s3 + $0xa8] sm:$0xff]
    %v6768 = vld [vmem:[%s3 + $0xb0] sm:$0xff]
    %v6769 = vld [vmem:[%s3 + $0xb8] sm:$0xff]
    %v6771 = vsel %vm3587, %v6706, 0
    %v6774 = vsel %vm3587, %v6707, 0
    %v6777 = vsel %vm3587, %v6708, 0
    %v6780 = vsel %vm3587, %v6709, 0
    %v6783 = vsel %vm3587, %v6710, 0
    %v6786 = vsel %vm3587, %v6711, 0
    %v6789 = vsel %vm3587, %v6712, 0
    %v6792 = vsel %vm3587, %v6713, 0
    %v6795 = vsel %vm3587, %v6714, 0
    %v6798 = vsel %vm3587, %v6715, 0
    %v6801 = vsel %vm3587, %v6716, 0
    %v6804 = vsel %vm3587, %v6717, 0
    %v6807 = vsel %vm3587, %v6718, 0
    %v6810 = vsel %vm3587, %v6719, 0
    %v6813 = vsel %vm3587, %v6720, 0
    %v6816 = vsel %vm3587, %v6721, 0
    %v6819 = vsel %vm3587, %v6722, 0
    %v6822 = vsel %vm3587, %v6723, 0
    %v6825 = vsel %vm3587, %v6724, 0
    %v6828 = vsel %vm3587, %v6725, 0
    %v6831 = vsel %vm3587, %v6726, 0
    %v6834 = vsel %vm3587, %v6727, 0
    %v6837 = vsel %vm3587, %v6728, 0
    %v6840 = vsel %vm3587, %v6729, 0
    %v6843 = vsel %vm3587, %v6730, 0
    %v6846 = vsel %vm3587, %v6731, 0
    %v6849 = vsel %vm3587, %v6732, 0
    %v6852 = vsel %vm3587, %v6733, 0
    %v6855 = vsel %vm3587, %v6734, 0
    %v6858 = vsel %vm3587, %v6735, 0
    %v6861 = vsel %vm3587, %v6736, 0
    %v6864 = vsel %vm3587, %v6737, 0
    %v6867 = vsel %vm3587, %v6738, 0
    %v6870 = vsel %vm3587, %v6739, 0
    %v6873 = vsel %vm3587, %v6740, 0
    %v6876 = vsel %vm3587, %v6741, 0
    %v6879 = vsel %vm3587, %v6742, 0
    %v6882 = vsel %vm3587, %v6743, 0
    %v6885 = vsel %vm3587, %v6744, 0
    %v6888 = vsel %vm3587, %v6745, 0
    %v6891 = vsel %vm3587, %v6746, 0
    %v6894 = vsel %vm3587, %v6747, 0
    %v6897 = vsel %vm3587, %v6748, 0
    %v6900 = vsel %vm3587, %v6749, 0
    %v6903 = vsel %vm3587, %v6750, 0
    %v6906 = vsel %vm3587, %v6751, 0
    %v6909 = vsel %vm3587, %v6752, 0
    %v6912 = vsel %vm3587, %v6753, 0
    %v6915 = vsel %vm3587, %v6754, 0
    %v6918 = vsel %vm3587, %v6755, 0
    %v6921 = vsel %vm3587, %v6756, 0
    %v6924 = vsel %vm3587, %v6757, 0
    %v6927 = vsel %vm3587, %v6758, 0
    %v6930 = vsel %vm3587, %v6759, 0
    %v6933 = vsel %vm3587, %v6760, 0
    %v6936 = vsel %vm3587, %v6761, 0
    %6938 = vmatprep.subr.mxu0 0.0
    %6939 = vmatpush1.msra.mxu0 %v6762
    %6940 = vmatprep.subr.mxu0 0.0
    %6941 = vmatpush1.msra.mxu0 %v6763
    %6942 = vmatprep.subr.mxu0 0.0
    %6943 = vmatpush1.msra.mxu0 %v6764
    %6944 = vmatprep.subr.mxu0 0.0
    %6945 = vmatpush1.msra.mxu0 %v6765
    %6946 = vmatprep.subr.mxu0 0.0
    %6947 = vmatpush1.msra.mxu0 %v6766
    %6948 = vmatprep.subr.mxu0 0.0
    %6949 = vmatpush1.msra.mxu0 %v6767
    %6950 = vmatprep.subr.mxu0 0.0
    %6951 = vmatpush1.msra.mxu0 %v6768
    %6952 = vmatprep.subr.mxu0 0.0
    %6953 = vmatpush1.msra.mxu0 %v6769
    %6954 = vmatprep.subr.mxu0 0.0
    %6955 = vmatpush1.msra.mxu0 0.0
    %6956 = vmatprep.subr.mxu0 0.0
    %6957 = vmatpush1.msra.mxu0 0.0
    %6958 = vmatprep.subr.mxu0 0.0
    %6959 = vmatpush1.msra.mxu0 0.0
    %6960 = vmatprep.subr.mxu0 0.0
    %6961 = vmatpush1.msra.mxu0 0.0
    %6962 = vmatprep.subr.mxu0 0.0
    %6963 = vmatpush1.msra.mxu0 0.0
    %6964 = vmatprep.subr.mxu0 0.0
    %6965 = vmatpush1.msra.mxu0 0.0
    %6966 = vmatprep.subr.mxu0 0.0
    %6967 = vmatpush1.msra.mxu0 0.0
    %6968 = vmatprep.subr.mxu0 0.0
    %6969 = vmatpush1.msra.mxu0 0.0
    %6970 = vmatprep.subr.mxu0 0.0
    %6971 = vmatpush1.msra.mxu0 0.0
    %6972 = vmatprep.subr.mxu0 0.0
    %6973 = vmatpush1.msra.mxu0 0.0
    %6974 = vmatprep.subr.mxu0 0.0
    %6975 = vmatpush1.msra.mxu0 0.0
    %6976 = vmatprep.subr.mxu0 0.0
    %6977 = vmatpush1.msra.mxu0 0.0
    %6978 = vmatprep.subr.mxu0 0.0
    %6979 = vmatpush1.msra.mxu0 0.0
    %6980 = vmatprep.subr.mxu0 0.0
    %6981 = vmatpush1.msra.mxu0 0.0
    %6982 = vmatprep.subr.mxu0 0.0
    %6983 = vmatpush1.msra.mxu0 0.0
    %6984 = vmatprep.subr.mxu0 0.0
    %6985 = vmatpush1.msra.mxu0 0.0
    %6986 = vmatprep.subr.mxu0 0.0
    %6987 = vmatpush1.msra.mxu0 0.0
    %6988 = vmatprep.subr.mxu0 0.0
    %6989 = vmatpush1.msra.mxu0 0.0
    %6990 = vmatprep.subr.mxu0 0.0
    %6991 = vmatpush1.msra.mxu0 0.0
    %6992 = vmatprep.subr.mxu0 0.0
    %6993 = vmatpush1.msra.mxu0 0.0
    %6994 = vmatprep.subr.mxu0 0.0
    %6995 = vmatpush1.msra.mxu0 0.0
    %6996 = vmatprep.subr.mxu0 0.0
    %6997 = vmatpush1.msra.mxu0 0.0
    %6998 = vmatprep.subr.mxu0 0.0
    %6999 = vmatpush1.msra.mxu0 0.0
    %7000 = vmatprep.subr.mxu0 0.0
    %7001 = vmatpush1.msra.mxu0 0.0
    %7002 = vmatprep.mubr.f32.mxu0 0.0
    %7003 = vmatmul.mubr.f32.gmra.mrb[0].mxu0 %v6771
    %v7004 = vpop.f32.mrb[0].mxu0
    %v7005 = vadd.f32 0.0, %v7004
    %v7006 = vpop.f32.mrb[0].mxu0
    %7007 = vmatprep.mubr.f32.mxu0 0.0
    %7008 = vmatmul.mubr.f32.gmra.mrb[0].mxu0 %v6774
    %v7009 = vpop.f32.mrb[0].mxu0
    %v7010 = vadd.f32 0.0, %v7009
    %v7011 = vpop.f32.mrb[0].mxu0
    %7012 = vmatprep.mubr.f32.mxu0 0.0
    %7013 = vmatmul.mubr.f32.gmra.mrb[0].mxu0 %v6777
    %v7014 = vpop.f32.mrb[0].mxu0
    %v7015 = vadd.f32 0.0, %v7014
    %v7016 = vpop.f32.mrb[0].mxu0
    %7017 = vmatprep.mubr.f32.mxu0 0.0
    %7018 = vmatmul.mubr.f32.gmra.mrb[0].mxu0 %v6780
    %v7019 = vpop.f32.mrb[0].mxu0
    %v7020 = vadd.f32 0.0, %v7019
    %v7021 = vpop.f32.mrb[0].mxu0
    %7022 = vmatprep.mubr.f32.mxu0 0.0
    %7023 = vmatmul.mubr.f32.gmra.mrb[0].mxu0 %v6783
    %v7024 = vpop.f32.mrb[0].mxu0
    %v7025 = vadd.f32 0.0, %v7024
    %v7026 = vpop.f32.mrb[0].mxu0
    %7027 = vmatprep.mubr.f32.mxu0 0.0
    %7028 = vmatmul.mubr.f32.gmra.mrb[0].mxu0 %v6786
    %v7029 = vpop.f32.mrb[0].mxu0
    %v7030 = vadd.f32 0.0, %v7029
    %v7031 = vpop.f32.mrb[0].mxu0
    %7032 = vmatprep.mubr.f32.mxu0 0.0
    %7033 = vmatmul.mubr.f32.gmra.mrb[0].mxu0 %v6789
    %v7034 = vpop.f32.mrb[0].mxu0
    %v7035 = vadd.f32 0.0, %v7034
    %v7036 = vpop.f32.mrb[0].mxu0
    %7037 = vmatprep.mubr.f32.mxu0 0.0
    %7038 = vmatmul.mubr.f32.gmra.mrb[0].mxu0 %v6792
    %v7039 = vpop.f32.mrb[0].mxu0
    %v7040 = vadd.f32 0.0, %v7039
    %v7041 = vpop.f32.mrb[0].mxu0
    %7042 = vmatprep.mubr.f32.mxu0 0.0
    %7043 = vmatmul.mubr.f32.gmra.mrb[0].mxu0 %v6795
    %v7044 = vpop.f32.mrb[0].mxu0
    %v7045 = vadd.f32 0.0, %v7044
    %v7046 = vpop.f32.mrb[0].mxu0
    %7047 = vmatprep.mubr.f32.mxu0 0.0
    %7048 = vmatmul.mubr.f32.gmra.mrb[0].mxu0 %v6798
    %v7049 = vpop.f32.mrb[0].mxu0
    %v7050 = vadd.f32 0.0, %v7049
    %v7051 = vpop.f32.mrb[0].mxu0
    %7052 = vmatprep.mubr.f32.mxu0 0.0
    %7053 = vmatmul.mubr.f32.gmra.mrb[0].mxu0 %v6801
    %v7054 = vpop.f32.mrb[0].mxu0
    %v7055 = vadd.f32 0.0, %v7054
    %v7056 = vpop.f32.mrb[0].mxu0
    %7057 = vmatprep.mubr.f32.mxu0 0.0
    %7058 = vmatmul.mubr.f32.gmra.mrb[0].mxu0 %v6804
    %v7059 = vpop.f32.mrb[0].mxu0
    %v7060 = vadd.f32 0.0, %v7059
    %v7061 = vpop.f32.mrb[0].mxu0
    %7062 = vmatprep.mubr.f32.mxu0 0.0
    %7063 = vmatmul.mubr.f32.gmra.mrb[0].mxu0 %v6807
    %v7064 = vpop.f32.mrb[0].mxu0
    %v7065 = vadd.f32 0.0, %v7064
    %v7066 = vpop.f32.mrb[0].mxu0
    %7067 = vmatprep.mubr.f32.mxu0 0.0
    %7068 = vmatmul.mubr.f32.gmra.mrb[0].mxu0 %v6810
    %v7069 = vpop.f32.mrb[0].mxu0
    %v7070 = vadd.f32 0.0, %v7069
    %v7071 = vpop.f32.mrb[0].mxu0
    %7072 = vmatprep.mubr.f32.mxu0 0.0
    %7073 = vmatmul.mubr.f32.gmra.mrb[0].mxu0 %v6813
    %v7074 = vpop.f32.mrb[0].mxu0
    %v7075 = vadd.f32 0.0, %v7074
    %v7076 = vpop.f32.mrb[0].mxu0
    %7077 = vmatprep.mubr.f32.mxu0 0.0
    %7078 = vmatmul.mubr.f32.gmra.mrb[0].mxu0 %v6816
    %v7079 = vpop.f32.mrb[0].mxu0
    %v7080 = vadd.f32 0.0, %v7079
    %v7081 = vpop.f32.mrb[0].mxu0
    %7082 = vmatprep.mubr.f32.mxu0 0.0
    %7083 = vmatmul.mubr.f32.gmra.mrb[0].mxu0 %v6819
    %v7084 = vpop.f32.mrb[0].mxu0
    %v7085 = vadd.f32 0.0, %v7084
    %v7086 = vpop.f32.mrb[0].mxu0
    %7087 = vmatprep.mubr.f32.mxu0 0.0
    %7088 = vmatmul.mubr.f32.gmra.mrb[0].mxu0 %v6822
    %v7089 = vpop.f32.mrb[0].mxu0
    %v7090 = vadd.f32 0.0, %v7089
    %v7091 = vpop.f32.mrb[0].mxu0
    %7092 = vmatprep.mubr.f32.mxu0 0.0
    %7093 = vmatmul.mubr.f32.gmra.mrb[0].mxu0 %v6825
    %v7094 = vpop.f32.mrb[0].mxu0
    %v7095 = vadd.f32 0.0, %v7094
    %v7096 = vpop.f32.mrb[0].mxu0
    %7097 = vmatprep.mubr.f32.mxu0 0.0
    %7098 = vmatmul.mubr.f32.gmra.mrb[0].mxu0 %v6828
    %v7099 = vpop.f32.mrb[0].mxu0
    %v7100 = vadd.f32 0.0, %v7099
    %v7101 = vpop.f32.mrb[0].mxu0
    %7102 = vmatprep.mubr.f32.mxu0 0.0
    %7103 = vmatmul.mubr.f32.gmra.mrb[0].mxu0 %v6831
    %v7104 = vpop.f32.mrb[0].mxu0
    %v7105 = vadd.f32 0.0, %v7104
    %v7106 = vpop.f32.mrb[0].mxu0
    %7107 = vmatprep.mubr.f32.mxu0 0.0
    %7108 = vmatmul.mubr.f32.gmra.mrb[0].mxu0 %v6834
    %v7109 = vpop.f32.mrb[0].mxu0
    %v7110 = vadd.f32 0.0, %v7109
    %v7111 = vpop.f32.mrb[0].mxu0
    %7112 = vmatprep.mubr.f32.mxu0 0.0
    %7113 = vmatmul.mubr.f32.gmra.mrb[0].mxu0 %v6837
    %v7114 = vpop.f32.mrb[0].mxu0
    %v7115 = vadd.f32 0.0, %v7114
    %v7116 = vpop.f32.mrb[0].mxu0
    %7117 = vmatprep.mubr.f32.mxu0 0.0
    %7118 = vmatmul.mubr.f32.gmra.mrb[0].mxu0 %v6840
    %v7119 = vpop.f32.mrb[0].mxu0
    %v7120 = vadd.f32 0.0, %v7119
    %v7121 = vpop.f32.mrb[0].mxu0
    %7122 = vmatprep.mubr.f32.mxu0 0.0
    %7123 = vmatmul.mubr.f32.gmra.mrb[0].mxu0 %v6843
    %v7124 = vpop.f32.mrb[0].mxu0
    %v7125 = vadd.f32 0.0, %v7124
    %v7126 = vpop.f32.mrb[0].mxu0
    %7127 = vmatprep.mubr.f32.mxu0 0.0
    %7128 = vmatmul.mubr.f32.gmra.mrb[0].mxu0 %v6846
    %v7129 = vpop.f32.mrb[0].mxu0
    %v7130 = vadd.f32 0.0, %v7129
    %v7131 = vpop.f32.mrb[0].mxu0
    %7132 = vmatprep.mubr.f32.mxu0 0.0
    %7133 = vmatmul.mubr.f32.gmra.mrb[0].mxu0 %v6849
    %v7134 = vpop.f32.mrb[0].mxu0
    %v7135 = vadd.f32 0.0, %v7134
    %v7136 = vpop.f32.mrb[0].mxu0
    %7137 = vmatprep.mubr.f32.mxu0 0.0
    %7138 = vmatmul.mubr.f32.gmra.mrb[0].mxu0 %v6852
    %v7139 = vpop.f32.mrb[0].mxu0
    %v7140 = vadd.f32 0.0, %v7139
    %v7141 = vpop.f32.mrb[0].mxu0
    %7142 = vmatprep.mubr.f32.mxu0 0.0
    %7143 = vmatmul.mubr.f32.gmra.mrb[0].mxu0 %v6855
    %v7144 = vpop.f32.mrb[0].mxu0
    %v7145 = vadd.f32 0.0, %v7144
    %v7146 = vpop.f32.mrb[0].mxu0
    %7147 = vmatprep.mubr.f32.mxu0 0.0
    %7148 = vmatmul.mubr.f32.gmra.mrb[0].mxu0 %v6858
    %v7149 = vpop.f32.mrb[0].mxu0
    %v7150 = vadd.f32 0.0, %v7149
    %v7151 = vpop.f32.mrb[0].mxu0
    %7152 = vmatprep.mubr.f32.mxu0 0.0
    %7153 = vmatmul.mubr.f32.gmra.mrb[0].mxu0 %v6861
    %v7154 = vpop.f32.mrb[0].mxu0
    %v7155 = vadd.f32 0.0, %v7154
    %v7156 = vpop.f32.mrb[0].mxu0
    %7157 = vmatprep.mubr.f32.mxu0 0.0
    %7158 = vmatmul.mubr.f32.gmra.mrb[0].mxu0 %v6864
    %v7159 = vpop.f32.mrb[0].mxu0
    %v7160 = vadd.f32 0.0, %v7159
    %v7161 = vpop.f32.mrb[0].mxu0
    %7162 = vmatprep.mubr.f32.mxu0 0.0
    %7163 = vmatmul.mubr.f32.gmra.mrb[0].mxu0 %v6867
    %v7164 = vpop.f32.mrb[0].mxu0
    %v7165 = vadd.f32 0.0, %v7164
    %v7166 = vpop.f32.mrb[0].mxu0
    %7167 = vmatprep.mubr.f32.mxu0 0.0
    %7168 = vmatmul.mubr.f32.gmra.mrb[0].mxu0 %v6870
    %v7169 = vpop.f32.mrb[0].mxu0
    %v7170 = vadd.f32 0.0, %v7169
    %v7171 = vpop.f32.mrb[0].mxu0
    %7172 = vmatprep.mubr.f32.mxu0 0.0
    %7173 = vmatmul.mubr.f32.gmra.mrb[0].mxu0 %v6873
    %v7174 = vpop.f32.mrb[0].mxu0
    %v7175 = vadd.f32 0.0, %v7174
    %v7176 = vpop.f32.mrb[0].mxu0
    %7177 = vmatprep.mubr.f32.mxu0 0.0
    %7178 = vmatmul.mubr.f32.gmra.mrb[0].mxu0 %v6876
    %v7179 = vpop.f32.mrb[0].mxu0
    %v7180 = vadd.f32 0.0, %v7179
    %v7181 = vpop.f32.mrb[0].mxu0
    %7182 = vmatprep.mubr.f32.mxu0 0.0
    %7183 = vmatmul.mubr.f32.gmra.mrb[0].mxu0 %v6879
    %v7184 = vpop.f32.mrb[0].mxu0
    %v7185 = vadd.f32 0.0, %v7184
    %v7186 = vpop.f32.mrb[0].mxu0
    %7187 = vmatprep.mubr.f32.mxu0 0.0
    %7188 = vmatmul.mubr.f32.gmra.mrb[0].mxu0 %v6882
    %v7189 = vpop.f32.mrb[0].mxu0
    %v7190 = vadd.f32 0.0, %v7189
    %v7191 = vpop.f32.mrb[0].mxu0
    %7192 = vmatprep.mubr.f32.mxu0 0.0
    %7193 = vmatmul.mubr.f32.gmra.mrb[0].mxu0 %v6885
    %v7194 = vpop.f32.mrb[0].mxu0
    %v7195 = vadd.f32 0.0, %v7194
    %v7196 = vpop.f32.mrb[0].mxu0
    %7197 = vmatprep.mubr.f32.mxu0 0.0
    %7198 = vmatmul.mubr.f32.gmra.mrb[0].mxu0 %v6888
    %v7199 = vpop.f32.mrb[0].mxu0
    %v7200 = vadd.f32 0.0, %v7199
    %v7201 = vpop.f32.mrb[0].mxu0
    %7202 = vmatprep.mubr.f32.mxu0 0.0
    %7203 = vmatmul.mubr.f32.gmra.mrb[0].mxu0 %v6891
    %v7204 = vpop.f32.mrb[0].mxu0
    %v7205 = vadd.f32 0.0, %v7204
    %v7206 = vpop.f32.mrb[0].mxu0
    %7207 = vmatprep.mubr.f32.mxu0 0.0
    %7208 = vmatmul.mubr.f32.gmra.mrb[0].mxu0 %v6894
    %v7209 = vpop.f32.mrb[0].mxu0
    %v7210 = vadd.f32 0.0, %v7209
    %v7211 = vpop.f32.mrb[0].mxu0
    %7212 = vmatprep.mubr.f32.mxu0 0.0
    %7213 = vmatmul.mubr.f32.gmra.mrb[0].mxu0 %v6897
    %v7214 = vpop.f32.mrb[0].mxu0
    %v7215 = vadd.f32 0.0, %v7214
    %v7216 = vpop.f32.mrb[0].mxu0
    %7217 = vmatprep.mubr.f32.mxu0 0.0
    %7218 = vmatmul.mubr.f32.gmra.mrb[0].mxu0 %v6900
    %v7219 = vpop.f32.mrb[0].mxu0
    %v7220 = vadd.f32 0.0, %v7219
    %v7221 = vpop.f32.mrb[0].mxu0
    %7222 = vmatprep.mubr.f32.mxu0 0.0
    %7223 = vmatmul.mubr.f32.gmra.mrb[0].mxu0 %v6903
    %v7224 = vpop.f32.mrb[0].mxu0
    %v7225 = vadd.f32 0.0, %v7224
    %v7226 = vpop.f32.mrb[0].mxu0
    %7227 = vmatprep.mubr.f32.mxu0 0.0
    %7228 = vmatmul.mubr.f32.gmra.mrb[0].mxu0 %v6906
    %v7229 = vpop.f32.mrb[0].mxu0
    %v7230 = vadd.f32 0.0, %v7229
    %v7231 = vpop.f32.mrb[0].mxu0
    %7232 = vmatprep.mubr.f32.mxu0 0.0
    %7233 = vmatmul.mubr.f32.gmra.mrb[0].mxu0 %v6909
    %v7234 = vpop.f32.mrb[0].mxu0
    %v7235 = vadd.f32 0.0, %v7234
    %v7236 = vpop.f32.mrb[0].mxu0
    %7237 = vmatprep.mubr.f32.mxu0 0.0
    %7238 = vmatmul.mubr.f32.gmra.mrb[0].mxu0 %v6912
    %v7239 = vpop.f32.mrb[0].mxu0
    %v7240 = vadd.f32 0.0, %v7239
    %v7241 = vpop.f32.mrb[0].mxu0
    %7242 = vmatprep.mubr.f32.mxu0 0.0
    %7243 = vmatmul.mubr.f32.gmra.mrb[0].mxu0 %v6915
    %v7244 = vpop.f32.mrb[0].mxu0
    %v7245 = vadd.f32 0.0, %v7244
    %v7246 = vpop.f32.mrb[0].mxu0
    %7247 = vmatprep.mubr.f32.mxu0 0.0
    %7248 = vmatmul.mubr.f32.gmra.mrb[0].mxu0 %v6918
    %v7249 = vpop.f32.mrb[0].mxu0
    %v7250 = vadd.f32 0.0, %v7249
    %v7251 = vpop.f32.mrb[0].mxu0
    %7252 = vmatprep.mubr.f32.mxu0 0.0
    %7253 = vmatmul.mubr.f32.gmra.mrb[0].mxu0 %v6921
    %v7254 = vpop.f32.mrb[0].mxu0
    %v7255 = vadd.f32 0.0, %v7254
    %v7256 = vpop.f32.mrb[0].mxu0
    %7257 = vmatprep.mubr.f32.mxu0 0.0
    %7258 = vmatmul.mubr.f32.gmra.mrb[0].mxu0 %v6924
    %v7259 = vpop.f32.mrb[0].mxu0
    %v7260 = vadd.f32 0.0, %v7259
    %v7261 = vpop.f32.mrb[0].mxu0
    %7262 = vmatprep.mubr.f32.mxu0 0.0
    %7263 = vmatmul.mubr.f32.gmra.mrb[0].mxu0 %v6927
    %v7264 = vpop.f32.mrb[0].mxu0
    %v7265 = vadd.f32 0.0, %v7264
    %v7266 = vpop.f32.mrb[0].mxu0
    %7267 = vmatprep.mubr.f32.mxu0 0.0
    %7268 = vmatmul.mubr.f32.gmra.mrb[0].mxu0 %v6930
    %v7269 = vpop.f32.mrb[0].mxu0
    %v7270 = vadd.f32 0.0, %v7269
    %v7271 = vpop.f32.mrb[0].mxu0
    %7272 = vmatprep.mubr.f32.mxu0 0.0
    %7273 = vmatmul.mubr.f32.gmra.mrb[0].mxu0 %v6933
    %v7274 = vpop.f32.mrb[0].mxu0
    %v7275 = vadd.f32 0.0, %v7274
    %v7276 = vpop.f32.mrb[0].mxu0
    %7277 = vmatprep.mubr.f32.mxu0 0.0
    %7278 = vmatmul.mubr.f32.gmra.mrb[0].mxu0 %v6936
    %v7279 = vpop.f32.mrb[0].mxu0
    %v7280 = vadd.f32 0.0, %v7279
    %v7281 = vpop.f32.mrb[0].mxu0
    %7282 = vdwg.mxu0
    %v7283 = vadd.f32 %v6428, %v7005
    %v7284 = vadd.f32 %v6433, %v7010
    %v7285 = vadd.f32 %v6438, %v7015
    %v7286 = vadd.f32 %v6443, %v7020
    %v7287 = vadd.f32 %v6448, %v7025
    %v7288 = vadd.f32 %v6453, %v7030
    %v7289 = vadd.f32 %v6458, %v7035
    %v7290 = vadd.f32 %v6463, %v7040
    %v7291 = vadd.f32 %v6468, %v7045
    %v7292 = vadd.f32 %v6473, %v7050
    %v7293 = vadd.f32 %v6478, %v7055
    %v7294 = vadd.f32 %v6483, %v7060
    %v7295 = vadd.f32 %v6488, %v7065
    %v7296 = vadd.f32 %v6493, %v7070
    %v7297 = vadd.f32 %v6498, %v7075
    %v7298 = vadd.f32 %v6503, %v7080
    %v7299 = vadd.f32 %v6508, %v7085
    %v7300 = vadd.f32 %v6513, %v7090
    %v7301 = vadd.f32 %v6518, %v7095
    %v7302 = vadd.f32 %v6523, %v7100
    %v7303 = vadd.f32 %v6528, %v7105
    %v7304 = vadd.f32 %v6533, %v7110
    %v7305 = vadd.f32 %v6538, %v7115
    %v7306 = vadd.f32 %v6543, %v7120
    %v7307 = vadd.f32 %v6548, %v7125
    %v7308 = vadd.f32 %v6553, %v7130
    %v7309 = vadd.f32 %v6558, %v7135
    %v7310 = vadd.f32 %v6563, %v7140
    %v7311 = vadd.f32 %v6568, %v7145
    %v7312 = vadd.f32 %v6573, %v7150
    %v7313 = vadd.f32 %v6578, %v7155
    %v7314 = vadd.f32 %v6583, %v7160
    %v7315 = vadd.f32 %v6588, %v7165
    %v7316 = vadd.f32 %v6593, %v7170
    %v7317 = vadd.f32 %v6598, %v7175
    %v7318 = vadd.f32 %v6603, %v7180
    %v7319 = vadd.f32 %v6608, %v7185
    %v7320 = vadd.f32 %v6613, %v7190
    %v7321 = vadd.f32 %v6618, %v7195
    %v7322 = vadd.f32 %v6623, %v7200
    %v7323 = vadd.f32 %v6628, %v7205
    %v7324 = vadd.f32 %v6633, %v7210
    %v7325 = vadd.f32 %v6638, %v7215
    %v7326 = vadd.f32 %v6643, %v7220
    %v7327 = vadd.f32 %v6648, %v7225
    %v7328 = vadd.f32 %v6653, %v7230
    %v7329 = vadd.f32 %v6658, %v7235
    %v7330 = vadd.f32 %v6663, %v7240
    %v7331 = vadd.f32 %v6668, %v7245
    %v7332 = vadd.f32 %v6673, %v7250
    %v7333 = vadd.f32 %v6678, %v7255
    %v7334 = vadd.f32 %v6683, %v7260
    %v7335 = vadd.f32 %v6688, %v7265
    %v7336 = vadd.f32 %v6693, %v7270
    %v7337 = vadd.f32 %v6698, %v7275
    %v7338 = vadd.f32 %v6703, %v7280
    %v7339 = vld [vmem:[%s4] sm:$0x1]
    %v7341 = vlaneseq
    %v7342 = vshrl.u32 %v7341, 7
    %v7343 = vsub.s32 0, %v7342
    %v7344 = vrot.slane %v7339, %v7343
    %v7346 = vadd.f32 %v7283, %v7344
    %v7347 = vadd.f32 %v7284, %v7344
    %v7348 = vadd.f32 %v7285, %v7344
    %v7349 = vadd.f32 %v7286, %v7344
    %v7350 = vadd.f32 %v7287, %v7344
    %v7351 = vadd.f32 %v7288, %v7344
    %v7352 = vadd.f32 %v7289, %v7344
    %v7353 = vadd.f32 %v7290, %v7344
    %v7354 = vadd.f32 %v7291, %v7344
    %v7355 = vadd.f32 %v7292, %v7344
    %v7356 = vadd.f32 %v7293, %v7344
    %v7357 = vadd.f32 %v7294, %v7344
    %v7358 = vadd.f32 %v7295, %v7344
    %v7359 = vadd.f32 %v7296, %v7344
    %v7360 = vadd.f32 %v7297, %v7344
    %v7361 = vadd.f32 %v7298, %v7344
    %v7362 = vadd.f32 %v7299, %v7344
    %v7363 = vadd.f32 %v7300, %v7344
    %v7364 = vadd.f32 %v7301, %v7344
    %v7365 = vadd.f32 %v7302, %v7344
    %v7366 = vadd.f32 %v7303, %v7344
    %v7367 = vadd.f32 %v7304, %v7344
    %v7368 = vadd.f32 %v7305, %v7344
    %v7369 = vadd.f32 %v7306, %v7344
    %v7370 = vadd.f32 %v7307, %v7344
    %v7371 = vadd.f32 %v7308, %v7344
    %v7372 = vadd.f32 %v7309, %v7344
    %v7373 = vadd.f32 %v7310, %v7344
    %v7374 = vadd.f32 %v7311, %v7344
    %v7375 = vadd.f32 %v7312, %v7344
    %v7376 = vadd.f32 %v7313, %v7344
    %v7377 = vadd.f32 %v7314, %v7344
    %v7378 = vadd.f32 %v7315, %v7344
    %v7379 = vadd.f32 %v7316, %v7344
    %v7380 = vadd.f32 %v7317, %v7344
    %v7381 = vadd.f32 %v7318, %v7344
    %v7382 = vadd.f32 %v7319, %v7344
    %v7383 = vadd.f32 %v7320, %v7344
    %v7384 = vadd.f32 %v7321, %v7344
    %v7385 = vadd.f32 %v7322, %v7344
    %v7386 = vadd.f32 %v7323, %v7344
    %v7387 = vadd.f32 %v7324, %v7344
    %v7388 = vadd.f32 %v7325, %v7344
    %v7389 = vadd.f32 %v7326, %v7344
    %v7390 = vadd.f32 %v7327, %v7344
    %v7391 = vadd.f32 %v7328, %v7344
    %v7392 = vadd.f32 %v7329, %v7344
    %v7393 = vadd.f32 %v7330, %v7344
    %v7394 = vadd.f32 %v7331, %v7344
    %v7395 = vadd.f32 %v7332, %v7344
    %v7396 = vadd.f32 %v7333, %v7344
    %v7397 = vadd.f32 %v7334, %v7344
    %v7398 = vadd.f32 %v7335, %v7344
    %v7399 = vadd.f32 %v7336, %v7344
    %v7400 = vadd.f32 %v7337, %v7344
    %v7401 = vadd.f32 %v7338, %v7344
    %v7402 = vmax.f32 %v7346, 0.0
    %v7403 = vmax.f32 %v7347, 0.0
    %v7404 = vmax.f32 %v7348, 0.0
    %v7405 = vmax.f32 %v7349, 0.0
    %v7406 = vmax.f32 %v7350, 0.0
    %v7407 = vmax.f32 %v7351, 0.0
    %v7408 = vmax.f32 %v7352, 0.0
    %v7409 = vmax.f32 %v7353, 0.0
    %v7410 = vmax.f32 %v7354, 0.0
    %v7411 = vmax.f32 %v7355, 0.0
    %v7412 = vmax.f32 %v7356, 0.0
    %v7413 = vmax.f32 %v7357, 0.0
    %v7414 = vmax.f32 %v7358, 0.0
    %v7415 = vmax.f32 %v7359, 0.0
    %v7416 = vmax.f32 %v7360, 0.0
    %v7417 = vmax.f32 %v7361, 0.0
    %v7418 = vmax.f32 %v7362, 0.0
    %v7419 = vmax.f32 %v7363, 0.0
    %v7420 = vmax.f32 %v7364, 0.0
    %v7421 = vmax.f32 %v7365, 0.0
    %v7422 = vmax.f32 %v7366, 0.0
    %v7423 = vmax.f32 %v7367, 0.0
    %v7424 = vmax.f32 %v7368, 0.0
    %v7425 = vmax.f32 %v7369, 0.0
    %v7426 = vmax.f32 %v7370, 0.0
    %v7427 = vmax.f32 %v7371, 0.0
    %v7428 = vmax.f32 %v7372, 0.0
    %v7429 = vmax.f32 %v7373, 0.0
    %v7430 = vmax.f32 %v7374, 0.0
    %v7431 = vmax.f32 %v7375, 0.0
    %v7432 = vmax.f32 %v7376, 0.0
    %v7433 = vmax.f32 %v7377, 0.0
    %v7434 = vmax.f32 %v7378, 0.0
    %v7435 = vmax.f32 %v7379, 0.0
    %v7436 = vmax.f32 %v7380, 0.0
    %v7437 = vmax.f32 %v7381, 0.0
    %v7438 = vmax.f32 %v7382, 0.0
    %v7439 = vmax.f32 %v7383, 0.0
    %v7440 = vmax.f32 %v7384, 0.0
    %v7441 = vmax.f32 %v7385, 0.0
    %v7442 = vmax.f32 %v7386, 0.0
    %v7443 = vmax.f32 %v7387, 0.0
    %v7444 = vmax.f32 %v7388, 0.0
    %v7445 = vmax.f32 %v7389, 0.0
    %v7446 = vmax.f32 %v7390, 0.0
    %v7447 = vmax.f32 %v7391, 0.0
    %v7448 = vmax.f32 %v7392, 0.0
    %v7449 = vmax.f32 %v7393, 0.0
    %v7450 = vmax.f32 %v7394, 0.0
    %v7451 = vmax.f32 %v7395, 0.0
    %v7452 = vmax.f32 %v7396, 0.0
    %v7453 = vmax.f32 %v7397, 0.0
    %v7454 = vmax.f32 %v7398, 0.0
    %v7455 = vmax.f32 %v7399, 0.0
    %v7456 = vmax.f32 %v7400, 0.0
    %v7457 = vmax.f32 %v7401, 0.0
    %7458 = vst.msk [vmem:[#allocation4] sm:$0xff] %vm3587, %v7402
    %7459 = vst.msk [vmem:[#allocation4 + $0x8] sm:$0xff] %vm3587, %v7403
    %7460 = vst.msk [vmem:[#allocation4 + $0x10] sm:$0xff] %vm3587, %v7404
    %7461 = vst.msk [vmem:[#allocation4 + $0x18] sm:$0xff] %vm3587, %v7405
    %7462 = vst.msk [vmem:[#allocation4 + $0x20] sm:$0xff] %vm3587, %v7406
    %7463 = vst.msk [vmem:[#allocation4 + $0x28] sm:$0xff] %vm3587, %v7407
    %7464 = vst.msk [vmem:[#allocation4 + $0x30] sm:$0xff] %vm3587, %v7408
    %7465 = vst.msk [vmem:[#allocation4 + $0x38] sm:$0xff] %vm3587, %v7409
    %7466 = vst.msk [vmem:[#allocation4 + $0x40] sm:$0xff] %vm3587, %v7410
    %7467 = vst.msk [vmem:[#allocation4 + $0x48] sm:$0xff] %vm3587, %v7411
    %7468 = vst.msk [vmem:[#allocation4 + $0x50] sm:$0xff] %vm3587, %v7412
    %7469 = vst.msk [vmem:[#allocation4 + $0x58] sm:$0xff] %vm3587, %v7413
    %7470 = vst.msk [vmem:[#allocation4 + $0x60] sm:$0xff] %vm3587, %v7414
    %7471 = vst.msk [vmem:[#allocation4 + $0x68] sm:$0xff] %vm3587, %v7415
    %7472 = vst.msk [vmem:[#allocation4 + $0x70] sm:$0xff] %vm3587, %v7416
    %7473 = vst.msk [vmem:[#allocation4 + $0x78] sm:$0xff] %vm3587, %v7417
    %7474 = vst.msk [vmem:[#allocation4 + $0x80] sm:$0xff] %vm3587, %v7418
    %7475 = vst.msk [vmem:[#allocation4 + $0x88] sm:$0xff] %vm3587, %v7419
    %7476 = vst.msk [vmem:[#allocation4 + $0x90] sm:$0xff] %vm3587, %v7420
    %7477 = vst.msk [vmem:[#allocation4 + $0x98] sm:$0xff] %vm3587, %v7421
    %7478 = vst.msk [vmem:[#allocation4 + $0xa0] sm:$0xff] %vm3587, %v7422
    %7479 = vst.msk [vmem:[#allocation4 + $0xa8] sm:$0xff] %vm3587, %v7423
    %7480 = vst.msk [vmem:[#allocation4 + $0xb0] sm:$0xff] %vm3587, %v7424
    %7481 = vst.msk [vmem:[#allocation4 + $0xb8] sm:$0xff] %vm3587, %v7425
    %7482 = vst.msk [vmem:[#allocation4 + $0xc0] sm:$0xff] %vm3587, %v7426
    %7483 = vst.msk [vmem:[#allocation4 + $0xc8] sm:$0xff] %vm3587, %v7427
    %7484 = vst.msk [vmem:[#allocation4 + $0xd0] sm:$0xff] %vm3587, %v7428
    %7485 = vst.msk [vmem:[#allocation4 + $0xd8] sm:$0xff] %vm3587, %v7429
    %7486 = vst.msk [vmem:[#allocation4 + $0xe0] sm:$0xff] %vm3587, %v7430
    %7487 = vst.msk [vmem:[#allocation4 + $0xe8] sm:$0xff] %vm3587, %v7431
    %7488 = vst.msk [vmem:[#allocation4 + $0xf0] sm:$0xff] %vm3587, %v7432
    %7489 = vst.msk [vmem:[#allocation4 + $0xf8] sm:$0xff] %vm3587, %v7433
    %7490 = vst.msk [vmem:[#allocation4 + $0x100] sm:$0xff] %vm3587, %v7434
    %7491 = vst.msk [vmem:[#allocation4 + $0x108] sm:$0xff] %vm3587, %v7435
    %7492 = vst.msk [vmem:[#allocation4 + $0x110] sm:$0xff] %vm3587, %v7436
    %7493 = vst.msk [vmem:[#allocation4 + $0x118] sm:$0xff] %vm3587, %v7437
    %7494 = vst.msk [vmem:[#allocation4 + $0x120] sm:$0xff] %vm3587, %v7438
    %7495 = vst.msk [vmem:[#allocation4 + $0x128] sm:$0xff] %vm3587, %v7439
    %7496 = vst.msk [vmem:[#allocation4 + $0x130] sm:$0xff] %vm3587, %v7440
    %7497 = vst.msk [vmem:[#allocation4 + $0x138] sm:$0xff] %vm3587, %v7441
    %7498 = vst.msk [vmem:[#allocation4 + $0x140] sm:$0xff] %vm3587, %v7442
    %7499 = vst.msk [vmem:[#allocation4 + $0x148] sm:$0xff] %vm3587, %v7443
    %7500 = vst.msk [vmem:[#allocation4 + $0x150] sm:$0xff] %vm3587, %v7444
    %7501 = vst.msk [vmem:[#allocation4 + $0x158] sm:$0xff] %vm3587, %v7445
    %7502 = vst.msk [vmem:[#allocation4 + $0x160] sm:$0xff] %vm3587, %v7446
    %7503 = vst.msk [vmem:[#allocation4 + $0x168] sm:$0xff] %vm3587, %v7447
    %7504 = vst.msk [vmem:[#allocation4 + $0x170] sm:$0xff] %vm3587, %v7448
    %7505 = vst.msk [vmem:[#allocation4 + $0x178] sm:$0xff] %vm3587, %v7449
    %7506 = vst.msk [vmem:[#allocation4 + $0x180] sm:$0xff] %vm3587, %v7450
    %7507 = vst.msk [vmem:[#allocation4 + $0x188] sm:$0xff] %vm3587, %v7451
    %7508 = vst.msk [vmem:[#allocation4 + $0x190] sm:$0xff] %vm3587, %v7452
    %7509 = vst.msk [vmem:[#allocation4 + $0x198] sm:$0xff] %vm3587, %v7453
    %7510 = vst.msk [vmem:[#allocation4 + $0x1a0] sm:$0xff] %vm3587, %v7454
    %7511 = vst.msk [vmem:[#allocation4 + $0x1a8] sm:$0xff] %vm3587, %v7455
    %7512 = vst.msk [vmem:[#allocation4 + $0x1b0] sm:$0xff] %vm3587, %v7456
    %7513 = vst.msk [vmem:[#allocation4 + $0x1b8] sm:$0xff] %vm3587, %v7457
    %7514 = vst.msk [vmem:[#allocation4 + $0x1c0] sm:$0xff] %vm3587, 0.0
    %v7515 = vld [vmem:[#allocation4] ss:$2 sm:$0xff]
    %s7516 = scalar_lea.vmem [#allocation4], 16
    %v7517 = vld [vmem:[%s7516] ss:$2 sm:$0xff]
    %s7518 = scalar_lea.vmem [#allocation4], 32
    %v7519 = vld [vmem:[%s7518] ss:$2 sm:$0xff]
    %s7520 = scalar_lea.vmem [#allocation4], 48
    %v7521 = vld [vmem:[%s7520] ss:$2 sm:$0xff]
    %s7522 = scalar_lea.vmem [#allocation4], 64
    %v7523 = vld [vmem:[%s7522] ss:$2 sm:$0xff]
    %s7524 = scalar_lea.vmem [#allocation4], 80
    %v7525 = vld [vmem:[%s7524] ss:$2 sm:$0xff]
    %s7526 = scalar_lea.vmem [#allocation4], 96
    %v7527 = vld [vmem:[%s7526] ss:$2 sm:$0xff]
    %s7528 = scalar_lea.vmem [#allocation4], 112
    %v7529 = vld [vmem:[%s7528] ss:$2 sm:$0xff]
    %s7530 = scalar_lea.vmem [#allocation4], 128
    %v7531 = vld [vmem:[%s7530] ss:$2 sm:$0xff]
    %s7532 = scalar_lea.vmem [#allocation4], 144
    %v7533 = vld [vmem:[%s7532] ss:$2 sm:$0xff]
    %s7534 = scalar_lea.vmem [#allocation4], 160
    %v7535 = vld [vmem:[%s7534] ss:$2 sm:$0xff]
    %s7536 = scalar_lea.vmem [#allocation4], 176
    %v7537 = vld [vmem:[%s7536] ss:$2 sm:$0xff]
    %s7538 = scalar_lea.vmem [#allocation4], 192
    %v7539 = vld [vmem:[%s7538] ss:$2 sm:$0xff]
    %s7540 = scalar_lea.vmem [#allocation4], 208
    %v7541 = vld [vmem:[%s7540] ss:$2 sm:$0xff]
    %s7542 = scalar_lea.vmem [#allocation4], 224
    %v7543 = vld [vmem:[%s7542] ss:$2 sm:$0xff]
    %s7544 = scalar_lea.vmem [#allocation4], 240
    %v7545 = vld [vmem:[%s7544] ss:$2 sm:$0xff]
    %s7546 = scalar_lea.vmem [#allocation4], 256
    %v7547 = vld [vmem:[%s7546] ss:$2 sm:$0xff]
    %s7548 = scalar_lea.vmem [#allocation4], 272
    %v7549 = vld [vmem:[%s7548] ss:$2 sm:$0xff]
    %s7550 = scalar_lea.vmem [#allocation4], 288
    %v7551 = vld [vmem:[%s7550] ss:$2 sm:$0xff]
    %s7552 = scalar_lea.vmem [#allocation4], 304
    %v7553 = vld [vmem:[%s7552] ss:$2 sm:$0xff]
    %s7554 = scalar_lea.vmem [#allocation4], 320
    %v7555 = vld [vmem:[%s7554] ss:$2 sm:$0xff]
    %s7556 = scalar_lea.vmem [#allocation4], 336
    %v7557 = vld [vmem:[%s7556] ss:$2 sm:$0xff]
    %s7558 = scalar_lea.vmem [#allocation4], 352
    %v7559 = vld [vmem:[%s7558] ss:$2 sm:$0xff]
    %s7560 = scalar_lea.vmem [#allocation4], 368
    %v7561 = vld [vmem:[%s7560] ss:$2 sm:$0xff]
    %s7562 = scalar_lea.vmem [#allocation4], 384
    %v7563 = vld [vmem:[%s7562] ss:$2 sm:$0xff]
    %s7564 = scalar_lea.vmem [#allocation4], 400
    %v7565 = vld [vmem:[%s7564] ss:$2 sm:$0xff]
    %s7566 = scalar_lea.vmem [#allocation4], 416
    %v7567 = vld [vmem:[%s7566] ss:$2 sm:$0xff]
    %s7568 = scalar_lea.vmem [#allocation4], 432
    %v7569 = vld [vmem:[%s7568] ss:$2 sm:$0xff]
    %s7570 = scalar_lea.vmem [#allocation4], 1
    %v7571 = vld [vmem:[%s7570] ss:$2 sm:$0xff]
    %s7572 = scalar_lea.vmem [#allocation4], 17
    %v7573 = vld [vmem:[%s7572] ss:$2 sm:$0xff]
    %s7574 = scalar_lea.vmem [#allocation4], 33
    %v7575 = vld [vmem:[%s7574] ss:$2 sm:$0xff]
    %s7576 = scalar_lea.vmem [#allocation4], 49
    %v7577 = vld [vmem:[%s7576] ss:$2 sm:$0xff]
    %s7578 = scalar_lea.vmem [#allocation4], 65
    %v7579 = vld [vmem:[%s7578] ss:$2 sm:$0xff]
    %s7580 = scalar_lea.vmem [#allocation4], 81
    %v7581 = vld [vmem:[%s7580] ss:$2 sm:$0xff]
    %s7582 = scalar_lea.vmem [#allocation4], 97
    %v7583 = vld [vmem:[%s7582] ss:$2 sm:$0xff]
    %s7584 = scalar_lea.vmem [#allocation4], 113
    %v7585 = vld [vmem:[%s7584] ss:$2 sm:$0xff]
    %s7586 = scalar_lea.vmem [#allocation4], 129
    %v7587 = vld [vmem:[%s7586] ss:$2 sm:$0xff]
    %s7588 = scalar_lea.vmem [#allocation4], 145
    %v7589 = vld [vmem:[%s7588] ss:$2 sm:$0xff]
    %s7590 = scalar_lea.vmem [#allocation4], 161
    %v7591 = vld [vmem:[%s7590] ss:$2 sm:$0xff]
    %s7592 = scalar_lea.vmem [#allocation4], 177
    %v7593 = vld [vmem:[%s7592] ss:$2 sm:$0xff]
    %s7594 = scalar_lea.vmem [#allocation4], 193
    %v7595 = vld [vmem:[%s7594] ss:$2 sm:$0xff]
    %s7596 = scalar_lea.vmem [#allocation4], 209
    %v7597 = vld [vmem:[%s7596] ss:$2 sm:$0xff]
    %s7598 = scalar_lea.vmem [#allocation4], 225
    %v7599 = vld [vmem:[%s7598] ss:$2 sm:$0xff]
    %s7600 = scalar_lea.vmem [#allocation4], 241
    %v7601 = vld [vmem:[%s7600] ss:$2 sm:$0xff]
    %s7602 = scalar_lea.vmem [#allocation4], 257
    %v7603 = vld [vmem:[%s7602] ss:$2 sm:$0xff]
    %s7604 = scalar_lea.vmem [#allocation4], 273
    %v7605 = vld [vmem:[%s7604] ss:$2 sm:$0xff]
    %s7606 = scalar_lea.vmem [#allocation4], 289
    %v7607 = vld [vmem:[%s7606] ss:$2 sm:$0xff]
    %s7608 = scalar_lea.vmem [#allocation4], 305
    %v7609 = vld [vmem:[%s7608] ss:$2 sm:$0xff]
    %s7610 = scalar_lea.vmem [#allocation4], 321
    %v7611 = vld [vmem:[%s7610] ss:$2 sm:$0xff]
    %s7612 = scalar_lea.vmem [#allocation4], 337
    %v7613 = vld [vmem:[%s7612] ss:$2 sm:$0xff]
    %s7614 = scalar_lea.vmem [#allocation4], 353
    %v7615 = vld [vmem:[%s7614] ss:$2 sm:$0xff]
    %s7616 = scalar_lea.vmem [#allocation4], 369
    %v7617 = vld [vmem:[%s7616] ss:$2 sm:$0xff]
    %s7618 = scalar_lea.vmem [#allocation4], 385
    %v7619 = vld [vmem:[%s7618] ss:$2 sm:$0xff]
    %s7620 = scalar_lea.vmem [#allocation4], 401
    %v7621 = vld [vmem:[%s7620] ss:$2 sm:$0xff]
    %s7622 = scalar_lea.vmem [#allocation4], 417
    %v7623 = vld [vmem:[%s7622] ss:$2 sm:$0xff]
    %s7624 = scalar_lea.vmem [#allocation4], 433
    %v7625 = vld [vmem:[%s7624] ss:$2 sm:$0xff]
    %v7626 = vmax.f32 %v7515, %v7571
    %v7627 = vmax.f32 %v7517, %v7573
    %v7628 = vmax.f32 %v7519, %v7575
    %v7629 = vmax.f32 %v7521, %v7577
    %v7630 = vmax.f32 %v7523, %v7579
    %v7631 = vmax.f32 %v7525, %v7581
    %v7632 = vmax.f32 %v7527, %v7583
    %v7633 = vmax.f32 %v7529, %v7585
    %v7634 = vmax.f32 %v7531, %v7587
    %v7635 = vmax.f32 %v7533, %v7589
    %v7636 = vmax.f32 %v7535, %v7591
    %v7637 = vmax.f32 %v7537, %v7593
    %v7638 = vmax.f32 %v7539, %v7595
    %v7639 = vmax.f32 %v7541, %v7597
    %v7640 = vmax.f32 %v7543, %v7599
    %v7641 = vmax.f32 %v7545, %v7601
    %v7642 = vmax.f32 %v7547, %v7603
    %v7643 = vmax.f32 %v7549, %v7605
    %v7644 = vmax.f32 %v7551, %v7607
    %v7645 = vmax.f32 %v7553, %v7609
    %v7646 = vmax.f32 %v7555, %v7611
    %v7647 = vmax.f32 %v7557, %v7613
    %v7648 = vmax.f32 %v7559, %v7615
    %v7649 = vmax.f32 %v7561, %v7617
    %v7650 = vmax.f32 %v7563, %v7619
    %v7651 = vmax.f32 %v7565, %v7621
    %v7652 = vmax.f32 %v7567, %v7623
    %v7653 = vmax.f32 %v7569, %v7625
    %s7654 = scalar_lea.vmem [#allocation4], 2
    %v7655 = vld [vmem:[%s7654] ss:$2 sm:$0xff]
    %s7656 = scalar_lea.vmem [#allocation4], 18
    %v7657 = vld [vmem:[%s7656] ss:$2 sm:$0xff]
    %s7658 = scalar_lea.vmem [#allocation4], 34
    %v7659 = vld [vmem:[%s7658] ss:$2 sm:$0xff]
    %s7660 = scalar_lea.vmem [#allocation4], 50
    %v7661 = vld [vmem:[%s7660] ss:$2 sm:$0xff]
    %s7662 = scalar_lea.vmem [#allocation4], 66
    %v7663 = vld [vmem:[%s7662] ss:$2 sm:$0xff]
    %s7664 = scalar_lea.vmem [#allocation4], 82
    %v7665 = vld [vmem:[%s7664] ss:$2 sm:$0xff]
    %s7666 = scalar_lea.vmem [#allocation4], 98
    %v7667 = vld [vmem:[%s7666] ss:$2 sm:$0xff]
    %s7668 = scalar_lea.vmem [#allocation4], 114
    %v7669 = vld [vmem:[%s7668] ss:$2 sm:$0xff]
    %s7670 = scalar_lea.vmem [#allocation4], 130
    %v7671 = vld [vmem:[%s7670] ss:$2 sm:$0xff]
    %s7672 = scalar_lea.vmem [#allocation4], 146
    %v7673 = vld [vmem:[%s7672] ss:$2 sm:$0xff]
    %s7674 = scalar_lea.vmem [#allocation4], 162
    %v7675 = vld [vmem:[%s7674] ss:$2 sm:$0xff]
    %s7676 = scalar_lea.vmem [#allocation4], 178
    %v7677 = vld [vmem:[%s7676] ss:$2 sm:$0xff]
    %s7678 = scalar_lea.vmem [#allocation4], 194
    %v7679 = vld [vmem:[%s7678] ss:$2 sm:$0xff]
    %s7680 = scalar_lea.vmem [#allocation4], 210
    %v7681 = vld [vmem:[%s7680] ss:$2 sm:$0xff]
    %s7682 = scalar_lea.vmem [#allocation4], 226
    %v7683 = vld [vmem:[%s7682] ss:$2 sm:$0xff]
    %s7684 = scalar_lea.vmem [#allocation4], 242
    %v7685 = vld [vmem:[%s7684] ss:$2 sm:$0xff]
    %s7686 = scalar_lea.vmem [#allocation4], 258
    %v7687 = vld [vmem:[%s7686] ss:$2 sm:$0xff]
    %s7688 = scalar_lea.vmem [#allocation4], 274
    %v7689 = vld [vmem:[%s7688] ss:$2 sm:$0xff]
    %s7690 = scalar_lea.vmem [#allocation4], 290
    %v7691 = vld [vmem:[%s7690] ss:$2 sm:$0xff]
    %s7692 = scalar_lea.vmem [#allocation4], 306
    %v7693 = vld [vmem:[%s7692] ss:$2 sm:$0xff]
    %s7694 = scalar_lea.vmem [#allocation4], 322
    %v7695 = vld [vmem:[%s7694] ss:$2 sm:$0xff]
    %s7696 = scalar_lea.vmem [#allocation4], 338
    %v7697 = vld [vmem:[%s7696] ss:$2 sm:$0xff]
    %s7698 = scalar_lea.vmem [#allocation4], 354
    %v7699 = vld [vmem:[%s7698] ss:$2 sm:$0xff]
    %s7700 = scalar_lea.vmem [#allocation4], 370
    %v7701 = vld [vmem:[%s7700] ss:$2 sm:$0xff]
    %s7702 = scalar_lea.vmem [#allocation4], 386
    %v7703 = vld [vmem:[%s7702] ss:$2 sm:$0xff]
    %s7704 = scalar_lea.vmem [#allocation4], 402
    %v7705 = vld [vmem:[%s7704] ss:$2 sm:$0xff]
    %s7706 = scalar_lea.vmem [#allocation4], 418
    %v7707 = vld [vmem:[%s7706] ss:$2 sm:$0xff]
    %s7708 = scalar_lea.vmem [#allocation4], 434
    %v7709 = vld [vmem:[%s7708] ss:$2 sm:$0xff]
    %v7710 = vmax.f32 %v7626, %v7655
    %v7711 = vmax.f32 %v7627, %v7657
    %v7712 = vmax.f32 %v7628, %v7659
    %v7713 = vmax.f32 %v7629, %v7661
    %v7714 = vmax.f32 %v7630, %v7663
    %v7715 = vmax.f32 %v7631, %v7665
    %v7716 = vmax.f32 %v7632, %v7667
    %v7717 = vmax.f32 %v7633, %v7669
    %v7718 = vmax.f32 %v7634, %v7671
    %v7719 = vmax.f32 %v7635, %v7673
    %v7720 = vmax.f32 %v7636, %v7675
    %v7721 = vmax.f32 %v7637, %v7677
    %v7722 = vmax.f32 %v7638, %v7679
    %v7723 = vmax.f32 %v7639, %v7681
    %v7724 = vmax.f32 %v7640, %v7683
    %v7725 = vmax.f32 %v7641, %v7685
    %v7726 = vmax.f32 %v7642, %v7687
    %v7727 = vmax.f32 %v7643, %v7689
    %v7728 = vmax.f32 %v7644, %v7691
    %v7729 = vmax.f32 %v7645, %v7693
    %v7730 = vmax.f32 %v7646, %v7695
    %v7731 = vmax.f32 %v7647, %v7697
    %v7732 = vmax.f32 %v7648, %v7699
    %v7733 = vmax.f32 %v7649, %v7701
    %v7734 = vmax.f32 %v7650, %v7703
    %v7735 = vmax.f32 %v7651, %v7705
    %v7736 = vmax.f32 %v7652, %v7707
    %v7737 = vmax.f32 %v7653, %v7709
    %7738 = vst.msk [vmem:[#allocation5] sm:$0xff] %vm3587, %v7710
    %7739 = vst.msk [vmem:[#allocation5 + $0x8] sm:$0xff] %vm3587, %v7711
    %7740 = vst.msk [vmem:[#allocation5 + $0x10] sm:$0xff] %vm3587, %v7712
    %7741 = vst.msk [vmem:[#allocation5 + $0x18] sm:$0xff] %vm3587, %v7713
    %7742 = vst.msk [vmem:[#allocation5 + $0x20] sm:$0xff] %vm3587, %v7714
    %7743 = vst.msk [vmem:[#allocation5 + $0x28] sm:$0xff] %vm3587, %v7715
    %7744 = vst.msk [vmem:[#allocation5 + $0x30] sm:$0xff] %vm3587, %v7716
    %7745 = vst.msk [vmem:[#allocation5 + $0x38] sm:$0xff] %vm3587, %v7717
    %7746 = vst.msk [vmem:[#allocation5 + $0x40] sm:$0xff] %vm3587, %v7718
    %7747 = vst.msk [vmem:[#allocation5 + $0x48] sm:$0xff] %vm3587, %v7719
    %7748 = vst.msk [vmem:[#allocation5 + $0x50] sm:$0xff] %vm3587, %v7720
    %7749 = vst.msk [vmem:[#allocation5 + $0x58] sm:$0xff] %vm3587, %v7721
    %7750 = vst.msk [vmem:[#allocation5 + $0x60] sm:$0xff] %vm3587, %v7722
    %7751 = vst.msk [vmem:[#allocation5 + $0x68] sm:$0xff] %vm3587, %v7723
    %7752 = vst.msk [vmem:[#allocation5 + $0x70] sm:$0xff] %vm3587, %v7724
    %7753 = vst.msk [vmem:[#allocation5 + $0x78] sm:$0xff] %vm3587, %v7725
    %7754 = vst.msk [vmem:[#allocation5 + $0x80] sm:$0xff] %vm3587, %v7726
    %7755 = vst.msk [vmem:[#allocation5 + $0x88] sm:$0xff] %vm3587, %v7727
    %7756 = vst.msk [vmem:[#allocation5 + $0x90] sm:$0xff] %vm3587, %v7728
    %7757 = vst.msk [vmem:[#allocation5 + $0x98] sm:$0xff] %vm3587, %v7729
    %7758 = vst.msk [vmem:[#allocation5 + $0xa0] sm:$0xff] %vm3587, %v7730
    %7759 = vst.msk [vmem:[#allocation5 + $0xa8] sm:$0xff] %vm3587, %v7731
    %7760 = vst.msk [vmem:[#allocation5 + $0xb0] sm:$0xff] %vm3587, %v7732
    %7761 = vst.msk [vmem:[#allocation5 + $0xb8] sm:$0xff] %vm3587, %v7733
    %7762 = vst.msk [vmem:[#allocation5 + $0xc0] sm:$0xff] %vm3587, %v7734
    %7763 = vst.msk [vmem:[#allocation5 + $0xc8] sm:$0xff] %vm3587, %v7735
    %7764 = vst.msk [vmem:[#allocation5 + $0xd0] sm:$0xff] %vm3587, %v7736
    %7765 = vst.msk [vmem:[#allocation5 + $0xd8] sm:$0xff] %vm3587, %v7737
    %v7766 = vld [vmem:[%s6] sm:$0x1]
    %v7768 = vlaneseq
    %v7769 = vshrl.u32 %v7768, 7
    %v7770 = vsub.s32 0, %v7769
    %v7771 = vrot.slane %v7766, %v7770
    %v7773 = vld [vmem:[#allocation5] ss:$28 sm:$0xff]
    %v7774 = vld [vmem:[%s5] sm:$0xff]
    %v7775 = vld [vmem:[%s5 + $0x8] sm:$0xff]
    %v7776 = vld [vmem:[%s5 + $0x10] sm:$0xff]
    %v7777 = vld [vmem:[%s5 + $0x18] sm:$0xff]
    %v7778 = vld [vmem:[%s5 + $0x20] sm:$0xff]
    %v7779 = vld [vmem:[%s5 + $0x28] sm:$0xff]
    %v7780 = vld [vmem:[%s5 + $0x30] sm:$0xff]
    %v7781 = vld [vmem:[%s5 + $0x38] sm:$0xff]
    %v7783 = vsel %vm3587, %v7773, 0
    %7785 = vmatprep.subr.mxu0 0.0
    %7786 = vmatpush1.msra.mxu0 %v7774
    %7787 = vmatprep.subr.mxu0 0.0
    %7788 = vmatpush1.msra.mxu0 %v7775
    %7789 = vmatprep.subr.mxu0 0.0
    %7790 = vmatpush1.msra.mxu0 %v7776
    %7791 = vmatprep.subr.mxu0 0.0
    %7792 = vmatpush1.msra.mxu0 %v7777
    %7793 = vmatprep.subr.mxu0 0.0
    %7794 = vmatpush1.msra.mxu0 %v7778
    %7795 = vmatprep.subr.mxu0 0.0
    %7796 = vmatpush1.msra.mxu0 %v7779
    %7797 = vmatprep.subr.mxu0 0.0
    %7798 = vmatpush1.msra.mxu0 %v7780
    %7799 = vmatprep.subr.mxu0 0.0
    %7800 = vmatpush1.msra.mxu0 %v7781
    %7801 = vmatprep.subr.mxu0 0.0
    %7802 = vmatpush1.msra.mxu0 0.0
    %7803 = vmatprep.subr.mxu0 0.0
    %7804 = vmatpush1.msra.mxu0 0.0
    %7805 = vmatprep.subr.mxu0 0.0
    %7806 = vmatpush1.msra.mxu0 0.0
    %7807 = vmatprep.subr.mxu0 0.0
    %7808 = vmatpush1.msra.mxu0 0.0
    %7809 = vmatprep.subr.mxu0 0.0
    %7810 = vmatpush1.msra.mxu0 0.0
    %7811 = vmatprep.subr.mxu0 0.0
    %7812 = vmatpush1.msra.mxu0 0.0
    %7813 = vmatprep.subr.mxu0 0.0
    %7814 = vmatpush1.msra.mxu0 0.0
    %7815 = vmatprep.subr.mxu0 0.0
    %7816 = vmatpush1.msra.mxu0 0.0
    %7817 = vmatprep.subr.mxu0 0.0
    %7818 = vmatpush1.msra.mxu0 0.0
    %7819 = vmatprep.subr.mxu0 0.0
    %7820 = vmatpush1.msra.mxu0 0.0
    %7821 = vmatprep.subr.mxu0 0.0
    %7822 = vmatpush1.msra.mxu0 0.0
    %7823 = vmatprep.subr.mxu0 0.0
    %7824 = vmatpush1.msra.mxu0 0.0
    %7825 = vmatprep.subr.mxu0 0.0
    %7826 = vmatpush1.msra.mxu0 0.0
    %7827 = vmatprep.subr.mxu0 0.0
    %7828 = vmatpush1.msra.mxu0 0.0
    %7829 = vmatprep.subr.mxu0 0.0
    %7830 = vmatpush1.msra.mxu0 0.0
    %7831 = vmatprep.subr.mxu0 0.0
    %7832 = vmatpush1.msra.mxu0 0.0
    %7833 = vmatprep.subr.mxu0 0.0
    %7834 = vmatpush1.msra.mxu0 0.0
    %7835 = vmatprep.subr.mxu0 0.0
    %7836 = vmatpush1.msra.mxu0 0.0
    %7837 = vmatprep.subr.mxu0 0.0
    %7838 = vmatpush1.msra.mxu0 0.0
    %7839 = vmatprep.subr.mxu0 0.0
    %7840 = vmatpush1.msra.mxu0 0.0
    %7841 = vmatprep.subr.mxu0 0.0
    %7842 = vmatpush1.msra.mxu0 0.0
    %7843 = vmatprep.subr.mxu0 0.0
    %7844 = vmatpush1.msra.mxu0 0.0
    %7845 = vmatprep.subr.mxu0 0.0
    %7846 = vmatpush1.msra.mxu0 0.0
    %7847 = vmatprep.subr.mxu0 0.0
    %7848 = vmatpush1.msra.mxu0 0.0
    %7849 = vmatprep.mubr.f32.mxu0 0.0
    %7850 = vmatmul.mubr.f32.gmra.mrb[0].mxu0 %v7783
    %v7851 = vpop.f32.mrb[0].mxu0
    %v7852 = vadd.f32 0.0, %v7851
    %v7853 = vpop.f32.mrb[0].mxu0
    %7854 = vdwg.mxu0
    %v7855 = vadd.f32 %v7771, %v7852
    %s7856 = scalar_lea.vmem [#allocation5], 1
    %v7857 = vld [vmem:[%s7856] ss:$28 sm:$0xff]
    %v7858 = vld [vmem:[%s5 + $0x40] sm:$0xff]
    %v7859 = vld [vmem:[%s5 + $0x48] sm:$0xff]
    %v7860 = vld [vmem:[%s5 + $0x50] sm:$0xff]
    %v7861 = vld [vmem:[%s5 + $0x58] sm:$0xff]
    %v7862 = vld [vmem:[%s5 + $0x60] sm:$0xff]
    %v7863 = vld [vmem:[%s5 + $0x68] sm:$0xff]
    %v7864 = vld [vmem:[%s5 + $0x70] sm:$0xff]
    %v7865 = vld [vmem:[%s5 + $0x78] sm:$0xff]
    %v7867 = vsel %vm3587, %v7857, 0
    %7869 = vmatprep.subr.mxu0 0.0
    %7870 = vmatpush1.msra.mxu0 %v7858
    %7871 = vmatprep.subr.mxu0 0.0
    %7872 = vmatpush1.msra.mxu0 %v7859
    %7873 = vmatprep.subr.mxu0 0.0
    %7874 = vmatpush1.msra.mxu0 %v7860
    %7875 = vmatprep.subr.mxu0 0.0
    %7876 = vmatpush1.msra.mxu0 %v7861
    %7877 = vmatprep.subr.mxu0 0.0
    %7878 = vmatpush1.msra.mxu0 %v7862
    %7879 = vmatprep.subr.mxu0 0.0
    %7880 = vmatpush1.msra.mxu0 %v7863
    %7881 = vmatprep.subr.mxu0 0.0
    %7882 = vmatpush1.msra.mxu0 %v7864
    %7883 = vmatprep.subr.mxu0 0.0
    %7884 = vmatpush1.msra.mxu0 %v7865
    %7885 = vmatprep.subr.mxu0 0.0
    %7886 = vmatpush1.msra.mxu0 0.0
    %7887 = vmatprep.subr.mxu0 0.0
    %7888 = vmatpush1.msra.mxu0 0.0
    %7889 = vmatprep.subr.mxu0 0.0
    %7890 = vmatpush1.msra.mxu0 0.0
    %7891 = vmatprep.subr.mxu0 0.0
    %7892 = vmatpush1.msra.mxu0 0.0
    %7893 = vmatprep.subr.mxu0 0.0
    %7894 = vmatpush1.msra.mxu0 0.0
    %7895 = vmatprep.subr.mxu0 0.0
    %7896 = vmatpush1.msra.mxu0 0.0
    %7897 = vmatprep.subr.mxu0 0.0
    %7898 = vmatpush1.msra.mxu0 0.0
    %7899 = vmatprep.subr.mxu0 0.0
    %7900 = vmatpush1.msra.mxu0 0.0
    %7901 = vmatprep.subr.mxu0 0.0
    %7902 = vmatpush1.msra.mxu0 0.0
    %7903 = vmatprep.subr.mxu0 0.0
    %7904 = vmatpush1.msra.mxu0 0.0
    %7905 = vmatprep.subr.mxu0 0.0
    %7906 = vmatpush1.msra.mxu0 0.0
    %7907 = vmatprep.subr.mxu0 0.0
    %7908 = vmatpush1.msra.mxu0 0.0
    %7909 = vmatprep.subr.mxu0 0.0
    %7910 = vmatpush1.msra.mxu0 0.0
    %7911 = vmatprep.subr.mxu0 0.0
    %7912 = vmatpush1.msra.mxu0 0.0
    %7913 = vmatprep.subr.mxu0 0.0
    %7914 = vmatpush1.msra.mxu0 0.0
    %7915 = vmatprep.subr.mxu0 0.0
    %7916 = vmatpush1.msra.mxu0 0.0
    %7917 = vmatprep.subr.mxu0 0.0
    %7918 = vmatpush1.msra.mxu0 0.0
    %7919 = vmatprep.subr.mxu0 0.0
    %7920 = vmatpush1.msra.mxu0 0.0
    %7921 = vmatprep.subr.mxu0 0.0
    %7922 = vmatpush1.msra.mxu0 0.0
    %7923 = vmatprep.subr.mxu0 0.0
    %7924 = vmatpush1.msra.mxu0 0.0
    %7925 = vmatprep.subr.mxu0 0.0
    %7926 = vmatpush1.msra.mxu0 0.0
    %7927 = vmatprep.subr.mxu0 0.0
    %7928 = vmatpush1.msra.mxu0 0.0
    %7929 = vmatprep.subr.mxu0 0.0
    %7930 = vmatpush1.msra.mxu0 0.0
    %7931 = vmatprep.subr.mxu0 0.0
    %7932 = vmatpush1.msra.mxu0 0.0
    %7933 = vmatprep.mubr.f32.mxu0 0.0
    %7934 = vmatmul.mubr.f32.gmra.mrb[0].mxu0 %v7867
    %v7935 = vpop.f32.mrb[0].mxu0
    %v7936 = vadd.f32 0.0, %v7935
    %v7937 = vpop.f32.mrb[0].mxu0
    %7938 = vdwg.mxu0
    %v7939 = vadd.f32 %v7855, %v7936
    %s7940 = scalar_lea.vmem [#allocation5], 2
    %v7941 = vld [vmem:[%s7940] ss:$28 sm:$0xff]
    %v7942 = vld [vmem:[%s5 + $0x80] sm:$0xff]
    %v7943 = vld [vmem:[%s5 + $0x88] sm:$0xff]
    %v7944 = vld [vmem:[%s5 + $0x90] sm:$0xff]
    %v7945 = vld [vmem:[%s5 + $0x98] sm:$0xff]
    %v7946 = vld [vmem:[%s5 + $0xa0] sm:$0xff]
    %v7947 = vld [vmem:[%s5 + $0xa8] sm:$0xff]
    %v7948 = vld [vmem:[%s5 + $0xb0] sm:$0xff]
    %v7949 = vld [vmem:[%s5 + $0xb8] sm:$0xff]
    %v7951 = vsel %vm3587, %v7941, 0
    %7953 = vmatprep.subr.mxu0 0.0
    %7954 = vmatpush1.msra.mxu0 %v7942
    %7955 = vmatprep.subr.mxu0 0.0
    %7956 = vmatpush1.msra.mxu0 %v7943
    %7957 = vmatprep.subr.mxu0 0.0
    %7958 = vmatpush1.msra.mxu0 %v7944
    %7959 = vmatprep.subr.mxu0 0.0
    %7960 = vmatpush1.msra.mxu0 %v7945
    %7961 = vmatprep.subr.mxu0 0.0
    %7962 = vmatpush1.msra.mxu0 %v7946
    %7963 = vmatprep.subr.mxu0 0.0
    %7964 = vmatpush1.msra.mxu0 %v7947
    %7965 = vmatprep.subr.mxu0 0.0
    %7966 = vmatpush1.msra.mxu0 %v7948
    %7967 = vmatprep.subr.mxu0 0.0
    %7968 = vmatpush1.msra.mxu0 %v7949
    %7969 = vmatprep.subr.mxu0 0.0
    %7970 = vmatpush1.msra.mxu0 0.0
    %7971 = vmatprep.subr.mxu0 0.0
    %7972 = vmatpush1.msra.mxu0 0.0
    %7973 = vmatprep.subr.mxu0 0.0
    %7974 = vmatpush1.msra.mxu0 0.0
    %7975 = vmatprep.subr.mxu0 0.0
    %7976 = vmatpush1.msra.mxu0 0.0
    %7977 = vmatprep.subr.mxu0 0.0
    %7978 = vmatpush1.msra.mxu0 0.0
    %7979 = vmatprep.subr.mxu0 0.0
    %7980 = vmatpush1.msra.mxu0 0.0
    %7981 = vmatprep.subr.mxu0 0.0
    %7982 = vmatpush1.msra.mxu0 0.0
    %7983 = vmatprep.subr.mxu0 0.0
    %7984 = vmatpush1.msra.mxu0 0.0
    %7985 = vmatprep.subr.mxu0 0.0
    %7986 = vmatpush1.msra.mxu0 0.0
    %7987 = vmatprep.subr.mxu0 0.0
    %7988 = vmatpush1.msra.mxu0 0.0
    %7989 = vmatprep.subr.mxu0 0.0
    %7990 = vmatpush1.msra.mxu0 0.0
    %7991 = vmatprep.subr.mxu0 0.0
    %7992 = vmatpush1.msra.mxu0 0.0
    %7993 = vmatprep.subr.mxu0 0.0
    %7994 = vmatpush1.msra.mxu0 0.0
    %7995 = vmatprep.subr.mxu0 0.0
    %7996 = vmatpush1.msra.mxu0 0.0
    %7997 = vmatprep.subr.mxu0 0.0
    %7998 = vmatpush1.msra.mxu0 0.0
    %7999 = vmatprep.subr.mxu0 0.0
    %8000 = vmatpush1.msra.mxu0 0.0
    %8001 = vmatprep.subr.mxu0 0.0
    %8002 = vmatpush1.msra.mxu0 0.0
    %8003 = vmatprep.subr.mxu0 0.0
    %8004 = vmatpush1.msra.mxu0 0.0
    %8005 = vmatprep.subr.mxu0 0.0
    %8006 = vmatpush1.msra.mxu0 0.0
    %8007 = vmatprep.subr.mxu0 0.0
    %8008 = vmatpush1.msra.mxu0 0.0
    %8009 = vmatprep.subr.mxu0 0.0
    %8010 = vmatpush1.msra.mxu0 0.0
    %8011 = vmatprep.subr.mxu0 0.0
    %8012 = vmatpush1.msra.mxu0 0.0
    %8013 = vmatprep.subr.mxu0 0.0
    %8014 = vmatpush1.msra.mxu0 0.0
    %8015 = vmatprep.subr.mxu0 0.0
    %8016 = vmatpush1.msra.mxu0 0.0
    %8017 = vmatprep.mubr.f32.mxu0 0.0
    %8018 = vmatmul.mubr.f32.gmra.mrb[0].mxu0 %v7951
    %v8019 = vpop.f32.mrb[0].mxu0
    %v8020 = vadd.f32 0.0, %v8019
    %v8021 = vpop.f32.mrb[0].mxu0
    %8022 = vdwg.mxu0
    %v8023 = vadd.f32 %v7939, %v8020
    %s8024 = scalar_lea.vmem [#allocation5], 3
    %v8025 = vld [vmem:[%s8024] ss:$28 sm:$0xff]
    %v8026 = vld [vmem:[%s5 + $0xc0] sm:$0xff]
    %v8027 = vld [vmem:[%s5 + $0xc8] sm:$0xff]
    %v8028 = vld [vmem:[%s5 + $0xd0] sm:$0xff]
    %v8029 = vld [vmem:[%s5 + $0xd8] sm:$0xff]
    %v8030 = vld [vmem:[%s5 + $0xe0] sm:$0xff]
    %v8031 = vld [vmem:[%s5 + $0xe8] sm:$0xff]
    %v8032 = vld [vmem:[%s5 + $0xf0] sm:$0xff]
    %v8033 = vld [vmem:[%s5 + $0xf8] sm:$0xff]
    %v8035 = vsel %vm3587, %v8025, 0
    %8037 = vmatprep.subr.mxu0 0.0
    %8038 = vmatpush1.msra.mxu0 %v8026
    %8039 = vmatprep.subr.mxu0 0.0
    %8040 = vmatpush1.msra.mxu0 %v8027
    %8041 = vmatprep.subr.mxu0 0.0
    %8042 = vmatpush1.msra.mxu0 %v8028
    %8043 = vmatprep.subr.mxu0 0.0
    %8044 = vmatpush1.msra.mxu0 %v8029
    %8045 = vmatprep.subr.mxu0 0.0
    %8046 = vmatpush1.msra.mxu0 %v8030
    %8047 = vmatprep.subr.mxu0 0.0
    %8048 = vmatpush1.msra.mxu0 %v8031
    %8049 = vmatprep.subr.mxu0 0.0
    %8050 = vmatpush1.msra.mxu0 %v8032
    %8051 = vmatprep.subr.mxu0 0.0
    %8052 = vmatpush1.msra.mxu0 %v8033
    %8053 = vmatprep.subr.mxu0 0.0
    %8054 = vmatpush1.msra.mxu0 0.0
    %8055 = vmatprep.subr.mxu0 0.0
    %8056 = vmatpush1.msra.mxu0 0.0
    %8057 = vmatprep.subr.mxu0 0.0
    %8058 = vmatpush1.msra.mxu0 0.0
    %8059 = vmatprep.subr.mxu0 0.0
    %8060 = vmatpush1.msra.mxu0 0.0
    %8061 = vmatprep.subr.mxu0 0.0
    %8062 = vmatpush1.msra.mxu0 0.0
    %8063 = vmatprep.subr.mxu0 0.0
    %8064 = vmatpush1.msra.mxu0 0.0
    %8065 = vmatprep.subr.mxu0 0.0
    %8066 = vmatpush1.msra.mxu0 0.0
    %8067 = vmatprep.subr.mxu0 0.0
    %8068 = vmatpush1.msra.mxu0 0.0
    %8069 = vmatprep.subr.mxu0 0.0
    %8070 = vmatpush1.msra.mxu0 0.0
    %8071 = vmatprep.subr.mxu0 0.0
    %8072 = vmatpush1.msra.mxu0 0.0
    %8073 = vmatprep.subr.mxu0 0.0
    %8074 = vmatpush1.msra.mxu0 0.0
    %8075 = vmatprep.subr.mxu0 0.0
    %8076 = vmatpush1.msra.mxu0 0.0
    %8077 = vmatprep.subr.mxu0 0.0
    %8078 = vmatpush1.msra.mxu0 0.0
    %8079 = vmatprep.subr.mxu0 0.0
    %8080 = vmatpush1.msra.mxu0 0.0
    %8081 = vmatprep.subr.mxu0 0.0
    %8082 = vmatpush1.msra.mxu0 0.0
    %8083 = vmatprep.subr.mxu0 0.0
    %8084 = vmatpush1.msra.mxu0 0.0
    %8085 = vmatprep.subr.mxu0 0.0
    %8086 = vmatpush1.msra.mxu0 0.0
    %8087 = vmatprep.subr.mxu0 0.0
    %8088 = vmatpush1.msra.mxu0 0.0
    %8089 = vmatprep.subr.mxu0 0.0
    %8090 = vmatpush1.msra.mxu0 0.0
    %8091 = vmatprep.subr.mxu0 0.0
    %8092 = vmatpush1.msra.mxu0 0.0
    %8093 = vmatprep.subr.mxu0 0.0
    %8094 = vmatpush1.msra.mxu0 0.0
    %8095 = vmatprep.subr.mxu0 0.0
    %8096 = vmatpush1.msra.mxu0 0.0
    %8097 = vmatprep.subr.mxu0 0.0
    %8098 = vmatpush1.msra.mxu0 0.0
    %8099 = vmatprep.subr.mxu0 0.0
    %8100 = vmatpush1.msra.mxu0 0.0
    %8101 = vmatprep.mubr.f32.mxu0 0.0
    %8102 = vmatmul.mubr.f32.gmra.mrb[0].mxu0 %v8035
    %v8103 = vpop.f32.mrb[0].mxu0
    %v8104 = vadd.f32 0.0, %v8103
    %v8105 = vpop.f32.mrb[0].mxu0
    %8106 = vdwg.mxu0
    %v8107 = vadd.f32 %v8023, %v8104
    %s8108 = scalar_lea.vmem [#allocation5], 4
    %v8109 = vld [vmem:[%s8108] ss:$28 sm:$0xff]
    %v8110 = vld [vmem:[%s5 + $0x100] sm:$0xff]
    %v8111 = vld [vmem:[%s5 + $0x108] sm:$0xff]
    %v8112 = vld [vmem:[%s5 + $0x110] sm:$0xff]
    %v8113 = vld [vmem:[%s5 + $0x118] sm:$0xff]
    %v8114 = vld [vmem:[%s5 + $0x120] sm:$0xff]
    %v8115 = vld [vmem:[%s5 + $0x128] sm:$0xff]
    %v8116 = vld [vmem:[%s5 + $0x130] sm:$0xff]
    %v8117 = vld [vmem:[%s5 + $0x138] sm:$0xff]
    %v8119 = vsel %vm3587, %v8109, 0
    %8121 = vmatprep.subr.mxu0 0.0
    %8122 = vmatpush1.msra.mxu0 %v8110
    %8123 = vmatprep.subr.mxu0 0.0
    %8124 = vmatpush1.msra.mxu0 %v8111
    %8125 = vmatprep.subr.mxu0 0.0
    %8126 = vmatpush1.msra.mxu0 %v8112
    %8127 = vmatprep.subr.mxu0 0.0
    %8128 = vmatpush1.msra.mxu0 %v8113
    %8129 = vmatprep.subr.mxu0 0.0
    %8130 = vmatpush1.msra.mxu0 %v8114
    %8131 = vmatprep.subr.mxu0 0.0
    %8132 = vmatpush1.msra.mxu0 %v8115
    %8133 = vmatprep.subr.mxu0 0.0
    %8134 = vmatpush1.msra.mxu0 %v8116
    %8135 = vmatprep.subr.mxu0 0.0
    %8136 = vmatpush1.msra.mxu0 %v8117
    %8137 = vmatprep.subr.mxu0 0.0
    %8138 = vmatpush1.msra.mxu0 0.0
    %8139 = vmatprep.subr.mxu0 0.0
    %8140 = vmatpush1.msra.mxu0 0.0
    %8141 = vmatprep.subr.mxu0 0.0
    %8142 = vmatpush1.msra.mxu0 0.0
    %8143 = vmatprep.subr.mxu0 0.0
    %8144 = vmatpush1.msra.mxu0 0.0
    %8145 = vmatprep.subr.mxu0 0.0
    %8146 = vmatpush1.msra.mxu0 0.0
    %8147 = vmatprep.subr.mxu0 0.0
    %8148 = vmatpush1.msra.mxu0 0.0
    %8149 = vmatprep.subr.mxu0 0.0
    %8150 = vmatpush1.msra.mxu0 0.0
    %8151 = vmatprep.subr.mxu0 0.0
    %8152 = vmatpush1.msra.mxu0 0.0
    %8153 = vmatprep.subr.mxu0 0.0
    %8154 = vmatpush1.msra.mxu0 0.0
    %8155 = vmatprep.subr.mxu0 0.0
    %8156 = vmatpush1.msra.mxu0 0.0
    %8157 = vmatprep.subr.mxu0 0.0
    %8158 = vmatpush1.msra.mxu0 0.0
    %8159 = vmatprep.subr.mxu0 0.0
    %8160 = vmatpush1.msra.mxu0 0.0
    %8161 = vmatprep.subr.mxu0 0.0
    %8162 = vmatpush1.msra.mxu0 0.0
    %8163 = vmatprep.subr.mxu0 0.0
    %8164 = vmatpush1.msra.mxu0 0.0
    %8165 = vmatprep.subr.mxu0 0.0
    %8166 = vmatpush1.msra.mxu0 0.0
    %8167 = vmatprep.subr.mxu0 0.0
    %8168 = vmatpush1.msra.mxu0 0.0
    %8169 = vmatprep.subr.mxu0 0.0
    %8170 = vmatpush1.msra.mxu0 0.0
    %8171 = vmatprep.subr.mxu0 0.0
    %8172 = vmatpush1.msra.mxu0 0.0
    %8173 = vmatprep.subr.mxu0 0.0
    %8174 = vmatpush1.msra.mxu0 0.0
    %8175 = vmatprep.subr.mxu0 0.0
    %8176 = vmatpush1.msra.mxu0 0.0
    %8177 = vmatprep.subr.mxu0 0.0
    %8178 = vmatpush1.msra.mxu0 0.0
    %8179 = vmatprep.subr.mxu0 0.0
    %8180 = vmatpush1.msra.mxu0 0.0
    %8181 = vmatprep.subr.mxu0 0.0
    %8182 = vmatpush1.msra.mxu0 0.0
    %8183 = vmatprep.subr.mxu0 0.0
    %8184 = vmatpush1.msra.mxu0 0.0
    %8185 = vmatprep.mubr.f32.mxu0 0.0
    %8186 = vmatmul.mubr.f32.gmra.mrb[0].mxu0 %v8119
    %v8187 = vpop.f32.mrb[0].mxu0
    %v8188 = vadd.f32 0.0, %v8187
    %v8189 = vpop.f32.mrb[0].mxu0
    %8190 = vdwg.mxu0
    %v8191 = vadd.f32 %v8107, %v8188
    %s8192 = scalar_lea.vmem [#allocation5], 5
    %v8193 = vld [vmem:[%s8192] ss:$28 sm:$0xff]
    %v8194 = vld [vmem:[%s5 + $0x140] sm:$0xff]
    %v8195 = vld [vmem:[%s5 + $0x148] sm:$0xff]
    %v8196 = vld [vmem:[%s5 + $0x150] sm:$0xff]
    %v8197 = vld [vmem:[%s5 + $0x158] sm:$0xff]
    %v8198 = vld [vmem:[%s5 + $0x160] sm:$0xff]
    %v8199 = vld [vmem:[%s5 + $0x168] sm:$0xff]
    %v8200 = vld [vmem:[%s5 + $0x170] sm:$0xff]
    %v8201 = vld [vmem:[%s5 + $0x178] sm:$0xff]
    %v8203 = vsel %vm3587, %v8193, 0
    %8205 = vmatprep.subr.mxu0 0.0
    %8206 = vmatpush1.msra.mxu0 %v8194
    %8207 = vmatprep.subr.mxu0 0.0
    %8208 = vmatpush1.msra.mxu0 %v8195
    %8209 = vmatprep.subr.mxu0 0.0
    %8210 = vmatpush1.msra.mxu0 %v8196
    %8211 = vmatprep.subr.mxu0 0.0
    %8212 = vmatpush1.msra.mxu0 %v8197
    %8213 = vmatprep.subr.mxu0 0.0
    %8214 = vmatpush1.msra.mxu0 %v8198
    %8215 = vmatprep.subr.mxu0 0.0
    %8216 = vmatpush1.msra.mxu0 %v8199
    %8217 = vmatprep.subr.mxu0 0.0
    %8218 = vmatpush1.msra.mxu0 %v8200
    %8219 = vmatprep.subr.mxu0 0.0
    %8220 = vmatpush1.msra.mxu0 %v8201
    %8221 = vmatprep.subr.mxu0 0.0
    %8222 = vmatpush1.msra.mxu0 0.0
    %8223 = vmatprep.subr.mxu0 0.0
    %8224 = vmatpush1.msra.mxu0 0.0
    %8225 = vmatprep.subr.mxu0 0.0
    %8226 = vmatpush1.msra.mxu0 0.0
    %8227 = vmatprep.subr.mxu0 0.0
    %8228 = vmatpush1.msra.mxu0 0.0
    %8229 = vmatprep.subr.mxu0 0.0
    %8230 = vmatpush1.msra.mxu0 0.0
    %8231 = vmatprep.subr.mxu0 0.0
    %8232 = vmatpush1.msra.mxu0 0.0
    %8233 = vmatprep.subr.mxu0 0.0
    %8234 = vmatpush1.msra.mxu0 0.0
    %8235 = vmatprep.subr.mxu0 0.0
    %8236 = vmatpush1.msra.mxu0 0.0
    %8237 = vmatprep.subr.mxu0 0.0
    %8238 = vmatpush1.msra.mxu0 0.0
    %8239 = vmatprep.subr.mxu0 0.0
    %8240 = vmatpush1.msra.mxu0 0.0
    %8241 = vmatprep.subr.mxu0 0.0
    %8242 = vmatpush1.msra.mxu0 0.0
    %8243 = vmatprep.subr.mxu0 0.0
    %8244 = vmatpush1.msra.mxu0 0.0
    %8245 = vmatprep.subr.mxu0 0.0
    %8246 = vmatpush1.msra.mxu0 0.0
    %8247 = vmatprep.subr.mxu0 0.0
    %8248 = vmatpush1.msra.mxu0 0.0
    %8249 = vmatprep.subr.mxu0 0.0
    %8250 = vmatpush1.msra.mxu0 0.0
    %8251 = vmatprep.subr.mxu0 0.0
    %8252 = vmatpush1.msra.mxu0 0.0
    %8253 = vmatprep.subr.mxu0 0.0
    %8254 = vmatpush1.msra.mxu0 0.0
    %8255 = vmatprep.subr.mxu0 0.0
    %8256 = vmatpush1.msra.mxu0 0.0
    %8257 = vmatprep.subr.mxu0 0.0
    %8258 = vmatpush1.msra.mxu0 0.0
    %8259 = vmatprep.subr.mxu0 0.0
    %8260 = vmatpush1.msra.mxu0 0.0
    %8261 = vmatprep.subr.mxu0 0.0
    %8262 = vmatpush1.msra.mxu0 0.0
    %8263 = vmatprep.subr.mxu0 0.0
    %8264 = vmatpush1.msra.mxu0 0.0
    %8265 = vmatprep.subr.mxu0 0.0
    %8266 = vmatpush1.msra.mxu0 0.0
    %8267 = vmatprep.subr.mxu0 0.0
    %8268 = vmatpush1.msra.mxu0 0.0
    %8269 = vmatprep.mubr.f32.mxu0 0.0
    %8270 = vmatmul.mubr.f32.gmra.mrb[0].mxu0 %v8203
    %v8271 = vpop.f32.mrb[0].mxu0
    %v8272 = vadd.f32 0.0, %v8271
    %v8273 = vpop.f32.mrb[0].mxu0
    %8274 = vdwg.mxu0
    %v8275 = vadd.f32 %v8191, %v8272
    %s8276 = scalar_lea.vmem [#allocation5], 6
    %v8277 = vld [vmem:[%s8276] ss:$28 sm:$0xff]
    %v8278 = vld [vmem:[%s5 + $0x180] sm:$0xff]
    %v8279 = vld [vmem:[%s5 + $0x188] sm:$0xff]
    %v8280 = vld [vmem:[%s5 + $0x190] sm:$0xff]
    %v8281 = vld [vmem:[%s5 + $0x198] sm:$0xff]
    %v8282 = vld [vmem:[%s5 + $0x1a0] sm:$0xff]
    %v8283 = vld [vmem:[%s5 + $0x1a8] sm:$0xff]
    %v8284 = vld [vmem:[%s5 + $0x1b0] sm:$0xff]
    %v8285 = vld [vmem:[%s5 + $0x1b8] sm:$0xff]
    %v8287 = vsel %vm3587, %v8277, 0
    %8289 = vmatprep.subr.mxu0 0.0
    %8290 = vmatpush1.msra.mxu0 %v8278
    %8291 = vmatprep.subr.mxu0 0.0
    %8292 = vmatpush1.msra.mxu0 %v8279
    %8293 = vmatprep.subr.mxu0 0.0
    %8294 = vmatpush1.msra.mxu0 %v8280
    %8295 = vmatprep.subr.mxu0 0.0
    %8296 = vmatpush1.msra.mxu0 %v8281
    %8297 = vmatprep.subr.mxu0 0.0
    %8298 = vmatpush1.msra.mxu0 %v8282
    %8299 = vmatprep.subr.mxu0 0.0
    %8300 = vmatpush1.msra.mxu0 %v8283
    %8301 = vmatprep.subr.mxu0 0.0
    %8302 = vmatpush1.msra.mxu0 %v8284
    %8303 = vmatprep.subr.mxu0 0.0
    %8304 = vmatpush1.msra.mxu0 %v8285
    %8305 = vmatprep.subr.mxu0 0.0
    %8306 = vmatpush1.msra.mxu0 0.0
    %8307 = vmatprep.subr.mxu0 0.0
    %8308 = vmatpush1.msra.mxu0 0.0
    %8309 = vmatprep.subr.mxu0 0.0
    %8310 = vmatpush1.msra.mxu0 0.0
    %8311 = vmatprep.subr.mxu0 0.0
    %8312 = vmatpush1.msra.mxu0 0.0
    %8313 = vmatprep.subr.mxu0 0.0
    %8314 = vmatpush1.msra.mxu0 0.0
    %8315 = vmatprep.subr.mxu0 0.0
    %8316 = vmatpush1.msra.mxu0 0.0
    %8317 = vmatprep.subr.mxu0 0.0
    %8318 = vmatpush1.msra.mxu0 0.0
    %8319 = vmatprep.subr.mxu0 0.0
    %8320 = vmatpush1.msra.mxu0 0.0
    %8321 = vmatprep.subr.mxu0 0.0
    %8322 = vmatpush1.msra.mxu0 0.0
    %8323 = vmatprep.subr.mxu0 0.0
    %8324 = vmatpush1.msra.mxu0 0.0
    %8325 = vmatprep.subr.mxu0 0.0
    %8326 = vmatpush1.msra.mxu0 0.0
    %8327 = vmatprep.subr.mxu0 0.0
    %8328 = vmatpush1.msra.mxu0 0.0
    %8329 = vmatprep.subr.mxu0 0.0
    %8330 = vmatpush1.msra.mxu0 0.0
    %8331 = vmatprep.subr.mxu0 0.0
    %8332 = vmatpush1.msra.mxu0 0.0
    %8333 = vmatprep.subr.mxu0 0.0
    %8334 = vmatpush1.msra.mxu0 0.0
    %8335 = vmatprep.subr.mxu0 0.0
    %8336 = vmatpush1.msra.mxu0 0.0
    %8337 = vmatprep.subr.mxu0 0.0
    %8338 = vmatpush1.msra.mxu0 0.0
    %8339 = vmatprep.subr.mxu0 0.0
    %8340 = vmatpush1.msra.mxu0 0.0
    %8341 = vmatprep.subr.mxu0 0.0
    %8342 = vmatpush1.msra.mxu0 0.0
    %8343 = vmatprep.subr.mxu0 0.0
    %8344 = vmatpush1.msra.mxu0 0.0
    %8345 = vmatprep.subr.mxu0 0.0
    %8346 = vmatpush1.msra.mxu0 0.0
    %8347 = vmatprep.subr.mxu0 0.0
    %8348 = vmatpush1.msra.mxu0 0.0
    %8349 = vmatprep.subr.mxu0 0.0
    %8350 = vmatpush1.msra.mxu0 0.0
    %8351 = vmatprep.subr.mxu0 0.0
    %8352 = vmatpush1.msra.mxu0 0.0
    %8353 = vmatprep.mubr.f32.mxu0 0.0
    %8354 = vmatmul.mubr.f32.gmra.mrb[0].mxu0 %v8287
    %v8355 = vpop.f32.mrb[0].mxu0
    %v8356 = vadd.f32 0.0, %v8355
    %v8357 = vpop.f32.mrb[0].mxu0
    %8358 = vdwg.mxu0
    %v8359 = vadd.f32 %v8275, %v8356
    %s8360 = scalar_lea.vmem [#allocation5], 7
    %v8361 = vld [vmem:[%s8360] ss:$28 sm:$0xff]
    %v8362 = vld [vmem:[%s5 + $0x1c0] sm:$0xff]
    %v8363 = vld [vmem:[%s5 + $0x1c8] sm:$0xff]
    %v8364 = vld [vmem:[%s5 + $0x1d0] sm:$0xff]
    %v8365 = vld [vmem:[%s5 + $0x1d8] sm:$0xff]
    %v8366 = vld [vmem:[%s5 + $0x1e0] sm:$0xff]
    %v8367 = vld [vmem:[%s5 + $0x1e8] sm:$0xff]
    %v8368 = vld [vmem:[%s5 + $0x1f0] sm:$0xff]
    %v8369 = vld [vmem:[%s5 + $0x1f8] sm:$0xff]
    %v8371 = vsel %vm3587, %v8361, 0
    %8373 = vmatprep.subr.mxu0 0.0
    %8374 = vmatpush1.msra.mxu0 %v8362
    %8375 = vmatprep.subr.mxu0 0.0
    %8376 = vmatpush1.msra.mxu0 %v8363
    %8377 = vmatprep.subr.mxu0 0.0
    %8378 = vmatpush1.msra.mxu0 %v8364
    %8379 = vmatprep.subr.mxu0 0.0
    %8380 = vmatpush1.msra.mxu0 %v8365
    %8381 = vmatprep.subr.mxu0 0.0
    %8382 = vmatpush1.msra.mxu0 %v8366
    %8383 = vmatprep.subr.mxu0 0.0
    %8384 = vmatpush1.msra.mxu0 %v8367
    %8385 = vmatprep.subr.mxu0 0.0
    %8386 = vmatpush1.msra.mxu0 %v8368
    %8387 = vmatprep.subr.mxu0 0.0
    %8388 = vmatpush1.msra.mxu0 %v8369
    %8389 = vmatprep.subr.mxu0 0.0
    %8390 = vmatpush1.msra.mxu0 0.0
    %8391 = vmatprep.subr.mxu0 0.0
    %8392 = vmatpush1.msra.mxu0 0.0
    %8393 = vmatprep.subr.mxu0 0.0
    %8394 = vmatpush1.msra.mxu0 0.0
    %8395 = vmatprep.subr.mxu0 0.0
    %8396 = vmatpush1.msra.mxu0 0.0
    %8397 = vmatprep.subr.mxu0 0.0
    %8398 = vmatpush1.msra.mxu0 0.0
    %8399 = vmatprep.subr.mxu0 0.0
    %8400 = vmatpush1.msra.mxu0 0.0
    %8401 = vmatprep.subr.mxu0 0.0
    %8402 = vmatpush1.msra.mxu0 0.0
    %8403 = vmatprep.subr.mxu0 0.0
    %8404 = vmatpush1.msra.mxu0 0.0
    %8405 = vmatprep.subr.mxu0 0.0
    %8406 = vmatpush1.msra.mxu0 0.0
    %8407 = vmatprep.subr.mxu0 0.0
    %8408 = vmatpush1.msra.mxu0 0.0
    %8409 = vmatprep.subr.mxu0 0.0
    %8410 = vmatpush1.msra.mxu0 0.0
    %8411 = vmatprep.subr.mxu0 0.0
    %8412 = vmatpush1.msra.mxu0 0.0
    %8413 = vmatprep.subr.mxu0 0.0
    %8414 = vmatpush1.msra.mxu0 0.0
    %8415 = vmatprep.subr.mxu0 0.0
    %8416 = vmatpush1.msra.mxu0 0.0
    %8417 = vmatprep.subr.mxu0 0.0
    %8418 = vmatpush1.msra.mxu0 0.0
    %8419 = vmatprep.subr.mxu0 0.0
    %8420 = vmatpush1.msra.mxu0 0.0
    %8421 = vmatprep.subr.mxu0 0.0
    %8422 = vmatpush1.msra.mxu0 0.0
    %8423 = vmatprep.subr.mxu0 0.0
    %8424 = vmatpush1.msra.mxu0 0.0
    %8425 = vmatprep.subr.mxu0 0.0
    %8426 = vmatpush1.msra.mxu0 0.0
    %8427 = vmatprep.subr.mxu0 0.0
    %8428 = vmatpush1.msra.mxu0 0.0
    %8429 = vmatprep.subr.mxu0 0.0
    %8430 = vmatpush1.msra.mxu0 0.0
    %8431 = vmatprep.subr.mxu0 0.0
    %8432 = vmatpush1.msra.mxu0 0.0
    %8433 = vmatprep.subr.mxu0 0.0
    %8434 = vmatpush1.msra.mxu0 0.0
    %8435 = vmatprep.subr.mxu0 0.0
    %8436 = vmatpush1.msra.mxu0 0.0
    %8437 = vmatprep.mubr.f32.mxu0 0.0
    %8438 = vmatmul.mubr.f32.gmra.mrb[0].mxu0 %v8371
    %v8439 = vpop.f32.mrb[0].mxu0
    %v8440 = vadd.f32 0.0, %v8439
    %v8441 = vpop.f32.mrb[0].mxu0
    %8442 = vdwg.mxu0
    %v8443 = vadd.f32 %v8359, %v8440
    %s8444 = scalar_lea.vmem [#allocation5], 8
    %v8445 = vld [vmem:[%s8444] ss:$28 sm:$0xff]
    %v8446 = vld [vmem:[%s5 + $0x200] sm:$0xff]
    %v8447 = vld [vmem:[%s5 + $0x208] sm:$0xff]
    %v8448 = vld [vmem:[%s5 + $0x210] sm:$0xff]
    %v8449 = vld [vmem:[%s5 + $0x218] sm:$0xff]
    %v8450 = vld [vmem:[%s5 + $0x220] sm:$0xff]
    %v8451 = vld [vmem:[%s5 + $0x228] sm:$0xff]
    %v8452 = vld [vmem:[%s5 + $0x230] sm:$0xff]
    %v8453 = vld [vmem:[%s5 + $0x238] sm:$0xff]
    %v8455 = vsel %vm3587, %v8445, 0
    %8457 = vmatprep.subr.mxu0 0.0
    %8458 = vmatpush1.msra.mxu0 %v8446
    %8459 = vmatprep.subr.mxu0 0.0
    %8460 = vmatpush1.msra.mxu0 %v8447
    %8461 = vmatprep.subr.mxu0 0.0
    %8462 = vmatpush1.msra.mxu0 %v8448
    %8463 = vmatprep.subr.mxu0 0.0
    %8464 = vmatpush1.msra.mxu0 %v8449
    %8465 = vmatprep.subr.mxu0 0.0
    %8466 = vmatpush1.msra.mxu0 %v8450
    %8467 = vmatprep.subr.mxu0 0.0
    %8468 = vmatpush1.msra.mxu0 %v8451
    %8469 = vmatprep.subr.mxu0 0.0
    %8470 = vmatpush1.msra.mxu0 %v8452
    %8471 = vmatprep.subr.mxu0 0.0
    %8472 = vmatpush1.msra.mxu0 %v8453
    %8473 = vmatprep.subr.mxu0 0.0
    %8474 = vmatpush1.msra.mxu0 0.0
    %8475 = vmatprep.subr.mxu0 0.0
    %8476 = vmatpush1.msra.mxu0 0.0
    %8477 = vmatprep.subr.mxu0 0.0
    %8478 = vmatpush1.msra.mxu0 0.0
    %8479 = vmatprep.subr.mxu0 0.0
    %8480 = vmatpush1.msra.mxu0 0.0
    %8481 = vmatprep.subr.mxu0 0.0
    %8482 = vmatpush1.msra.mxu0 0.0
    %8483 = vmatprep.subr.mxu0 0.0
    %8484 = vmatpush1.msra.mxu0 0.0
    %8485 = vmatprep.subr.mxu0 0.0
    %8486 = vmatpush1.msra.mxu0 0.0
    %8487 = vmatprep.subr.mxu0 0.0
    %8488 = vmatpush1.msra.mxu0 0.0
    %8489 = vmatprep.subr.mxu0 0.0
    %8490 = vmatpush1.msra.mxu0 0.0
    %8491 = vmatprep.subr.mxu0 0.0
    %8492 = vmatpush1.msra.mxu0 0.0
    %8493 = vmatprep.subr.mxu0 0.0
    %8494 = vmatpush1.msra.mxu0 0.0
    %8495 = vmatprep.subr.mxu0 0.0
    %8496 = vmatpush1.msra.mxu0 0.0
    %8497 = vmatprep.subr.mxu0 0.0
    %8498 = vmatpush1.msra.mxu0 0.0
    %8499 = vmatprep.subr.mxu0 0.0
    %8500 = vmatpush1.msra.mxu0 0.0
    %8501 = vmatprep.subr.mxu0 0.0
    %8502 = vmatpush1.msra.mxu0 0.0
    %8503 = vmatprep.subr.mxu0 0.0
    %8504 = vmatpush1.msra.mxu0 0.0
    %8505 = vmatprep.subr.mxu0 0.0
    %8506 = vmatpush1.msra.mxu0 0.0
    %8507 = vmatprep.subr.mxu0 0.0
    %8508 = vmatpush1.msra.mxu0 0.0
    %8509 = vmatprep.subr.mxu0 0.0
    %8510 = vmatpush1.msra.mxu0 0.0
    %8511 = vmatprep.subr.mxu0 0.0
    %8512 = vmatpush1.msra.mxu0 0.0
    %8513 = vmatprep.subr.mxu0 0.0
    %8514 = vmatpush1.msra.mxu0 0.0
    %8515 = vmatprep.subr.mxu0 0.0
    %8516 = vmatpush1.msra.mxu0 0.0
    %8517 = vmatprep.subr.mxu0 0.0
    %8518 = vmatpush1.msra.mxu0 0.0
    %8519 = vmatprep.subr.mxu0 0.0
    %8520 = vmatpush1.msra.mxu0 0.0
    %8521 = vmatprep.mubr.f32.mxu0 0.0
    %8522 = vmatmul.mubr.f32.gmra.mrb[0].mxu0 %v8455
    %v8523 = vpop.f32.mrb[0].mxu0
    %v8524 = vadd.f32 0.0, %v8523
    %v8525 = vpop.f32.mrb[0].mxu0
    %8526 = vdwg.mxu0
    %v8527 = vadd.f32 %v8443, %v8524
    %s8528 = scalar_lea.vmem [#allocation5], 9
    %v8529 = vld [vmem:[%s8528] ss:$28 sm:$0xff]
    %v8530 = vld [vmem:[%s5 + $0x240] sm:$0xff]
    %v8531 = vld [vmem:[%s5 + $0x248] sm:$0xff]
    %v8532 = vld [vmem:[%s5 + $0x250] sm:$0xff]
    %v8533 = vld [vmem:[%s5 + $0x258] sm:$0xff]
    %v8534 = vld [vmem:[%s5 + $0x260] sm:$0xff]
    %v8535 = vld [vmem:[%s5 + $0x268] sm:$0xff]
    %v8536 = vld [vmem:[%s5 + $0x270] sm:$0xff]
    %v8537 = vld [vmem:[%s5 + $0x278] sm:$0xff]
    %v8539 = vsel %vm3587, %v8529, 0
    %8541 = vmatprep.subr.mxu0 0.0
    %8542 = vmatpush1.msra.mxu0 %v8530
    %8543 = vmatprep.subr.mxu0 0.0
    %8544 = vmatpush1.msra.mxu0 %v8531
    %8545 = vmatprep.subr.mxu0 0.0
    %8546 = vmatpush1.msra.mxu0 %v8532
    %8547 = vmatprep.subr.mxu0 0.0
    %8548 = vmatpush1.msra.mxu0 %v8533
    %8549 = vmatprep.subr.mxu0 0.0
    %8550 = vmatpush1.msra.mxu0 %v8534
    %8551 = vmatprep.subr.mxu0 0.0
    %8552 = vmatpush1.msra.mxu0 %v8535
    %8553 = vmatprep.subr.mxu0 0.0
    %8554 = vmatpush1.msra.mxu0 %v8536
    %8555 = vmatprep.subr.mxu0 0.0
    %8556 = vmatpush1.msra.mxu0 %v8537
    %8557 = vmatprep.subr.mxu0 0.0
    %8558 = vmatpush1.msra.mxu0 0.0
    %8559 = vmatprep.subr.mxu0 0.0
    %8560 = vmatpush1.msra.mxu0 0.0
    %8561 = vmatprep.subr.mxu0 0.0
    %8562 = vmatpush1.msra.mxu0 0.0
    %8563 = vmatprep.subr.mxu0 0.0
    %8564 = vmatpush1.msra.mxu0 0.0
    %8565 = vmatprep.subr.mxu0 0.0
    %8566 = vmatpush1.msra.mxu0 0.0
    %8567 = vmatprep.subr.mxu0 0.0
    %8568 = vmatpush1.msra.mxu0 0.0
    %8569 = vmatprep.subr.mxu0 0.0
    %8570 = vmatpush1.msra.mxu0 0.0
    %8571 = vmatprep.subr.mxu0 0.0
    %8572 = vmatpush1.msra.mxu0 0.0
    %8573 = vmatprep.subr.mxu0 0.0
    %8574 = vmatpush1.msra.mxu0 0.0
    %8575 = vmatprep.subr.mxu0 0.0
    %8576 = vmatpush1.msra.mxu0 0.0
    %8577 = vmatprep.subr.mxu0 0.0
    %8578 = vmatpush1.msra.mxu0 0.0
    %8579 = vmatprep.subr.mxu0 0.0
    %8580 = vmatpush1.msra.mxu0 0.0
    %8581 = vmatprep.subr.mxu0 0.0
    %8582 = vmatpush1.msra.mxu0 0.0
    %8583 = vmatprep.subr.mxu0 0.0
    %8584 = vmatpush1.msra.mxu0 0.0
    %8585 = vmatprep.subr.mxu0 0.0
    %8586 = vmatpush1.msra.mxu0 0.0
    %8587 = vmatprep.subr.mxu0 0.0
    %8588 = vmatpush1.msra.mxu0 0.0
    %8589 = vmatprep.subr.mxu0 0.0
    %8590 = vmatpush1.msra.mxu0 0.0
    %8591 = vmatprep.subr.mxu0 0.0
    %8592 = vmatpush1.msra.mxu0 0.0
    %8593 = vmatprep.subr.mxu0 0.0
    %8594 = vmatpush1.msra.mxu0 0.0
    %8595 = vmatprep.subr.mxu0 0.0
    %8596 = vmatpush1.msra.mxu0 0.0
    %8597 = vmatprep.subr.mxu0 0.0
    %8598 = vmatpush1.msra.mxu0 0.0
    %8599 = vmatprep.subr.mxu0 0.0
    %8600 = vmatpush1.msra.mxu0 0.0
    %8601 = vmatprep.subr.mxu0 0.0
    %8602 = vmatpush1.msra.mxu0 0.0
    %8603 = vmatprep.subr.mxu0 0.0
    %8604 = vmatpush1.msra.mxu0 0.0
    %8605 = vmatprep.mubr.f32.mxu0 0.0
    %8606 = vmatmul.mubr.f32.gmra.mrb[0].mxu0 %v8539
    %v8607 = vpop.f32.mrb[0].mxu0
    %v8608 = vadd.f32 0.0, %v8607
    %v8609 = vpop.f32.mrb[0].mxu0
    %8610 = vdwg.mxu0
    %v8611 = vadd.f32 %v8527, %v8608
    %s8612 = scalar_lea.vmem [#allocation5], 10
    %v8613 = vld [vmem:[%s8612] ss:$28 sm:$0xff]
    %v8614 = vld [vmem:[%s5 + $0x280] sm:$0xff]
    %v8615 = vld [vmem:[%s5 + $0x288] sm:$0xff]
    %v8616 = vld [vmem:[%s5 + $0x290] sm:$0xff]
    %v8617 = vld [vmem:[%s5 + $0x298] sm:$0xff]
    %v8618 = vld [vmem:[%s5 + $0x2a0] sm:$0xff]
    %v8619 = vld [vmem:[%s5 + $0x2a8] sm:$0xff]
    %v8620 = vld [vmem:[%s5 + $0x2b0] sm:$0xff]
    %v8621 = vld [vmem:[%s5 + $0x2b8] sm:$0xff]
    %v8623 = vsel %vm3587, %v8613, 0
    %8625 = vmatprep.subr.mxu0 0.0
    %8626 = vmatpush1.msra.mxu0 %v8614
    %8627 = vmatprep.subr.mxu0 0.0
    %8628 = vmatpush1.msra.mxu0 %v8615
    %8629 = vmatprep.subr.mxu0 0.0
    %8630 = vmatpush1.msra.mxu0 %v8616
    %8631 = vmatprep.subr.mxu0 0.0
    %8632 = vmatpush1.msra.mxu0 %v8617
    %8633 = vmatprep.subr.mxu0 0.0
    %8634 = vmatpush1.msra.mxu0 %v8618
    %8635 = vmatprep.subr.mxu0 0.0
    %8636 = vmatpush1.msra.mxu0 %v8619
    %8637 = vmatprep.subr.mxu0 0.0
    %8638 = vmatpush1.msra.mxu0 %v8620
    %8639 = vmatprep.subr.mxu0 0.0
    %8640 = vmatpush1.msra.mxu0 %v8621
    %8641 = vmatprep.subr.mxu0 0.0
    %8642 = vmatpush1.msra.mxu0 0.0
    %8643 = vmatprep.subr.mxu0 0.0
    %8644 = vmatpush1.msra.mxu0 0.0
    %8645 = vmatprep.subr.mxu0 0.0
    %8646 = vmatpush1.msra.mxu0 0.0
    %8647 = vmatprep.subr.mxu0 0.0
    %8648 = vmatpush1.msra.mxu0 0.0
    %8649 = vmatprep.subr.mxu0 0.0
    %8650 = vmatpush1.msra.mxu0 0.0
    %8651 = vmatprep.subr.mxu0 0.0
    %8652 = vmatpush1.msra.mxu0 0.0
    %8653 = vmatprep.subr.mxu0 0.0
    %8654 = vmatpush1.msra.mxu0 0.0
    %8655 = vmatprep.subr.mxu0 0.0
    %8656 = vmatpush1.msra.mxu0 0.0
    %8657 = vmatprep.subr.mxu0 0.0
    %8658 = vmatpush1.msra.mxu0 0.0
    %8659 = vmatprep.subr.mxu0 0.0
    %8660 = vmatpush1.msra.mxu0 0.0
    %8661 = vmatprep.subr.mxu0 0.0
    %8662 = vmatpush1.msra.mxu0 0.0
    %8663 = vmatprep.subr.mxu0 0.0
    %8664 = vmatpush1.msra.mxu0 0.0
    %8665 = vmatprep.subr.mxu0 0.0
    %8666 = vmatpush1.msra.mxu0 0.0
    %8667 = vmatprep.subr.mxu0 0.0
    %8668 = vmatpush1.msra.mxu0 0.0
    %8669 = vmatprep.subr.mxu0 0.0
    %8670 = vmatpush1.msra.mxu0 0.0
    %8671 = vmatprep.subr.mxu0 0.0
    %8672 = vmatpush1.msra.mxu0 0.0
    %8673 = vmatprep.subr.mxu0 0.0
    %8674 = vmatpush1.msra.mxu0 0.0
    %8675 = vmatprep.subr.mxu0 0.0
    %8676 = vmatpush1.msra.mxu0 0.0
    %8677 = vmatprep.subr.mxu0 0.0
    %8678 = vmatpush1.msra.mxu0 0.0
    %8679 = vmatprep.subr.mxu0 0.0
    %8680 = vmatpush1.msra.mxu0 0.0
    %8681 = vmatprep.subr.mxu0 0.0
    %8682 = vmatpush1.msra.mxu0 0.0
    %8683 = vmatprep.subr.mxu0 0.0
    %8684 = vmatpush1.msra.mxu0 0.0
    %8685 = vmatprep.subr.mxu0 0.0
    %8686 = vmatpush1.msra.mxu0 0.0
    %8687 = vmatprep.subr.mxu0 0.0
    %8688 = vmatpush1.msra.mxu0 0.0
    %8689 = vmatprep.mubr.f32.mxu0 0.0
    %8690 = vmatmul.mubr.f32.gmra.mrb[0].mxu0 %v8623
    %v8691 = vpop.f32.mrb[0].mxu0
    %v8692 = vadd.f32 0.0, %v8691
    %v8693 = vpop.f32.mrb[0].mxu0
    %8694 = vdwg.mxu0
    %v8695 = vadd.f32 %v8611, %v8692
    %s8696 = scalar_lea.vmem [#allocation5], 11
    %v8697 = vld [vmem:[%s8696] ss:$28 sm:$0xff]
    %v8698 = vld [vmem:[%s5 + $0x2c0] sm:$0xff]
    %v8699 = vld [vmem:[%s5 + $0x2c8] sm:$0xff]
    %v8700 = vld [vmem:[%s5 + $0x2d0] sm:$0xff]
    %v8701 = vld [vmem:[%s5 + $0x2d8] sm:$0xff]
    %v8702 = vld [vmem:[%s5 + $0x2e0] sm:$0xff]
    %v8703 = vld [vmem:[%s5 + $0x2e8] sm:$0xff]
    %v8704 = vld [vmem:[%s5 + $0x2f0] sm:$0xff]
    %v8705 = vld [vmem:[%s5 + $0x2f8] sm:$0xff]
    %v8707 = vsel %vm3587, %v8697, 0
    %8709 = vmatprep.subr.mxu0 0.0
    %8710 = vmatpush1.msra.mxu0 %v8698
    %8711 = vmatprep.subr.mxu0 0.0
    %8712 = vmatpush1.msra.mxu0 %v8699
    %8713 = vmatprep.subr.mxu0 0.0
    %8714 = vmatpush1.msra.mxu0 %v8700
    %8715 = vmatprep.subr.mxu0 0.0
    %8716 = vmatpush1.msra.mxu0 %v8701
    %8717 = vmatprep.subr.mxu0 0.0
    %8718 = vmatpush1.msra.mxu0 %v8702
    %8719 = vmatprep.subr.mxu0 0.0
    %8720 = vmatpush1.msra.mxu0 %v8703
    %8721 = vmatprep.subr.mxu0 0.0
    %8722 = vmatpush1.msra.mxu0 %v8704
    %8723 = vmatprep.subr.mxu0 0.0
    %8724 = vmatpush1.msra.mxu0 %v8705
    %8725 = vmatprep.subr.mxu0 0.0
    %8726 = vmatpush1.msra.mxu0 0.0
    %8727 = vmatprep.subr.mxu0 0.0
    %8728 = vmatpush1.msra.mxu0 0.0
    %8729 = vmatprep.subr.mxu0 0.0
    %8730 = vmatpush1.msra.mxu0 0.0
    %8731 = vmatprep.subr.mxu0 0.0
    %8732 = vmatpush1.msra.mxu0 0.0
    %8733 = vmatprep.subr.mxu0 0.0
    %8734 = vmatpush1.msra.mxu0 0.0
    %8735 = vmatprep.subr.mxu0 0.0
    %8736 = vmatpush1.msra.mxu0 0.0
    %8737 = vmatprep.subr.mxu0 0.0
    %8738 = vmatpush1.msra.mxu0 0.0
    %8739 = vmatprep.subr.mxu0 0.0
    %8740 = vmatpush1.msra.mxu0 0.0
    %8741 = vmatprep.subr.mxu0 0.0
    %8742 = vmatpush1.msra.mxu0 0.0
    %8743 = vmatprep.subr.mxu0 0.0
    %8744 = vmatpush1.msra.mxu0 0.0
    %8745 = vmatprep.subr.mxu0 0.0
    %8746 = vmatpush1.msra.mxu0 0.0
    %8747 = vmatprep.subr.mxu0 0.0
    %8748 = vmatpush1.msra.mxu0 0.0
    %8749 = vmatprep.subr.mxu0 0.0
    %8750 = vmatpush1.msra.mxu0 0.0
    %8751 = vmatprep.subr.mxu0 0.0
    %8752 = vmatpush1.msra.mxu0 0.0
    %8753 = vmatprep.subr.mxu0 0.0
    %8754 = vmatpush1.msra.mxu0 0.0
    %8755 = vmatprep.subr.mxu0 0.0
    %8756 = vmatpush1.msra.mxu0 0.0
    %8757 = vmatprep.subr.mxu0 0.0
    %8758 = vmatpush1.msra.mxu0 0.0
    %8759 = vmatprep.subr.mxu0 0.0
    %8760 = vmatpush1.msra.mxu0 0.0
    %8761 = vmatprep.subr.mxu0 0.0
    %8762 = vmatpush1.msra.mxu0 0.0
    %8763 = vmatprep.subr.mxu0 0.0
    %8764 = vmatpush1.msra.mxu0 0.0
    %8765 = vmatprep.subr.mxu0 0.0
    %8766 = vmatpush1.msra.mxu0 0.0
    %8767 = vmatprep.subr.mxu0 0.0
    %8768 = vmatpush1.msra.mxu0 0.0
    %8769 = vmatprep.subr.mxu0 0.0
    %8770 = vmatpush1.msra.mxu0 0.0
    %8771 = vmatprep.subr.mxu0 0.0
    %8772 = vmatpush1.msra.mxu0 0.0
    %8773 = vmatprep.mubr.f32.mxu0 0.0
    %8774 = vmatmul.mubr.f32.gmra.mrb[0].mxu0 %v8707
    %v8775 = vpop.f32.mrb[0].mxu0
    %v8776 = vadd.f32 0.0, %v8775
    %v8777 = vpop.f32.mrb[0].mxu0
    %8778 = vdwg.mxu0
    %v8779 = vadd.f32 %v8695, %v8776
    %s8780 = scalar_lea.vmem [#allocation5], 12
    %v8781 = vld [vmem:[%s8780] ss:$28 sm:$0xff]
    %v8782 = vld [vmem:[%s5 + $0x300] sm:$0xff]
    %v8783 = vld [vmem:[%s5 + $0x308] sm:$0xff]
    %v8784 = vld [vmem:[%s5 + $0x310] sm:$0xff]
    %v8785 = vld [vmem:[%s5 + $0x318] sm:$0xff]
    %v8786 = vld [vmem:[%s5 + $0x320] sm:$0xff]
    %v8787 = vld [vmem:[%s5 + $0x328] sm:$0xff]
    %v8788 = vld [vmem:[%s5 + $0x330] sm:$0xff]
    %v8789 = vld [vmem:[%s5 + $0x338] sm:$0xff]
    %v8791 = vsel %vm3587, %v8781, 0
    %8793 = vmatprep.subr.mxu0 0.0
    %8794 = vmatpush1.msra.mxu0 %v8782
    %8795 = vmatprep.subr.mxu0 0.0
    %8796 = vmatpush1.msra.mxu0 %v8783
    %8797 = vmatprep.subr.mxu0 0.0
    %8798 = vmatpush1.msra.mxu0 %v8784
    %8799 = vmatprep.subr.mxu0 0.0
    %8800 = vmatpush1.msra.mxu0 %v8785
    %8801 = vmatprep.subr.mxu0 0.0
    %8802 = vmatpush1.msra.mxu0 %v8786
    %8803 = vmatprep.subr.mxu0 0.0
    %8804 = vmatpush1.msra.mxu0 %v8787
    %8805 = vmatprep.subr.mxu0 0.0
    %8806 = vmatpush1.msra.mxu0 %v8788
    %8807 = vmatprep.subr.mxu0 0.0
    %8808 = vmatpush1.msra.mxu0 %v8789
    %8809 = vmatprep.subr.mxu0 0.0
    %8810 = vmatpush1.msra.mxu0 0.0
    %8811 = vmatprep.subr.mxu0 0.0
    %8812 = vmatpush1.msra.mxu0 0.0
    %8813 = vmatprep.subr.mxu0 0.0
    %8814 = vmatpush1.msra.mxu0 0.0
    %8815 = vmatprep.subr.mxu0 0.0
    %8816 = vmatpush1.msra.mxu0 0.0
    %8817 = vmatprep.subr.mxu0 0.0
    %8818 = vmatpush1.msra.mxu0 0.0
    %8819 = vmatprep.subr.mxu0 0.0
    %8820 = vmatpush1.msra.mxu0 0.0
    %8821 = vmatprep.subr.mxu0 0.0
    %8822 = vmatpush1.msra.mxu0 0.0
    %8823 = vmatprep.subr.mxu0 0.0
    %8824 = vmatpush1.msra.mxu0 0.0
    %8825 = vmatprep.subr.mxu0 0.0
    %8826 = vmatpush1.msra.mxu0 0.0
    %8827 = vmatprep.subr.mxu0 0.0
    %8828 = vmatpush1.msra.mxu0 0.0
    %8829 = vmatprep.subr.mxu0 0.0
    %8830 = vmatpush1.msra.mxu0 0.0
    %8831 = vmatprep.subr.mxu0 0.0
    %8832 = vmatpush1.msra.mxu0 0.0
    %8833 = vmatprep.subr.mxu0 0.0
    %8834 = vmatpush1.msra.mxu0 0.0
    %8835 = vmatprep.subr.mxu0 0.0
    %8836 = vmatpush1.msra.mxu0 0.0
    %8837 = vmatprep.subr.mxu0 0.0
    %8838 = vmatpush1.msra.mxu0 0.0
    %8839 = vmatprep.subr.mxu0 0.0
    %8840 = vmatpush1.msra.mxu0 0.0
    %8841 = vmatprep.subr.mxu0 0.0
    %8842 = vmatpush1.msra.mxu0 0.0
    %8843 = vmatprep.subr.mxu0 0.0
    %8844 = vmatpush1.msra.mxu0 0.0
    %8845 = vmatprep.subr.mxu0 0.0
    %8846 = vmatpush1.msra.mxu0 0.0
    %8847 = vmatprep.subr.mxu0 0.0
    %8848 = vmatpush1.msra.mxu0 0.0
    %8849 = vmatprep.subr.mxu0 0.0
    %8850 = vmatpush1.msra.mxu0 0.0
    %8851 = vmatprep.subr.mxu0 0.0
    %8852 = vmatpush1.msra.mxu0 0.0
    %8853 = vmatprep.subr.mxu0 0.0
    %8854 = vmatpush1.msra.mxu0 0.0
    %8855 = vmatprep.subr.mxu0 0.0
    %8856 = vmatpush1.msra.mxu0 0.0
    %8857 = vmatprep.mubr.f32.mxu0 0.0
    %8858 = vmatmul.mubr.f32.gmra.mrb[0].mxu0 %v8791
    %v8859 = vpop.f32.mrb[0].mxu0
    %v8860 = vadd.f32 0.0, %v8859
    %v8861 = vpop.f32.mrb[0].mxu0
    %8862 = vdwg.mxu0
    %v8863 = vadd.f32 %v8779, %v8860
    %s8864 = scalar_lea.vmem [#allocation5], 13
    %v8865 = vld [vmem:[%s8864] ss:$28 sm:$0xff]
    %v8866 = vld [vmem:[%s5 + $0x340] sm:$0xff]
    %v8867 = vld [vmem:[%s5 + $0x348] sm:$0xff]
    %v8868 = vld [vmem:[%s5 + $0x350] sm:$0xff]
    %v8869 = vld [vmem:[%s5 + $0x358] sm:$0xff]
    %v8870 = vld [vmem:[%s5 + $0x360] sm:$0xff]
    %v8871 = vld [vmem:[%s5 + $0x368] sm:$0xff]
    %v8872 = vld [vmem:[%s5 + $0x370] sm:$0xff]
    %v8873 = vld [vmem:[%s5 + $0x378] sm:$0xff]
    %v8875 = vsel %vm3587, %v8865, 0
    %8877 = vmatprep.subr.mxu0 0.0
    %8878 = vmatpush1.msra.mxu0 %v8866
    %8879 = vmatprep.subr.mxu0 0.0
    %8880 = vmatpush1.msra.mxu0 %v8867
    %8881 = vmatprep.subr.mxu0 0.0
    %8882 = vmatpush1.msra.mxu0 %v8868
    %8883 = vmatprep.subr.mxu0 0.0
    %8884 = vmatpush1.msra.mxu0 %v8869
    %8885 = vmatprep.subr.mxu0 0.0
    %8886 = vmatpush1.msra.mxu0 %v8870
    %8887 = vmatprep.subr.mxu0 0.0
    %8888 = vmatpush1.msra.mxu0 %v8871
    %8889 = vmatprep.subr.mxu0 0.0
    %8890 = vmatpush1.msra.mxu0 %v8872
    %8891 = vmatprep.subr.mxu0 0.0
    %8892 = vmatpush1.msra.mxu0 %v8873
    %8893 = vmatprep.subr.mxu0 0.0
    %8894 = vmatpush1.msra.mxu0 0.0
    %8895 = vmatprep.subr.mxu0 0.0
    %8896 = vmatpush1.msra.mxu0 0.0
    %8897 = vmatprep.subr.mxu0 0.0
    %8898 = vmatpush1.msra.mxu0 0.0
    %8899 = vmatprep.subr.mxu0 0.0
    %8900 = vmatpush1.msra.mxu0 0.0
    %8901 = vmatprep.subr.mxu0 0.0
    %8902 = vmatpush1.msra.mxu0 0.0
    %8903 = vmatprep.subr.mxu0 0.0
    %8904 = vmatpush1.msra.mxu0 0.0
    %8905 = vmatprep.subr.mxu0 0.0
    %8906 = vmatpush1.msra.mxu0 0.0
    %8907 = vmatprep.subr.mxu0 0.0
    %8908 = vmatpush1.msra.mxu0 0.0
    %8909 = vmatprep.subr.mxu0 0.0
    %8910 = vmatpush1.msra.mxu0 0.0
    %8911 = vmatprep.subr.mxu0 0.0
    %8912 = vmatpush1.msra.mxu0 0.0
    %8913 = vmatprep.subr.mxu0 0.0
    %8914 = vmatpush1.msra.mxu0 0.0
    %8915 = vmatprep.subr.mxu0 0.0
    %8916 = vmatpush1.msra.mxu0 0.0
    %8917 = vmatprep.subr.mxu0 0.0
    %8918 = vmatpush1.msra.mxu0 0.0
    %8919 = vmatprep.subr.mxu0 0.0
    %8920 = vmatpush1.msra.mxu0 0.0
    %8921 = vmatprep.subr.mxu0 0.0
    %8922 = vmatpush1.msra.mxu0 0.0
    %8923 = vmatprep.subr.mxu0 0.0
    %8924 = vmatpush1.msra.mxu0 0.0
    %8925 = vmatprep.subr.mxu0 0.0
    %8926 = vmatpush1.msra.mxu0 0.0
    %8927 = vmatprep.subr.mxu0 0.0
    %8928 = vmatpush1.msra.mxu0 0.0
    %8929 = vmatprep.subr.mxu0 0.0
    %8930 = vmatpush1.msra.mxu0 0.0
    %8931 = vmatprep.subr.mxu0 0.0
    %8932 = vmatpush1.msra.mxu0 0.0
    %8933 = vmatprep.subr.mxu0 0.0
    %8934 = vmatpush1.msra.mxu0 0.0
    %8935 = vmatprep.subr.mxu0 0.0
    %8936 = vmatpush1.msra.mxu0 0.0
    %8937 = vmatprep.subr.mxu0 0.0
    %8938 = vmatpush1.msra.mxu0 0.0
    %8939 = vmatprep.subr.mxu0 0.0
    %8940 = vmatpush1.msra.mxu0 0.0
    %8941 = vmatprep.mubr.f32.mxu0 0.0
    %8942 = vmatmul.mubr.f32.gmra.mrb[0].mxu0 %v8875
    %v8943 = vpop.f32.mrb[0].mxu0
    %v8944 = vadd.f32 0.0, %v8943
    %v8945 = vpop.f32.mrb[0].mxu0
    %8946 = vdwg.mxu0
    %v8947 = vadd.f32 %v8863, %v8944
    %s8948 = scalar_lea.vmem [#allocation5], 14
    %v8949 = vld [vmem:[%s8948] ss:$28 sm:$0xff]
    %v8950 = vld [vmem:[%s5 + $0x380] sm:$0xff]
    %v8951 = vld [vmem:[%s5 + $0x388] sm:$0xff]
    %v8952 = vld [vmem:[%s5 + $0x390] sm:$0xff]
    %v8953 = vld [vmem:[%s5 + $0x398] sm:$0xff]
    %v8954 = vld [vmem:[%s5 + $0x3a0] sm:$0xff]
    %v8955 = vld [vmem:[%s5 + $0x3a8] sm:$0xff]
    %v8956 = vld [vmem:[%s5 + $0x3b0] sm:$0xff]
    %v8957 = vld [vmem:[%s5 + $0x3b8] sm:$0xff]
    %v8959 = vsel %vm3587, %v8949, 0
    %8961 = vmatprep.subr.mxu0 0.0
    %8962 = vmatpush1.msra.mxu0 %v8950
    %8963 = vmatprep.subr.mxu0 0.0
    %8964 = vmatpush1.msra.mxu0 %v8951
    %8965 = vmatprep.subr.mxu0 0.0
    %8966 = vmatpush1.msra.mxu0 %v8952
    %8967 = vmatprep.subr.mxu0 0.0
    %8968 = vmatpush1.msra.mxu0 %v8953
    %8969 = vmatprep.subr.mxu0 0.0
    %8970 = vmatpush1.msra.mxu0 %v8954
    %8971 = vmatprep.subr.mxu0 0.0
    %8972 = vmatpush1.msra.mxu0 %v8955
    %8973 = vmatprep.subr.mxu0 0.0
    %8974 = vmatpush1.msra.mxu0 %v8956
    %8975 = vmatprep.subr.mxu0 0.0
    %8976 = vmatpush1.msra.mxu0 %v8957
    %8977 = vmatprep.subr.mxu0 0.0
    %8978 = vmatpush1.msra.mxu0 0.0
    %8979 = vmatprep.subr.mxu0 0.0
    %8980 = vmatpush1.msra.mxu0 0.0
    %8981 = vmatprep.subr.mxu0 0.0
    %8982 = vmatpush1.msra.mxu0 0.0
    %8983 = vmatprep.subr.mxu0 0.0
    %8984 = vmatpush1.msra.mxu0 0.0
    %8985 = vmatprep.subr.mxu0 0.0
    %8986 = vmatpush1.msra.mxu0 0.0
    %8987 = vmatprep.subr.mxu0 0.0
    %8988 = vmatpush1.msra.mxu0 0.0
    %8989 = vmatprep.subr.mxu0 0.0
    %8990 = vmatpush1.msra.mxu0 0.0
    %8991 = vmatprep.subr.mxu0 0.0
    %8992 = vmatpush1.msra.mxu0 0.0
    %8993 = vmatprep.subr.mxu0 0.0
    %8994 = vmatpush1.msra.mxu0 0.0
    %8995 = vmatprep.subr.mxu0 0.0
    %8996 = vmatpush1.msra.mxu0 0.0
    %8997 = vmatprep.subr.mxu0 0.0
    %8998 = vmatpush1.msra.mxu0 0.0
    %8999 = vmatprep.subr.mxu0 0.0
    %9000 = vmatpush1.msra.mxu0 0.0
    %9001 = vmatprep.subr.mxu0 0.0
    %9002 = vmatpush1.msra.mxu0 0.0
    %9003 = vmatprep.subr.mxu0 0.0
    %9004 = vmatpush1.msra.mxu0 0.0
    %9005 = vmatprep.subr.mxu0 0.0
    %9006 = vmatpush1.msra.mxu0 0.0
    %9007 = vmatprep.subr.mxu0 0.0
    %9008 = vmatpush1.msra.mxu0 0.0
    %9009 = vmatprep.subr.mxu0 0.0
    %9010 = vmatpush1.msra.mxu0 0.0
    %9011 = vmatprep.subr.mxu0 0.0
    %9012 = vmatpush1.msra.mxu0 0.0
    %9013 = vmatprep.subr.mxu0 0.0
    %9014 = vmatpush1.msra.mxu0 0.0
    %9015 = vmatprep.subr.mxu0 0.0
    %9016 = vmatpush1.msra.mxu0 0.0
    %9017 = vmatprep.subr.mxu0 0.0
    %9018 = vmatpush1.msra.mxu0 0.0
    %9019 = vmatprep.subr.mxu0 0.0
    %9020 = vmatpush1.msra.mxu0 0.0
    %9021 = vmatprep.subr.mxu0 0.0
    %9022 = vmatpush1.msra.mxu0 0.0
    %9023 = vmatprep.subr.mxu0 0.0
    %9024 = vmatpush1.msra.mxu0 0.0
    %9025 = vmatprep.mubr.f32.mxu0 0.0
    %9026 = vmatmul.mubr.f32.gmra.mrb[0].mxu0 %v8959
    %v9027 = vpop.f32.mrb[0].mxu0
    %v9028 = vadd.f32 0.0, %v9027
    %v9029 = vpop.f32.mrb[0].mxu0
    %9030 = vdwg.mxu0
    %v9031 = vadd.f32 %v8947, %v9028
    %s9032 = scalar_lea.vmem [#allocation5], 15
    %v9033 = vld [vmem:[%s9032] ss:$28 sm:$0xff]
    %v9034 = vld [vmem:[%s5 + $0x3c0] sm:$0xff]
    %v9035 = vld [vmem:[%s5 + $0x3c8] sm:$0xff]
    %v9036 = vld [vmem:[%s5 + $0x3d0] sm:$0xff]
    %v9037 = vld [vmem:[%s5 + $0x3d8] sm:$0xff]
    %v9038 = vld [vmem:[%s5 + $0x3e0] sm:$0xff]
    %v9039 = vld [vmem:[%s5 + $0x3e8] sm:$0xff]
    %v9040 = vld [vmem:[%s5 + $0x3f0] sm:$0xff]
    %v9041 = vld [vmem:[%s5 + $0x3f8] sm:$0xff]
    %v9043 = vsel %vm3587, %v9033, 0
    %9045 = vmatprep.subr.mxu0 0.0
    %9046 = vmatpush1.msra.mxu0 %v9034
    %9047 = vmatprep.subr.mxu0 0.0
    %9048 = vmatpush1.msra.mxu0 %v9035
    %9049 = vmatprep.subr.mxu0 0.0
    %9050 = vmatpush1.msra.mxu0 %v9036
    %9051 = vmatprep.subr.mxu0 0.0
    %9052 = vmatpush1.msra.mxu0 %v9037
    %9053 = vmatprep.subr.mxu0 0.0
    %9054 = vmatpush1.msra.mxu0 %v9038
    %9055 = vmatprep.subr.mxu0 0.0
    %9056 = vmatpush1.msra.mxu0 %v9039
    %9057 = vmatprep.subr.mxu0 0.0
    %9058 = vmatpush1.msra.mxu0 %v9040
    %9059 = vmatprep.subr.mxu0 0.0
    %9060 = vmatpush1.msra.mxu0 %v9041
    %9061 = vmatprep.subr.mxu0 0.0
    %9062 = vmatpush1.msra.mxu0 0.0
    %9063 = vmatprep.subr.mxu0 0.0
    %9064 = vmatpush1.msra.mxu0 0.0
    %9065 = vmatprep.subr.mxu0 0.0
    %9066 = vmatpush1.msra.mxu0 0.0
    %9067 = vmatprep.subr.mxu0 0.0
    %9068 = vmatpush1.msra.mxu0 0.0
    %9069 = vmatprep.subr.mxu0 0.0
    %9070 = vmatpush1.msra.mxu0 0.0
    %9071 = vmatprep.subr.mxu0 0.0
    %9072 = vmatpush1.msra.mxu0 0.0
    %9073 = vmatprep.subr.mxu0 0.0
    %9074 = vmatpush1.msra.mxu0 0.0
    %9075 = vmatprep.subr.mxu0 0.0
    %9076 = vmatpush1.msra.mxu0 0.0
    %9077 = vmatprep.subr.mxu0 0.0
    %9078 = vmatpush1.msra.mxu0 0.0
    %9079 = vmatprep.subr.mxu0 0.0
    %9080 = vmatpush1.msra.mxu0 0.0
    %9081 = vmatprep.subr.mxu0 0.0
    %9082 = vmatpush1.msra.mxu0 0.0
    %9083 = vmatprep.subr.mxu0 0.0
    %9084 = vmatpush1.msra.mxu0 0.0
    %9085 = vmatprep.subr.mxu0 0.0
    %9086 = vmatpush1.msra.mxu0 0.0
    %9087 = vmatprep.subr.mxu0 0.0
    %9088 = vmatpush1.msra.mxu0 0.0
    %9089 = vmatprep.subr.mxu0 0.0
    %9090 = vmatpush1.msra.mxu0 0.0
    %9091 = vmatprep.subr.mxu0 0.0
    %9092 = vmatpush1.msra.mxu0 0.0
    %9093 = vmatprep.subr.mxu0 0.0
    %9094 = vmatpush1.msra.mxu0 0.0
    %9095 = vmatprep.subr.mxu0 0.0
    %9096 = vmatpush1.msra.mxu0 0.0
    %9097 = vmatprep.subr.mxu0 0.0
    %9098 = vmatpush1.msra.mxu0 0.0
    %9099 = vmatprep.subr.mxu0 0.0
    %9100 = vmatpush1.msra.mxu0 0.0
    %9101 = vmatprep.subr.mxu0 0.0
    %9102 = vmatpush1.msra.mxu0 0.0
    %9103 = vmatprep.subr.mxu0 0.0
    %9104 = vmatpush1.msra.mxu0 0.0
    %9105 = vmatprep.subr.mxu0 0.0
    %9106 = vmatpush1.msra.mxu0 0.0
    %9107 = vmatprep.subr.mxu0 0.0
    %9108 = vmatpush1.msra.mxu0 0.0
    %9109 = vmatprep.mubr.f32.mxu0 0.0
    %9110 = vmatmul.mubr.f32.gmra.mrb[0].mxu0 %v9043
    %v9111 = vpop.f32.mrb[0].mxu0
    %v9112 = vadd.f32 0.0, %v9111
    %v9113 = vpop.f32.mrb[0].mxu0
    %9114 = vdwg.mxu0
    %v9115 = vadd.f32 %v9031, %v9112
    %s9116 = scalar_lea.vmem [#allocation5], 16
    %v9117 = vld [vmem:[%s9116] ss:$28 sm:$0xff]
    %v9118 = vld [vmem:[%s5 + $0x400] sm:$0xff]
    %v9119 = vld [vmem:[%s5 + $0x408] sm:$0xff]
    %v9120 = vld [vmem:[%s5 + $0x410] sm:$0xff]
    %v9121 = vld [vmem:[%s5 + $0x418] sm:$0xff]
    %v9122 = vld [vmem:[%s5 + $0x420] sm:$0xff]
    %v9123 = vld [vmem:[%s5 + $0x428] sm:$0xff]
    %v9124 = vld [vmem:[%s5 + $0x430] sm:$0xff]
    %v9125 = vld [vmem:[%s5 + $0x438] sm:$0xff]
    %v9127 = vsel %vm3587, %v9117, 0
    %9129 = vmatprep.subr.mxu0 0.0
    %9130 = vmatpush1.msra.mxu0 %v9118
    %9131 = vmatprep.subr.mxu0 0.0
    %9132 = vmatpush1.msra.mxu0 %v9119
    %9133 = vmatprep.subr.mxu0 0.0
    %9134 = vmatpush1.msra.mxu0 %v9120
    %9135 = vmatprep.subr.mxu0 0.0
    %9136 = vmatpush1.msra.mxu0 %v9121
    %9137 = vmatprep.subr.mxu0 0.0
    %9138 = vmatpush1.msra.mxu0 %v9122
    %9139 = vmatprep.subr.mxu0 0.0
    %9140 = vmatpush1.msra.mxu0 %v9123
    %9141 = vmatprep.subr.mxu0 0.0
    %9142 = vmatpush1.msra.mxu0 %v9124
    %9143 = vmatprep.subr.mxu0 0.0
    %9144 = vmatpush1.msra.mxu0 %v9125
    %9145 = vmatprep.subr.mxu0 0.0
    %9146 = vmatpush1.msra.mxu0 0.0
    %9147 = vmatprep.subr.mxu0 0.0
    %9148 = vmatpush1.msra.mxu0 0.0
    %9149 = vmatprep.subr.mxu0 0.0
    %9150 = vmatpush1.msra.mxu0 0.0
    %9151 = vmatprep.subr.mxu0 0.0
    %9152 = vmatpush1.msra.mxu0 0.0
    %9153 = vmatprep.subr.mxu0 0.0
    %9154 = vmatpush1.msra.mxu0 0.0
    %9155 = vmatprep.subr.mxu0 0.0
    %9156 = vmatpush1.msra.mxu0 0.0
    %9157 = vmatprep.subr.mxu0 0.0
    %9158 = vmatpush1.msra.mxu0 0.0
    %9159 = vmatprep.subr.mxu0 0.0
    %9160 = vmatpush1.msra.mxu0 0.0
    %9161 = vmatprep.subr.mxu0 0.0
    %9162 = vmatpush1.msra.mxu0 0.0
    %9163 = vmatprep.subr.mxu0 0.0
    %9164 = vmatpush1.msra.mxu0 0.0
    %9165 = vmatprep.subr.mxu0 0.0
    %9166 = vmatpush1.msra.mxu0 0.0
    %9167 = vmatprep.subr.mxu0 0.0
    %9168 = vmatpush1.msra.mxu0 0.0
    %9169 = vmatprep.subr.mxu0 0.0
    %9170 = vmatpush1.msra.mxu0 0.0
    %9171 = vmatprep.subr.mxu0 0.0
    %9172 = vmatpush1.msra.mxu0 0.0
    %9173 = vmatprep.subr.mxu0 0.0
    %9174 = vmatpush1.msra.mxu0 0.0
    %9175 = vmatprep.subr.mxu0 0.0
    %9176 = vmatpush1.msra.mxu0 0.0
    %9177 = vmatprep.subr.mxu0 0.0
    %9178 = vmatpush1.msra.mxu0 0.0
    %9179 = vmatprep.subr.mxu0 0.0
    %9180 = vmatpush1.msra.mxu0 0.0
    %9181 = vmatprep.subr.mxu0 0.0
    %9182 = vmatpush1.msra.mxu0 0.0
    %9183 = vmatprep.subr.mxu0 0.0
    %9184 = vmatpush1.msra.mxu0 0.0
    %9185 = vmatprep.subr.mxu0 0.0
    %9186 = vmatpush1.msra.mxu0 0.0
    %9187 = vmatprep.subr.mxu0 0.0
    %9188 = vmatpush1.msra.mxu0 0.0
    %9189 = vmatprep.subr.mxu0 0.0
    %9190 = vmatpush1.msra.mxu0 0.0
    %9191 = vmatprep.subr.mxu0 0.0
    %9192 = vmatpush1.msra.mxu0 0.0
    %9193 = vmatprep.mubr.f32.mxu0 0.0
    %9194 = vmatmul.mubr.f32.gmra.mrb[0].mxu0 %v9127
    %v9195 = vpop.f32.mrb[0].mxu0
    %v9196 = vadd.f32 0.0, %v9195
    %v9197 = vpop.f32.mrb[0].mxu0
    %9198 = vdwg.mxu0
    %v9199 = vadd.f32 %v9115, %v9196
    %s9200 = scalar_lea.vmem [#allocation5], 17
    %v9201 = vld [vmem:[%s9200] ss:$28 sm:$0xff]
    %v9202 = vld [vmem:[%s5 + $0x440] sm:$0xff]
    %v9203 = vld [vmem:[%s5 + $0x448] sm:$0xff]
    %v9204 = vld [vmem:[%s5 + $0x450] sm:$0xff]
    %v9205 = vld [vmem:[%s5 + $0x458] sm:$0xff]
    %v9206 = vld [vmem:[%s5 + $0x460] sm:$0xff]
    %v9207 = vld [vmem:[%s5 + $0x468] sm:$0xff]
    %v9208 = vld [vmem:[%s5 + $0x470] sm:$0xff]
    %v9209 = vld [vmem:[%s5 + $0x478] sm:$0xff]
    %v9211 = vsel %vm3587, %v9201, 0
    %9213 = vmatprep.subr.mxu0 0.0
    %9214 = vmatpush1.msra.mxu0 %v9202
    %9215 = vmatprep.subr.mxu0 0.0
    %9216 = vmatpush1.msra.mxu0 %v9203
    %9217 = vmatprep.subr.mxu0 0.0
    %9218 = vmatpush1.msra.mxu0 %v9204
    %9219 = vmatprep.subr.mxu0 0.0
    %9220 = vmatpush1.msra.mxu0 %v9205
    %9221 = vmatprep.subr.mxu0 0.0
    %9222 = vmatpush1.msra.mxu0 %v9206
    %9223 = vmatprep.subr.mxu0 0.0
    %9224 = vmatpush1.msra.mxu0 %v9207
    %9225 = vmatprep.subr.mxu0 0.0
    %9226 = vmatpush1.msra.mxu0 %v9208
    %9227 = vmatprep.subr.mxu0 0.0
    %9228 = vmatpush1.msra.mxu0 %v9209
    %9229 = vmatprep.subr.mxu0 0.0
    %9230 = vmatpush1.msra.mxu0 0.0
    %9231 = vmatprep.subr.mxu0 0.0
    %9232 = vmatpush1.msra.mxu0 0.0
    %9233 = vmatprep.subr.mxu0 0.0
    %9234 = vmatpush1.msra.mxu0 0.0
    %9235 = vmatprep.subr.mxu0 0.0
    %9236 = vmatpush1.msra.mxu0 0.0
    %9237 = vmatprep.subr.mxu0 0.0
    %9238 = vmatpush1.msra.mxu0 0.0
    %9239 = vmatprep.subr.mxu0 0.0
    %9240 = vmatpush1.msra.mxu0 0.0
    %9241 = vmatprep.subr.mxu0 0.0
    %9242 = vmatpush1.msra.mxu0 0.0
    %9243 = vmatprep.subr.mxu0 0.0
    %9244 = vmatpush1.msra.mxu0 0.0
    %9245 = vmatprep.subr.mxu0 0.0
    %9246 = vmatpush1.msra.mxu0 0.0
    %9247 = vmatprep.subr.mxu0 0.0
    %9248 = vmatpush1.msra.mxu0 0.0
    %9249 = vmatprep.subr.mxu0 0.0
    %9250 = vmatpush1.msra.mxu0 0.0
    %9251 = vmatprep.subr.mxu0 0.0
    %9252 = vmatpush1.msra.mxu0 0.0
    %9253 = vmatprep.subr.mxu0 0.0
    %9254 = vmatpush1.msra.mxu0 0.0
    %9255 = vmatprep.subr.mxu0 0.0
    %9256 = vmatpush1.msra.mxu0 0.0
    %9257 = vmatprep.subr.mxu0 0.0
    %9258 = vmatpush1.msra.mxu0 0.0
    %9259 = vmatprep.subr.mxu0 0.0
    %9260 = vmatpush1.msra.mxu0 0.0
    %9261 = vmatprep.subr.mxu0 0.0
    %9262 = vmatpush1.msra.mxu0 0.0
    %9263 = vmatprep.subr.mxu0 0.0
    %9264 = vmatpush1.msra.mxu0 0.0
    %9265 = vmatprep.subr.mxu0 0.0
    %9266 = vmatpush1.msra.mxu0 0.0
    %9267 = vmatprep.subr.mxu0 0.0
    %9268 = vmatpush1.msra.mxu0 0.0
    %9269 = vmatprep.subr.mxu0 0.0
    %9270 = vmatpush1.msra.mxu0 0.0
    %9271 = vmatprep.subr.mxu0 0.0
    %9272 = vmatpush1.msra.mxu0 0.0
    %9273 = vmatprep.subr.mxu0 0.0
    %9274 = vmatpush1.msra.mxu0 0.0
    %9275 = vmatprep.subr.mxu0 0.0
    %9276 = vmatpush1.msra.mxu0 0.0
    %9277 = vmatprep.mubr.f32.mxu0 0.0
    %9278 = vmatmul.mubr.f32.gmra.mrb[0].mxu0 %v9211
    %v9279 = vpop.f32.mrb[0].mxu0
    %v9280 = vadd.f32 0.0, %v9279
    %v9281 = vpop.f32.mrb[0].mxu0
    %9282 = vdwg.mxu0
    %v9283 = vadd.f32 %v9199, %v9280
    %s9284 = scalar_lea.vmem [#allocation5], 18
    %v9285 = vld [vmem:[%s9284] ss:$28 sm:$0xff]
    %v9286 = vld [vmem:[%s5 + $0x480] sm:$0xff]
    %v9287 = vld [vmem:[%s5 + $0x488] sm:$0xff]
    %v9288 = vld [vmem:[%s5 + $0x490] sm:$0xff]
    %v9289 = vld [vmem:[%s5 + $0x498] sm:$0xff]
    %v9290 = vld [vmem:[%s5 + $0x4a0] sm:$0xff]
    %v9291 = vld [vmem:[%s5 + $0x4a8] sm:$0xff]
    %v9292 = vld [vmem:[%s5 + $0x4b0] sm:$0xff]
    %v9293 = vld [vmem:[%s5 + $0x4b8] sm:$0xff]
    %v9295 = vsel %vm3587, %v9285, 0
    %9297 = vmatprep.subr.mxu0 0.0
    %9298 = vmatpush1.msra.mxu0 %v9286
    %9299 = vmatprep.subr.mxu0 0.0
    %9300 = vmatpush1.msra.mxu0 %v9287
    %9301 = vmatprep.subr.mxu0 0.0
    %9302 = vmatpush1.msra.mxu0 %v9288
    %9303 = vmatprep.subr.mxu0 0.0
    %9304 = vmatpush1.msra.mxu0 %v9289
    %9305 = vmatprep.subr.mxu0 0.0
    %9306 = vmatpush1.msra.mxu0 %v9290
    %9307 = vmatprep.subr.mxu0 0.0
    %9308 = vmatpush1.msra.mxu0 %v9291
    %9309 = vmatprep.subr.mxu0 0.0
    %9310 = vmatpush1.msra.mxu0 %v9292
    %9311 = vmatprep.subr.mxu0 0.0
    %9312 = vmatpush1.msra.mxu0 %v9293
    %9313 = vmatprep.subr.mxu0 0.0
    %9314 = vmatpush1.msra.mxu0 0.0
    %9315 = vmatprep.subr.mxu0 0.0
    %9316 = vmatpush1.msra.mxu0 0.0
    %9317 = vmatprep.subr.mxu0 0.0
    %9318 = vmatpush1.msra.mxu0 0.0
    %9319 = vmatprep.subr.mxu0 0.0
    %9320 = vmatpush1.msra.mxu0 0.0
    %9321 = vmatprep.subr.mxu0 0.0
    %9322 = vmatpush1.msra.mxu0 0.0
    %9323 = vmatprep.subr.mxu0 0.0
    %9324 = vmatpush1.msra.mxu0 0.0
    %9325 = vmatprep.subr.mxu0 0.0
    %9326 = vmatpush1.msra.mxu0 0.0
    %9327 = vmatprep.subr.mxu0 0.0
    %9328 = vmatpush1.msra.mxu0 0.0
    %9329 = vmatprep.subr.mxu0 0.0
    %9330 = vmatpush1.msra.mxu0 0.0
    %9331 = vmatprep.subr.mxu0 0.0
    %9332 = vmatpush1.msra.mxu0 0.0
    %9333 = vmatprep.subr.mxu0 0.0
    %9334 = vmatpush1.msra.mxu0 0.0
    %9335 = vmatprep.subr.mxu0 0.0
    %9336 = vmatpush1.msra.mxu0 0.0
    %9337 = vmatprep.subr.mxu0 0.0
    %9338 = vmatpush1.msra.mxu0 0.0
    %9339 = vmatprep.subr.mxu0 0.0
    %9340 = vmatpush1.msra.mxu0 0.0
    %9341 = vmatprep.subr.mxu0 0.0
    %9342 = vmatpush1.msra.mxu0 0.0
    %9343 = vmatprep.subr.mxu0 0.0
    %9344 = vmatpush1.msra.mxu0 0.0
    %9345 = vmatprep.subr.mxu0 0.0
    %9346 = vmatpush1.msra.mxu0 0.0
    %9347 = vmatprep.subr.mxu0 0.0
    %9348 = vmatpush1.msra.mxu0 0.0
    %9349 = vmatprep.subr.mxu0 0.0
    %9350 = vmatpush1.msra.mxu0 0.0
    %9351 = vmatprep.subr.mxu0 0.0
    %9352 = vmatpush1.msra.mxu0 0.0
    %9353 = vmatprep.subr.mxu0 0.0
    %9354 = vmatpush1.msra.mxu0 0.0
    %9355 = vmatprep.subr.mxu0 0.0
    %9356 = vmatpush1.msra.mxu0 0.0
    %9357 = vmatprep.subr.mxu0 0.0
    %9358 = vmatpush1.msra.mxu0 0.0
    %9359 = vmatprep.subr.mxu0 0.0
    %9360 = vmatpush1.msra.mxu0 0.0
    %9361 = vmatprep.mubr.f32.mxu0 0.0
    %9362 = vmatmul.mubr.f32.gmra.mrb[0].mxu0 %v9295
    %v9363 = vpop.f32.mrb[0].mxu0
    %v9364 = vadd.f32 0.0, %v9363
    %v9365 = vpop.f32.mrb[0].mxu0
    %9366 = vdwg.mxu0
    %v9367 = vadd.f32 %v9283, %v9364
    %s9368 = scalar_lea.vmem [#allocation5], 19
    %v9369 = vld [vmem:[%s9368] ss:$28 sm:$0xff]
    %v9370 = vld [vmem:[%s5 + $0x4c0] sm:$0xff]
    %v9371 = vld [vmem:[%s5 + $0x4c8] sm:$0xff]
    %v9372 = vld [vmem:[%s5 + $0x4d0] sm:$0xff]
    %v9373 = vld [vmem:[%s5 + $0x4d8] sm:$0xff]
    %v9374 = vld [vmem:[%s5 + $0x4e0] sm:$0xff]
    %v9375 = vld [vmem:[%s5 + $0x4e8] sm:$0xff]
    %v9376 = vld [vmem:[%s5 + $0x4f0] sm:$0xff]
    %v9377 = vld [vmem:[%s5 + $0x4f8] sm:$0xff]
    %v9379 = vsel %vm3587, %v9369, 0
    %9381 = vmatprep.subr.mxu0 0.0
    %9382 = vmatpush1.msra.mxu0 %v9370
    %9383 = vmatprep.subr.mxu0 0.0
    %9384 = vmatpush1.msra.mxu0 %v9371
    %9385 = vmatprep.subr.mxu0 0.0
    %9386 = vmatpush1.msra.mxu0 %v9372
    %9387 = vmatprep.subr.mxu0 0.0
    %9388 = vmatpush1.msra.mxu0 %v9373
    %9389 = vmatprep.subr.mxu0 0.0
    %9390 = vmatpush1.msra.mxu0 %v9374
    %9391 = vmatprep.subr.mxu0 0.0
    %9392 = vmatpush1.msra.mxu0 %v9375
    %9393 = vmatprep.subr.mxu0 0.0
    %9394 = vmatpush1.msra.mxu0 %v9376
    %9395 = vmatprep.subr.mxu0 0.0
    %9396 = vmatpush1.msra.mxu0 %v9377
    %9397 = vmatprep.subr.mxu0 0.0
    %9398 = vmatpush1.msra.mxu0 0.0
    %9399 = vmatprep.subr.mxu0 0.0
    %9400 = vmatpush1.msra.mxu0 0.0
    %9401 = vmatprep.subr.mxu0 0.0
    %9402 = vmatpush1.msra.mxu0 0.0
    %9403 = vmatprep.subr.mxu0 0.0
    %9404 = vmatpush1.msra.mxu0 0.0
    %9405 = vmatprep.subr.mxu0 0.0
    %9406 = vmatpush1.msra.mxu0 0.0
    %9407 = vmatprep.subr.mxu0 0.0
    %9408 = vmatpush1.msra.mxu0 0.0
    %9409 = vmatprep.subr.mxu0 0.0
    %9410 = vmatpush1.msra.mxu0 0.0
    %9411 = vmatprep.subr.mxu0 0.0
    %9412 = vmatpush1.msra.mxu0 0.0
    %9413 = vmatprep.subr.mxu0 0.0
    %9414 = vmatpush1.msra.mxu0 0.0
    %9415 = vmatprep.subr.mxu0 0.0
    %9416 = vmatpush1.msra.mxu0 0.0
    %9417 = vmatprep.subr.mxu0 0.0
    %9418 = vmatpush1.msra.mxu0 0.0
    %9419 = vmatprep.subr.mxu0 0.0
    %9420 = vmatpush1.msra.mxu0 0.0
    %9421 = vmatprep.subr.mxu0 0.0
    %9422 = vmatpush1.msra.mxu0 0.0
    %9423 = vmatprep.subr.mxu0 0.0
    %9424 = vmatpush1.msra.mxu0 0.0
    %9425 = vmatprep.subr.mxu0 0.0
    %9426 = vmatpush1.msra.mxu0 0.0
    %9427 = vmatprep.subr.mxu0 0.0
    %9428 = vmatpush1.msra.mxu0 0.0
    %9429 = vmatprep.subr.mxu0 0.0
    %9430 = vmatpush1.msra.mxu0 0.0
    %9431 = vmatprep.subr.mxu0 0.0
    %9432 = vmatpush1.msra.mxu0 0.0
    %9433 = vmatprep.subr.mxu0 0.0
    %9434 = vmatpush1.msra.mxu0 0.0
    %9435 = vmatprep.subr.mxu0 0.0
    %9436 = vmatpush1.msra.mxu0 0.0
    %9437 = vmatprep.subr.mxu0 0.0
    %9438 = vmatpush1.msra.mxu0 0.0
    %9439 = vmatprep.subr.mxu0 0.0
    %9440 = vmatpush1.msra.mxu0 0.0
    %9441 = vmatprep.subr.mxu0 0.0
    %9442 = vmatpush1.msra.mxu0 0.0
    %9443 = vmatprep.subr.mxu0 0.0
    %9444 = vmatpush1.msra.mxu0 0.0
    %9445 = vmatprep.mubr.f32.mxu0 0.0
    %9446 = vmatmul.mubr.f32.gmra.mrb[0].mxu0 %v9379
    %v9447 = vpop.f32.mrb[0].mxu0
    %v9448 = vadd.f32 0.0, %v9447
    %v9449 = vpop.f32.mrb[0].mxu0
    %9450 = vdwg.mxu0
    %v9451 = vadd.f32 %v9367, %v9448
    %s9452 = scalar_lea.vmem [#allocation5], 20
    %v9453 = vld [vmem:[%s9452] ss:$28 sm:$0xff]
    %v9454 = vld [vmem:[%s5 + $0x500] sm:$0xff]
    %v9455 = vld [vmem:[%s5 + $0x508] sm:$0xff]
    %v9456 = vld [vmem:[%s5 + $0x510] sm:$0xff]
    %v9457 = vld [vmem:[%s5 + $0x518] sm:$0xff]
    %v9458 = vld [vmem:[%s5 + $0x520] sm:$0xff]
    %v9459 = vld [vmem:[%s5 + $0x528] sm:$0xff]
    %v9460 = vld [vmem:[%s5 + $0x530] sm:$0xff]
    %v9461 = vld [vmem:[%s5 + $0x538] sm:$0xff]
    %v9463 = vsel %vm3587, %v9453, 0
    %9465 = vmatprep.subr.mxu0 0.0
    %9466 = vmatpush1.msra.mxu0 %v9454
    %9467 = vmatprep.subr.mxu0 0.0
    %9468 = vmatpush1.msra.mxu0 %v9455
    %9469 = vmatprep.subr.mxu0 0.0
    %9470 = vmatpush1.msra.mxu0 %v9456
    %9471 = vmatprep.subr.mxu0 0.0
    %9472 = vmatpush1.msra.mxu0 %v9457
    %9473 = vmatprep.subr.mxu0 0.0
    %9474 = vmatpush1.msra.mxu0 %v9458
    %9475 = vmatprep.subr.mxu0 0.0
    %9476 = vmatpush1.msra.mxu0 %v9459
    %9477 = vmatprep.subr.mxu0 0.0
    %9478 = vmatpush1.msra.mxu0 %v9460
    %9479 = vmatprep.subr.mxu0 0.0
    %9480 = vmatpush1.msra.mxu0 %v9461
    %9481 = vmatprep.subr.mxu0 0.0
    %9482 = vmatpush1.msra.mxu0 0.0
    %9483 = vmatprep.subr.mxu0 0.0
    %9484 = vmatpush1.msra.mxu0 0.0
    %9485 = vmatprep.subr.mxu0 0.0
    %9486 = vmatpush1.msra.mxu0 0.0
    %9487 = vmatprep.subr.mxu0 0.0
    %9488 = vmatpush1.msra.mxu0 0.0
    %9489 = vmatprep.subr.mxu0 0.0
    %9490 = vmatpush1.msra.mxu0 0.0
    %9491 = vmatprep.subr.mxu0 0.0
    %9492 = vmatpush1.msra.mxu0 0.0
    %9493 = vmatprep.subr.mxu0 0.0
    %9494 = vmatpush1.msra.mxu0 0.0
    %9495 = vmatprep.subr.mxu0 0.0
    %9496 = vmatpush1.msra.mxu0 0.0
    %9497 = vmatprep.subr.mxu0 0.0
    %9498 = vmatpush1.msra.mxu0 0.0
    %9499 = vmatprep.subr.mxu0 0.0
    %9500 = vmatpush1.msra.mxu0 0.0
    %9501 = vmatprep.subr.mxu0 0.0
    %9502 = vmatpush1.msra.mxu0 0.0
    %9503 = vmatprep.subr.mxu0 0.0
    %9504 = vmatpush1.msra.mxu0 0.0
    %9505 = vmatprep.subr.mxu0 0.0
    %9506 = vmatpush1.msra.mxu0 0.0
    %9507 = vmatprep.subr.mxu0 0.0
    %9508 = vmatpush1.msra.mxu0 0.0
    %9509 = vmatprep.subr.mxu0 0.0
    %9510 = vmatpush1.msra.mxu0 0.0
    %9511 = vmatprep.subr.mxu0 0.0
    %9512 = vmatpush1.msra.mxu0 0.0
    %9513 = vmatprep.subr.mxu0 0.0
    %9514 = vmatpush1.msra.mxu0 0.0
    %9515 = vmatprep.subr.mxu0 0.0
    %9516 = vmatpush1.msra.mxu0 0.0
    %9517 = vmatprep.subr.mxu0 0.0
    %9518 = vmatpush1.msra.mxu0 0.0
    %9519 = vmatprep.subr.mxu0 0.0
    %9520 = vmatpush1.msra.mxu0 0.0
    %9521 = vmatprep.subr.mxu0 0.0
    %9522 = vmatpush1.msra.mxu0 0.0
    %9523 = vmatprep.subr.mxu0 0.0
    %9524 = vmatpush1.msra.mxu0 0.0
    %9525 = vmatprep.subr.mxu0 0.0
    %9526 = vmatpush1.msra.mxu0 0.0
    %9527 = vmatprep.subr.mxu0 0.0
    %9528 = vmatpush1.msra.mxu0 0.0
    %9529 = vmatprep.mubr.f32.mxu0 0.0
    %9530 = vmatmul.mubr.f32.gmra.mrb[0].mxu0 %v9463
    %v9531 = vpop.f32.mrb[0].mxu0
    %v9532 = vadd.f32 0.0, %v9531
    %v9533 = vpop.f32.mrb[0].mxu0
    %9534 = vdwg.mxu0
    %v9535 = vadd.f32 %v9451, %v9532
    %s9536 = scalar_lea.vmem [#allocation5], 21
    %v9537 = vld [vmem:[%s9536] ss:$28 sm:$0xff]
    %v9538 = vld [vmem:[%s5 + $0x540] sm:$0xff]
    %v9539 = vld [vmem:[%s5 + $0x548] sm:$0xff]
    %v9540 = vld [vmem:[%s5 + $0x550] sm:$0xff]
    %v9541 = vld [vmem:[%s5 + $0x558] sm:$0xff]
    %v9542 = vld [vmem:[%s5 + $0x560] sm:$0xff]
    %v9543 = vld [vmem:[%s5 + $0x568] sm:$0xff]
    %v9544 = vld [vmem:[%s5 + $0x570] sm:$0xff]
    %v9545 = vld [vmem:[%s5 + $0x578] sm:$0xff]
    %v9547 = vsel %vm3587, %v9537, 0
    %9549 = vmatprep.subr.mxu0 0.0
    %9550 = vmatpush1.msra.mxu0 %v9538
    %9551 = vmatprep.subr.mxu0 0.0
    %9552 = vmatpush1.msra.mxu0 %v9539
    %9553 = vmatprep.subr.mxu0 0.0
    %9554 = vmatpush1.msra.mxu0 %v9540
    %9555 = vmatprep.subr.mxu0 0.0
    %9556 = vmatpush1.msra.mxu0 %v9541
    %9557 = vmatprep.subr.mxu0 0.0
    %9558 = vmatpush1.msra.mxu0 %v9542
    %9559 = vmatprep.subr.mxu0 0.0
    %9560 = vmatpush1.msra.mxu0 %v9543
    %9561 = vmatprep.subr.mxu0 0.0
    %9562 = vmatpush1.msra.mxu0 %v9544
    %9563 = vmatprep.subr.mxu0 0.0
    %9564 = vmatpush1.msra.mxu0 %v9545
    %9565 = vmatprep.subr.mxu0 0.0
    %9566 = vmatpush1.msra.mxu0 0.0
    %9567 = vmatprep.subr.mxu0 0.0
    %9568 = vmatpush1.msra.mxu0 0.0
    %9569 = vmatprep.subr.mxu0 0.0
    %9570 = vmatpush1.msra.mxu0 0.0
    %9571 = vmatprep.subr.mxu0 0.0
    %9572 = vmatpush1.msra.mxu0 0.0
    %9573 = vmatprep.subr.mxu0 0.0
    %9574 = vmatpush1.msra.mxu0 0.0
    %9575 = vmatprep.subr.mxu0 0.0
    %9576 = vmatpush1.msra.mxu0 0.0
    %9577 = vmatprep.subr.mxu0 0.0
    %9578 = vmatpush1.msra.mxu0 0.0
    %9579 = vmatprep.subr.mxu0 0.0
    %9580 = vmatpush1.msra.mxu0 0.0
    %9581 = vmatprep.subr.mxu0 0.0
    %9582 = vmatpush1.msra.mxu0 0.0
    %9583 = vmatprep.subr.mxu0 0.0
    %9584 = vmatpush1.msra.mxu0 0.0
    %9585 = vmatprep.subr.mxu0 0.0
    %9586 = vmatpush1.msra.mxu0 0.0
    %9587 = vmatprep.subr.mxu0 0.0
    %9588 = vmatpush1.msra.mxu0 0.0
    %9589 = vmatprep.subr.mxu0 0.0
    %9590 = vmatpush1.msra.mxu0 0.0
    %9591 = vmatprep.subr.mxu0 0.0
    %9592 = vmatpush1.msra.mxu0 0.0
    %9593 = vmatprep.subr.mxu0 0.0
    %9594 = vmatpush1.msra.mxu0 0.0
    %9595 = vmatprep.subr.mxu0 0.0
    %9596 = vmatpush1.msra.mxu0 0.0
    %9597 = vmatprep.subr.mxu0 0.0
    %9598 = vmatpush1.msra.mxu0 0.0
    %9599 = vmatprep.subr.mxu0 0.0
    %9600 = vmatpush1.msra.mxu0 0.0
    %9601 = vmatprep.subr.mxu0 0.0
    %9602 = vmatpush1.msra.mxu0 0.0
    %9603 = vmatprep.subr.mxu0 0.0
    %9604 = vmatpush1.msra.mxu0 0.0
    %9605 = vmatprep.subr.mxu0 0.0
    %9606 = vmatpush1.msra.mxu0 0.0
    %9607 = vmatprep.subr.mxu0 0.0
    %9608 = vmatpush1.msra.mxu0 0.0
    %9609 = vmatprep.subr.mxu0 0.0
    %9610 = vmatpush1.msra.mxu0 0.0
    %9611 = vmatprep.subr.mxu0 0.0
    %9612 = vmatpush1.msra.mxu0 0.0
    %9613 = vmatprep.mubr.f32.mxu0 0.0
    %9614 = vmatmul.mubr.f32.gmra.mrb[0].mxu0 %v9547
    %v9615 = vpop.f32.mrb[0].mxu0
    %v9616 = vadd.f32 0.0, %v9615
    %v9617 = vpop.f32.mrb[0].mxu0
    %9618 = vdwg.mxu0
    %v9619 = vadd.f32 %v9535, %v9616
    %s9620 = scalar_lea.vmem [#allocation5], 22
    %v9621 = vld [vmem:[%s9620] ss:$28 sm:$0xff]
    %v9622 = vld [vmem:[%s5 + $0x580] sm:$0xff]
    %v9623 = vld [vmem:[%s5 + $0x588] sm:$0xff]
    %v9624 = vld [vmem:[%s5 + $0x590] sm:$0xff]
    %v9625 = vld [vmem:[%s5 + $0x598] sm:$0xff]
    %v9626 = vld [vmem:[%s5 + $0x5a0] sm:$0xff]
    %v9627 = vld [vmem:[%s5 + $0x5a8] sm:$0xff]
    %v9628 = vld [vmem:[%s5 + $0x5b0] sm:$0xff]
    %v9629 = vld [vmem:[%s5 + $0x5b8] sm:$0xff]
    %v9631 = vsel %vm3587, %v9621, 0
    %9633 = vmatprep.subr.mxu0 0.0
    %9634 = vmatpush1.msra.mxu0 %v9622
    %9635 = vmatprep.subr.mxu0 0.0
    %9636 = vmatpush1.msra.mxu0 %v9623
    %9637 = vmatprep.subr.mxu0 0.0
    %9638 = vmatpush1.msra.mxu0 %v9624
    %9639 = vmatprep.subr.mxu0 0.0
    %9640 = vmatpush1.msra.mxu0 %v9625
    %9641 = vmatprep.subr.mxu0 0.0
    %9642 = vmatpush1.msra.mxu0 %v9626
    %9643 = vmatprep.subr.mxu0 0.0
    %9644 = vmatpush1.msra.mxu0 %v9627
    %9645 = vmatprep.subr.mxu0 0.0
    %9646 = vmatpush1.msra.mxu0 %v9628
    %9647 = vmatprep.subr.mxu0 0.0
    %9648 = vmatpush1.msra.mxu0 %v9629
    %9649 = vmatprep.subr.mxu0 0.0
    %9650 = vmatpush1.msra.mxu0 0.0
    %9651 = vmatprep.subr.mxu0 0.0
    %9652 = vmatpush1.msra.mxu0 0.0
    %9653 = vmatprep.subr.mxu0 0.0
    %9654 = vmatpush1.msra.mxu0 0.0
    %9655 = vmatprep.subr.mxu0 0.0
    %9656 = vmatpush1.msra.mxu0 0.0
    %9657 = vmatprep.subr.mxu0 0.0
    %9658 = vmatpush1.msra.mxu0 0.0
    %9659 = vmatprep.subr.mxu0 0.0
    %9660 = vmatpush1.msra.mxu0 0.0
    %9661 = vmatprep.subr.mxu0 0.0
    %9662 = vmatpush1.msra.mxu0 0.0
    %9663 = vmatprep.subr.mxu0 0.0
    %9664 = vmatpush1.msra.mxu0 0.0
    %9665 = vmatprep.subr.mxu0 0.0
    %9666 = vmatpush1.msra.mxu0 0.0
    %9667 = vmatprep.subr.mxu0 0.0
    %9668 = vmatpush1.msra.mxu0 0.0
    %9669 = vmatprep.subr.mxu0 0.0
    %9670 = vmatpush1.msra.mxu0 0.0
    %9671 = vmatprep.subr.mxu0 0.0
    %9672 = vmatpush1.msra.mxu0 0.0
    %9673 = vmatprep.subr.mxu0 0.0
    %9674 = vmatpush1.msra.mxu0 0.0
    %9675 = vmatprep.subr.mxu0 0.0
    %9676 = vmatpush1.msra.mxu0 0.0
    %9677 = vmatprep.subr.mxu0 0.0
    %9678 = vmatpush1.msra.mxu0 0.0
    %9679 = vmatprep.subr.mxu0 0.0
    %9680 = vmatpush1.msra.mxu0 0.0
    %9681 = vmatprep.subr.mxu0 0.0
    %9682 = vmatpush1.msra.mxu0 0.0
    %9683 = vmatprep.subr.mxu0 0.0
    %9684 = vmatpush1.msra.mxu0 0.0
    %9685 = vmatprep.subr.mxu0 0.0
    %9686 = vmatpush1.msra.mxu0 0.0
    %9687 = vmatprep.subr.mxu0 0.0
    %9688 = vmatpush1.msra.mxu0 0.0
    %9689 = vmatprep.subr.mxu0 0.0
    %9690 = vmatpush1.msra.mxu0 0.0
    %9691 = vmatprep.subr.mxu0 0.0
    %9692 = vmatpush1.msra.mxu0 0.0
    %9693 = vmatprep.subr.mxu0 0.0
    %9694 = vmatpush1.msra.mxu0 0.0
    %9695 = vmatprep.subr.mxu0 0.0
    %9696 = vmatpush1.msra.mxu0 0.0
    %9697 = vmatprep.mubr.f32.mxu0 0.0
    %9698 = vmatmul.mubr.f32.gmra.mrb[0].mxu0 %v9631
    %v9699 = vpop.f32.mrb[0].mxu0
    %v9700 = vadd.f32 0.0, %v9699
    %v9701 = vpop.f32.mrb[0].mxu0
    %9702 = vdwg.mxu0
    %v9703 = vadd.f32 %v9619, %v9700
    %s9704 = scalar_lea.vmem [#allocation5], 23
    %v9705 = vld [vmem:[%s9704] ss:$28 sm:$0xff]
    %v9706 = vld [vmem:[%s5 + $0x5c0] sm:$0xff]
    %v9707 = vld [vmem:[%s5 + $0x5c8] sm:$0xff]
    %v9708 = vld [vmem:[%s5 + $0x5d0] sm:$0xff]
    %v9709 = vld [vmem:[%s5 + $0x5d8] sm:$0xff]
    %v9710 = vld [vmem:[%s5 + $0x5e0] sm:$0xff]
    %v9711 = vld [vmem:[%s5 + $0x5e8] sm:$0xff]
    %v9712 = vld [vmem:[%s5 + $0x5f0] sm:$0xff]
    %v9713 = vld [vmem:[%s5 + $0x5f8] sm:$0xff]
    %v9715 = vsel %vm3587, %v9705, 0
    %9717 = vmatprep.subr.mxu0 0.0
    %9718 = vmatpush1.msra.mxu0 %v9706
    %9719 = vmatprep.subr.mxu0 0.0
    %9720 = vmatpush1.msra.mxu0 %v9707
    %9721 = vmatprep.subr.mxu0 0.0
    %9722 = vmatpush1.msra.mxu0 %v9708
    %9723 = vmatprep.subr.mxu0 0.0
    %9724 = vmatpush1.msra.mxu0 %v9709
    %9725 = vmatprep.subr.mxu0 0.0
    %9726 = vmatpush1.msra.mxu0 %v9710
    %9727 = vmatprep.subr.mxu0 0.0
    %9728 = vmatpush1.msra.mxu0 %v9711
    %9729 = vmatprep.subr.mxu0 0.0
    %9730 = vmatpush1.msra.mxu0 %v9712
    %9731 = vmatprep.subr.mxu0 0.0
    %9732 = vmatpush1.msra.mxu0 %v9713
    %9733 = vmatprep.subr.mxu0 0.0
    %9734 = vmatpush1.msra.mxu0 0.0
    %9735 = vmatprep.subr.mxu0 0.0
    %9736 = vmatpush1.msra.mxu0 0.0
    %9737 = vmatprep.subr.mxu0 0.0
    %9738 = vmatpush1.msra.mxu0 0.0
    %9739 = vmatprep.subr.mxu0 0.0
    %9740 = vmatpush1.msra.mxu0 0.0
    %9741 = vmatprep.subr.mxu0 0.0
    %9742 = vmatpush1.msra.mxu0 0.0
    %9743 = vmatprep.subr.mxu0 0.0
    %9744 = vmatpush1.msra.mxu0 0.0
    %9745 = vmatprep.subr.mxu0 0.0
    %9746 = vmatpush1.msra.mxu0 0.0
    %9747 = vmatprep.subr.mxu0 0.0
    %9748 = vmatpush1.msra.mxu0 0.0
    %9749 = vmatprep.subr.mxu0 0.0
    %9750 = vmatpush1.msra.mxu0 0.0
    %9751 = vmatprep.subr.mxu0 0.0
    %9752 = vmatpush1.msra.mxu0 0.0
    %9753 = vmatprep.subr.mxu0 0.0
    %9754 = vmatpush1.msra.mxu0 0.0
    %9755 = vmatprep.subr.mxu0 0.0
    %9756 = vmatpush1.msra.mxu0 0.0
    %9757 = vmatprep.subr.mxu0 0.0
    %9758 = vmatpush1.msra.mxu0 0.0
    %9759 = vmatprep.subr.mxu0 0.0
    %9760 = vmatpush1.msra.mxu0 0.0
    %9761 = vmatprep.subr.mxu0 0.0
    %9762 = vmatpush1.msra.mxu0 0.0
    %9763 = vmatprep.subr.mxu0 0.0
    %9764 = vmatpush1.msra.mxu0 0.0
    %9765 = vmatprep.subr.mxu0 0.0
    %9766 = vmatpush1.msra.mxu0 0.0
    %9767 = vmatprep.subr.mxu0 0.0
    %9768 = vmatpush1.msra.mxu0 0.0
    %9769 = vmatprep.subr.mxu0 0.0
    %9770 = vmatpush1.msra.mxu0 0.0
    %9771 = vmatprep.subr.mxu0 0.0
    %9772 = vmatpush1.msra.mxu0 0.0
    %9773 = vmatprep.subr.mxu0 0.0
    %9774 = vmatpush1.msra.mxu0 0.0
    %9775 = vmatprep.subr.mxu0 0.0
    %9776 = vmatpush1.msra.mxu0 0.0
    %9777 = vmatprep.subr.mxu0 0.0
    %9778 = vmatpush1.msra.mxu0 0.0
    %9779 = vmatprep.subr.mxu0 0.0
    %9780 = vmatpush1.msra.mxu0 0.0
    %9781 = vmatprep.mubr.f32.mxu0 0.0
    %9782 = vmatmul.mubr.f32.gmra.mrb[0].mxu0 %v9715
    %v9783 = vpop.f32.mrb[0].mxu0
    %v9784 = vadd.f32 0.0, %v9783
    %v9785 = vpop.f32.mrb[0].mxu0
    %9786 = vdwg.mxu0
    %v9787 = vadd.f32 %v9703, %v9784
    %v9788 = vmax.f32 %v9787, 0.0
    %v9789 = vld [vmem:[%s7] sm:$0x1]
    %v9790 = vld [vmem:[#allocation6] sm:$0x1]
    %9792 = vset.pattern.permute.xlu0 0
    %9793 = vperm.xlu0 %9792, %v9790
    %v9794 = vpop.permute.xlu0 %9793
    %v9796 = vlaneseq
    %v9797 = vshrl.u32 %v9796, 7
    %v9798 = vsub.s32 0, %v9797
    %v9799 = vrot.slane %v9794, %v9798
    %9800 = vmatprep.subr.mxu0 0.0
    %9801 = vmatpush1.xpose.msra.mxu0 %v9788
    %9802 = vmatprep.subr.mxu0 0.0
    %9803 = vmatpush1.xpose.msra.mxu0 0.0
    %9804 = vmatprep.subr.mxu0 0.0
    %9805 = vmatpush1.xpose.msra.mxu0 0.0
    %9806 = vmatprep.subr.mxu0 0.0
    %9807 = vmatpush1.xpose.msra.mxu0 0.0
    %9808 = vmatprep.subr.mxu0 0.0
    %9809 = vmatpush1.xpose.msra.mxu0 0.0
    %9810 = vmatprep.subr.mxu0 0.0
    %9811 = vmatpush1.xpose.msra.mxu0 0.0
    %9812 = vmatprep.subr.mxu0 0.0
    %9813 = vmatpush1.xpose.msra.mxu0 0.0
    %9814 = vmatprep.subr.mxu0 0.0
    %9815 = vmatpush1.xpose.msra.mxu0 0.0
    %9816 = vmatprep.subr.mxu0 0.0
    %9817 = vmatpush1.xpose.msra.mxu0 0.0
    %9818 = vmatprep.subr.mxu0 0.0
    %9819 = vmatpush1.xpose.msra.mxu0 0.0
    %9820 = vmatprep.subr.mxu0 0.0
    %9821 = vmatpush1.xpose.msra.mxu0 0.0
    %9822 = vmatprep.subr.mxu0 0.0
    %9823 = vmatpush1.xpose.msra.mxu0 0.0
    %9824 = vmatprep.subr.mxu0 0.0
    %9825 = vmatpush1.xpose.msra.mxu0 0.0
    %9826 = vmatprep.subr.mxu0 0.0
    %9827 = vmatpush1.xpose.msra.mxu0 0.0
    %9828 = vmatprep.subr.mxu0 0.0
    %9829 = vmatpush1.xpose.msra.mxu0 0.0
    %9830 = vmatprep.subr.mxu0 0.0
    %9831 = vmatpush1.xpose.msra.mxu0 0.0
    %9832 = vmatprep.subr.mxu0 0.0
    %9833 = vmatpush1.xpose.msra.mxu0 0.0
    %9834 = vmatprep.subr.mxu0 0.0
    %9835 = vmatpush1.xpose.msra.mxu0 0.0
    %9836 = vmatprep.subr.mxu0 0.0
    %9837 = vmatpush1.xpose.msra.mxu0 0.0
    %9838 = vmatprep.subr.mxu0 0.0
    %9839 = vmatpush1.xpose.msra.mxu0 0.0
    %9840 = vmatprep.subr.mxu0 0.0
    %9841 = vmatpush1.xpose.msra.mxu0 0.0
    %9842 = vmatprep.subr.mxu0 0.0
    %9843 = vmatpush1.xpose.msra.mxu0 0.0
    %9844 = vmatprep.subr.mxu0 0.0
    %9845 = vmatpush1.xpose.msra.mxu0 0.0
    %9846 = vmatprep.subr.mxu0 0.0
    %9847 = vmatpush1.xpose.msra.mxu0 0.0
    %9848 = vmatprep.subr.mxu0 0.0
    %9849 = vmatpush1.xpose.msra.mxu0 0.0
    %9850 = vmatprep.subr.mxu0 0.0
    %9851 = vmatpush1.xpose.msra.mxu0 0.0
    %9852 = vmatprep.subr.mxu0 0.0
    %9853 = vmatpush1.xpose.msra.mxu0 0.0
    %9854 = vmatprep.subr.mxu0 0.0
    %9855 = vmatpush1.xpose.msra.mxu0 0.0
    %9856 = vmatprep.subr.mxu0 0.0
    %9857 = vmatpush1.xpose.msra.mxu0 0.0
    %9858 = vmatprep.subr.mxu0 0.0
    %9859 = vmatpush1.xpose.msra.mxu0 0.0
    %9860 = vmatprep.subr.mxu0 0.0
    %9861 = vmatpush1.xpose.msra.mxu0 0.0
    %9862 = vmatprep.subr.mxu0 0.0
    %9863 = vmatpush1.xpose.msra.mxu0 0.0
    %9864 = vmatprep.mubr.f32.mxu0 0.0
    %9865 = vmatmul.mubr.f32.gmra.mrb[0].mxu0 %v9789
    %v9866 = vpop.f32.mrb[0].mxu0
    %v9867 = vadd.f32 %v9799, %v9866
    %v9868 = vpop.f32.mrb[0].mxu0
    %9869 = vdwg.mxu0
    %v9870 = vxor.u32 %v9867, 2147483648
    %v9871 = vmul.f32 %v9870, 1.442695
    %v9872 = vpow.pop %v9871
    %v9873 = vadd.f32 %v9872, 1.0
    %v9874 = vrcp.pop %v9873
    %v9875 = vmul.f32 1.0, %v9874
    %v9876 = vlaneseq
    %v9877 = vshrl.u32 %v9876, 7
    %v9878 = vsub.s32 0, %v9877
    %v9879 = vrot.slane %v9875, %v9878
    %vm9880 = vcmask 64512
    %9881 = vst.msk [vmem:[%s9] sm:$0xff] %vm9880, %v9879
    // Predicated region
    $region42: #{wake_word_forward.1} parent=1 // pred_check
      _
    $region43: #{wake_word_forward.1} parent=1 // pred_check_branch
      %9883 = sbr.rel (0) target = $region45
    $region44: #{wake_word_forward.1} parent=1 // pred_region
      _
    $region45: #{wake_word_forward.1} parent=1 // pred_fallthru
      _
    // Predicated region
    $region46: #{wake_word_forward.1} parent=1 // pred_check
      _
    $region47: #{wake_word_forward.1} parent=1 // pred_check_branch
      %9885 = sbr.rel (0) target = $region49
    $region48: #{wake_word_forward.1} parent=1 // pred_region
      _
    $region49: #{wake_word_forward.1} parent=1 // pred_fallthru
      _
    %9886 = vsyncpa [#allocation8], 1

</llo_original>
